<compile_context>
chip_gen: v7x
topology: tpu7x:2x2x1
jax: 0.10.0
libtpu: 0.0.40
codegen_flags: <defaults>
</compile_context>

<pallas_src>
import jax
import jax.numpy as jnp
import numpy as np
from jax.experimental import pallas as pl
from jax.experimental.pallas import tpu as pltpu

N, C, H, W = 2, 64, 16, 16       # channels fixed to 64 by the module
CR = C // 16                     # ChannelAttention hidden width (ratio=16)
HW = H * W                       # 256 pixels
K3 = 3                           # body conv kernel size
K7 = 7                           # spatial-attention kernel size
PAD7 = K7 // 2


def _sigmoid(x):
    # sigmoid via EUP exp + approximate reciprocal (both off the VALU slot).
    return pl.reciprocal(1.0 + jnp.exp(-x), approx=True)


# ----------------------------------------------------------------------------
# Fused CBAM kernel: one grid step == one image.
# ----------------------------------------------------------------------------
def cbam_kernel(x_ref, w1_ref, b1_ref, w2_ref, b2_ref,
                wfc1_ref, wfc2_ref, m2_ref,
                o_ref, xp_ref, patch_ref):
    # x_ref:   (1, H, W, C)   f32   input image (NHWC block)
    # w1/w2:   (9*C, C)       bf16  im2col conv weights
    # b1/b2:   (1, C)         f32
    # wfc1:    (C, CR) f32 ;  wfc2: (CR, C) f32
    # m2_ref:  (HW, 2*HW)     bf16  7x7 spatial conv as dense matrix [mean|max]
    # o_ref:   (1, H, W, C)   f32
    # xp_ref:  (H+2, W+2, C)  f32   padded-activation scratch (halo)
    # patch:   (HW, 9*C)      f32   im2col scratch

    # Zero the halo once per image; interiors are fully overwritten below.
    xp_ref[...] = jnp.zeros_like(xp_ref)

    def conv3x3(img_hwc, w_ref, b_ref, relu):
        # Write interior (borders stay zero), build im2col patch, one matmul.
        xp_ref[1:H + 1, 1:W + 1, :] = img_hwc
        for kh in range(K3):
            for kw in range(K3):
                t = kh * K3 + kw
                patch_ref[:, t * C:(t + 1) * C] = (
                    xp_ref[kh:kh + H, kw:kw + W, :].reshape(HW, C))
        acc = jnp.dot(patch_ref[...].astype(jnp.bfloat16), w_ref[...],
                      preferred_element_type=jnp.float32) + b_ref[...]
        return jnp.maximum(acc, 0.0) if relu else acc

    h1 = conv3x3(x_ref[0], w1_ref, b1_ref, relu=True)                 # (HW, C)
    res1 = conv3x3(h1.reshape(H, W, C), w2_ref, b2_ref, relu=False)   # (HW, C)

    # ---------------- channel attention ----------------
    avg = jnp.mean(res1, axis=0, keepdims=True)        # (1, C)
    mx = jnp.max(res1, axis=0, keepdims=True)          # (1, C)
    pooled = jnp.concatenate([avg, mx], axis=0)        # (2, C) -> one MLP pass
    hid = jnp.maximum(
        jnp.dot(pooled, wfc1_ref[...], preferred_element_type=jnp.float32),
        0.0)                                           # (2, CR)
    mlp = jnp.dot(hid, wfc2_ref[...], preferred_element_type=jnp.float32)
    ca = _sigmoid(mlp[0:1, :] + mlp[1:2, :])           # (1, C)
    out = res1 * ca                                    # (HW, C)

    # ---------------- spatial attention ----------------
    # Per-pixel mean/max over channels, broadcast back over the 64 lanes so the
    # single MXU matmul below directly yields lane-dense (HW, C) logits.
    mean_bc = jnp.broadcast_to(jnp.mean(out, axis=1, keepdims=True), (HW, C))
    max_bc = jnp.broadcast_to(jnp.max(out, axis=1, keepdims=True), (HW, C))
    logits = (
        jnp.dot(m2_ref[:, :HW], mean_bc.astype(jnp.bfloat16),
                preferred_element_type=jnp.float32)
        + jnp.dot(m2_ref[:, HW:], max_bc.astype(jnp.bfloat16),
                  preferred_element_type=jnp.float32))            # (HW, C)
    result = out * _sigmoid(logits)
    o_ref[0] = result.reshape(H, W, C)


# ----------------------------------------------------------------------------
# Wrapper: weight preprocessing (trace-time only) + single pallas_call.
# ----------------------------------------------------------------------------
def _build_sa_matrix(w_sa_flat):
    """Dense (HW, 2*HW) matrix M with M[(io,jo),(c,ii,ji)] = w[c, ii-io+3, ji-jo+3]
    (zero outside the 7x7 support) -- the 7x7 'same' conv incl. zero padding."""
    wk = w_sa_flat.reshape(2, K7, K7)
    di = jnp.arange(H)[None, :] - jnp.arange(H)[:, None] + PAD7   # (Ho, Hi)
    dj = jnp.arange(W)[None, :] - jnp.arange(W)[:, None] + PAD7   # (Wo, Wi)
    vh = (di >= 0) & (di < K7)
    vw = (dj >= 0) & (dj < K7)
    a = wk[:, jnp.clip(di, 0, K7 - 1)[:, :, None, None],
           jnp.clip(dj, 0, K7 - 1)[None, None, :, :]]             # (2,Ho,Hi,Wo,Wi)
    a = jnp.where((vh[:, :, None, None] & vw[None, None, :, :])[None], a, 0.0)
    # -> (io, jo, c, ii, ji) -> (HW, 2*HW)
    return jnp.transpose(a, (1, 3, 0, 2, 4)).reshape(HW, 2 * HW)


@jax.jit
def cbam_forward(x_nchw, params):
    x = jnp.transpose(x_nchw, (0, 2, 3, 1)).astype(jnp.float32)   # -> NHWC
    w1 = params["w_conv1"].reshape(9 * C, C).astype(jnp.bfloat16)
    w2 = params["w_conv2"].reshape(9 * C, C).astype(jnp.bfloat16)
    b1 = params["b_conv1"].astype(jnp.float32)
    b2 = params["b_conv2"].astype(jnp.float32)
    wfc1 = params["w_fc1"].astype(jnp.float32)
    wfc2 = params["w_fc2"].astype(jnp.float32)
    m2 = _build_sa_matrix(params["w_sa"]).astype(jnp.bfloat16)    # (HW, 2*HW)

    y = pl.pallas_call(
        cbam_kernel,
        out_shape=jax.ShapeDtypeStruct((N, H, W, C), jnp.float32),
        grid_spec=pltpu.PrefetchScalarGridSpec(
            num_scalar_prefetch=0,
            grid=(N,),
            in_specs=[
                pl.BlockSpec((1, H, W, C), lambda i: (i, 0, 0, 0)),
                pl.BlockSpec((9 * C, C), lambda i: (0, 0)),
                pl.BlockSpec((1, C), lambda i: (0, 0)),
                pl.BlockSpec((9 * C, C), lambda i: (0, 0)),
                pl.BlockSpec((1, C), lambda i: (0, 0)),
                pl.BlockSpec((C, CR), lambda i: (0, 0)),
                pl.BlockSpec((CR, C), lambda i: (0, 0)),
                pl.BlockSpec((HW, 2 * HW), lambda i: (0, 0)),
            ],
            out_specs=pl.BlockSpec((1, H, W, C), lambda i: (i, 0, 0, 0)),
            scratch_shapes=[
                pltpu.VMEM((H + 2, W + 2, C), jnp.float32),   # padded activ.
                pltpu.VMEM((HW, 9 * C), jnp.float32),         # im2col patch
            ],
        ),
        compiler_params=pltpu.CompilerParams(
            dimension_semantics=("parallel",)),
    )(x, w1, b1, w2, b2, wfc1, wfc2, m2)
    return jnp.transpose(y, (0, 3, 1, 2))                         # -> NCHW


# ----------------------------------------------------------------------------
# Pure-JAX f32 reference (same math as the PyTorch module) for checking.
# ----------------------------------------------------------------------------
@jax.jit
def ref_forward(x_nchw, params):
    x = jnp.transpose(x_nchw, (0, 2, 3, 1))

    def conv3x3_ref(xx, w9, b):
        n, h, wd, cin = xx.shape
        xp = jnp.pad(xx, ((0, 0), (1, 1), (1, 1), (0, 0)))
        acc = jnp.zeros((n, h, wd, w9.shape[-1]), jnp.float32)
        for kh in range(3):
            for kw in range(3):
                acc += jnp.einsum("nhwc,cd->nhwd",
                                  xp[:, kh:kh + h, kw:kw + wd, :],
                                  w9[kh * 3 + kw])
        return acc + b[0]

    h1 = jnp.maximum(conv3x3_ref(x, params["w_conv1"], params["b_conv1"]), 0.0)
    res1 = conv3x3_ref(h1, params["w_conv2"], params["b_conv2"])

    avg = jnp.mean(res1, axis=(1, 2))
    mx = jnp.max(res1, axis=(1, 2))

    def mlp(v):
        return jnp.maximum(v @ params["w_fc1"], 0.0) @ params["w_fc2"]

    scale = jax.nn.sigmoid(mlp(avg) + mlp(mx))
    out = res1 * scale[:, None, None, :]

    mmean = jnp.mean(out, axis=-1)
    mmax = jnp.max(out, axis=-1)
    pm = jnp.pad(jnp.stack([mmean, mmax], axis=1),
                 ((0, 0), (0, 0), (3, 3), (3, 3)))
    w_sa = params["w_sa"].reshape(2, K7, K7)
    n, h, wd = mmean.shape
    acc = jnp.zeros((n, h, wd), jnp.float32)
    for ci in range(2):
        for kh in range(K7):
            for kw in range(K7):
                acc += pm[:, ci, kh:kh + h, kw:kw + wd] * w_sa[ci, kh, kw]
    res = out * jax.nn.sigmoid(acc)[:, :, :, None]
    return jnp.transpose(res, (0, 3, 1, 2))


if __name__ == "__main__":
    key = jax.random.PRNGKey(0)
    ks = jax.random.split(key, 8)
    params = {
        # nn.Conv2d(64, 64, 3, padding=1) weights as (9, Cin, Cout) + bias
        "w_conv1": 0.05 * jax.random.normal(ks[0], (9, C, C), jnp.float32),
        "b_conv1": 0.05 * jax.random.normal(ks[1], (1, C), jnp.float32),
        "w_conv2": 0.05 * jax.random.normal(ks[2], (9, C, C), jnp.float32),
        "b_conv2": 0.05 * jax.random.normal(ks[3], (1, C), jnp.float32),
        # ChannelAttention 1x1 convs (bias=False) as dense matrices
        "w_fc1": 0.1 * jax.random.normal(ks[4], (C, CR), jnp.float32),
        "w_fc2": 0.1 * jax.random.normal(ks[5], (CR, C), jnp.float32),
        # SpatialAttention 7x7 conv (2 -> 1, bias=False), flattened (2*7*7,)
        "w_sa": 0.1 * jax.random.normal(ks[6], (2 * K7 * K7,), jnp.float32),
    }
    x = jax.random.normal(ks[7], (N, C, H, W), jnp.float32)   # NCHW input

    y = jax.block_until_ready(cbam_forward(x, params))
    y_ref = jax.block_until_ready(ref_forward(x, params))

    assert y.shape == (N, C, H, W)
    np.testing.assert_allclose(np.asarray(y), np.asarray(y_ref),
                               atol=5e-2, rtol=5e-2)
    print("KERNEL_OK")
</pallas_src>

<mosaic_0001>
module attributes {stable_mosaic.version = 11 : i64} {
  func.func @cbam_kernel(%arg0: i32, %arg1: memref<1x16x16x64xf32, #tpu.memory_space<vmem>>, %arg2: memref<576x64xbf16, #tpu.memory_space<vmem>>, %arg3: memref<1x64xf32, #tpu.memory_space<vmem>>, %arg4: memref<576x64xbf16, #tpu.memory_space<vmem>>, %arg5: memref<1x64xf32, #tpu.memory_space<vmem>>, %arg6: memref<64x4xf32, #tpu.memory_space<vmem>>, %arg7: memref<4x64xf32, #tpu.memory_space<vmem>>, %arg8: memref<256x512xbf16, #tpu.memory_space<vmem>>, %arg9: memref<1x16x16x64xf32, #tpu.memory_space<vmem>>, %arg10: memref<18x18x64xf32, #tpu.memory_space<vmem>>, %arg11: memref<256x576xf32, #tpu.memory_space<vmem>>) attributes {dimension_semantics = [#tpu.dimension_semantics<parallel>], iteration_bounds = array<i64: 2>, scalar_prefetch = 0 : i64, scratch_operands = 2 : i64, tpu.core_type = #tpu.core_type<tc>, window_params = [{transform_indices = @transform_0, window_bounds = array<i64: 1, 16, 16, 64>}, {pipeline_mode = #tpu.pipeline_mode<synchronous>, transform_indices = @transform_1, window_bounds = array<i64: 576, 64>}, {pipeline_mode = #tpu.pipeline_mode<synchronous>, transform_indices = @transform_2, window_bounds = array<i64: 1, 64>}, {pipeline_mode = #tpu.pipeline_mode<synchronous>, transform_indices = @transform_3, window_bounds = array<i64: 576, 64>}, {pipeline_mode = #tpu.pipeline_mode<synchronous>, transform_indices = @transform_4, window_bounds = array<i64: 1, 64>}, {pipeline_mode = #tpu.pipeline_mode<synchronous>, transform_indices = @transform_5, window_bounds = array<i64: 64, 4>}, {pipeline_mode = #tpu.pipeline_mode<synchronous>, transform_indices = @transform_6, window_bounds = array<i64: 4, 64>}, {pipeline_mode = #tpu.pipeline_mode<synchronous>, transform_indices = @transform_7, window_bounds = array<i64: 256, 512>}, {transform_indices = @transform_8, window_bounds = array<i64: 1, 16, 16, 64>}]} {
    %cst = arith.constant 0.000000e+00 : f32
    %0 = vector.broadcast %cst : f32 to vector<18x18x64xf32>
    %c0 = arith.constant 0 : index
    %c0_0 = arith.constant 0 : index
    %c0_1 = arith.constant 0 : index
    %1 = vector.load %arg10[%c0, %c0_0, %c0_1] : memref<18x18x64xf32, #tpu.memory_space<vmem>>, vector<18x18x64xf32>
    tpu.vector_store %arg10[%c0, %c0_0, %c0_1], %0 {strides = array<i32>} : memref<18x18x64xf32, #tpu.memory_space<vmem>>, vector<18x18x64xf32>,
    %c0_2 = arith.constant 0 : index
    %c0_3 = arith.constant 0 : index
    %c0_4 = arith.constant 0 : index
    %c0_5 = arith.constant 0 : index
    %2 = vector.load %arg1[%c0_2, %c0_3, %c0_4, %c0_5] : memref<1x16x16x64xf32, #tpu.memory_space<vmem>>, vector<1x16x16x64xf32>
    %3 = vector.shape_cast %2 : vector<1x16x16x64xf32> to vector<16x16x64xf32>
    %c1 = arith.constant 1 : index
    %c1_6 = arith.constant 1 : index
    %c0_7 = arith.constant 0 : index
    %4 = vector.load %arg10[%c1, %c1_6, %c0_7] : memref<18x18x64xf32, #tpu.memory_space<vmem>>, vector<16x16x64xf32>
    tpu.vector_store %arg10[%c1, %c1_6, %c0_7], %3 {strides = array<i32>} : memref<18x18x64xf32, #tpu.memory_space<vmem>>, vector<16x16x64xf32>,
    %c0_8 = arith.constant 0 : index
    %c0_9 = arith.constant 0 : index
    %c0_10 = arith.constant 0 : index
    %5 = vector.load %arg10[%c0_8, %c0_9, %c0_10] : memref<18x18x64xf32, #tpu.memory_space<vmem>>, vector<16x16x64xf32>
    %6 = vector.shape_cast %5 : vector<16x16x64xf32> to vector<256x64xf32>
    %c0_11 = arith.constant 0 : index
    %c0_12 = arith.constant 0 : index
    %7 = vector.load %arg11[%c0_11, %c0_12] : memref<256x576xf32, #tpu.memory_space<vmem>>, vector<256x64xf32>
    tpu.vector_store %arg11[%c0_11, %c0_12], %6 {strides = array<i32>} : memref<256x576xf32, #tpu.memory_space<vmem>>, vector<256x64xf32>,
    %c0_13 = arith.constant 0 : index
    %c1_14 = arith.constant 1 : index
    %c0_15 = arith.constant 0 : index
    %8 = vector.load %arg10[%c0_13, %c1_14, %c0_15] : memref<18x18x64xf32, #tpu.memory_space<vmem>>, vector<16x16x64xf32>
    %9 = vector.shape_cast %8 : vector<16x16x64xf32> to vector<256x64xf32>
    %c0_16 = arith.constant 0 : index
    %c64 = arith.constant 64 : index
    %10 = vector.load %arg11[%c0_16, %c64] : memref<256x576xf32, #tpu.memory_space<vmem>>, vector<256x64xf32>
    tpu.vector_store %arg11[%c0_16, %c64], %9 {strides = array<i32>} : memref<256x576xf32, #tpu.memory_space<vmem>>, vector<256x64xf32>,
    %c0_17 = arith.constant 0 : index
    %c2 = arith.constant 2 : index
    %c0_18 = arith.constant 0 : index
    %11 = vector.load %arg10[%c0_17, %c2, %c0_18] : memref<18x18x64xf32, #tpu.memory_space<vmem>>, vector<16x16x64xf32>
    %12 = vector.shape_cast %11 : vector<16x16x64xf32> to vector<256x64xf32>
    %c0_19 = arith.constant 0 : index
    %c128 = arith.constant 128 : index
    %13 = vector.load %arg11[%c0_19, %c128] : memref<256x576xf32, #tpu.memory_space<vmem>>, vector<256x64xf32>
    tpu.vector_store %arg11[%c0_19, %c128], %12 {strides = array<i32>} : memref<256x576xf32, #tpu.memory_space<vmem>>, vector<256x64xf32>,
    %c1_20 = arith.constant 1 : index
    %c0_21 = arith.constant 0 : index
    %c0_22 = arith.constant 0 : index
    %14 = vector.load %arg10[%c1_20, %c0_21, %c0_22] : memref<18x18x64xf32, #tpu.memory_space<vmem>>, vector<16x16x64xf32>
    %15 = vector.shape_cast %14 : vector<16x16x64xf32> to vector<256x64xf32>
    %c0_23 = arith.constant 0 : index
    %c192 = arith.constant 192 : index
    %16 = vector.load %arg11[%c0_23, %c192] : memref<256x576xf32, #tpu.memory_space<vmem>>, vector<256x64xf32>
    tpu.vector_store %arg11[%c0_23, %c192], %15 {strides = array<i32>} : memref<256x576xf32, #tpu.memory_space<vmem>>, vector<256x64xf32>,
    %c1_24 = arith.constant 1 : index
    %c1_25 = arith.constant 1 : index
    %c0_26 = arith.constant 0 : index
    %17 = vector.load %arg10[%c1_24, %c1_25, %c0_26] : memref<18x18x64xf32, #tpu.memory_space<vmem>>, vector<16x16x64xf32>
    %18 = vector.shape_cast %17 : vector<16x16x64xf32> to vector<256x64xf32>
    %c0_27 = arith.constant 0 : index
    %c256 = arith.constant 256 : index
    %19 = vector.load %arg11[%c0_27, %c256] : memref<256x576xf32, #tpu.memory_space<vmem>>, vector<256x64xf32>
    tpu.vector_store %arg11[%c0_27, %c256], %18 {strides = array<i32>} : memref<256x576xf32, #tpu.memory_space<vmem>>, vector<256x64xf32>,
    %c1_28 = arith.constant 1 : index
    %c2_29 = arith.constant 2 : index
    %c0_30 = arith.constant 0 : index
    %20 = vector.load %arg10[%c1_28, %c2_29, %c0_30] : memref<18x18x64xf32, #tpu.memory_space<vmem>>, vector<16x16x64xf32>
    %21 = vector.shape_cast %20 : vector<16x16x64xf32> to vector<256x64xf32>
    %c0_31 = arith.constant 0 : index
    %c320 = arith.constant 320 : index
    %22 = vector.load %arg11[%c0_31, %c320] : memref<256x576xf32, #tpu.memory_space<vmem>>, vector<256x64xf32>
    tpu.vector_store %arg11[%c0_31, %c320], %21 {strides = array<i32>} : memref<256x576xf32, #tpu.memory_space<vmem>>, vector<256x64xf32>,
    %c2_32 = arith.constant 2 : index
    %c0_33 = arith.constant 0 : index
    %c0_34 = arith.constant 0 : index
    %23 = vector.load %arg10[%c2_32, %c0_33, %c0_34] : memref<18x18x64xf32, #tpu.memory_space<vmem>>, vector<16x16x64xf32>
    %24 = vector.shape_cast %23 : vector<16x16x64xf32> to vector<256x64xf32>
    %c0_35 = arith.constant 0 : index
    %c384 = arith.constant 384 : index
    %25 = vector.load %arg11[%c0_35, %c384] : memref<256x576xf32, #tpu.memory_space<vmem>>, vector<256x64xf32>
    tpu.vector_store %arg11[%c0_35, %c384], %24 {strides = array<i32>} : memref<256x576xf32, #tpu.memory_space<vmem>>, vector<256x64xf32>,
    %c2_36 = arith.constant 2 : index
    %c1_37 = arith.constant 1 : index
    %c0_38 = arith.constant 0 : index
    %26 = vector.load %arg10[%c2_36, %c1_37, %c0_38] : memref<18x18x64xf32, #tpu.memory_space<vmem>>, vector<16x16x64xf32>
    %27 = vector.shape_cast %26 : vector<16x16x64xf32> to vector<256x64xf32>
    %c0_39 = arith.constant 0 : index
    %c448 = arith.constant 448 : index
    %28 = vector.load %arg11[%c0_39, %c448] : memref<256x576xf32, #tpu.memory_space<vmem>>, vector<256x64xf32>
    tpu.vector_store %arg11[%c0_39, %c448], %27 {strides = array<i32>} : memref<256x576xf32, #tpu.memory_space<vmem>>, vector<256x64xf32>,
    %c2_40 = arith.constant 2 : index
    %c2_41 = arith.constant 2 : index
    %c0_42 = arith.constant 0 : index
    %29 = vector.load %arg10[%c2_40, %c2_41, %c0_42] : memref<18x18x64xf32, #tpu.memory_space<vmem>>, vector<16x16x64xf32>
    %30 = vector.shape_cast %29 : vector<16x16x64xf32> to vector<256x64xf32>
    %c0_43 = arith.constant 0 : index
    %c512 = arith.constant 512 : index
    %31 = vector.load %arg11[%c0_43, %c512] : memref<256x576xf32, #tpu.memory_space<vmem>>, vector<256x64xf32>
    tpu.vector_store %arg11[%c0_43, %c512], %30 {strides = array<i32>} : memref<256x576xf32, #tpu.memory_space<vmem>>, vector<256x64xf32>,
    %c0_44 = arith.constant 0 : index
    %c0_45 = arith.constant 0 : index
    %32 = vector.load %arg11[%c0_44, %c0_45] : memref<256x576xf32, #tpu.memory_space<vmem>>, vector<256x576xf32>
    %33 = arith.truncf %32 : vector<256x576xf32> to vector<256x576xbf16>
    %c0_46 = arith.constant 0 : index
    %c0_47 = arith.constant 0 : index
    %34 = vector.load %arg2[%c0_46, %c0_47] : memref<576x64xbf16, #tpu.memory_space<vmem>>, vector<576x64xbf16>
    %cst_48 = arith.constant dense<0.000000e+00> : vector<256x64xf32>
    %35 = tpu.matmul %33, %34, %cst_48 {dimension_numbers = #tpu.dot_dimension_numbers<[1], [0], [0], [1], [0, 0, 1, 1], [], []>} : vector<256x576xbf16>, vector<576x64xbf16>, vector<256x64xf32> -> vector<256x64xf32>
    %c0_49 = arith.constant 0 : index
    %c0_50 = arith.constant 0 : index
    %36 = vector.load %arg3[%c0_49, %c0_50] : memref<1x64xf32, #tpu.memory_space<vmem>>, vector<1x64xf32>
    %37 = vector.broadcast %36 : vector<1x64xf32> to vector<256x64xf32>
    %38 = arith.addf %35, %37 : vector<256x64xf32>
    %cst_51 = arith.constant 0.000000e+00 : f32
    %39 = vector.broadcast %cst_51 : f32 to vector<256x64xf32>
    %40 = arith.maximumf %38, %39 : vector<256x64xf32>
    %41 = vector.shape_cast %40 : vector<256x64xf32> to vector<16x16x64xf32>
    %c1_52 = arith.constant 1 : index
    %c1_53 = arith.constant 1 : index
    %c0_54 = arith.constant 0 : index
    %42 = vector.load %arg10[%c1_52, %c1_53, %c0_54] : memref<18x18x64xf32, #tpu.memory_space<vmem>>, vector<16x16x64xf32>
    tpu.vector_store %arg10[%c1_52, %c1_53, %c0_54], %41 {strides = array<i32>} : memref<18x18x64xf32, #tpu.memory_space<vmem>>, vector<16x16x64xf32>,
    %c0_55 = arith.constant 0 : index
    %c0_56 = arith.constant 0 : index
    %c0_57 = arith.constant 0 : index
    %43 = vector.load %arg10[%c0_55, %c0_56, %c0_57] : memref<18x18x64xf32, #tpu.memory_space<vmem>>, vector<16x16x64xf32>
    %44 = vector.shape_cast %43 : vector<16x16x64xf32> to vector<256x64xf32>
    %c0_58 = arith.constant 0 : index
    %c0_59 = arith.constant 0 : index
    %45 = vector.load %arg11[%c0_58, %c0_59] : memref<256x576xf32, #tpu.memory_space<vmem>>, vector<256x64xf32>
    tpu.vector_store %arg11[%c0_58, %c0_59], %44 {strides = array<i32>} : memref<256x576xf32, #tpu.memory_space<vmem>>, vector<256x64xf32>,
    %c0_60 = arith.constant 0 : index
    %c1_61 = arith.constant 1 : index
    %c0_62 = arith.constant 0 : index
    %46 = vector.load %arg10[%c0_60, %c1_61, %c0_62] : memref<18x18x64xf32, #tpu.memory_space<vmem>>, vector<16x16x64xf32>
    %47 = vector.shape_cast %46 : vector<16x16x64xf32> to vector<256x64xf32>
    %c0_63 = arith.constant 0 : index
    %c64_64 = arith.constant 64 : index
    %48 = vector.load %arg11[%c0_63, %c64_64] : memref<256x576xf32, #tpu.memory_space<vmem>>, vector<256x64xf32>
    tpu.vector_store %arg11[%c0_63, %c64_64], %47 {strides = array<i32>} : memref<256x576xf32, #tpu.memory_space<vmem>>, vector<256x64xf32>,
    %c0_65 = arith.constant 0 : index
    %c2_66 = arith.constant 2 : index
    %c0_67 = arith.constant 0 : index
    %49 = vector.load %arg10[%c0_65, %c2_66, %c0_67] : memref<18x18x64xf32, #tpu.memory_space<vmem>>, vector<16x16x64xf32>
    %50 = vector.shape_cast %49 : vector<16x16x64xf32> to vector<256x64xf32>
    %c0_68 = arith.constant 0 : index
    %c128_69 = arith.constant 128 : index
    %51 = vector.load %arg11[%c0_68, %c128_69] : memref<256x576xf32, #tpu.memory_space<vmem>>, vector<256x64xf32>
    tpu.vector_store %arg11[%c0_68, %c128_69], %50 {strides = array<i32>} : memref<256x576xf32, #tpu.memory_space<vmem>>, vector<256x64xf32>,
    %c1_70 = arith.constant 1 : index
    %c0_71 = arith.constant 0 : index
    %c0_72 = arith.constant 0 : index
    %52 = vector.load %arg10[%c1_70, %c0_71, %c0_72] : memref<18x18x64xf32, #tpu.memory_space<vmem>>, vector<16x16x64xf32>
    %53 = vector.shape_cast %52 : vector<16x16x64xf32> to vector<256x64xf32>
    %c0_73 = arith.constant 0 : index
    %c192_74 = arith.constant 192 : index
    %54 = vector.load %arg11[%c0_73, %c192_74] : memref<256x576xf32, #tpu.memory_space<vmem>>, vector<256x64xf32>
    tpu.vector_store %arg11[%c0_73, %c192_74], %53 {strides = array<i32>} : memref<256x576xf32, #tpu.memory_space<vmem>>, vector<256x64xf32>,
    %c1_75 = arith.constant 1 : index
    %c1_76 = arith.constant 1 : index
    %c0_77 = arith.constant 0 : index
    %55 = vector.load %arg10[%c1_75, %c1_76, %c0_77] : memref<18x18x64xf32, #tpu.memory_space<vmem>>, vector<16x16x64xf32>
    %56 = vector.shape_cast %55 : vector<16x16x64xf32> to vector<256x64xf32>
    %c0_78 = arith.constant 0 : index
    %c256_79 = arith.constant 256 : index
    %57 = vector.load %arg11[%c0_78, %c256_79] : memref<256x576xf32, #tpu.memory_space<vmem>>, vector<256x64xf32>
    tpu.vector_store %arg11[%c0_78, %c256_79], %56 {strides = array<i32>} : memref<256x576xf32, #tpu.memory_space<vmem>>, vector<256x64xf32>,
    %c1_80 = arith.constant 1 : index
    %c2_81 = arith.constant 2 : index
    %c0_82 = arith.constant 0 : index
    %58 = vector.load %arg10[%c1_80, %c2_81, %c0_82] : memref<18x18x64xf32, #tpu.memory_space<vmem>>, vector<16x16x64xf32>
    %59 = vector.shape_cast %58 : vector<16x16x64xf32> to vector<256x64xf32>
    %c0_83 = arith.constant 0 : index
    %c320_84 = arith.constant 320 : index
    %60 = vector.load %arg11[%c0_83, %c320_84] : memref<256x576xf32, #tpu.memory_space<vmem>>, vector<256x64xf32>
    tpu.vector_store %arg11[%c0_83, %c320_84], %59 {strides = array<i32>} : memref<256x576xf32, #tpu.memory_space<vmem>>, vector<256x64xf32>,
    %c2_85 = arith.constant 2 : index
    %c0_86 = arith.constant 0 : index
    %c0_87 = arith.constant 0 : index
    %61 = vector.load %arg10[%c2_85, %c0_86, %c0_87] : memref<18x18x64xf32, #tpu.memory_space<vmem>>, vector<16x16x64xf32>
    %62 = vector.shape_cast %61 : vector<16x16x64xf32> to vector<256x64xf32>
    %c0_88 = arith.constant 0 : index
    %c384_89 = arith.constant 384 : index
    %63 = vector.load %arg11[%c0_88, %c384_89] : memref<256x576xf32, #tpu.memory_space<vmem>>, vector<256x64xf32>
    tpu.vector_store %arg11[%c0_88, %c384_89], %62 {strides = array<i32>} : memref<256x576xf32, #tpu.memory_space<vmem>>, vector<256x64xf32>,
    %c2_90 = arith.constant 2 : index
    %c1_91 = arith.constant 1 : index
    %c0_92 = arith.constant 0 : index
    %64 = vector.load %arg10[%c2_90, %c1_91, %c0_92] : memref<18x18x64xf32, #tpu.memory_space<vmem>>, vector<16x16x64xf32>
    %65 = vector.shape_cast %64 : vector<16x16x64xf32> to vector<256x64xf32>
    %c0_93 = arith.constant 0 : index
    %c448_94 = arith.constant 448 : index
    %66 = vector.load %arg11[%c0_93, %c448_94] : memref<256x576xf32, #tpu.memory_space<vmem>>, vector<256x64xf32>
    tpu.vector_store %arg11[%c0_93, %c448_94], %65 {strides = array<i32>} : memref<256x576xf32, #tpu.memory_space<vmem>>, vector<256x64xf32>,
    %c2_95 = arith.constant 2 : index
    %c2_96 = arith.constant 2 : index
    %c0_97 = arith.constant 0 : index
    %67 = vector.load %arg10[%c2_95, %c2_96, %c0_97] : memref<18x18x64xf32, #tpu.memory_space<vmem>>, vector<16x16x64xf32>
    %68 = vector.shape_cast %67 : vector<16x16x64xf32> to vector<256x64xf32>
    %c0_98 = arith.constant 0 : index
    %c512_99 = arith.constant 512 : index
    %69 = vector.load %arg11[%c0_98, %c512_99] : memref<256x576xf32, #tpu.memory_space<vmem>>, vector<256x64xf32>
    tpu.vector_store %arg11[%c0_98, %c512_99], %68 {strides = array<i32>} : memref<256x576xf32, #tpu.memory_space<vmem>>, vector<256x64xf32>,
    %c0_100 = arith.constant 0 : index
    %c0_101 = arith.constant 0 : index
    %70 = vector.load %arg11[%c0_100, %c0_101] : memref<256x576xf32, #tpu.memory_space<vmem>>, vector<256x576xf32>
    %71 = arith.truncf %70 : vector<256x576xf32> to vector<256x576xbf16>
    %c0_102 = arith.constant 0 : index
    %c0_103 = arith.constant 0 : index
    %72 = vector.load %arg4[%c0_102, %c0_103] : memref<576x64xbf16, #tpu.memory_space<vmem>>, vector<576x64xbf16>
    %cst_104 = arith.constant dense<0.000000e+00> : vector<256x64xf32>
    %73 = tpu.matmul %71, %72, %cst_104 {dimension_numbers = #tpu.dot_dimension_numbers<[1], [0], [0], [1], [0, 0, 1, 1], [], []>} : vector<256x576xbf16>, vector<576x64xbf16>, vector<256x64xf32> -> vector<256x64xf32>
    %c0_105 = arith.constant 0 : index
    %c0_106 = arith.constant 0 : index
    %74 = vector.load %arg5[%c0_105, %c0_106] : memref<1x64xf32, #tpu.memory_space<vmem>>, vector<1x64xf32>
    %75 = vector.broadcast %74 : vector<1x64xf32> to vector<256x64xf32>
    %76 = arith.addf %73, %75 : vector<256x64xf32>
    %cst_107 = arith.constant dense<0.000000e+00> : vector<64xf32>
    %77 = vector.multi_reduction <add>, %76, %cst_107 [0] : vector<256x64xf32> to vector<64xf32>
    %78 = vector.shape_cast %77 : vector<64xf32> to vector<1x64xf32>
    %cst_108 = arith.constant 2.560000e+02 : f32
    %79 = vector.broadcast %cst_108 : f32 to vector<1x64xf32>
    %80 = arith.divf %78, %79 : vector<1x64xf32>
    %cst_109 = arith.constant dense<0xFF800000> : vector<64xf32>
    %81 = vector.multi_reduction <maximumf>, %76, %cst_109 [0] : vector<256x64xf32> to vector<64xf32>
    %82 = vector.shape_cast %81 : vector<64xf32> to vector<1x64xf32>
    %83 = tpu.concatenate %80, %82 in 0 : vector<1x64xf32>, vector<1x64xf32> -> vector<2x64xf32>
    %c0_110 = arith.constant 0 : index
    %c0_111 = arith.constant 0 : index
    %84 = vector.load %arg6[%c0_110, %c0_111] : memref<64x4xf32, #tpu.memory_space<vmem>>, vector<64x4xf32>
    %cst_112 = arith.constant dense<0.000000e+00> : vector<2x4xf32>
    %85 = tpu.matmul %83, %84, %cst_112 {dimension_numbers = #tpu.dot_dimension_numbers<[1], [0], [0], [1], [0, 0, 1, 1], [], []>} : vector<2x64xf32>, vector<64x4xf32>, vector<2x4xf32> -> vector<2x4xf32>
    %cst_113 = arith.constant 0.000000e+00 : f32
    %86 = vector.broadcast %cst_113 : f32 to vector<2x4xf32>
    %87 = arith.maximumf %85, %86 : vector<2x4xf32>
    %c0_114 = arith.constant 0 : index
    %c0_115 = arith.constant 0 : index
    %88 = vector.load %arg7[%c0_114, %c0_115] : memref<4x64xf32, #tpu.memory_space<vmem>>, vector<4x64xf32>
    %cst_116 = arith.constant dense<0.000000e+00> : vector<2x64xf32>
    %89 = tpu.matmul %87, %88, %cst_116 {dimension_numbers = #tpu.dot_dimension_numbers<[1], [0], [0], [1], [0, 0, 1, 1], [], []>} : vector<2x4xf32>, vector<4x64xf32>, vector<2x64xf32> -> vector<2x64xf32>
    %90 = vector.extract_strided_slice %89 {offsets = [0, 0], sizes = [1, 64], strides = [1, 1]} : vector<2x64xf32> to vector<1x64xf32>
    %91 = vector.extract_strided_slice %89 {offsets = [1, 0], sizes = [1, 64], strides = [1, 1]} : vector<2x64xf32> to vector<1x64xf32>
    %92 = arith.addf %90, %91 : vector<1x64xf32>
    %cst_117 = arith.constant 0.000000e+00 : f32
    %93 = vector.broadcast %cst_117 : f32 to vector<1x64xf32>
    %94 = arith.subf %93, %92 : vector<1x64xf32>
    %95 = math.exp %94 : vector<1x64xf32>
    %cst_118 = arith.constant 1.000000e+00 : f32
    %96 = vector.broadcast %cst_118 : f32 to vector<1x64xf32>
    %97 = arith.addf %96, %95 : vector<1x64xf32>
    %98 = tpu.reciprocal %97 {approx = true} : vector<1x64xf32> -> vector<1x64xf32>
    %99 = vector.broadcast %98 : vector<1x64xf32> to vector<256x64xf32>
    %100 = arith.mulf %76, %99 : vector<256x64xf32>
    %cst_119 = arith.constant dense<0.000000e+00> : vector<256xf32>
    %101 = vector.multi_reduction <add>, %100, %cst_119 [1] : vector<256x64xf32> to vector<256xf32>
    %102 = vector.shape_cast %101 : vector<256xf32> to vector<256x1xf32>
    %cst_120 = arith.constant 6.400000e+01 : f32
    %103 = vector.broadcast %cst_120 : f32 to vector<256x1xf32>
    %104 = arith.divf %102, %103 : vector<256x1xf32>
    %105 = vector.shape_cast %104 : vector<256x1xf32> to vector<256x1xf32>
    %106 = vector.broadcast %105 : vector<256x1xf32> to vector<256x64xf32>
    %cst_121 = arith.constant dense<0xFF800000> : vector<256xf32>
    %107 = vector.multi_reduction <maximumf>, %100, %cst_121 [1] : vector<256x64xf32> to vector<256xf32>
    %108 = vector.shape_cast %107 : vector<256xf32> to vector<256x1xf32>
    %109 = vector.shape_cast %108 : vector<256x1xf32> to vector<256x1xf32>
    %110 = vector.broadcast %109 : vector<256x1xf32> to vector<256x64xf32>
    %c0_122 = arith.constant 0 : index
    %c0_123 = arith.constant 0 : index
    %111 = vector.load %arg8[%c0_122, %c0_123] : memref<256x512xbf16, #tpu.memory_space<vmem>>, vector<256x256xbf16>
    %112 = arith.truncf %106 : vector<256x64xf32> to vector<256x64xbf16>
    %cst_124 = arith.constant dense<0.000000e+00> : vector<256x64xf32>
    %113 = tpu.matmul %111, %112, %cst_124 {dimension_numbers = #tpu.dot_dimension_numbers<[1], [0], [0], [1], [0, 0, 1, 1], [], []>} : vector<256x256xbf16>, vector<256x64xbf16>, vector<256x64xf32> -> vector<256x64xf32>
    %c0_125 = arith.constant 0 : index
    %c256_126 = arith.constant 256 : index
    %114 = vector.load %arg8[%c0_125, %c256_126] : memref<256x512xbf16, #tpu.memory_space<vmem>>, vector<256x256xbf16>
    %115 = arith.truncf %110 : vector<256x64xf32> to vector<256x64xbf16>
    %cst_127 = arith.constant dense<0.000000e+00> : vector<256x64xf32>
    %116 = tpu.matmul %114, %115, %cst_127 {dimension_numbers = #tpu.dot_dimension_numbers<[1], [0], [0], [1], [0, 0, 1, 1], [], []>} : vector<256x256xbf16>, vector<256x64xbf16>, vector<256x64xf32> -> vector<256x64xf32>
    %117 = arith.addf %113, %116 : vector<256x64xf32>
    %cst_128 = arith.constant 0.000000e+00 : f32
    %118 = vector.broadcast %cst_128 : f32 to vector<256x64xf32>
    %119 = arith.subf %118, %117 : vector<256x64xf32>
    %120 = math.exp %119 : vector<256x64xf32>
    %cst_129 = arith.constant 1.000000e+00 : f32
    %121 = vector.broadcast %cst_129 : f32 to vector<256x64xf32>
    %122 = arith.addf %121, %120 : vector<256x64xf32>
    %123 = tpu.reciprocal %122 {approx = true} : vector<256x64xf32> -> vector<256x64xf32>
    %124 = arith.mulf %100, %123 : vector<256x64xf32>
    %125 = vector.shape_cast %124 : vector<256x64xf32> to vector<16x16x64xf32>
    %c0_130 = arith.constant 0 : index
    %c0_131 = arith.constant 0 : index
    %c0_132 = arith.constant 0 : index
    %c0_133 = arith.constant 0 : index
    %126 = vector.load %arg9[%c0_130, %c0_131, %c0_132, %c0_133] : memref<1x16x16x64xf32, #tpu.memory_space<vmem>>, vector<1x16x16x64xf32>
    %127 = vector.shape_cast %126 : vector<1x16x16x64xf32> to vector<16x16x64xf32>
    %128 = vector.shape_cast %125 : vector<16x16x64xf32> to vector<1x16x16x64xf32>
    tpu.vector_store %arg9[%c0_130, %c0_131, %c0_132, %c0_133], %128 {strides = array<i32>} : memref<1x16x16x64xf32, #tpu.memory_space<vmem>>, vector<1x16x16x64xf32>,
    return
  }
  func.func @transform_0(%arg0: i32) -> (i32, i32, i32, i32) {
    %c0_i32 = arith.constant 0 : i32
    %c0_i32_0 = arith.constant 0 : i32
    %c0_i32_1 = arith.constant 0 : i32
    %c0_i32_2 = arith.constant 0 : i32
    return %arg0, %c0_i32, %c0_i32_0, %c0_i32_1 : i32, i32, i32, i32
  }
  func.func @transform_1(%arg0: i32) -> (i32, i32) {
    %c0_i32 = arith.constant 0 : i32
    %c0_i32_0 = arith.constant 0 : i32
    %c0_i32_1 = arith.constant 0 : i32
    return %c0_i32, %c0_i32_0 : i32, i32
  }
  func.func @transform_2(%arg0: i32) -> (i32, i32) {
    %c0_i32 = arith.constant 0 : i32
    %c0_i32_0 = arith.constant 0 : i32
    %c0_i32_1 = arith.constant 0 : i32
    return %c0_i32, %c0_i32_0 : i32, i32
  }
  func.func @transform_3(%arg0: i32) -> (i32, i32) {
    %c0_i32 = arith.constant 0 : i32
    %c0_i32_0 = arith.constant 0 : i32
    %c0_i32_1 = arith.constant 0 : i32
    return %c0_i32, %c0_i32_0 : i32, i32
  }
  func.func @transform_4(%arg0: i32) -> (i32, i32) {
    %c0_i32 = arith.constant 0 : i32
    %c0_i32_0 = arith.constant 0 : i32
    %c0_i32_1 = arith.constant 0 : i32
    return %c0_i32, %c0_i32_0 : i32, i32
  }
  func.func @transform_5(%arg0: i32) -> (i32, i32) {
    %c0_i32 = arith.constant 0 : i32
    %c0_i32_0 = arith.constant 0 : i32
    %c0_i32_1 = arith.constant 0 : i32
    return %c0_i32, %c0_i32_0 : i32, i32
  }
  func.func @transform_6(%arg0: i32) -> (i32, i32) {
    %c0_i32 = arith.constant 0 : i32
    %c0_i32_0 = arith.constant 0 : i32
    %c0_i32_1 = arith.constant 0 : i32
    return %c0_i32, %c0_i32_0 : i32, i32
  }
  func.func @transform_7(%arg0: i32) -> (i32, i32) {
    %c0_i32 = arith.constant 0 : i32
    %c0_i32_0 = arith.constant 0 : i32
    %c0_i32_1 = arith.constant 0 : i32
    return %c0_i32, %c0_i32_0 : i32, i32
  }
  func.func @transform_8(%arg0: i32) -> (i32, i32, i32, i32) {
    %c0_i32 = arith.constant 0 : i32
    %c0_i32_0 = arith.constant 0 : i32
    %c0_i32_1 = arith.constant 0 : i32
    %c0_i32_2 = arith.constant 0 : i32
    return %arg0, %c0_i32, %c0_i32_0, %c0_i32_1 : i32, i32, i32, i32
  }
}

</mosaic_0001>

<llo_original>
// kernel: cbam_forward.1
$region0: #{cbam_forward.1}
  #allocation0 [shape = 'u32[]', space=smem, size = 0x4, offset = 0x4, fixed_abs, tag = 'smem constant byte address 0x4 - core index']
  #allocation1 [shape = 'u32[144,128]{1,0:T(1,128)}', space=vmem, size = 0x12000, scoped, tag = 'internal scratch']
  #allocation2 [shape = 'f32[18,18,64]{2,1,0:T(8,128)}', space=vmem, size = 0x36000, scoped, tag = 'scratch operand']
  #allocation3 [shape = 'f32[256,576]{1,0:T(8,128)}', space=vmem, size = 0xa0000, scoped, tag = 'scratch operand']
  %s0 = inlined_call_operand.vmem [shape: f32[2,16,16,64], index: 0, kind: input, shape index: {}]
  %s1 = inlined_call_operand.vmem [shape: bf16[576,64], index: 1, kind: input, shape index: {}]
  %s2 = inlined_call_operand.vmem [shape: f32[1,64], index: 2, kind: input, shape index: {}]
  %s3 = inlined_call_operand.vmem [shape: bf16[576,64], index: 3, kind: input, shape index: {}]
  %s4 = inlined_call_operand.vmem [shape: f32[1,64], index: 4, kind: input, shape index: {}]
  %s5 = inlined_call_operand.vmem [shape: f32[64,4], index: 5, kind: input, shape index: {}]
  %s6 = inlined_call_operand.vmem [shape: f32[4,64], index: 6, kind: input, shape index: {}]
  %s7 = inlined_call_operand.vmem [shape: bf16[256,512], index: 7, kind: input, shape index: {}]
  %s8 = inlined_call_operand.hbm [shape: f32[2,16,16,64], index: 8, kind: output, shape index: {}]
  %s9 = sld [smem:[#allocation0]]
  $region65: #{cbam_forward.1} parent=0
    _
  %s11 = ssub.s32 1, %s9
  %s12 = scalar_select 0, %s11, %s9
  $region1: #{cbam_forward.1} parent=0
    #allocation4 [shape = 'u8[262144]{0}', space=vmem, size = 0x40000, scoped, tag = 'output window, operand 0']
    #allocation5 [shape = 's32[2]{0}', space=sflag, size = 0x8, scoped, tag = 'scoped memory for cbam_forward.1']
    %13 = vsyncpa [#allocation5], 0
    %s14 = scalar_lea.sflag [#allocation5], 1
    %15 = vsyncpa %s14, 0
    loop: start=0, step=1, limit=4
    $region2: #{cbam_forward.1} parent=1 // loop_pre_header
      _
    $region3: #{cbam_forward.1} parent=1 // loop_header
      %s17 = sphi 0, %s21
      %p18 = scmp.ge.s32.totalorder %s17, 4
      %s27 = sphi 0, %s29
      %s30 = sphi 0, %s27
      %s31 = sphi 0, %s30
      %s47 = sphi 0, %s31
      %s51 = sphi 0, %s51
      %s53 = sphi 0, %s51
      %s54 = sphi 0, %s53
      %s68 = sphi 0, %s54
      %s72 = sphi 0, %s72
      %s74 = sphi 0, %s72
      %s75 = sphi 0, %s74
      %s89 = sphi 0, %s75
      %s93 = sphi 0, %s93
      %s95 = sphi 0, %s93
      %s96 = sphi 0, %s95
      %s110 = sphi 0, %s96
      %s114 = sphi 0, %s114
      %s116 = sphi 0, %s114
      %s117 = sphi 0, %s116
      %s131 = sphi 0, %s117
      %s135 = sphi 0, %s135
      %s137 = sphi 0, %s135
      %s138 = sphi 0, %s137
      %s152 = sphi 0, %s138
      %s156 = sphi 0, %s156
      %s158 = sphi 0, %s156
      %s159 = sphi 0, %s158
      %s173 = sphi 0, %s159
      %s177 = sphi 0, %s177
      %s179 = sphi 0, %s177
      %s180 = sphi 0, %s179
      %s194 = sphi 0, %s180
      %s200 = sphi 0, %s202
      %s203 = sphi 0, %s200
      %s204 = sphi 0, %s203
      %s220 = sphi 0, %s204
    $region4: #{cbam_forward.1} parent=1 // loop_header_branch
      %20 = sbr.rel (%p18) target = $region8
    $region5: #{cbam_forward.1} parent=1 // loop_body
      %s22 = ssub.s32 %s17, 1
      %s23 = ssub.s32 %s17, 2
      %s24 = sadd.s32 %s17, 1
      %s25 = ssub.s32 %s17, %s24
      %p26 = scmp.eq.s32.totalorder %s25, 0
      %s28 = sadd.s32 %s27, 1
      %s29 = scalar_select %p26, %s27, %s28
      %p32 = pneg %p26
      %p33 = scmp.eq.s32.totalorder %s17, 1
      %p34 = por %p32, %p33
      %p35 = scmp.ne.s32.totalorder %s27, %s30
      %p36 = scmp.eq.s32.totalorder %s17, 0
      %p37 = por %p35, %p36
      %p38 = scmp.ne.s32.totalorder %s27, %s30
      %p39 = scmp.eq.s32.totalorder %s22, 1
      %p40 = por %p38, %p39
      %p41 = scmp.ne.s32.totalorder %s30, %s31
      %p42 = scmp.eq.s32.totalorder %s22, 0
      %p43 = por %p41, %p42
      %p44 = scmp.ne.s32.totalorder %s30, %s31
      %p45 = scmp.eq.s32.totalorder %s23, 1
      %p46 = por %p44, %p45
      %p48 = scmp.ne.s32.totalorder %s31, %s47
      %p49 = scmp.eq.s32.totalorder %s23, 0
      %p50 = por %p48, %p49
      %s52 = sadd.s32 %s51, 1
      %p55 = scmp.eq.s32.totalorder %s17, 1
      %p56 = scmp.ne.s32.totalorder %s51, %s53
      %p57 = scmp.eq.s32.totalorder %s17, 0
      %p58 = por %p56, %p57
      %p59 = scmp.ne.s32.totalorder %s51, %s53
      %p60 = scmp.eq.s32.totalorder %s22, 1
      %p61 = por %p59, %p60
      %p62 = scmp.ne.s32.totalorder %s53, %s54
      %p63 = scmp.eq.s32.totalorder %s22, 0
      %p64 = por %p62, %p63
      %p65 = scmp.ne.s32.totalorder %s53, %s54
      %p66 = scmp.eq.s32.totalorder %s23, 1
      %p67 = por %p65, %p66
      %p69 = scmp.ne.s32.totalorder %s54, %s68
      %p70 = scmp.eq.s32.totalorder %s23, 0
      %p71 = por %p69, %p70
      %s73 = sadd.s32 %s72, 1
      %p76 = scmp.eq.s32.totalorder %s17, 1
      %p77 = scmp.ne.s32.totalorder %s72, %s74
      %p78 = scmp.eq.s32.totalorder %s17, 0
      %p79 = por %p77, %p78
      %p80 = scmp.ne.s32.totalorder %s72, %s74
      %p81 = scmp.eq.s32.totalorder %s22, 1
      %p82 = por %p80, %p81
      %p83 = scmp.ne.s32.totalorder %s74, %s75
      %p84 = scmp.eq.s32.totalorder %s22, 0
      %p85 = por %p83, %p84
      %p86 = scmp.ne.s32.totalorder %s74, %s75
      %p87 = scmp.eq.s32.totalorder %s23, 1
      %p88 = por %p86, %p87
      %p90 = scmp.ne.s32.totalorder %s75, %s89
      %p91 = scmp.eq.s32.totalorder %s23, 0
      %p92 = por %p90, %p91
      %s94 = sadd.s32 %s93, 1
      %p97 = scmp.eq.s32.totalorder %s17, 1
      %p98 = scmp.ne.s32.totalorder %s93, %s95
      %p99 = scmp.eq.s32.totalorder %s17, 0
      %p100 = por %p98, %p99
      %p101 = scmp.ne.s32.totalorder %s93, %s95
      %p102 = scmp.eq.s32.totalorder %s22, 1
      %p103 = por %p101, %p102
      %p104 = scmp.ne.s32.totalorder %s95, %s96
      %p105 = scmp.eq.s32.totalorder %s22, 0
      %p106 = por %p104, %p105
      %p107 = scmp.ne.s32.totalorder %s95, %s96
      %p108 = scmp.eq.s32.totalorder %s23, 1
      %p109 = por %p107, %p108
      %p111 = scmp.ne.s32.totalorder %s96, %s110
      %p112 = scmp.eq.s32.totalorder %s23, 0
      %p113 = por %p111, %p112
      %s115 = sadd.s32 %s114, 1
      %p118 = scmp.eq.s32.totalorder %s17, 1
      %p119 = scmp.ne.s32.totalorder %s114, %s116
      %p120 = scmp.eq.s32.totalorder %s17, 0
      %p121 = por %p119, %p120
      %p122 = scmp.ne.s32.totalorder %s114, %s116
      %p123 = scmp.eq.s32.totalorder %s22, 1
      %p124 = por %p122, %p123
      %p125 = scmp.ne.s32.totalorder %s116, %s117
      %p126 = scmp.eq.s32.totalorder %s22, 0
      %p127 = por %p125, %p126
      %p128 = scmp.ne.s32.totalorder %s116, %s117
      %p129 = scmp.eq.s32.totalorder %s23, 1
      %p130 = por %p128, %p129
      %p132 = scmp.ne.s32.totalorder %s117, %s131
      %p133 = scmp.eq.s32.totalorder %s23, 0
      %p134 = por %p132, %p133
      %s136 = sadd.s32 %s135, 1
      %p139 = scmp.eq.s32.totalorder %s17, 1
      %p140 = scmp.ne.s32.totalorder %s135, %s137
      %p141 = scmp.eq.s32.totalorder %s17, 0
      %p142 = por %p140, %p141
      %p143 = scmp.ne.s32.totalorder %s135, %s137
      %p144 = scmp.eq.s32.totalorder %s22, 1
      %p145 = por %p143, %p144
      %p146 = scmp.ne.s32.totalorder %s137, %s138
      %p147 = scmp.eq.s32.totalorder %s22, 0
      %p148 = por %p146, %p147
      %p149 = scmp.ne.s32.totalorder %s137, %s138
      %p150 = scmp.eq.s32.totalorder %s23, 1
      %p151 = por %p149, %p150
      %p153 = scmp.ne.s32.totalorder %s138, %s152
      %p154 = scmp.eq.s32.totalorder %s23, 0
      %p155 = por %p153, %p154
      %s157 = sadd.s32 %s156, 1
      %p160 = scmp.eq.s32.totalorder %s17, 1
      %p161 = scmp.ne.s32.totalorder %s156, %s158
      %p162 = scmp.eq.s32.totalorder %s17, 0
      %p163 = por %p161, %p162
      %p164 = scmp.ne.s32.totalorder %s156, %s158
      %p165 = scmp.eq.s32.totalorder %s22, 1
      %p166 = por %p164, %p165
      %p167 = scmp.ne.s32.totalorder %s158, %s159
      %p168 = scmp.eq.s32.totalorder %s22, 0
      %p169 = por %p167, %p168
      %p170 = scmp.ne.s32.totalorder %s158, %s159
      %p171 = scmp.eq.s32.totalorder %s23, 1
      %p172 = por %p170, %p171
      %p174 = scmp.ne.s32.totalorder %s159, %s173
      %p175 = scmp.eq.s32.totalorder %s23, 0
      %p176 = por %p174, %p175
      %s178 = sadd.s32 %s177, 1
      %p181 = scmp.eq.s32.totalorder %s17, 1
      %p182 = scmp.ne.s32.totalorder %s177, %s179
      %p183 = scmp.eq.s32.totalorder %s17, 0
      %p184 = por %p182, %p183
      %p185 = scmp.ne.s32.totalorder %s177, %s179
      %p186 = scmp.eq.s32.totalorder %s22, 1
      %p187 = por %p185, %p186
      %p188 = scmp.ne.s32.totalorder %s179, %s180
      %p189 = scmp.eq.s32.totalorder %s22, 0
      %p190 = por %p188, %p189
      %p191 = scmp.ne.s32.totalorder %s179, %s180
      %p192 = scmp.eq.s32.totalorder %s23, 1
      %p193 = por %p191, %p192
      %p195 = scmp.ne.s32.totalorder %s180, %s194
      %p196 = scmp.eq.s32.totalorder %s23, 0
      %p197 = por %p195, %p196
      %s198 = ssub.s32 %s17, %s24
      %p199 = scmp.eq.s32.totalorder %s198, 0
      %s201 = sadd.s32 %s200, 1
      %s202 = scalar_select %p199, %s200, %s201
      %p205 = pneg %p199
      %p206 = scmp.eq.s32.totalorder %s17, 1
      %p207 = por %p205, %p206
      %p208 = scmp.ne.s32.totalorder %s200, %s203
      %p209 = scmp.eq.s32.totalorder %s17, 0
      %p210 = por %p208, %p209
      %p211 = scmp.ne.s32.totalorder %s200, %s203
      %p212 = scmp.eq.s32.totalorder %s22, 1
      %p213 = por %p211, %p212
      %p214 = scmp.ne.s32.totalorder %s203, %s204
      %p215 = scmp.eq.s32.totalorder %s22, 0
      %p216 = por %p214, %p215
      %p217 = scmp.ne.s32.totalorder %s203, %s204
      %p218 = scmp.eq.s32.totalorder %s23, 1
      %p219 = por %p217, %p218
      %p221 = scmp.ne.s32.totalorder %s204, %s220
      %p222 = scmp.eq.s32.totalorder %s23, 0
      %p223 = por %p221, %p222
      %p224 = scmp.le.s32.totalorder 1, %s17
      %p225 = scmp.lt.s32.totalorder %s17, 3
      %p226 = pnand %p224, %p225
      %p227 = pneg %p226
      // Predicated region
      $region9: #{cbam_forward.1} parent=5 // pred_check
        _
      $region10: #{cbam_forward.1} parent=5 // pred_check_branch
        %229 = sbr.rel (%p226) target = $region12
      $region11: #{cbam_forward.1} parent=5 // pred_region
        %s230 = ssub.s32 %s17, 1
        // Predicated region
        $region13: #{cbam_forward.1} parent=11 // pred_check
          %p231 = pneg %p64
        $region14: #{cbam_forward.1} parent=11 // pred_check_branch
          %233 = sbr.rel (%p231) target = $region16
        $region15: #{cbam_forward.1} parent=11 // pred_region
          _
        $region16: #{cbam_forward.1} parent=11 // pred_fallthru
          _
        // Predicated region
        $region17: #{cbam_forward.1} parent=11 // pred_check
          %p234 = pneg %p85
        $region18: #{cbam_forward.1} parent=11 // pred_check_branch
          %236 = sbr.rel (%p234) target = $region20
        $region19: #{cbam_forward.1} parent=11 // pred_region
          _
        $region20: #{cbam_forward.1} parent=11 // pred_fallthru
          _
        // Predicated region
        $region21: #{cbam_forward.1} parent=11 // pred_check
          %p237 = pneg %p106
        $region22: #{cbam_forward.1} parent=11 // pred_check_branch
          %239 = sbr.rel (%p237) target = $region24
        $region23: #{cbam_forward.1} parent=11 // pred_region
          _
        $region24: #{cbam_forward.1} parent=11 // pred_fallthru
          _
        // Predicated region
        $region25: #{cbam_forward.1} parent=11 // pred_check
          %p240 = pneg %p127
        $region26: #{cbam_forward.1} parent=11 // pred_check_branch
          %242 = sbr.rel (%p240) target = $region28
        $region27: #{cbam_forward.1} parent=11 // pred_region
          _
        $region28: #{cbam_forward.1} parent=11 // pred_fallthru
          _
        // Predicated region
        $region29: #{cbam_forward.1} parent=11 // pred_check
          %p243 = pneg %p148
        $region30: #{cbam_forward.1} parent=11 // pred_check_branch
          %245 = sbr.rel (%p243) target = $region32
        $region31: #{cbam_forward.1} parent=11 // pred_region
          _
        $region32: #{cbam_forward.1} parent=11 // pred_fallthru
          _
        // Predicated region
        $region33: #{cbam_forward.1} parent=11 // pred_check
          %p246 = pneg %p169
        $region34: #{cbam_forward.1} parent=11 // pred_check_branch
          %248 = sbr.rel (%p246) target = $region36
        $region35: #{cbam_forward.1} parent=11 // pred_region
          _
        $region36: #{cbam_forward.1} parent=11 // pred_fallthru
          _
        // Predicated region
        $region37: #{cbam_forward.1} parent=11 // pred_check
          %p249 = pneg %p190
        $region38: #{cbam_forward.1} parent=11 // pred_check_branch
          %251 = sbr.rel (%p249) target = $region40
        $region39: #{cbam_forward.1} parent=11 // pred_region
          _
        $region40: #{cbam_forward.1} parent=11 // pred_fallthru
          _
      $region12: #{cbam_forward.1} parent=5 // pred_fallthru
        _
      %p252 = scmp.lt.s32.totalorder %s17, 2
      // Predicated region
      $region41: #{cbam_forward.1} parent=5 // pred_check
        %p253 = pneg %p252
      $region42: #{cbam_forward.1} parent=5 // pred_check_branch
        %255 = sbr.rel (%p253) target = $region44
      $region43: #{cbam_forward.1} parent=5 // pred_region
        // Predicated region
        $region45: #{cbam_forward.1} parent=43 // pred_check
          %p256 = pneg %p37
        $region46: #{cbam_forward.1} parent=43 // pred_check_branch
          %258 = sbr.rel (%p256) target = $region48
        $region47: #{cbam_forward.1} parent=43 // pred_region
          %p259 = scmp.lt.s32.totalorder %s17, 1
          %s260 = scalar_select %p259, %s17, 1
          %s261 = smul.addr %s260, 32
          %s262 = smul.addr %s261, 8
          %s263 = scalar_lea.vmem %s0, %s262
        $region48: #{cbam_forward.1} parent=43 // pred_fallthru
          _
      $region44: #{cbam_forward.1} parent=5 // pred_fallthru
        _
      %p264 = scmp.le.s32.totalorder 1, %s17
      %p265 = scmp.lt.s32.totalorder %s17, 3
      %p266 = pnand %p264, %p265
      %p267 = pneg %p266
      // Predicated region
      $region49: #{cbam_forward.1} parent=5 // pred_check
        _
      $region50: #{cbam_forward.1} parent=5 // pred_check_branch
        %269 = sbr.rel (%p266) target = $region52
      $region51: #{cbam_forward.1} parent=5 // pred_region
        %s270 = ssub.s32 %s17, 1
        %p271 = scmp.lt.s32.totalorder %s22, 1
        %s272 = scalar_select %p271, %s22, 1
        %s273 = smul.addr %s272, 32
        %s274 = smul.addr %s273, 8
        %s275 = scalar_lea.vmem %s0, %s274
        %p276 = pneg %p43
        %p277 = pneg %p40
        %p278 = pneg %p64
        %p279 = pneg %p61
        %p280 = pneg %p85
        %p281 = pneg %p82
        %p282 = pneg %p106
        %p283 = pneg %p103
        %p284 = pneg %p127
        %p285 = pneg %p124
        %p286 = pneg %p148
        %p287 = pneg %p145
        %p288 = pneg %p169
        %p289 = pneg %p166
        %p290 = pneg %p190
        %p291 = pneg %p187
        %p292 = pneg %p216
        %p293 = pneg %p213
        %s294 = sand.u32 %s203, 1
        %s295 = scalar_lea.sflag [#allocation5], %s294
        %s296 = sand.u32 %s203, 1
        %s297 = smul.addr %s296, 256
        %s298 = scalar_lea.vmem [#allocation4], %s297
        %p299 = scmp.lt.s32.totalorder %s22, 1
        %s300 = scalar_select %p299, %s22, 1
        %s301 = smul.addr %s300, 32
        %s302 = smul.addr %s301, 8
        %s303 = scalar_lea.vmem %s0, %s302
        %vm305 = vcmask 523264
        %306 = vst.msk [vmem:[#allocation2] sm:$0xff] %vm305, 0.0
        %307 = vst.msk [vmem:[#allocation2 + $0x8] sm:$0xff] %vm305, 0.0
        %vm308 = vcmask 517120
        %309 = vst.msk [vmem:[#allocation2 + $0x10] sm:$0x3] %vm308, 0.0
        %310 = vst.msk [vmem:[#allocation2 + $0x18] sm:$0xff] %vm305, 0.0
        %311 = vst.msk [vmem:[#allocation2 + $0x20] sm:$0xff] %vm305, 0.0
        %312 = vst.msk [vmem:[#allocation2 + $0x28] sm:$0x3] %vm308, 0.0
        %313 = vst.msk [vmem:[#allocation2 + $0x30] sm:$0xff] %vm305, 0.0
        %314 = vst.msk [vmem:[#allocation2 + $0x38] sm:$0xff] %vm305, 0.0
        %315 = vst.msk [vmem:[#allocation2 + $0x40] sm:$0x3] %vm308, 0.0
        %316 = vst.msk [vmem:[#allocation2 + $0x48] sm:$0xff] %vm305, 0.0
        %317 = vst.msk [vmem:[#allocation2 + $0x50] sm:$0xff] %vm305, 0.0
        %318 = vst.msk [vmem:[#allocation2 + $0x58] sm:$0x3] %vm308, 0.0
        %319 = vst.msk [vmem:[#allocation2 + $0x60] sm:$0xff] %vm305, 0.0
        %320 = vst.msk [vmem:[#allocation2 + $0x68] sm:$0xff] %vm305, 0.0
        %321 = vst.msk [vmem:[#allocation2 + $0x70] sm:$0x3] %vm308, 0.0
        %322 = vst.msk [vmem:[#allocation2 + $0x78] sm:$0xff] %vm305, 0.0
        %323 = vst.msk [vmem:[#allocation2 + $0x80] sm:$0xff] %vm305, 0.0
        %324 = vst.msk [vmem:[#allocation2 + $0x88] sm:$0x3] %vm308, 0.0
        %325 = vst.msk [vmem:[#allocation2 + $0x90] sm:$0xff] %vm305, 0.0
        %326 = vst.msk [vmem:[#allocation2 + $0x98] sm:$0xff] %vm305, 0.0
        %327 = vst.msk [vmem:[#allocation2 + $0xa0] sm:$0x3] %vm308, 0.0
        %328 = vst.msk [vmem:[#allocation2 + $0xa8] sm:$0xff] %vm305, 0.0
        %329 = vst.msk [vmem:[#allocation2 + $0xb0] sm:$0xff] %vm305, 0.0
        %330 = vst.msk [vmem:[#allocation2 + $0xb8] sm:$0x3] %vm308, 0.0
        %331 = vst.msk [vmem:[#allocation2 + $0xc0] sm:$0xff] %vm305, 0.0
        %332 = vst.msk [vmem:[#allocation2 + $0xc8] sm:$0xff] %vm305, 0.0
        %333 = vst.msk [vmem:[#allocation2 + $0xd0] sm:$0x3] %vm308, 0.0
        %334 = vst.msk [vmem:[#allocation2 + $0xd8] sm:$0xff] %vm305, 0.0
        %335 = vst.msk [vmem:[#allocation2 + $0xe0] sm:$0xff] %vm305, 0.0
        %336 = vst.msk [vmem:[#allocation2 + $0xe8] sm:$0x3] %vm308, 0.0
        %337 = vst.msk [vmem:[#allocation2 + $0xf0] sm:$0xff] %vm305, 0.0
        %338 = vst.msk [vmem:[#allocation2 + $0xf8] sm:$0xff] %vm305, 0.0
        %339 = vst.msk [vmem:[#allocation2 + $0x100] sm:$0x3] %vm308, 0.0
        %340 = vst.msk [vmem:[#allocation2 + $0x108] sm:$0xff] %vm305, 0.0
        %341 = vst.msk [vmem:[#allocation2 + $0x110] sm:$0xff] %vm305, 0.0
        %342 = vst.msk [vmem:[#allocation2 + $0x118] sm:$0x3] %vm308, 0.0
        %343 = vst.msk [vmem:[#allocation2 + $0x120] sm:$0xff] %vm305, 0.0
        %344 = vst.msk [vmem:[#allocation2 + $0x128] sm:$0xff] %vm305, 0.0
        %345 = vst.msk [vmem:[#allocation2 + $0x130] sm:$0x3] %vm308, 0.0
        %346 = vst.msk [vmem:[#allocation2 + $0x138] sm:$0xff] %vm305, 0.0
        %347 = vst.msk [vmem:[#allocation2 + $0x140] sm:$0xff] %vm305, 0.0
        %348 = vst.msk [vmem:[#allocation2 + $0x148] sm:$0x3] %vm308, 0.0
        %349 = vst.msk [vmem:[#allocation2 + $0x150] sm:$0xff] %vm305, 0.0
        %350 = vst.msk [vmem:[#allocation2 + $0x158] sm:$0xff] %vm305, 0.0
        %351 = vst.msk [vmem:[#allocation2 + $0x160] sm:$0x3] %vm308, 0.0
        %352 = vst.msk [vmem:[#allocation2 + $0x168] sm:$0xff] %vm305, 0.0
        %353 = vst.msk [vmem:[#allocation2 + $0x170] sm:$0xff] %vm305, 0.0
        %354 = vst.msk [vmem:[#allocation2 + $0x178] sm:$0x3] %vm308, 0.0
        %355 = vst.msk [vmem:[#allocation2 + $0x180] sm:$0xff] %vm305, 0.0
        %356 = vst.msk [vmem:[#allocation2 + $0x188] sm:$0xff] %vm305, 0.0
        %357 = vst.msk [vmem:[#allocation2 + $0x190] sm:$0x3] %vm308, 0.0
        %358 = vst.msk [vmem:[#allocation2 + $0x198] sm:$0xff] %vm305, 0.0
        %359 = vst.msk [vmem:[#allocation2 + $0x1a0] sm:$0xff] %vm305, 0.0
        %360 = vst.msk [vmem:[#allocation2 + $0x1a8] sm:$0x3] %vm308, 0.0
        %v361 = vld [vmem:[%s303] sm:$0xff]
        %v362 = vld [vmem:[%s303 + $0x8] sm:$0xff]
        %v363 = vld [vmem:[%s303 + $0x10] sm:$0xff]
        %v364 = vld [vmem:[%s303 + $0x18] sm:$0xff]
        %v365 = vld [vmem:[%s303 + $0x20] sm:$0xff]
        %v366 = vld [vmem:[%s303 + $0x28] sm:$0xff]
        %v367 = vld [vmem:[%s303 + $0x30] sm:$0xff]
        %v368 = vld [vmem:[%s303 + $0x38] sm:$0xff]
        %v369 = vld [vmem:[%s303 + $0x40] sm:$0xff]
        %v370 = vld [vmem:[%s303 + $0x48] sm:$0xff]
        %v371 = vld [vmem:[%s303 + $0x50] sm:$0xff]
        %v372 = vld [vmem:[%s303 + $0x58] sm:$0xff]
        %v373 = vld [vmem:[%s303 + $0x60] sm:$0xff]
        %v374 = vld [vmem:[%s303 + $0x68] sm:$0xff]
        %v375 = vld [vmem:[%s303 + $0x70] sm:$0xff]
        %v376 = vld [vmem:[%s303 + $0x78] sm:$0xff]
        %v377 = vld [vmem:[%s303 + $0x80] sm:$0xff]
        %v378 = vld [vmem:[%s303 + $0x88] sm:$0xff]
        %v379 = vld [vmem:[%s303 + $0x90] sm:$0xff]
        %v380 = vld [vmem:[%s303 + $0x98] sm:$0xff]
        %v381 = vld [vmem:[%s303 + $0xa0] sm:$0xff]
        %v382 = vld [vmem:[%s303 + $0xa8] sm:$0xff]
        %v383 = vld [vmem:[%s303 + $0xb0] sm:$0xff]
        %v384 = vld [vmem:[%s303 + $0xb8] sm:$0xff]
        %v385 = vld [vmem:[%s303 + $0xc0] sm:$0xff]
        %v386 = vld [vmem:[%s303 + $0xc8] sm:$0xff]
        %v387 = vld [vmem:[%s303 + $0xd0] sm:$0xff]
        %v388 = vld [vmem:[%s303 + $0xd8] sm:$0xff]
        %v389 = vld [vmem:[%s303 + $0xe0] sm:$0xff]
        %v390 = vld [vmem:[%s303 + $0xe8] sm:$0xff]
        %v391 = vld [vmem:[%s303 + $0xf0] sm:$0xff]
        %v392 = vld [vmem:[%s303 + $0xf8] sm:$0xff]
        %s393 = scalar_lea.vmem [#allocation2], 24
        %394 = vst.msk [vmem:[%s393 + $0x1] sm:$0xff] %vm305, %v361
        %395 = vst.msk [vmem:[%s393 + $0x9] sm:$0xff] %vm305, %v362
        %396 = vst.msk [vmem:[%s393 + $0x19] sm:$0xff] %vm305, %v363
        %397 = vst.msk [vmem:[%s393 + $0x21] sm:$0xff] %vm305, %v364
        %398 = vst.msk [vmem:[%s393 + $0x31] sm:$0xff] %vm305, %v365
        %399 = vst.msk [vmem:[%s393 + $0x39] sm:$0xff] %vm305, %v366
        %400 = vst.msk [vmem:[%s393 + $0x49] sm:$0xff] %vm305, %v367
        %401 = vst.msk [vmem:[%s393 + $0x51] sm:$0xff] %vm305, %v368
        %402 = vst.msk [vmem:[%s393 + $0x61] sm:$0xff] %vm305, %v369
        %403 = vst.msk [vmem:[%s393 + $0x69] sm:$0xff] %vm305, %v370
        %404 = vst.msk [vmem:[%s393 + $0x79] sm:$0xff] %vm305, %v371
        %405 = vst.msk [vmem:[%s393 + $0x81] sm:$0xff] %vm305, %v372
        %406 = vst.msk [vmem:[%s393 + $0x91] sm:$0xff] %vm305, %v373
        %407 = vst.msk [vmem:[%s393 + $0x99] sm:$0xff] %vm305, %v374
        %408 = vst.msk [vmem:[%s393 + $0xa9] sm:$0xff] %vm305, %v375
        %409 = vst.msk [vmem:[%s393 + $0xb1] sm:$0xff] %vm305, %v376
        %410 = vst.msk [vmem:[%s393 + $0xc1] sm:$0xff] %vm305, %v377
        %411 = vst.msk [vmem:[%s393 + $0xc9] sm:$0xff] %vm305, %v378
        %412 = vst.msk [vmem:[%s393 + $0xd9] sm:$0xff] %vm305, %v379
        %413 = vst.msk [vmem:[%s393 + $0xe1] sm:$0xff] %vm305, %v380
        %414 = vst.msk [vmem:[%s393 + $0xf1] sm:$0xff] %vm305, %v381
        %415 = vst.msk [vmem:[%s393 + $0xf9] sm:$0xff] %vm305, %v382
        %416 = vst.msk [vmem:[%s393 + $0x109] sm:$0xff] %vm305, %v383
        %417 = vst.msk [vmem:[%s393 + $0x111] sm:$0xff] %vm305, %v384
        %418 = vst.msk [vmem:[%s393 + $0x121] sm:$0xff] %vm305, %v385
        %419 = vst.msk [vmem:[%s393 + $0x129] sm:$0xff] %vm305, %v386
        %420 = vst.msk [vmem:[%s393 + $0x139] sm:$0xff] %vm305, %v387
        %421 = vst.msk [vmem:[%s393 + $0x141] sm:$0xff] %vm305, %v388
        %422 = vst.msk [vmem:[%s393 + $0x151] sm:$0xff] %vm305, %v389
        %423 = vst.msk [vmem:[%s393 + $0x159] sm:$0xff] %vm305, %v390
        %424 = vst.msk [vmem:[%s393 + $0x169] sm:$0xff] %vm305, %v391
        %425 = vst.msk [vmem:[%s393 + $0x171] sm:$0xff] %vm305, %v392
        %v426 = vld [vmem:[#allocation2] sm:$0xff]
        %v427 = vld [vmem:[#allocation2 + $0x8] sm:$0xff]
        %v428 = vld [vmem:[#allocation2 + $0x18] sm:$0xff]
        %v429 = vld [vmem:[#allocation2 + $0x20] sm:$0xff]
        %v430 = vld [vmem:[#allocation2 + $0x30] sm:$0xff]
        %v431 = vld [vmem:[#allocation2 + $0x38] sm:$0xff]
        %v432 = vld [vmem:[#allocation2 + $0x48] sm:$0xff]
        %v433 = vld [vmem:[#allocation2 + $0x50] sm:$0xff]
        %v434 = vld [vmem:[#allocation2 + $0x60] sm:$0xff]
        %v435 = vld [vmem:[#allocation2 + $0x68] sm:$0xff]
        %v436 = vld [vmem:[#allocation2 + $0x78] sm:$0xff]
        %v437 = vld [vmem:[#allocation2 + $0x80] sm:$0xff]
        %v438 = vld [vmem:[#allocation2 + $0x90] sm:$0xff]
        %v439 = vld [vmem:[#allocation2 + $0x98] sm:$0xff]
        %v440 = vld [vmem:[#allocation2 + $0xa8] sm:$0xff]
        %v441 = vld [vmem:[#allocation2 + $0xb0] sm:$0xff]
        %v442 = vld [vmem:[#allocation2 + $0xc0] sm:$0xff]
        %v443 = vld [vmem:[#allocation2 + $0xc8] sm:$0xff]
        %v444 = vld [vmem:[#allocation2 + $0xd8] sm:$0xff]
        %v445 = vld [vmem:[#allocation2 + $0xe0] sm:$0xff]
        %v446 = vld [vmem:[#allocation2 + $0xf0] sm:$0xff]
        %v447 = vld [vmem:[#allocation2 + $0xf8] sm:$0xff]
        %v448 = vld [vmem:[#allocation2 + $0x108] sm:$0xff]
        %v449 = vld [vmem:[#allocation2 + $0x110] sm:$0xff]
        %v450 = vld [vmem:[#allocation2 + $0x120] sm:$0xff]
        %v451 = vld [vmem:[#allocation2 + $0x128] sm:$0xff]
        %v452 = vld [vmem:[#allocation2 + $0x138] sm:$0xff]
        %v453 = vld [vmem:[#allocation2 + $0x140] sm:$0xff]
        %v454 = vld [vmem:[#allocation2 + $0x150] sm:$0xff]
        %v455 = vld [vmem:[#allocation2 + $0x158] sm:$0xff]
        %v456 = vld [vmem:[#allocation2 + $0x168] sm:$0xff]
        %v457 = vld [vmem:[#allocation2 + $0x170] sm:$0xff]
        %458 = vst.msk [vmem:[#allocation3] sm:$0xff] %vm305, %v426
        %459 = vst.msk [vmem:[#allocation3 + $0x28] sm:$0xff] %vm305, %v427
        %460 = vst.msk [vmem:[#allocation3 + $0x50] sm:$0xff] %vm305, %v428
        %461 = vst.msk [vmem:[#allocation3 + $0x78] sm:$0xff] %vm305, %v429
        %462 = vst.msk [vmem:[#allocation3 + $0xa0] sm:$0xff] %vm305, %v430
        %463 = vst.msk [vmem:[#allocation3 + $0xc8] sm:$0xff] %vm305, %v431
        %464 = vst.msk [vmem:[#allocation3 + $0xf0] sm:$0xff] %vm305, %v432
        %465 = vst.msk [vmem:[#allocation3 + $0x118] sm:$0xff] %vm305, %v433
        %466 = vst.msk [vmem:[#allocation3 + $0x140] sm:$0xff] %vm305, %v434
        %467 = vst.msk [vmem:[#allocation3 + $0x168] sm:$0xff] %vm305, %v435
        %468 = vst.msk [vmem:[#allocation3 + $0x190] sm:$0xff] %vm305, %v436
        %469 = vst.msk [vmem:[#allocation3 + $0x1b8] sm:$0xff] %vm305, %v437
        %470 = vst.msk [vmem:[#allocation3 + $0x1e0] sm:$0xff] %vm305, %v438
        %471 = vst.msk [vmem:[#allocation3 + $0x208] sm:$0xff] %vm305, %v439
        %472 = vst.msk [vmem:[#allocation3 + $0x230] sm:$0xff] %vm305, %v440
        %473 = vst.msk [vmem:[#allocation3 + $0x258] sm:$0xff] %vm305, %v441
        %474 = vst.msk [vmem:[#allocation3 + $0x280] sm:$0xff] %vm305, %v442
        %475 = vst.msk [vmem:[#allocation3 + $0x2a8] sm:$0xff] %vm305, %v443
        %476 = vst.msk [vmem:[#allocation3 + $0x2d0] sm:$0xff] %vm305, %v444
        %477 = vst.msk [vmem:[#allocation3 + $0x2f8] sm:$0xff] %vm305, %v445
        %478 = vst.msk [vmem:[#allocation3 + $0x320] sm:$0xff] %vm305, %v446
        %479 = vst.msk [vmem:[#allocation3 + $0x348] sm:$0xff] %vm305, %v447
        %480 = vst.msk [vmem:[#allocation3 + $0x370] sm:$0xff] %vm305, %v448
        %481 = vst.msk [vmem:[#allocation3 + $0x398] sm:$0xff] %vm305, %v449
        %482 = vst.msk [vmem:[#allocation3 + $0x3c0] sm:$0xff] %vm305, %v450
        %483 = vst.msk [vmem:[#allocation3 + $0x3e8] sm:$0xff] %vm305, %v451
        %484 = vst.msk [vmem:[#allocation3 + $0x410] sm:$0xff] %vm305, %v452
        %485 = vst.msk [vmem:[#allocation3 + $0x438] sm:$0xff] %vm305, %v453
        %486 = vst.msk [vmem:[#allocation3 + $0x460] sm:$0xff] %vm305, %v454
        %487 = vst.msk [vmem:[#allocation3 + $0x488] sm:$0xff] %vm305, %v455
        %488 = vst.msk [vmem:[#allocation3 + $0x4b0] sm:$0xff] %vm305, %v456
        %489 = vst.msk [vmem:[#allocation3 + $0x4d8] sm:$0xff] %vm305, %v457
        %v490 = vld [vmem:[#allocation2 + $0x1] sm:$0xff]
        %v491 = vld [vmem:[#allocation2 + $0x9] sm:$0xff]
        %v492 = vld [vmem:[#allocation2 + $0x19] sm:$0xff]
        %v493 = vld [vmem:[#allocation2 + $0x21] sm:$0xff]
        %v494 = vld [vmem:[#allocation2 + $0x31] sm:$0xff]
        %v495 = vld [vmem:[#allocation2 + $0x39] sm:$0xff]
        %v496 = vld [vmem:[#allocation2 + $0x49] sm:$0xff]
        %v497 = vld [vmem:[#allocation2 + $0x51] sm:$0xff]
        %v498 = vld [vmem:[#allocation2 + $0x61] sm:$0xff]
        %v499 = vld [vmem:[#allocation2 + $0x69] sm:$0xff]
        %v500 = vld [vmem:[#allocation2 + $0x79] sm:$0xff]
        %v501 = vld [vmem:[#allocation2 + $0x81] sm:$0xff]
        %v502 = vld [vmem:[#allocation2 + $0x91] sm:$0xff]
        %v503 = vld [vmem:[#allocation2 + $0x99] sm:$0xff]
        %v504 = vld [vmem:[#allocation2 + $0xa9] sm:$0xff]
        %v505 = vld [vmem:[#allocation2 + $0xb1] sm:$0xff]
        %v506 = vld [vmem:[#allocation2 + $0xc1] sm:$0xff]
        %v507 = vld [vmem:[#allocation2 + $0xc9] sm:$0xff]
        %v508 = vld [vmem:[#allocation2 + $0xd9] sm:$0xff]
        %v509 = vld [vmem:[#allocation2 + $0xe1] sm:$0xff]
        %v510 = vld [vmem:[#allocation2 + $0xf1] sm:$0xff]
        %v511 = vld [vmem:[#allocation2 + $0xf9] sm:$0xff]
        %v512 = vld [vmem:[#allocation2 + $0x109] sm:$0xff]
        %v513 = vld [vmem:[#allocation2 + $0x111] sm:$0xff]
        %v514 = vld [vmem:[#allocation2 + $0x121] sm:$0xff]
        %v515 = vld [vmem:[#allocation2 + $0x129] sm:$0xff]
        %v516 = vld [vmem:[#allocation2 + $0x139] sm:$0xff]
        %v517 = vld [vmem:[#allocation2 + $0x141] sm:$0xff]
        %v518 = vld [vmem:[#allocation2 + $0x151] sm:$0xff]
        %v519 = vld [vmem:[#allocation2 + $0x159] sm:$0xff]
        %v520 = vld [vmem:[#allocation2 + $0x169] sm:$0xff]
        %v521 = vld [vmem:[#allocation2 + $0x171] sm:$0xff]
        %554 = vrot.lane.b32.xlu0 %v490, 64
        %v555 = vpop.permute.xlu0 %554
        %556 = vrot.lane.b32.xlu0 %v491, 64
        %v557 = vpop.permute.xlu0 %556
        %558 = vrot.lane.b32.xlu0 %v492, 64
        %v559 = vpop.permute.xlu0 %558
        %560 = vrot.lane.b32.xlu0 %v493, 64
        %v561 = vpop.permute.xlu0 %560
        %562 = vrot.lane.b32.xlu0 %v494, 64
        %v563 = vpop.permute.xlu0 %562
        %564 = vrot.lane.b32.xlu0 %v495, 64
        %v565 = vpop.permute.xlu0 %564
        %566 = vrot.lane.b32.xlu0 %v496, 64
        %v567 = vpop.permute.xlu0 %566
        %568 = vrot.lane.b32.xlu0 %v497, 64
        %v569 = vpop.permute.xlu0 %568
        %570 = vrot.lane.b32.xlu0 %v498, 64
        %v571 = vpop.permute.xlu0 %570
        %572 = vrot.lane.b32.xlu0 %v499, 64
        %v573 = vpop.permute.xlu0 %572
        %574 = vrot.lane.b32.xlu0 %v500, 64
        %v575 = vpop.permute.xlu0 %574
        %576 = vrot.lane.b32.xlu0 %v501, 64
        %v577 = vpop.permute.xlu0 %576
        %578 = vrot.lane.b32.xlu0 %v502, 64
        %v579 = vpop.permute.xlu0 %578
        %580 = vrot.lane.b32.xlu0 %v503, 64
        %v581 = vpop.permute.xlu0 %580
        %582 = vrot.lane.b32.xlu0 %v504, 64
        %v583 = vpop.permute.xlu0 %582
        %584 = vrot.lane.b32.xlu0 %v505, 64
        %v585 = vpop.permute.xlu0 %584
        %586 = vrot.lane.b32.xlu0 %v506, 64
        %v587 = vpop.permute.xlu0 %586
        %588 = vrot.lane.b32.xlu0 %v507, 64
        %v589 = vpop.permute.xlu0 %588
        %590 = vrot.lane.b32.xlu0 %v508, 64
        %v591 = vpop.permute.xlu0 %590
        %592 = vrot.lane.b32.xlu0 %v509, 64
        %v593 = vpop.permute.xlu0 %592
        %594 = vrot.lane.b32.xlu0 %v510, 64
        %v595 = vpop.permute.xlu0 %594
        %596 = vrot.lane.b32.xlu0 %v511, 64
        %v597 = vpop.permute.xlu0 %596
        %598 = vrot.lane.b32.xlu0 %v512, 64
        %v599 = vpop.permute.xlu0 %598
        %600 = vrot.lane.b32.xlu0 %v513, 64
        %v601 = vpop.permute.xlu0 %600
        %602 = vrot.lane.b32.xlu0 %v514, 64
        %v603 = vpop.permute.xlu0 %602
        %604 = vrot.lane.b32.xlu0 %v515, 64
        %v605 = vpop.permute.xlu0 %604
        %606 = vrot.lane.b32.xlu0 %v516, 64
        %v607 = vpop.permute.xlu0 %606
        %608 = vrot.lane.b32.xlu0 %v517, 64
        %v609 = vpop.permute.xlu0 %608
        %610 = vrot.lane.b32.xlu0 %v518, 64
        %v611 = vpop.permute.xlu0 %610
        %612 = vrot.lane.b32.xlu0 %v519, 64
        %v613 = vpop.permute.xlu0 %612
        %614 = vrot.lane.b32.xlu0 %v520, 64
        %v615 = vpop.permute.xlu0 %614
        %616 = vrot.lane.b32.xlu0 %v521, 64
        %v617 = vpop.permute.xlu0 %616
        %vm650 = vcmask 1048064
        %651 = vst.msk [vmem:[#allocation3] sm:$0xff] %vm650, %v555
        %652 = vst.msk [vmem:[#allocation3 + $0x28] sm:$0xff] %vm650, %v557
        %653 = vst.msk [vmem:[#allocation3 + $0x50] sm:$0xff] %vm650, %v559
        %654 = vst.msk [vmem:[#allocation3 + $0x78] sm:$0xff] %vm650, %v561
        %655 = vst.msk [vmem:[#allocation3 + $0xa0] sm:$0xff] %vm650, %v563
        %656 = vst.msk [vmem:[#allocation3 + $0xc8] sm:$0xff] %vm650, %v565
        %657 = vst.msk [vmem:[#allocation3 + $0xf0] sm:$0xff] %vm650, %v567
        %658 = vst.msk [vmem:[#allocation3 + $0x118] sm:$0xff] %vm650, %v569
        %659 = vst.msk [vmem:[#allocation3 + $0x140] sm:$0xff] %vm650, %v571
        %660 = vst.msk [vmem:[#allocation3 + $0x168] sm:$0xff] %vm650, %v573
        %661 = vst.msk [vmem:[#allocation3 + $0x190] sm:$0xff] %vm650, %v575
        %662 = vst.msk [vmem:[#allocation3 + $0x1b8] sm:$0xff] %vm650, %v577
        %663 = vst.msk [vmem:[#allocation3 + $0x1e0] sm:$0xff] %vm650, %v579
        %664 = vst.msk [vmem:[#allocation3 + $0x208] sm:$0xff] %vm650, %v581
        %665 = vst.msk [vmem:[#allocation3 + $0x230] sm:$0xff] %vm650, %v583
        %666 = vst.msk [vmem:[#allocation3 + $0x258] sm:$0xff] %vm650, %v585
        %667 = vst.msk [vmem:[#allocation3 + $0x280] sm:$0xff] %vm650, %v587
        %668 = vst.msk [vmem:[#allocation3 + $0x2a8] sm:$0xff] %vm650, %v589
        %669 = vst.msk [vmem:[#allocation3 + $0x2d0] sm:$0xff] %vm650, %v591
        %670 = vst.msk [vmem:[#allocation3 + $0x2f8] sm:$0xff] %vm650, %v593
        %671 = vst.msk [vmem:[#allocation3 + $0x320] sm:$0xff] %vm650, %v595
        %672 = vst.msk [vmem:[#allocation3 + $0x348] sm:$0xff] %vm650, %v597
        %673 = vst.msk [vmem:[#allocation3 + $0x370] sm:$0xff] %vm650, %v599
        %674 = vst.msk [vmem:[#allocation3 + $0x398] sm:$0xff] %vm650, %v601
        %675 = vst.msk [vmem:[#allocation3 + $0x3c0] sm:$0xff] %vm650, %v603
        %676 = vst.msk [vmem:[#allocation3 + $0x3e8] sm:$0xff] %vm650, %v605
        %677 = vst.msk [vmem:[#allocation3 + $0x410] sm:$0xff] %vm650, %v607
        %678 = vst.msk [vmem:[#allocation3 + $0x438] sm:$0xff] %vm650, %v609
        %679 = vst.msk [vmem:[#allocation3 + $0x460] sm:$0xff] %vm650, %v611
        %680 = vst.msk [vmem:[#allocation3 + $0x488] sm:$0xff] %vm650, %v613
        %681 = vst.msk [vmem:[#allocation3 + $0x4b0] sm:$0xff] %vm650, %v615
        %682 = vst.msk [vmem:[#allocation3 + $0x4d8] sm:$0xff] %vm650, %v617
        %v683 = vld [vmem:[#allocation2 + $0x2] sm:$0xff]
        %v684 = vld [vmem:[#allocation2 + $0xa] sm:$0xff]
        %v685 = vld [vmem:[#allocation2 + $0x1a] sm:$0xff]
        %v686 = vld [vmem:[#allocation2 + $0x22] sm:$0xff]
        %v687 = vld [vmem:[#allocation2 + $0x32] sm:$0xff]
        %v688 = vld [vmem:[#allocation2 + $0x3a] sm:$0xff]
        %v689 = vld [vmem:[#allocation2 + $0x4a] sm:$0xff]
        %v690 = vld [vmem:[#allocation2 + $0x52] sm:$0xff]
        %v691 = vld [vmem:[#allocation2 + $0x62] sm:$0xff]
        %v692 = vld [vmem:[#allocation2 + $0x6a] sm:$0xff]
        %v693 = vld [vmem:[#allocation2 + $0x7a] sm:$0xff]
        %v694 = vld [vmem:[#allocation2 + $0x82] sm:$0xff]
        %v695 = vld [vmem:[#allocation2 + $0x92] sm:$0xff]
        %v696 = vld [vmem:[#allocation2 + $0x9a] sm:$0xff]
        %v697 = vld [vmem:[#allocation2 + $0xaa] sm:$0xff]
        %v698 = vld [vmem:[#allocation2 + $0xb2] sm:$0xff]
        %v699 = vld [vmem:[#allocation2 + $0xc2] sm:$0xff]
        %v700 = vld [vmem:[#allocation2 + $0xca] sm:$0xff]
        %v701 = vld [vmem:[#allocation2 + $0xda] sm:$0xff]
        %v702 = vld [vmem:[#allocation2 + $0xe2] sm:$0xff]
        %v703 = vld [vmem:[#allocation2 + $0xf2] sm:$0xff]
        %v704 = vld [vmem:[#allocation2 + $0xfa] sm:$0xff]
        %v705 = vld [vmem:[#allocation2 + $0x10a] sm:$0xff]
        %v706 = vld [vmem:[#allocation2 + $0x112] sm:$0xff]
        %v707 = vld [vmem:[#allocation2 + $0x122] sm:$0xff]
        %v708 = vld [vmem:[#allocation2 + $0x12a] sm:$0xff]
        %v709 = vld [vmem:[#allocation2 + $0x13a] sm:$0xff]
        %v710 = vld [vmem:[#allocation2 + $0x142] sm:$0xff]
        %v711 = vld [vmem:[#allocation2 + $0x152] sm:$0xff]
        %v712 = vld [vmem:[#allocation2 + $0x15a] sm:$0xff]
        %v713 = vld [vmem:[#allocation2 + $0x16a] sm:$0xff]
        %v714 = vld [vmem:[#allocation2 + $0x172] sm:$0xff]
        %715 = vst.msk [vmem:[#allocation3 + $0x8] sm:$0xff] %vm305, %v683
        %716 = vst.msk [vmem:[#allocation3 + $0x30] sm:$0xff] %vm305, %v684
        %717 = vst.msk [vmem:[#allocation3 + $0x58] sm:$0xff] %vm305, %v685
        %718 = vst.msk [vmem:[#allocation3 + $0x80] sm:$0xff] %vm305, %v686
        %719 = vst.msk [vmem:[#allocation3 + $0xa8] sm:$0xff] %vm305, %v687
        %720 = vst.msk [vmem:[#allocation3 + $0xd0] sm:$0xff] %vm305, %v688
        %721 = vst.msk [vmem:[#allocation3 + $0xf8] sm:$0xff] %vm305, %v689
        %722 = vst.msk [vmem:[#allocation3 + $0x120] sm:$0xff] %vm305, %v690
        %723 = vst.msk [vmem:[#allocation3 + $0x148] sm:$0xff] %vm305, %v691
        %724 = vst.msk [vmem:[#allocation3 + $0x170] sm:$0xff] %vm305, %v692
        %725 = vst.msk [vmem:[#allocation3 + $0x198] sm:$0xff] %vm305, %v693
        %726 = vst.msk [vmem:[#allocation3 + $0x1c0] sm:$0xff] %vm305, %v694
        %727 = vst.msk [vmem:[#allocation3 + $0x1e8] sm:$0xff] %vm305, %v695
        %728 = vst.msk [vmem:[#allocation3 + $0x210] sm:$0xff] %vm305, %v696
        %729 = vst.msk [vmem:[#allocation3 + $0x238] sm:$0xff] %vm305, %v697
        %730 = vst.msk [vmem:[#allocation3 + $0x260] sm:$0xff] %vm305, %v698
        %731 = vst.msk [vmem:[#allocation3 + $0x288] sm:$0xff] %vm305, %v699
        %732 = vst.msk [vmem:[#allocation3 + $0x2b0] sm:$0xff] %vm305, %v700
        %733 = vst.msk [vmem:[#allocation3 + $0x2d8] sm:$0xff] %vm305, %v701
        %734 = vst.msk [vmem:[#allocation3 + $0x300] sm:$0xff] %vm305, %v702
        %735 = vst.msk [vmem:[#allocation3 + $0x328] sm:$0xff] %vm305, %v703
        %736 = vst.msk [vmem:[#allocation3 + $0x350] sm:$0xff] %vm305, %v704
        %737 = vst.msk [vmem:[#allocation3 + $0x378] sm:$0xff] %vm305, %v705
        %738 = vst.msk [vmem:[#allocation3 + $0x3a0] sm:$0xff] %vm305, %v706
        %739 = vst.msk [vmem:[#allocation3 + $0x3c8] sm:$0xff] %vm305, %v707
        %740 = vst.msk [vmem:[#allocation3 + $0x3f0] sm:$0xff] %vm305, %v708
        %741 = vst.msk [vmem:[#allocation3 + $0x418] sm:$0xff] %vm305, %v709
        %742 = vst.msk [vmem:[#allocation3 + $0x440] sm:$0xff] %vm305, %v710
        %743 = vst.msk [vmem:[#allocation3 + $0x468] sm:$0xff] %vm305, %v711
        %744 = vst.msk [vmem:[#allocation3 + $0x490] sm:$0xff] %vm305, %v712
        %745 = vst.msk [vmem:[#allocation3 + $0x4b8] sm:$0xff] %vm305, %v713
        %746 = vst.msk [vmem:[#allocation3 + $0x4e0] sm:$0xff] %vm305, %v714
        %v747 = vld [vmem:[%s393] sm:$0xff]
        %v748 = vld [vmem:[%s393 + $0x8] sm:$0xff]
        %v749 = vld [vmem:[%s393 + $0x18] sm:$0xff]
        %v750 = vld [vmem:[%s393 + $0x20] sm:$0xff]
        %v751 = vld [vmem:[%s393 + $0x30] sm:$0xff]
        %v752 = vld [vmem:[%s393 + $0x38] sm:$0xff]
        %v753 = vld [vmem:[%s393 + $0x48] sm:$0xff]
        %v754 = vld [vmem:[%s393 + $0x50] sm:$0xff]
        %v755 = vld [vmem:[%s393 + $0x60] sm:$0xff]
        %v756 = vld [vmem:[%s393 + $0x68] sm:$0xff]
        %v757 = vld [vmem:[%s393 + $0x78] sm:$0xff]
        %v758 = vld [vmem:[%s393 + $0x80] sm:$0xff]
        %v759 = vld [vmem:[%s393 + $0x90] sm:$0xff]
        %v760 = vld [vmem:[%s393 + $0x98] sm:$0xff]
        %v761 = vld [vmem:[%s393 + $0xa8] sm:$0xff]
        %v762 = vld [vmem:[%s393 + $0xb0] sm:$0xff]
        %v763 = vld [vmem:[%s393 + $0xc0] sm:$0xff]
        %v764 = vld [vmem:[%s393 + $0xc8] sm:$0xff]
        %v765 = vld [vmem:[%s393 + $0xd8] sm:$0xff]
        %v766 = vld [vmem:[%s393 + $0xe0] sm:$0xff]
        %v767 = vld [vmem:[%s393 + $0xf0] sm:$0xff]
        %v768 = vld [vmem:[%s393 + $0xf8] sm:$0xff]
        %v769 = vld [vmem:[%s393 + $0x108] sm:$0xff]
        %v770 = vld [vmem:[%s393 + $0x110] sm:$0xff]
        %v771 = vld [vmem:[%s393 + $0x120] sm:$0xff]
        %v772 = vld [vmem:[%s393 + $0x128] sm:$0xff]
        %v773 = vld [vmem:[%s393 + $0x138] sm:$0xff]
        %v774 = vld [vmem:[%s393 + $0x140] sm:$0xff]
        %v775 = vld [vmem:[%s393 + $0x150] sm:$0xff]
        %v776 = vld [vmem:[%s393 + $0x158] sm:$0xff]
        %v777 = vld [vmem:[%s393 + $0x168] sm:$0xff]
        %v778 = vld [vmem:[%s393 + $0x170] sm:$0xff]
        %811 = vrot.lane.b32.xlu0 %v747, 64
        %v812 = vpop.permute.xlu0 %811
        %813 = vrot.lane.b32.xlu0 %v748, 64
        %v814 = vpop.permute.xlu0 %813
        %815 = vrot.lane.b32.xlu0 %v749, 64
        %v816 = vpop.permute.xlu0 %815
        %817 = vrot.lane.b32.xlu0 %v750, 64
        %v818 = vpop.permute.xlu0 %817
        %819 = vrot.lane.b32.xlu0 %v751, 64
        %v820 = vpop.permute.xlu0 %819
        %821 = vrot.lane.b32.xlu0 %v752, 64
        %v822 = vpop.permute.xlu0 %821
        %823 = vrot.lane.b32.xlu0 %v753, 64
        %v824 = vpop.permute.xlu0 %823
        %825 = vrot.lane.b32.xlu0 %v754, 64
        %v826 = vpop.permute.xlu0 %825
        %827 = vrot.lane.b32.xlu0 %v755, 64
        %v828 = vpop.permute.xlu0 %827
        %829 = vrot.lane.b32.xlu0 %v756, 64
        %v830 = vpop.permute.xlu0 %829
        %831 = vrot.lane.b32.xlu0 %v757, 64
        %v832 = vpop.permute.xlu0 %831
        %833 = vrot.lane.b32.xlu0 %v758, 64
        %v834 = vpop.permute.xlu0 %833
        %835 = vrot.lane.b32.xlu0 %v759, 64
        %v836 = vpop.permute.xlu0 %835
        %837 = vrot.lane.b32.xlu0 %v760, 64
        %v838 = vpop.permute.xlu0 %837
        %839 = vrot.lane.b32.xlu0 %v761, 64
        %v840 = vpop.permute.xlu0 %839
        %841 = vrot.lane.b32.xlu0 %v762, 64
        %v842 = vpop.permute.xlu0 %841
        %843 = vrot.lane.b32.xlu0 %v763, 64
        %v844 = vpop.permute.xlu0 %843
        %845 = vrot.lane.b32.xlu0 %v764, 64
        %v846 = vpop.permute.xlu0 %845
        %847 = vrot.lane.b32.xlu0 %v765, 64
        %v848 = vpop.permute.xlu0 %847
        %849 = vrot.lane.b32.xlu0 %v766, 64
        %v850 = vpop.permute.xlu0 %849
        %851 = vrot.lane.b32.xlu0 %v767, 64
        %v852 = vpop.permute.xlu0 %851
        %853 = vrot.lane.b32.xlu0 %v768, 64
        %v854 = vpop.permute.xlu0 %853
        %855 = vrot.lane.b32.xlu0 %v769, 64
        %v856 = vpop.permute.xlu0 %855
        %857 = vrot.lane.b32.xlu0 %v770, 64
        %v858 = vpop.permute.xlu0 %857
        %859 = vrot.lane.b32.xlu0 %v771, 64
        %v860 = vpop.permute.xlu0 %859
        %861 = vrot.lane.b32.xlu0 %v772, 64
        %v862 = vpop.permute.xlu0 %861
        %863 = vrot.lane.b32.xlu0 %v773, 64
        %v864 = vpop.permute.xlu0 %863
        %865 = vrot.lane.b32.xlu0 %v774, 64
        %v866 = vpop.permute.xlu0 %865
        %867 = vrot.lane.b32.xlu0 %v775, 64
        %v868 = vpop.permute.xlu0 %867
        %869 = vrot.lane.b32.xlu0 %v776, 64
        %v870 = vpop.permute.xlu0 %869
        %871 = vrot.lane.b32.xlu0 %v777, 64
        %v872 = vpop.permute.xlu0 %871
        %873 = vrot.lane.b32.xlu0 %v778, 64
        %v874 = vpop.permute.xlu0 %873
        %907 = vst.msk [vmem:[#allocation3 + $0x8] sm:$0xff] %vm650, %v812
        %908 = vst.msk [vmem:[#allocation3 + $0x30] sm:$0xff] %vm650, %v814
        %909 = vst.msk [vmem:[#allocation3 + $0x58] sm:$0xff] %vm650, %v816
        %910 = vst.msk [vmem:[#allocation3 + $0x80] sm:$0xff] %vm650, %v818
        %911 = vst.msk [vmem:[#allocation3 + $0xa8] sm:$0xff] %vm650, %v820
        %912 = vst.msk [vmem:[#allocation3 + $0xd0] sm:$0xff] %vm650, %v822
        %913 = vst.msk [vmem:[#allocation3 + $0xf8] sm:$0xff] %vm650, %v824
        %914 = vst.msk [vmem:[#allocation3 + $0x120] sm:$0xff] %vm650, %v826
        %915 = vst.msk [vmem:[#allocation3 + $0x148] sm:$0xff] %vm650, %v828
        %916 = vst.msk [vmem:[#allocation3 + $0x170] sm:$0xff] %vm650, %v830
        %917 = vst.msk [vmem:[#allocation3 + $0x198] sm:$0xff] %vm650, %v832
        %918 = vst.msk [vmem:[#allocation3 + $0x1c0] sm:$0xff] %vm650, %v834
        %919 = vst.msk [vmem:[#allocation3 + $0x1e8] sm:$0xff] %vm650, %v836
        %920 = vst.msk [vmem:[#allocation3 + $0x210] sm:$0xff] %vm650, %v838
        %921 = vst.msk [vmem:[#allocation3 + $0x238] sm:$0xff] %vm650, %v840
        %922 = vst.msk [vmem:[#allocation3 + $0x260] sm:$0xff] %vm650, %v842
        %923 = vst.msk [vmem:[#allocation3 + $0x288] sm:$0xff] %vm650, %v844
        %924 = vst.msk [vmem:[#allocation3 + $0x2b0] sm:$0xff] %vm650, %v846
        %925 = vst.msk [vmem:[#allocation3 + $0x2d8] sm:$0xff] %vm650, %v848
        %926 = vst.msk [vmem:[#allocation3 + $0x300] sm:$0xff] %vm650, %v850
        %927 = vst.msk [vmem:[#allocation3 + $0x328] sm:$0xff] %vm650, %v852
        %928 = vst.msk [vmem:[#allocation3 + $0x350] sm:$0xff] %vm650, %v854
        %929 = vst.msk [vmem:[#allocation3 + $0x378] sm:$0xff] %vm650, %v856
        %930 = vst.msk [vmem:[#allocation3 + $0x3a0] sm:$0xff] %vm650, %v858
        %931 = vst.msk [vmem:[#allocation3 + $0x3c8] sm:$0xff] %vm650, %v860
        %932 = vst.msk [vmem:[#allocation3 + $0x3f0] sm:$0xff] %vm650, %v862
        %933 = vst.msk [vmem:[#allocation3 + $0x418] sm:$0xff] %vm650, %v864
        %934 = vst.msk [vmem:[#allocation3 + $0x440] sm:$0xff] %vm650, %v866
        %935 = vst.msk [vmem:[#allocation3 + $0x468] sm:$0xff] %vm650, %v868
        %936 = vst.msk [vmem:[#allocation3 + $0x490] sm:$0xff] %vm650, %v870
        %937 = vst.msk [vmem:[#allocation3 + $0x4b8] sm:$0xff] %vm650, %v872
        %938 = vst.msk [vmem:[#allocation3 + $0x4e0] sm:$0xff] %vm650, %v874
        %v939 = vld [vmem:[%s393 + $0x1] sm:$0xff]
        %v940 = vld [vmem:[%s393 + $0x9] sm:$0xff]
        %v941 = vld [vmem:[%s393 + $0x19] sm:$0xff]
        %v942 = vld [vmem:[%s393 + $0x21] sm:$0xff]
        %v943 = vld [vmem:[%s393 + $0x31] sm:$0xff]
        %v944 = vld [vmem:[%s393 + $0x39] sm:$0xff]
        %v945 = vld [vmem:[%s393 + $0x49] sm:$0xff]
        %v946 = vld [vmem:[%s393 + $0x51] sm:$0xff]
        %v947 = vld [vmem:[%s393 + $0x61] sm:$0xff]
        %v948 = vld [vmem:[%s393 + $0x69] sm:$0xff]
        %v949 = vld [vmem:[%s393 + $0x79] sm:$0xff]
        %v950 = vld [vmem:[%s393 + $0x81] sm:$0xff]
        %v951 = vld [vmem:[%s393 + $0x91] sm:$0xff]
        %v952 = vld [vmem:[%s393 + $0x99] sm:$0xff]
        %v953 = vld [vmem:[%s393 + $0xa9] sm:$0xff]
        %v954 = vld [vmem:[%s393 + $0xb1] sm:$0xff]
        %v955 = vld [vmem:[%s393 + $0xc1] sm:$0xff]
        %v956 = vld [vmem:[%s393 + $0xc9] sm:$0xff]
        %v957 = vld [vmem:[%s393 + $0xd9] sm:$0xff]
        %v958 = vld [vmem:[%s393 + $0xe1] sm:$0xff]
        %v959 = vld [vmem:[%s393 + $0xf1] sm:$0xff]
        %v960 = vld [vmem:[%s393 + $0xf9] sm:$0xff]
        %v961 = vld [vmem:[%s393 + $0x109] sm:$0xff]
        %v962 = vld [vmem:[%s393 + $0x111] sm:$0xff]
        %v963 = vld [vmem:[%s393 + $0x121] sm:$0xff]
        %v964 = vld [vmem:[%s393 + $0x129] sm:$0xff]
        %v965 = vld [vmem:[%s393 + $0x139] sm:$0xff]
        %v966 = vld [vmem:[%s393 + $0x141] sm:$0xff]
        %v967 = vld [vmem:[%s393 + $0x151] sm:$0xff]
        %v968 = vld [vmem:[%s393 + $0x159] sm:$0xff]
        %v969 = vld [vmem:[%s393 + $0x169] sm:$0xff]
        %v970 = vld [vmem:[%s393 + $0x171] sm:$0xff]
        %971 = vst.msk [vmem:[#allocation3 + $0x10] sm:$0xff] %vm305, %v939
        %972 = vst.msk [vmem:[#allocation3 + $0x38] sm:$0xff] %vm305, %v940
        %973 = vst.msk [vmem:[#allocation3 + $0x60] sm:$0xff] %vm305, %v941
        %974 = vst.msk [vmem:[#allocation3 + $0x88] sm:$0xff] %vm305, %v942
        %975 = vst.msk [vmem:[#allocation3 + $0xb0] sm:$0xff] %vm305, %v943
        %976 = vst.msk [vmem:[#allocation3 + $0xd8] sm:$0xff] %vm305, %v944
        %977 = vst.msk [vmem:[#allocation3 + $0x100] sm:$0xff] %vm305, %v945
        %978 = vst.msk [vmem:[#allocation3 + $0x128] sm:$0xff] %vm305, %v946
        %979 = vst.msk [vmem:[#allocation3 + $0x150] sm:$0xff] %vm305, %v947
        %980 = vst.msk [vmem:[#allocation3 + $0x178] sm:$0xff] %vm305, %v948
        %981 = vst.msk [vmem:[#allocation3 + $0x1a0] sm:$0xff] %vm305, %v949
        %982 = vst.msk [vmem:[#allocation3 + $0x1c8] sm:$0xff] %vm305, %v950
        %983 = vst.msk [vmem:[#allocation3 + $0x1f0] sm:$0xff] %vm305, %v951
        %984 = vst.msk [vmem:[#allocation3 + $0x218] sm:$0xff] %vm305, %v952
        %985 = vst.msk [vmem:[#allocation3 + $0x240] sm:$0xff] %vm305, %v953
        %986 = vst.msk [vmem:[#allocation3 + $0x268] sm:$0xff] %vm305, %v954
        %987 = vst.msk [vmem:[#allocation3 + $0x290] sm:$0xff] %vm305, %v955
        %988 = vst.msk [vmem:[#allocation3 + $0x2b8] sm:$0xff] %vm305, %v956
        %989 = vst.msk [vmem:[#allocation3 + $0x2e0] sm:$0xff] %vm305, %v957
        %990 = vst.msk [vmem:[#allocation3 + $0x308] sm:$0xff] %vm305, %v958
        %991 = vst.msk [vmem:[#allocation3 + $0x330] sm:$0xff] %vm305, %v959
        %992 = vst.msk [vmem:[#allocation3 + $0x358] sm:$0xff] %vm305, %v960
        %993 = vst.msk [vmem:[#allocation3 + $0x380] sm:$0xff] %vm305, %v961
        %994 = vst.msk [vmem:[#allocation3 + $0x3a8] sm:$0xff] %vm305, %v962
        %995 = vst.msk [vmem:[#allocation3 + $0x3d0] sm:$0xff] %vm305, %v963
        %996 = vst.msk [vmem:[#allocation3 + $0x3f8] sm:$0xff] %vm305, %v964
        %997 = vst.msk [vmem:[#allocation3 + $0x420] sm:$0xff] %vm305, %v965
        %998 = vst.msk [vmem:[#allocation3 + $0x448] sm:$0xff] %vm305, %v966
        %999 = vst.msk [vmem:[#allocation3 + $0x470] sm:$0xff] %vm305, %v967
        %1000 = vst.msk [vmem:[#allocation3 + $0x498] sm:$0xff] %vm305, %v968
        %1001 = vst.msk [vmem:[#allocation3 + $0x4c0] sm:$0xff] %vm305, %v969
        %1002 = vst.msk [vmem:[#allocation3 + $0x4e8] sm:$0xff] %vm305, %v970
        %v1003 = vld [vmem:[%s393 + $0x2] sm:$0xff]
        %v1004 = vld [vmem:[%s393 + $0xa] sm:$0xff]
        %v1005 = vld [vmem:[%s393 + $0x1a] sm:$0xff]
        %v1006 = vld [vmem:[%s393 + $0x22] sm:$0xff]
        %v1007 = vld [vmem:[%s393 + $0x32] sm:$0xff]
        %v1008 = vld [vmem:[%s393 + $0x3a] sm:$0xff]
        %v1009 = vld [vmem:[%s393 + $0x4a] sm:$0xff]
        %v1010 = vld [vmem:[%s393 + $0x52] sm:$0xff]
        %v1011 = vld [vmem:[%s393 + $0x62] sm:$0xff]
        %v1012 = vld [vmem:[%s393 + $0x6a] sm:$0xff]
        %v1013 = vld [vmem:[%s393 + $0x7a] sm:$0xff]
        %v1014 = vld [vmem:[%s393 + $0x82] sm:$0xff]
        %v1015 = vld [vmem:[%s393 + $0x92] sm:$0xff]
        %v1016 = vld [vmem:[%s393 + $0x9a] sm:$0xff]
        %v1017 = vld [vmem:[%s393 + $0xaa] sm:$0xff]
        %v1018 = vld [vmem:[%s393 + $0xb2] sm:$0xff]
        %v1019 = vld [vmem:[%s393 + $0xc2] sm:$0xff]
        %v1020 = vld [vmem:[%s393 + $0xca] sm:$0xff]
        %v1021 = vld [vmem:[%s393 + $0xda] sm:$0xff]
        %v1022 = vld [vmem:[%s393 + $0xe2] sm:$0xff]
        %v1023 = vld [vmem:[%s393 + $0xf2] sm:$0xff]
        %v1024 = vld [vmem:[%s393 + $0xfa] sm:$0xff]
        %v1025 = vld [vmem:[%s393 + $0x10a] sm:$0xff]
        %v1026 = vld [vmem:[%s393 + $0x112] sm:$0xff]
        %v1027 = vld [vmem:[%s393 + $0x122] sm:$0xff]
        %v1028 = vld [vmem:[%s393 + $0x12a] sm:$0xff]
        %v1029 = vld [vmem:[%s393 + $0x13a] sm:$0xff]
        %v1030 = vld [vmem:[%s393 + $0x142] sm:$0xff]
        %v1031 = vld [vmem:[%s393 + $0x152] sm:$0xff]
        %v1032 = vld [vmem:[%s393 + $0x15a] sm:$0xff]
        %v1033 = vld [vmem:[%s393 + $0x16a] sm:$0xff]
        %v1034 = vld [vmem:[%s393 + $0x172] sm:$0xff]
        %1067 = vrot.lane.b32.xlu0 %v1003, 64
        %v1068 = vpop.permute.xlu0 %1067
        %1069 = vrot.lane.b32.xlu0 %v1004, 64
        %v1070 = vpop.permute.xlu0 %1069
        %1071 = vrot.lane.b32.xlu0 %v1005, 64
        %v1072 = vpop.permute.xlu0 %1071
        %1073 = vrot.lane.b32.xlu0 %v1006, 64
        %v1074 = vpop.permute.xlu0 %1073
        %1075 = vrot.lane.b32.xlu0 %v1007, 64
        %v1076 = vpop.permute.xlu0 %1075
        %1077 = vrot.lane.b32.xlu0 %v1008, 64
        %v1078 = vpop.permute.xlu0 %1077
        %1079 = vrot.lane.b32.xlu0 %v1009, 64
        %v1080 = vpop.permute.xlu0 %1079
        %1081 = vrot.lane.b32.xlu0 %v1010, 64
        %v1082 = vpop.permute.xlu0 %1081
        %1083 = vrot.lane.b32.xlu0 %v1011, 64
        %v1084 = vpop.permute.xlu0 %1083
        %1085 = vrot.lane.b32.xlu0 %v1012, 64
        %v1086 = vpop.permute.xlu0 %1085
        %1087 = vrot.lane.b32.xlu0 %v1013, 64
        %v1088 = vpop.permute.xlu0 %1087
        %1089 = vrot.lane.b32.xlu0 %v1014, 64
        %v1090 = vpop.permute.xlu0 %1089
        %1091 = vrot.lane.b32.xlu0 %v1015, 64
        %v1092 = vpop.permute.xlu0 %1091
        %1093 = vrot.lane.b32.xlu0 %v1016, 64
        %v1094 = vpop.permute.xlu0 %1093
        %1095 = vrot.lane.b32.xlu0 %v1017, 64
        %v1096 = vpop.permute.xlu0 %1095
        %1097 = vrot.lane.b32.xlu0 %v1018, 64
        %v1098 = vpop.permute.xlu0 %1097
        %1099 = vrot.lane.b32.xlu0 %v1019, 64
        %v1100 = vpop.permute.xlu0 %1099
        %1101 = vrot.lane.b32.xlu0 %v1020, 64
        %v1102 = vpop.permute.xlu0 %1101
        %1103 = vrot.lane.b32.xlu0 %v1021, 64
        %v1104 = vpop.permute.xlu0 %1103
        %1105 = vrot.lane.b32.xlu0 %v1022, 64
        %v1106 = vpop.permute.xlu0 %1105
        %1107 = vrot.lane.b32.xlu0 %v1023, 64
        %v1108 = vpop.permute.xlu0 %1107
        %1109 = vrot.lane.b32.xlu0 %v1024, 64
        %v1110 = vpop.permute.xlu0 %1109
        %1111 = vrot.lane.b32.xlu0 %v1025, 64
        %v1112 = vpop.permute.xlu0 %1111
        %1113 = vrot.lane.b32.xlu0 %v1026, 64
        %v1114 = vpop.permute.xlu0 %1113
        %1115 = vrot.lane.b32.xlu0 %v1027, 64
        %v1116 = vpop.permute.xlu0 %1115
        %1117 = vrot.lane.b32.xlu0 %v1028, 64
        %v1118 = vpop.permute.xlu0 %1117
        %1119 = vrot.lane.b32.xlu0 %v1029, 64
        %v1120 = vpop.permute.xlu0 %1119
        %1121 = vrot.lane.b32.xlu0 %v1030, 64
        %v1122 = vpop.permute.xlu0 %1121
        %1123 = vrot.lane.b32.xlu0 %v1031, 64
        %v1124 = vpop.permute.xlu0 %1123
        %1125 = vrot.lane.b32.xlu0 %v1032, 64
        %v1126 = vpop.permute.xlu0 %1125
        %1127 = vrot.lane.b32.xlu0 %v1033, 64
        %v1128 = vpop.permute.xlu0 %1127
        %1129 = vrot.lane.b32.xlu0 %v1034, 64
        %v1130 = vpop.permute.xlu0 %1129
        %1163 = vst.msk [vmem:[#allocation3 + $0x10] sm:$0xff] %vm650, %v1068
        %1164 = vst.msk [vmem:[#allocation3 + $0x38] sm:$0xff] %vm650, %v1070
        %1165 = vst.msk [vmem:[#allocation3 + $0x60] sm:$0xff] %vm650, %v1072
        %1166 = vst.msk [vmem:[#allocation3 + $0x88] sm:$0xff] %vm650, %v1074
        %1167 = vst.msk [vmem:[#allocation3 + $0xb0] sm:$0xff] %vm650, %v1076
        %1168 = vst.msk [vmem:[#allocation3 + $0xd8] sm:$0xff] %vm650, %v1078
        %1169 = vst.msk [vmem:[#allocation3 + $0x100] sm:$0xff] %vm650, %v1080
        %1170 = vst.msk [vmem:[#allocation3 + $0x128] sm:$0xff] %vm650, %v1082
        %1171 = vst.msk [vmem:[#allocation3 + $0x150] sm:$0xff] %vm650, %v1084
        %1172 = vst.msk [vmem:[#allocation3 + $0x178] sm:$0xff] %vm650, %v1086
        %1173 = vst.msk [vmem:[#allocation3 + $0x1a0] sm:$0xff] %vm650, %v1088
        %1174 = vst.msk [vmem:[#allocation3 + $0x1c8] sm:$0xff] %vm650, %v1090
        %1175 = vst.msk [vmem:[#allocation3 + $0x1f0] sm:$0xff] %vm650, %v1092
        %1176 = vst.msk [vmem:[#allocation3 + $0x218] sm:$0xff] %vm650, %v1094
        %1177 = vst.msk [vmem:[#allocation3 + $0x240] sm:$0xff] %vm650, %v1096
        %1178 = vst.msk [vmem:[#allocation3 + $0x268] sm:$0xff] %vm650, %v1098
        %1179 = vst.msk [vmem:[#allocation3 + $0x290] sm:$0xff] %vm650, %v1100
        %1180 = vst.msk [vmem:[#allocation3 + $0x2b8] sm:$0xff] %vm650, %v1102
        %1181 = vst.msk [vmem:[#allocation3 + $0x2e0] sm:$0xff] %vm650, %v1104
        %1182 = vst.msk [vmem:[#allocation3 + $0x308] sm:$0xff] %vm650, %v1106
        %1183 = vst.msk [vmem:[#allocation3 + $0x330] sm:$0xff] %vm650, %v1108
        %1184 = vst.msk [vmem:[#allocation3 + $0x358] sm:$0xff] %vm650, %v1110
        %1185 = vst.msk [vmem:[#allocation3 + $0x380] sm:$0xff] %vm650, %v1112
        %1186 = vst.msk [vmem:[#allocation3 + $0x3a8] sm:$0xff] %vm650, %v1114
        %1187 = vst.msk [vmem:[#allocation3 + $0x3d0] sm:$0xff] %vm650, %v1116
        %1188 = vst.msk [vmem:[#allocation3 + $0x3f8] sm:$0xff] %vm650, %v1118
        %1189 = vst.msk [vmem:[#allocation3 + $0x420] sm:$0xff] %vm650, %v1120
        %1190 = vst.msk [vmem:[#allocation3 + $0x448] sm:$0xff] %vm650, %v1122
        %1191 = vst.msk [vmem:[#allocation3 + $0x470] sm:$0xff] %vm650, %v1124
        %1192 = vst.msk [vmem:[#allocation3 + $0x498] sm:$0xff] %vm650, %v1126
        %1193 = vst.msk [vmem:[#allocation3 + $0x4c0] sm:$0xff] %vm650, %v1128
        %1194 = vst.msk [vmem:[#allocation3 + $0x4e8] sm:$0xff] %vm650, %v1130
        %s1195 = scalar_lea.vmem [#allocation2], 48
        %v1196 = vld [vmem:[%s1195] sm:$0xff]
        %v1197 = vld [vmem:[%s1195 + $0x8] sm:$0xff]
        %v1198 = vld [vmem:[%s1195 + $0x18] sm:$0xff]
        %v1199 = vld [vmem:[%s1195 + $0x20] sm:$0xff]
        %v1200 = vld [vmem:[%s1195 + $0x30] sm:$0xff]
        %v1201 = vld [vmem:[%s1195 + $0x38] sm:$0xff]
        %v1202 = vld [vmem:[%s1195 + $0x48] sm:$0xff]
        %v1203 = vld [vmem:[%s1195 + $0x50] sm:$0xff]
        %v1204 = vld [vmem:[%s1195 + $0x60] sm:$0xff]
        %v1205 = vld [vmem:[%s1195 + $0x68] sm:$0xff]
        %v1206 = vld [vmem:[%s1195 + $0x78] sm:$0xff]
        %v1207 = vld [vmem:[%s1195 + $0x80] sm:$0xff]
        %v1208 = vld [vmem:[%s1195 + $0x90] sm:$0xff]
        %v1209 = vld [vmem:[%s1195 + $0x98] sm:$0xff]
        %v1210 = vld [vmem:[%s1195 + $0xa8] sm:$0xff]
        %v1211 = vld [vmem:[%s1195 + $0xb0] sm:$0xff]
        %v1212 = vld [vmem:[%s1195 + $0xc0] sm:$0xff]
        %v1213 = vld [vmem:[%s1195 + $0xc8] sm:$0xff]
        %v1214 = vld [vmem:[%s1195 + $0xd8] sm:$0xff]
        %v1215 = vld [vmem:[%s1195 + $0xe0] sm:$0xff]
        %v1216 = vld [vmem:[%s1195 + $0xf0] sm:$0xff]
        %v1217 = vld [vmem:[%s1195 + $0xf8] sm:$0xff]
        %v1218 = vld [vmem:[%s1195 + $0x108] sm:$0xff]
        %v1219 = vld [vmem:[%s1195 + $0x110] sm:$0xff]
        %v1220 = vld [vmem:[%s1195 + $0x120] sm:$0xff]
        %v1221 = vld [vmem:[%s1195 + $0x128] sm:$0xff]
        %v1222 = vld [vmem:[%s1195 + $0x138] sm:$0xff]
        %v1223 = vld [vmem:[%s1195 + $0x140] sm:$0xff]
        %v1224 = vld [vmem:[%s1195 + $0x150] sm:$0xff]
        %v1225 = vld [vmem:[%s1195 + $0x158] sm:$0xff]
        %v1226 = vld [vmem:[%s1195 + $0x168] sm:$0xff]
        %v1227 = vld [vmem:[%s1195 + $0x170] sm:$0xff]
        %1228 = vst.msk [vmem:[#allocation3 + $0x18] sm:$0xff] %vm305, %v1196
        %1229 = vst.msk [vmem:[#allocation3 + $0x40] sm:$0xff] %vm305, %v1197
        %1230 = vst.msk [vmem:[#allocation3 + $0x68] sm:$0xff] %vm305, %v1198
        %1231 = vst.msk [vmem:[#allocation3 + $0x90] sm:$0xff] %vm305, %v1199
        %1232 = vst.msk [vmem:[#allocation3 + $0xb8] sm:$0xff] %vm305, %v1200
        %1233 = vst.msk [vmem:[#allocation3 + $0xe0] sm:$0xff] %vm305, %v1201
        %1234 = vst.msk [vmem:[#allocation3 + $0x108] sm:$0xff] %vm305, %v1202
        %1235 = vst.msk [vmem:[#allocation3 + $0x130] sm:$0xff] %vm305, %v1203
        %1236 = vst.msk [vmem:[#allocation3 + $0x158] sm:$0xff] %vm305, %v1204
        %1237 = vst.msk [vmem:[#allocation3 + $0x180] sm:$0xff] %vm305, %v1205
        %1238 = vst.msk [vmem:[#allocation3 + $0x1a8] sm:$0xff] %vm305, %v1206
        %1239 = vst.msk [vmem:[#allocation3 + $0x1d0] sm:$0xff] %vm305, %v1207
        %1240 = vst.msk [vmem:[#allocation3 + $0x1f8] sm:$0xff] %vm305, %v1208
        %1241 = vst.msk [vmem:[#allocation3 + $0x220] sm:$0xff] %vm305, %v1209
        %1242 = vst.msk [vmem:[#allocation3 + $0x248] sm:$0xff] %vm305, %v1210
        %1243 = vst.msk [vmem:[#allocation3 + $0x270] sm:$0xff] %vm305, %v1211
        %1244 = vst.msk [vmem:[#allocation3 + $0x298] sm:$0xff] %vm305, %v1212
        %1245 = vst.msk [vmem:[#allocation3 + $0x2c0] sm:$0xff] %vm305, %v1213
        %1246 = vst.msk [vmem:[#allocation3 + $0x2e8] sm:$0xff] %vm305, %v1214
        %1247 = vst.msk [vmem:[#allocation3 + $0x310] sm:$0xff] %vm305, %v1215
        %1248 = vst.msk [vmem:[#allocation3 + $0x338] sm:$0xff] %vm305, %v1216
        %1249 = vst.msk [vmem:[#allocation3 + $0x360] sm:$0xff] %vm305, %v1217
        %1250 = vst.msk [vmem:[#allocation3 + $0x388] sm:$0xff] %vm305, %v1218
        %1251 = vst.msk [vmem:[#allocation3 + $0x3b0] sm:$0xff] %vm305, %v1219
        %1252 = vst.msk [vmem:[#allocation3 + $0x3d8] sm:$0xff] %vm305, %v1220
        %1253 = vst.msk [vmem:[#allocation3 + $0x400] sm:$0xff] %vm305, %v1221
        %1254 = vst.msk [vmem:[#allocation3 + $0x428] sm:$0xff] %vm305, %v1222
        %1255 = vst.msk [vmem:[#allocation3 + $0x450] sm:$0xff] %vm305, %v1223
        %1256 = vst.msk [vmem:[#allocation3 + $0x478] sm:$0xff] %vm305, %v1224
        %1257 = vst.msk [vmem:[#allocation3 + $0x4a0] sm:$0xff] %vm305, %v1225
        %1258 = vst.msk [vmem:[#allocation3 + $0x4c8] sm:$0xff] %vm305, %v1226
        %1259 = vst.msk [vmem:[#allocation3 + $0x4f0] sm:$0xff] %vm305, %v1227
        %v1260 = vld [vmem:[%s1195 + $0x1] sm:$0xff]
        %v1261 = vld [vmem:[%s1195 + $0x9] sm:$0xff]
        %v1262 = vld [vmem:[%s1195 + $0x19] sm:$0xff]
        %v1263 = vld [vmem:[%s1195 + $0x21] sm:$0xff]
        %v1264 = vld [vmem:[%s1195 + $0x31] sm:$0xff]
        %v1265 = vld [vmem:[%s1195 + $0x39] sm:$0xff]
        %v1266 = vld [vmem:[%s1195 + $0x49] sm:$0xff]
        %v1267 = vld [vmem:[%s1195 + $0x51] sm:$0xff]
        %v1268 = vld [vmem:[%s1195 + $0x61] sm:$0xff]
        %v1269 = vld [vmem:[%s1195 + $0x69] sm:$0xff]
        %v1270 = vld [vmem:[%s1195 + $0x79] sm:$0xff]
        %v1271 = vld [vmem:[%s1195 + $0x81] sm:$0xff]
        %v1272 = vld [vmem:[%s1195 + $0x91] sm:$0xff]
        %v1273 = vld [vmem:[%s1195 + $0x99] sm:$0xff]
        %v1274 = vld [vmem:[%s1195 + $0xa9] sm:$0xff]
        %v1275 = vld [vmem:[%s1195 + $0xb1] sm:$0xff]
        %v1276 = vld [vmem:[%s1195 + $0xc1] sm:$0xff]
        %v1277 = vld [vmem:[%s1195 + $0xc9] sm:$0xff]
        %v1278 = vld [vmem:[%s1195 + $0xd9] sm:$0xff]
        %v1279 = vld [vmem:[%s1195 + $0xe1] sm:$0xff]
        %v1280 = vld [vmem:[%s1195 + $0xf1] sm:$0xff]
        %v1281 = vld [vmem:[%s1195 + $0xf9] sm:$0xff]
        %v1282 = vld [vmem:[%s1195 + $0x109] sm:$0xff]
        %v1283 = vld [vmem:[%s1195 + $0x111] sm:$0xff]
        %v1284 = vld [vmem:[%s1195 + $0x121] sm:$0xff]
        %v1285 = vld [vmem:[%s1195 + $0x129] sm:$0xff]
        %v1286 = vld [vmem:[%s1195 + $0x139] sm:$0xff]
        %v1287 = vld [vmem:[%s1195 + $0x141] sm:$0xff]
        %v1288 = vld [vmem:[%s1195 + $0x151] sm:$0xff]
        %v1289 = vld [vmem:[%s1195 + $0x159] sm:$0xff]
        %v1290 = vld [vmem:[%s1195 + $0x169] sm:$0xff]
        %v1291 = vld [vmem:[%s1195 + $0x171] sm:$0xff]
        %1324 = vrot.lane.b32.xlu0 %v1260, 64
        %v1325 = vpop.permute.xlu0 %1324
        %1326 = vrot.lane.b32.xlu0 %v1261, 64
        %v1327 = vpop.permute.xlu0 %1326
        %1328 = vrot.lane.b32.xlu0 %v1262, 64
        %v1329 = vpop.permute.xlu0 %1328
        %1330 = vrot.lane.b32.xlu0 %v1263, 64
        %v1331 = vpop.permute.xlu0 %1330
        %1332 = vrot.lane.b32.xlu0 %v1264, 64
        %v1333 = vpop.permute.xlu0 %1332
        %1334 = vrot.lane.b32.xlu0 %v1265, 64
        %v1335 = vpop.permute.xlu0 %1334
        %1336 = vrot.lane.b32.xlu0 %v1266, 64
        %v1337 = vpop.permute.xlu0 %1336
        %1338 = vrot.lane.b32.xlu0 %v1267, 64
        %v1339 = vpop.permute.xlu0 %1338
        %1340 = vrot.lane.b32.xlu0 %v1268, 64
        %v1341 = vpop.permute.xlu0 %1340
        %1342 = vrot.lane.b32.xlu0 %v1269, 64
        %v1343 = vpop.permute.xlu0 %1342
        %1344 = vrot.lane.b32.xlu0 %v1270, 64
        %v1345 = vpop.permute.xlu0 %1344
        %1346 = vrot.lane.b32.xlu0 %v1271, 64
        %v1347 = vpop.permute.xlu0 %1346
        %1348 = vrot.lane.b32.xlu0 %v1272, 64
        %v1349 = vpop.permute.xlu0 %1348
        %1350 = vrot.lane.b32.xlu0 %v1273, 64
        %v1351 = vpop.permute.xlu0 %1350
        %1352 = vrot.lane.b32.xlu0 %v1274, 64
        %v1353 = vpop.permute.xlu0 %1352
        %1354 = vrot.lane.b32.xlu0 %v1275, 64
        %v1355 = vpop.permute.xlu0 %1354
        %1356 = vrot.lane.b32.xlu0 %v1276, 64
        %v1357 = vpop.permute.xlu0 %1356
        %1358 = vrot.lane.b32.xlu0 %v1277, 64
        %v1359 = vpop.permute.xlu0 %1358
        %1360 = vrot.lane.b32.xlu0 %v1278, 64
        %v1361 = vpop.permute.xlu0 %1360
        %1362 = vrot.lane.b32.xlu0 %v1279, 64
        %v1363 = vpop.permute.xlu0 %1362
        %1364 = vrot.lane.b32.xlu0 %v1280, 64
        %v1365 = vpop.permute.xlu0 %1364
        %1366 = vrot.lane.b32.xlu0 %v1281, 64
        %v1367 = vpop.permute.xlu0 %1366
        %1368 = vrot.lane.b32.xlu0 %v1282, 64
        %v1369 = vpop.permute.xlu0 %1368
        %1370 = vrot.lane.b32.xlu0 %v1283, 64
        %v1371 = vpop.permute.xlu0 %1370
        %1372 = vrot.lane.b32.xlu0 %v1284, 64
        %v1373 = vpop.permute.xlu0 %1372
        %1374 = vrot.lane.b32.xlu0 %v1285, 64
        %v1375 = vpop.permute.xlu0 %1374
        %1376 = vrot.lane.b32.xlu0 %v1286, 64
        %v1377 = vpop.permute.xlu0 %1376
        %1378 = vrot.lane.b32.xlu0 %v1287, 64
        %v1379 = vpop.permute.xlu0 %1378
        %1380 = vrot.lane.b32.xlu0 %v1288, 64
        %v1381 = vpop.permute.xlu0 %1380
        %1382 = vrot.lane.b32.xlu0 %v1289, 64
        %v1383 = vpop.permute.xlu0 %1382
        %1384 = vrot.lane.b32.xlu0 %v1290, 64
        %v1385 = vpop.permute.xlu0 %1384
        %1386 = vrot.lane.b32.xlu0 %v1291, 64
        %v1387 = vpop.permute.xlu0 %1386
        %1420 = vst.msk [vmem:[#allocation3 + $0x18] sm:$0xff] %vm650, %v1325
        %1421 = vst.msk [vmem:[#allocation3 + $0x40] sm:$0xff] %vm650, %v1327
        %1422 = vst.msk [vmem:[#allocation3 + $0x68] sm:$0xff] %vm650, %v1329
        %1423 = vst.msk [vmem:[#allocation3 + $0x90] sm:$0xff] %vm650, %v1331
        %1424 = vst.msk [vmem:[#allocation3 + $0xb8] sm:$0xff] %vm650, %v1333
        %1425 = vst.msk [vmem:[#allocation3 + $0xe0] sm:$0xff] %vm650, %v1335
        %1426 = vst.msk [vmem:[#allocation3 + $0x108] sm:$0xff] %vm650, %v1337
        %1427 = vst.msk [vmem:[#allocation3 + $0x130] sm:$0xff] %vm650, %v1339
        %1428 = vst.msk [vmem:[#allocation3 + $0x158] sm:$0xff] %vm650, %v1341
        %1429 = vst.msk [vmem:[#allocation3 + $0x180] sm:$0xff] %vm650, %v1343
        %1430 = vst.msk [vmem:[#allocation3 + $0x1a8] sm:$0xff] %vm650, %v1345
        %1431 = vst.msk [vmem:[#allocation3 + $0x1d0] sm:$0xff] %vm650, %v1347
        %1432 = vst.msk [vmem:[#allocation3 + $0x1f8] sm:$0xff] %vm650, %v1349
        %1433 = vst.msk [vmem:[#allocation3 + $0x220] sm:$0xff] %vm650, %v1351
        %1434 = vst.msk [vmem:[#allocation3 + $0x248] sm:$0xff] %vm650, %v1353
        %1435 = vst.msk [vmem:[#allocation3 + $0x270] sm:$0xff] %vm650, %v1355
        %1436 = vst.msk [vmem:[#allocation3 + $0x298] sm:$0xff] %vm650, %v1357
        %1437 = vst.msk [vmem:[#allocation3 + $0x2c0] sm:$0xff] %vm650, %v1359
        %1438 = vst.msk [vmem:[#allocation3 + $0x2e8] sm:$0xff] %vm650, %v1361
        %1439 = vst.msk [vmem:[#allocation3 + $0x310] sm:$0xff] %vm650, %v1363
        %1440 = vst.msk [vmem:[#allocation3 + $0x338] sm:$0xff] %vm650, %v1365
        %1441 = vst.msk [vmem:[#allocation3 + $0x360] sm:$0xff] %vm650, %v1367
        %1442 = vst.msk [vmem:[#allocation3 + $0x388] sm:$0xff] %vm650, %v1369
        %1443 = vst.msk [vmem:[#allocation3 + $0x3b0] sm:$0xff] %vm650, %v1371
        %1444 = vst.msk [vmem:[#allocation3 + $0x3d8] sm:$0xff] %vm650, %v1373
        %1445 = vst.msk [vmem:[#allocation3 + $0x400] sm:$0xff] %vm650, %v1375
        %1446 = vst.msk [vmem:[#allocation3 + $0x428] sm:$0xff] %vm650, %v1377
        %1447 = vst.msk [vmem:[#allocation3 + $0x450] sm:$0xff] %vm650, %v1379
        %1448 = vst.msk [vmem:[#allocation3 + $0x478] sm:$0xff] %vm650, %v1381
        %1449 = vst.msk [vmem:[#allocation3 + $0x4a0] sm:$0xff] %vm650, %v1383
        %1450 = vst.msk [vmem:[#allocation3 + $0x4c8] sm:$0xff] %vm650, %v1385
        %1451 = vst.msk [vmem:[#allocation3 + $0x4f0] sm:$0xff] %vm650, %v1387
        %v1452 = vld [vmem:[%s1195 + $0x2] sm:$0xff]
        %v1453 = vld [vmem:[%s1195 + $0xa] sm:$0xff]
        %v1454 = vld [vmem:[%s1195 + $0x1a] sm:$0xff]
        %v1455 = vld [vmem:[%s1195 + $0x22] sm:$0xff]
        %v1456 = vld [vmem:[%s1195 + $0x32] sm:$0xff]
        %v1457 = vld [vmem:[%s1195 + $0x3a] sm:$0xff]
        %v1458 = vld [vmem:[%s1195 + $0x4a] sm:$0xff]
        %v1459 = vld [vmem:[%s1195 + $0x52] sm:$0xff]
        %v1460 = vld [vmem:[%s1195 + $0x62] sm:$0xff]
        %v1461 = vld [vmem:[%s1195 + $0x6a] sm:$0xff]
        %v1462 = vld [vmem:[%s1195 + $0x7a] sm:$0xff]
        %v1463 = vld [vmem:[%s1195 + $0x82] sm:$0xff]
        %v1464 = vld [vmem:[%s1195 + $0x92] sm:$0xff]
        %v1465 = vld [vmem:[%s1195 + $0x9a] sm:$0xff]
        %v1466 = vld [vmem:[%s1195 + $0xaa] sm:$0xff]
        %v1467 = vld [vmem:[%s1195 + $0xb2] sm:$0xff]
        %v1468 = vld [vmem:[%s1195 + $0xc2] sm:$0xff]
        %v1469 = vld [vmem:[%s1195 + $0xca] sm:$0xff]
        %v1470 = vld [vmem:[%s1195 + $0xda] sm:$0xff]
        %v1471 = vld [vmem:[%s1195 + $0xe2] sm:$0xff]
        %v1472 = vld [vmem:[%s1195 + $0xf2] sm:$0xff]
        %v1473 = vld [vmem:[%s1195 + $0xfa] sm:$0xff]
        %v1474 = vld [vmem:[%s1195 + $0x10a] sm:$0xff]
        %v1475 = vld [vmem:[%s1195 + $0x112] sm:$0xff]
        %v1476 = vld [vmem:[%s1195 + $0x122] sm:$0xff]
        %v1477 = vld [vmem:[%s1195 + $0x12a] sm:$0xff]
        %v1478 = vld [vmem:[%s1195 + $0x13a] sm:$0xff]
        %v1479 = vld [vmem:[%s1195 + $0x142] sm:$0xff]
        %v1480 = vld [vmem:[%s1195 + $0x152] sm:$0xff]
        %v1481 = vld [vmem:[%s1195 + $0x15a] sm:$0xff]
        %v1482 = vld [vmem:[%s1195 + $0x16a] sm:$0xff]
        %v1483 = vld [vmem:[%s1195 + $0x172] sm:$0xff]
        %1484 = vst.msk [vmem:[#allocation3 + $0x20] sm:$0xff] %vm305, %v1452
        %1485 = vst.msk [vmem:[#allocation3 + $0x48] sm:$0xff] %vm305, %v1453
        %1486 = vst.msk [vmem:[#allocation3 + $0x70] sm:$0xff] %vm305, %v1454
        %1487 = vst.msk [vmem:[#allocation3 + $0x98] sm:$0xff] %vm305, %v1455
        %1488 = vst.msk [vmem:[#allocation3 + $0xc0] sm:$0xff] %vm305, %v1456
        %1489 = vst.msk [vmem:[#allocation3 + $0xe8] sm:$0xff] %vm305, %v1457
        %1490 = vst.msk [vmem:[#allocation3 + $0x110] sm:$0xff] %vm305, %v1458
        %1491 = vst.msk [vmem:[#allocation3 + $0x138] sm:$0xff] %vm305, %v1459
        %1492 = vst.msk [vmem:[#allocation3 + $0x160] sm:$0xff] %vm305, %v1460
        %1493 = vst.msk [vmem:[#allocation3 + $0x188] sm:$0xff] %vm305, %v1461
        %1494 = vst.msk [vmem:[#allocation3 + $0x1b0] sm:$0xff] %vm305, %v1462
        %1495 = vst.msk [vmem:[#allocation3 + $0x1d8] sm:$0xff] %vm305, %v1463
        %1496 = vst.msk [vmem:[#allocation3 + $0x200] sm:$0xff] %vm305, %v1464
        %1497 = vst.msk [vmem:[#allocation3 + $0x228] sm:$0xff] %vm305, %v1465
        %1498 = vst.msk [vmem:[#allocation3 + $0x250] sm:$0xff] %vm305, %v1466
        %1499 = vst.msk [vmem:[#allocation3 + $0x278] sm:$0xff] %vm305, %v1467
        %1500 = vst.msk [vmem:[#allocation3 + $0x2a0] sm:$0xff] %vm305, %v1468
        %1501 = vst.msk [vmem:[#allocation3 + $0x2c8] sm:$0xff] %vm305, %v1469
        %1502 = vst.msk [vmem:[#allocation3 + $0x2f0] sm:$0xff] %vm305, %v1470
        %1503 = vst.msk [vmem:[#allocation3 + $0x318] sm:$0xff] %vm305, %v1471
        %1504 = vst.msk [vmem:[#allocation3 + $0x340] sm:$0xff] %vm305, %v1472
        %1505 = vst.msk [vmem:[#allocation3 + $0x368] sm:$0xff] %vm305, %v1473
        %1506 = vst.msk [vmem:[#allocation3 + $0x390] sm:$0xff] %vm305, %v1474
        %1507 = vst.msk [vmem:[#allocation3 + $0x3b8] sm:$0xff] %vm305, %v1475
        %1508 = vst.msk [vmem:[#allocation3 + $0x3e0] sm:$0xff] %vm305, %v1476
        %1509 = vst.msk [vmem:[#allocation3 + $0x408] sm:$0xff] %vm305, %v1477
        %1510 = vst.msk [vmem:[#allocation3 + $0x430] sm:$0xff] %vm305, %v1478
        %1511 = vst.msk [vmem:[#allocation3 + $0x458] sm:$0xff] %vm305, %v1479
        %1512 = vst.msk [vmem:[#allocation3 + $0x480] sm:$0xff] %vm305, %v1480
        %1513 = vst.msk [vmem:[#allocation3 + $0x4a8] sm:$0xff] %vm305, %v1481
        %1514 = vst.msk [vmem:[#allocation3 + $0x4d0] sm:$0xff] %vm305, %v1482
        %1515 = vst.msk [vmem:[#allocation3 + $0x4f8] sm:$0xff] %vm305, %v1483
        %v1516 = vld [vmem:[#allocation3] sm:$0xff]
        %v1517 = vld [vmem:[#allocation3 + $0x8] sm:$0xff]
        %v1518 = vld [vmem:[#allocation3 + $0x10] sm:$0xff]
        %v1519 = vld [vmem:[#allocation3 + $0x18] sm:$0xff]
        %v1520 = vld [vmem:[#allocation3 + $0x20] sm:$0xff]
        %v1521 = vld [vmem:[#allocation3 + $0x28] sm:$0xff]
        %v1522 = vld [vmem:[#allocation3 + $0x30] sm:$0xff]
        %v1523 = vld [vmem:[#allocation3 + $0x38] sm:$0xff]
        %v1524 = vld [vmem:[#allocation3 + $0x40] sm:$0xff]
        %v1525 = vld [vmem:[#allocation3 + $0x48] sm:$0xff]
        %v1526 = vld [vmem:[#allocation3 + $0x50] sm:$0xff]
        %v1527 = vld [vmem:[#allocation3 + $0x58] sm:$0xff]
        %v1528 = vld [vmem:[#allocation3 + $0x60] sm:$0xff]
        %v1529 = vld [vmem:[#allocation3 + $0x68] sm:$0xff]
        %v1530 = vld [vmem:[#allocation3 + $0x70] sm:$0xff]
        %v1531 = vld [vmem:[#allocation3 + $0x78] sm:$0xff]
        %v1532 = vld [vmem:[#allocation3 + $0x80] sm:$0xff]
        %v1533 = vld [vmem:[#allocation3 + $0x88] sm:$0xff]
        %v1534 = vld [vmem:[#allocation3 + $0x90] sm:$0xff]
        %v1535 = vld [vmem:[#allocation3 + $0x98] sm:$0xff]
        %v1536 = vld [vmem:[#allocation3 + $0xa0] sm:$0xff]
        %v1537 = vld [vmem:[#allocation3 + $0xa8] sm:$0xff]
        %v1538 = vld [vmem:[#allocation3 + $0xb0] sm:$0xff]
        %v1539 = vld [vmem:[#allocation3 + $0xb8] sm:$0xff]
        %v1540 = vld [vmem:[#allocation3 + $0xc0] sm:$0xff]
        %v1541 = vld [vmem:[#allocation3 + $0xc8] sm:$0xff]
        %v1542 = vld [vmem:[#allocation3 + $0xd0] sm:$0xff]
        %v1543 = vld [vmem:[#allocation3 + $0xd8] sm:$0xff]
        %v1544 = vld [vmem:[#allocation3 + $0xe0] sm:$0xff]
        %v1545 = vld [vmem:[#allocation3 + $0xe8] sm:$0xff]
        %v1546 = vld [vmem:[#allocation3 + $0xf0] sm:$0xff]
        %v1547 = vld [vmem:[#allocation3 + $0xf8] sm:$0xff]
        %v1548 = vld [vmem:[#allocation3 + $0x100] sm:$0xff]
        %v1549 = vld [vmem:[#allocation3 + $0x108] sm:$0xff]
        %v1550 = vld [vmem:[#allocation3 + $0x110] sm:$0xff]
        %v1551 = vld [vmem:[#allocation3 + $0x118] sm:$0xff]
        %v1552 = vld [vmem:[#allocation3 + $0x120] sm:$0xff]
        %v1553 = vld [vmem:[#allocation3 + $0x128] sm:$0xff]
        %v1554 = vld [vmem:[#allocation3 + $0x130] sm:$0xff]
        %v1555 = vld [vmem:[#allocation3 + $0x138] sm:$0xff]
        %v1556 = vld [vmem:[#allocation3 + $0x140] sm:$0xff]
        %v1557 = vld [vmem:[#allocation3 + $0x148] sm:$0xff]
        %v1558 = vld [vmem:[#allocation3 + $0x150] sm:$0xff]
        %v1559 = vld [vmem:[#allocation3 + $0x158] sm:$0xff]
        %v1560 = vld [vmem:[#allocation3 + $0x160] sm:$0xff]
        %v1561 = vld [vmem:[#allocation3 + $0x168] sm:$0xff]
        %v1562 = vld [vmem:[#allocation3 + $0x170] sm:$0xff]
        %v1563 = vld [vmem:[#allocation3 + $0x178] sm:$0xff]
        %v1564 = vld [vmem:[#allocation3 + $0x180] sm:$0xff]
        %v1565 = vld [vmem:[#allocation3 + $0x188] sm:$0xff]
        %v1566 = vld [vmem:[#allocation3 + $0x190] sm:$0xff]
        %v1567 = vld [vmem:[#allocation3 + $0x198] sm:$0xff]
        %v1568 = vld [vmem:[#allocation3 + $0x1a0] sm:$0xff]
        %v1569 = vld [vmem:[#allocation3 + $0x1a8] sm:$0xff]
        %v1570 = vld [vmem:[#allocation3 + $0x1b0] sm:$0xff]
        %v1571 = vld [vmem:[#allocation3 + $0x1b8] sm:$0xff]
        %v1572 = vld [vmem:[#allocation3 + $0x1c0] sm:$0xff]
        %v1573 = vld [vmem:[#allocation3 + $0x1c8] sm:$0xff]
        %v1574 = vld [vmem:[#allocation3 + $0x1d0] sm:$0xff]
        %v1575 = vld [vmem:[#allocation3 + $0x1d8] sm:$0xff]
        %v1576 = vld [vmem:[#allocation3 + $0x1e0] sm:$0xff]
        %v1577 = vld [vmem:[#allocation3 + $0x1e8] sm:$0xff]
        %v1578 = vld [vmem:[#allocation3 + $0x1f0] sm:$0xff]
        %v1579 = vld [vmem:[#allocation3 + $0x1f8] sm:$0xff]
        %v1580 = vld [vmem:[#allocation3 + $0x200] sm:$0xff]
        %v1581 = vld [vmem:[#allocation3 + $0x208] sm:$0xff]
        %v1582 = vld [vmem:[#allocation3 + $0x210] sm:$0xff]
        %v1583 = vld [vmem:[#allocation3 + $0x218] sm:$0xff]
        %v1584 = vld [vmem:[#allocation3 + $0x220] sm:$0xff]
        %v1585 = vld [vmem:[#allocation3 + $0x228] sm:$0xff]
        %v1586 = vld [vmem:[#allocation3 + $0x230] sm:$0xff]
        %v1587 = vld [vmem:[#allocation3 + $0x238] sm:$0xff]
        %v1588 = vld [vmem:[#allocation3 + $0x240] sm:$0xff]
        %v1589 = vld [vmem:[#allocation3 + $0x248] sm:$0xff]
        %v1590 = vld [vmem:[#allocation3 + $0x250] sm:$0xff]
        %v1591 = vld [vmem:[#allocation3 + $0x258] sm:$0xff]
        %v1592 = vld [vmem:[#allocation3 + $0x260] sm:$0xff]
        %v1593 = vld [vmem:[#allocation3 + $0x268] sm:$0xff]
        %v1594 = vld [vmem:[#allocation3 + $0x270] sm:$0xff]
        %v1595 = vld [vmem:[#allocation3 + $0x278] sm:$0xff]
        %v1596 = vld [vmem:[#allocation3 + $0x280] sm:$0xff]
        %v1597 = vld [vmem:[#allocation3 + $0x288] sm:$0xff]
        %v1598 = vld [vmem:[#allocation3 + $0x290] sm:$0xff]
        %v1599 = vld [vmem:[#allocation3 + $0x298] sm:$0xff]
        %v1600 = vld [vmem:[#allocation3 + $0x2a0] sm:$0xff]
        %v1601 = vld [vmem:[#allocation3 + $0x2a8] sm:$0xff]
        %v1602 = vld [vmem:[#allocation3 + $0x2b0] sm:$0xff]
        %v1603 = vld [vmem:[#allocation3 + $0x2b8] sm:$0xff]
        %v1604 = vld [vmem:[#allocation3 + $0x2c0] sm:$0xff]
        %v1605 = vld [vmem:[#allocation3 + $0x2c8] sm:$0xff]
        %v1606 = vld [vmem:[#allocation3 + $0x2d0] sm:$0xff]
        %v1607 = vld [vmem:[#allocation3 + $0x2d8] sm:$0xff]
        %v1608 = vld [vmem:[#allocation3 + $0x2e0] sm:$0xff]
        %v1609 = vld [vmem:[#allocation3 + $0x2e8] sm:$0xff]
        %v1610 = vld [vmem:[#allocation3 + $0x2f0] sm:$0xff]
        %v1611 = vld [vmem:[#allocation3 + $0x2f8] sm:$0xff]
        %v1612 = vld [vmem:[#allocation3 + $0x300] sm:$0xff]
        %v1613 = vld [vmem:[#allocation3 + $0x308] sm:$0xff]
        %v1614 = vld [vmem:[#allocation3 + $0x310] sm:$0xff]
        %v1615 = vld [vmem:[#allocation3 + $0x318] sm:$0xff]
        %v1616 = vld [vmem:[#allocation3 + $0x320] sm:$0xff]
        %v1617 = vld [vmem:[#allocation3 + $0x328] sm:$0xff]
        %v1618 = vld [vmem:[#allocation3 + $0x330] sm:$0xff]
        %v1619 = vld [vmem:[#allocation3 + $0x338] sm:$0xff]
        %v1620 = vld [vmem:[#allocation3 + $0x340] sm:$0xff]
        %v1621 = vld [vmem:[#allocation3 + $0x348] sm:$0xff]
        %v1622 = vld [vmem:[#allocation3 + $0x350] sm:$0xff]
        %v1623 = vld [vmem:[#allocation3 + $0x358] sm:$0xff]
        %v1624 = vld [vmem:[#allocation3 + $0x360] sm:$0xff]
        %v1625 = vld [vmem:[#allocation3 + $0x368] sm:$0xff]
        %v1626 = vld [vmem:[#allocation3 + $0x370] sm:$0xff]
        %v1627 = vld [vmem:[#allocation3 + $0x378] sm:$0xff]
        %v1628 = vld [vmem:[#allocation3 + $0x380] sm:$0xff]
        %v1629 = vld [vmem:[#allocation3 + $0x388] sm:$0xff]
        %v1630 = vld [vmem:[#allocation3 + $0x390] sm:$0xff]
        %v1631 = vld [vmem:[#allocation3 + $0x398] sm:$0xff]
        %v1632 = vld [vmem:[#allocation3 + $0x3a0] sm:$0xff]
        %v1633 = vld [vmem:[#allocation3 + $0x3a8] sm:$0xff]
        %v1634 = vld [vmem:[#allocation3 + $0x3b0] sm:$0xff]
        %v1635 = vld [vmem:[#allocation3 + $0x3b8] sm:$0xff]
        %v1636 = vld [vmem:[#allocation3 + $0x3c0] sm:$0xff]
        %v1637 = vld [vmem:[#allocation3 + $0x3c8] sm:$0xff]
        %v1638 = vld [vmem:[#allocation3 + $0x3d0] sm:$0xff]
        %v1639 = vld [vmem:[#allocation3 + $0x3d8] sm:$0xff]
        %v1640 = vld [vmem:[#allocation3 + $0x3e0] sm:$0xff]
        %v1641 = vld [vmem:[#allocation3 + $0x3e8] sm:$0xff]
        %v1642 = vld [vmem:[#allocation3 + $0x3f0] sm:$0xff]
        %v1643 = vld [vmem:[#allocation3 + $0x3f8] sm:$0xff]
        %v1644 = vld [vmem:[#allocation3 + $0x400] sm:$0xff]
        %v1645 = vld [vmem:[#allocation3 + $0x408] sm:$0xff]
        %v1646 = vld [vmem:[#allocation3 + $0x410] sm:$0xff]
        %v1647 = vld [vmem:[#allocation3 + $0x418] sm:$0xff]
        %v1648 = vld [vmem:[#allocation3 + $0x420] sm:$0xff]
        %v1649 = vld [vmem:[#allocation3 + $0x428] sm:$0xff]
        %v1650 = vld [vmem:[#allocation3 + $0x430] sm:$0xff]
        %v1651 = vld [vmem:[#allocation3 + $0x438] sm:$0xff]
        %v1652 = vld [vmem:[#allocation3 + $0x440] sm:$0xff]
        %v1653 = vld [vmem:[#allocation3 + $0x448] sm:$0xff]
        %v1654 = vld [vmem:[#allocation3 + $0x450] sm:$0xff]
        %v1655 = vld [vmem:[#allocation3 + $0x458] sm:$0xff]
        %v1656 = vld [vmem:[#allocation3 + $0x460] sm:$0xff]
        %v1657 = vld [vmem:[#allocation3 + $0x468] sm:$0xff]
        %v1658 = vld [vmem:[#allocation3 + $0x470] sm:$0xff]
        %v1659 = vld [vmem:[#allocation3 + $0x478] sm:$0xff]
        %v1660 = vld [vmem:[#allocation3 + $0x480] sm:$0xff]
        %v1661 = vld [vmem:[#allocation3 + $0x488] sm:$0xff]
        %v1662 = vld [vmem:[#allocation3 + $0x490] sm:$0xff]
        %v1663 = vld [vmem:[#allocation3 + $0x498] sm:$0xff]
        %v1664 = vld [vmem:[#allocation3 + $0x4a0] sm:$0xff]
        %v1665 = vld [vmem:[#allocation3 + $0x4a8] sm:$0xff]
        %v1666 = vld [vmem:[#allocation3 + $0x4b0] sm:$0xff]
        %v1667 = vld [vmem:[#allocation3 + $0x4b8] sm:$0xff]
        %v1668 = vld [vmem:[#allocation3 + $0x4c0] sm:$0xff]
        %v1669 = vld [vmem:[#allocation3 + $0x4c8] sm:$0xff]
        %v1670 = vld [vmem:[#allocation3 + $0x4d0] sm:$0xff]
        %v1671 = vld [vmem:[#allocation3 + $0x4d8] sm:$0xff]
        %v1672 = vld [vmem:[#allocation3 + $0x4e0] sm:$0xff]
        %v1673 = vld [vmem:[#allocation3 + $0x4e8] sm:$0xff]
        %v1674 = vld [vmem:[#allocation3 + $0x4f0] sm:$0xff]
        %v1675 = vld [vmem:[#allocation3 + $0x4f8] sm:$0xff]
        %v1676 = vpack.c.bf16 %v1521, %v1516
        %v1677 = vpack.c.bf16 %v1522, %v1517
        %v1678 = vpack.c.bf16 %v1523, %v1518
        %v1679 = vpack.c.bf16 %v1524, %v1519
        %v1680 = vpack.c.bf16 %v1525, %v1520
        %v1681 = vpack.c.bf16 %v1531, %v1526
        %v1682 = vpack.c.bf16 %v1532, %v1527
        %v1683 = vpack.c.bf16 %v1533, %v1528
        %v1684 = vpack.c.bf16 %v1534, %v1529
        %v1685 = vpack.c.bf16 %v1535, %v1530
        %v1686 = vpack.c.bf16 %v1541, %v1536
        %v1687 = vpack.c.bf16 %v1542, %v1537
        %v1688 = vpack.c.bf16 %v1543, %v1538
        %v1689 = vpack.c.bf16 %v1544, %v1539
        %v1690 = vpack.c.bf16 %v1545, %v1540
        %v1691 = vpack.c.bf16 %v1551, %v1546
        %v1692 = vpack.c.bf16 %v1552, %v1547
        %v1693 = vpack.c.bf16 %v1553, %v1548
        %v1694 = vpack.c.bf16 %v1554, %v1549
        %v1695 = vpack.c.bf16 %v1555, %v1550
        %v1696 = vpack.c.bf16 %v1561, %v1556
        %v1697 = vpack.c.bf16 %v1562, %v1557
        %v1698 = vpack.c.bf16 %v1563, %v1558
        %v1699 = vpack.c.bf16 %v1564, %v1559
        %v1700 = vpack.c.bf16 %v1565, %v1560
        %v1701 = vpack.c.bf16 %v1571, %v1566
        %v1702 = vpack.c.bf16 %v1572, %v1567
        %v1703 = vpack.c.bf16 %v1573, %v1568
        %v1704 = vpack.c.bf16 %v1574, %v1569
        %v1705 = vpack.c.bf16 %v1575, %v1570
        %v1706 = vpack.c.bf16 %v1581, %v1576
        %v1707 = vpack.c.bf16 %v1582, %v1577
        %v1708 = vpack.c.bf16 %v1583, %v1578
        %v1709 = vpack.c.bf16 %v1584, %v1579
        %v1710 = vpack.c.bf16 %v1585, %v1580
        %v1711 = vpack.c.bf16 %v1591, %v1586
        %v1712 = vpack.c.bf16 %v1592, %v1587
        %v1713 = vpack.c.bf16 %v1593, %v1588
        %v1714 = vpack.c.bf16 %v1594, %v1589
        %v1715 = vpack.c.bf16 %v1595, %v1590
        %v1716 = vpack.c.bf16 %v1601, %v1596
        %v1717 = vpack.c.bf16 %v1602, %v1597
        %v1718 = vpack.c.bf16 %v1603, %v1598
        %v1719 = vpack.c.bf16 %v1604, %v1599
        %v1720 = vpack.c.bf16 %v1605, %v1600
        %v1721 = vpack.c.bf16 %v1611, %v1606
        %v1722 = vpack.c.bf16 %v1612, %v1607
        %v1723 = vpack.c.bf16 %v1613, %v1608
        %v1724 = vpack.c.bf16 %v1614, %v1609
        %v1725 = vpack.c.bf16 %v1615, %v1610
        %v1726 = vpack.c.bf16 %v1621, %v1616
        %v1727 = vpack.c.bf16 %v1622, %v1617
        %v1728 = vpack.c.bf16 %v1623, %v1618
        %v1729 = vpack.c.bf16 %v1624, %v1619
        %v1730 = vpack.c.bf16 %v1625, %v1620
        %v1731 = vpack.c.bf16 %v1631, %v1626
        %v1732 = vpack.c.bf16 %v1632, %v1627
        %v1733 = vpack.c.bf16 %v1633, %v1628
        %v1734 = vpack.c.bf16 %v1634, %v1629
        %v1735 = vpack.c.bf16 %v1635, %v1630
        %v1736 = vpack.c.bf16 %v1641, %v1636
        %v1737 = vpack.c.bf16 %v1642, %v1637
        %v1738 = vpack.c.bf16 %v1643, %v1638
        %v1739 = vpack.c.bf16 %v1644, %v1639
        %v1740 = vpack.c.bf16 %v1645, %v1640
        %v1741 = vpack.c.bf16 %v1651, %v1646
        %v1742 = vpack.c.bf16 %v1652, %v1647
        %v1743 = vpack.c.bf16 %v1653, %v1648
        %v1744 = vpack.c.bf16 %v1654, %v1649
        %v1745 = vpack.c.bf16 %v1655, %v1650
        %v1746 = vpack.c.bf16 %v1661, %v1656
        %v1747 = vpack.c.bf16 %v1662, %v1657
        %v1748 = vpack.c.bf16 %v1663, %v1658
        %v1749 = vpack.c.bf16 %v1664, %v1659
        %v1750 = vpack.c.bf16 %v1665, %v1660
        %v1751 = vpack.c.bf16 %v1671, %v1666
        %v1752 = vpack.c.bf16 %v1672, %v1667
        %v1753 = vpack.c.bf16 %v1673, %v1668
        %v1754 = vpack.c.bf16 %v1674, %v1669
        %v1755 = vpack.c.bf16 %v1675, %v1670
        %v1756 = vld [vmem:[%s1] sm:$0xf]
        %v1757 = vld [vmem:[%s1 + $0x4] sm:$0xf]
        %v1758 = vld [vmem:[%s1 + $0x8] sm:$0xf]
        %v1759 = vld [vmem:[%s1 + $0xc] sm:$0xf]
        %v1760 = vld [vmem:[%s1 + $0x10] sm:$0xf]
        %v1761 = vld [vmem:[%s1 + $0x14] sm:$0xf]
        %v1762 = vld [vmem:[%s1 + $0x18] sm:$0xf]
        %v1763 = vld [vmem:[%s1 + $0x1c] sm:$0xf]
        %v1764 = vld [vmem:[%s1 + $0x20] sm:$0xf]
        %v1765 = vld [vmem:[%s1 + $0x24] sm:$0xf]
        %v1766 = vld [vmem:[%s1 + $0x28] sm:$0xf]
        %v1767 = vld [vmem:[%s1 + $0x2c] sm:$0xf]
        %v1768 = vld [vmem:[%s1 + $0x30] sm:$0xf]
        %v1769 = vld [vmem:[%s1 + $0x34] sm:$0xf]
        %v1770 = vld [vmem:[%s1 + $0x38] sm:$0xf]
        %v1771 = vld [vmem:[%s1 + $0x3c] sm:$0xf]
        %v1772 = vld [vmem:[%s1 + $0x40] sm:$0xf]
        %v1773 = vld [vmem:[%s1 + $0x44] sm:$0xf]
        %v1774 = vld [vmem:[%s1 + $0x48] sm:$0xf]
        %v1775 = vld [vmem:[%s1 + $0x4c] sm:$0xf]
        %v1776 = vld [vmem:[%s1 + $0x50] sm:$0xf]
        %v1777 = vld [vmem:[%s1 + $0x54] sm:$0xf]
        %v1778 = vld [vmem:[%s1 + $0x58] sm:$0xf]
        %v1779 = vld [vmem:[%s1 + $0x5c] sm:$0xf]
        %v1780 = vld [vmem:[%s1 + $0x60] sm:$0xf]
        %v1781 = vld [vmem:[%s1 + $0x64] sm:$0xf]
        %v1782 = vld [vmem:[%s1 + $0x68] sm:$0xf]
        %v1783 = vld [vmem:[%s1 + $0x6c] sm:$0xf]
        %v1784 = vld [vmem:[%s1 + $0x70] sm:$0xf]
        %v1785 = vld [vmem:[%s1 + $0x74] sm:$0xf]
        %v1786 = vld [vmem:[%s1 + $0x78] sm:$0xf]
        %v1787 = vld [vmem:[%s1 + $0x7c] sm:$0xf]
        %v1788 = vld [vmem:[%s1 + $0x80] sm:$0xf]
        %v1789 = vld [vmem:[%s1 + $0x84] sm:$0xf]
        %v1790 = vld [vmem:[%s1 + $0x88] sm:$0xf]
        %v1791 = vld [vmem:[%s1 + $0x8c] sm:$0xf]
        %v1792 = vld [vmem:[%s1 + $0x90] sm:$0xf]
        %v1793 = vld [vmem:[%s1 + $0x94] sm:$0xf]
        %v1794 = vld [vmem:[%s1 + $0x98] sm:$0xf]
        %v1795 = vld [vmem:[%s1 + $0x9c] sm:$0xf]
        %v1796 = vld [vmem:[%s1 + $0xa0] sm:$0xf]
        %v1797 = vld [vmem:[%s1 + $0xa4] sm:$0xf]
        %v1798 = vld [vmem:[%s1 + $0xa8] sm:$0xf]
        %v1799 = vld [vmem:[%s1 + $0xac] sm:$0xf]
        %v1800 = vld [vmem:[%s1 + $0xb0] sm:$0xf]
        %v1801 = vld [vmem:[%s1 + $0xb4] sm:$0xf]
        %v1802 = vld [vmem:[%s1 + $0xb8] sm:$0xf]
        %v1803 = vld [vmem:[%s1 + $0xbc] sm:$0xf]
        %v1804 = vld [vmem:[%s1 + $0xc0] sm:$0xf]
        %v1805 = vld [vmem:[%s1 + $0xc4] sm:$0xf]
        %v1806 = vld [vmem:[%s1 + $0xc8] sm:$0xf]
        %v1807 = vld [vmem:[%s1 + $0xcc] sm:$0xf]
        %v1808 = vld [vmem:[%s1 + $0xd0] sm:$0xf]
        %v1809 = vld [vmem:[%s1 + $0xd4] sm:$0xf]
        %v1810 = vld [vmem:[%s1 + $0xd8] sm:$0xf]
        %v1811 = vld [vmem:[%s1 + $0xdc] sm:$0xf]
        %v1812 = vld [vmem:[%s1 + $0xe0] sm:$0xf]
        %v1813 = vld [vmem:[%s1 + $0xe4] sm:$0xf]
        %v1814 = vld [vmem:[%s1 + $0xe8] sm:$0xf]
        %v1815 = vld [vmem:[%s1 + $0xec] sm:$0xf]
        %v1816 = vld [vmem:[%s1 + $0xf0] sm:$0xf]
        %v1817 = vld [vmem:[%s1 + $0xf4] sm:$0xf]
        %v1818 = vld [vmem:[%s1 + $0xf8] sm:$0xf]
        %v1819 = vld [vmem:[%s1 + $0xfc] sm:$0xf]
        %v1820 = vld [vmem:[%s1 + $0x100] sm:$0xf]
        %v1821 = vld [vmem:[%s1 + $0x104] sm:$0xf]
        %v1822 = vld [vmem:[%s1 + $0x108] sm:$0xf]
        %v1823 = vld [vmem:[%s1 + $0x10c] sm:$0xf]
        %v1824 = vld [vmem:[%s1 + $0x110] sm:$0xf]
        %v1825 = vld [vmem:[%s1 + $0x114] sm:$0xf]
        %v1826 = vld [vmem:[%s1 + $0x118] sm:$0xf]
        %v1827 = vld [vmem:[%s1 + $0x11c] sm:$0xf]
        %v1828 = vld [vmem:[%s2] sm:$0x1]
        %v1830 = vlaneseq
        %v1831 = vshrl.u32 %v1830, 7
        %v1832 = vsub.s32 0, %v1831
        %v1833 = vrot.slane %v1828, %v1832
        %v1907 = vunpack.c.l.b16 %v1756
        %v1908 = vunpack.c.l.b16 %v1757
        %v1909 = vunpack.c.l.b16 %v1758
        %v1910 = vunpack.c.l.b16 %v1759
        %v1911 = vunpack.c.l.b16 %v1760
        %v1912 = vunpack.c.l.b16 %v1761
        %v1913 = vunpack.c.l.b16 %v1762
        %v1914 = vunpack.c.l.b16 %v1763
        %v1915 = vunpack.c.l.b16 %v1764
        %v1916 = vunpack.c.l.b16 %v1765
        %v1917 = vunpack.c.l.b16 %v1766
        %v1918 = vunpack.c.l.b16 %v1767
        %v1919 = vunpack.c.l.b16 %v1768
        %v1920 = vunpack.c.l.b16 %v1769
        %v1921 = vunpack.c.l.b16 %v1770
        %v1922 = vunpack.c.l.b16 %v1771
        %v1923 = vunpack.c.l.b16 %v1772
        %v1924 = vunpack.c.l.b16 %v1773
        %v1925 = vunpack.c.l.b16 %v1774
        %v1926 = vunpack.c.l.b16 %v1775
        %v1927 = vunpack.c.l.b16 %v1776
        %v1928 = vunpack.c.l.b16 %v1777
        %v1929 = vunpack.c.l.b16 %v1778
        %v1930 = vunpack.c.l.b16 %v1779
        %v1931 = vunpack.c.l.b16 %v1780
        %v1932 = vunpack.c.l.b16 %v1781
        %v1933 = vunpack.c.l.b16 %v1782
        %v1934 = vunpack.c.l.b16 %v1783
        %v1935 = vunpack.c.l.b16 %v1784
        %v1936 = vunpack.c.l.b16 %v1785
        %v1937 = vunpack.c.l.b16 %v1786
        %v1938 = vunpack.c.l.b16 %v1787
        %v1939 = vunpack.c.l.b16 %v1788
        %v1940 = vunpack.c.l.b16 %v1789
        %v1941 = vunpack.c.l.b16 %v1790
        %v1942 = vunpack.c.l.b16 %v1791
        %v1943 = vunpack.c.l.b16 %v1792
        %v1944 = vunpack.c.l.b16 %v1793
        %v1945 = vunpack.c.l.b16 %v1794
        %v1946 = vunpack.c.l.b16 %v1795
        %v1947 = vunpack.c.l.b16 %v1796
        %v1948 = vunpack.c.l.b16 %v1797
        %v1949 = vunpack.c.l.b16 %v1798
        %v1950 = vunpack.c.l.b16 %v1799
        %v1951 = vunpack.c.l.b16 %v1800
        %v1952 = vunpack.c.l.b16 %v1801
        %v1953 = vunpack.c.l.b16 %v1802
        %v1954 = vunpack.c.l.b16 %v1803
        %v1955 = vunpack.c.l.b16 %v1804
        %v1956 = vunpack.c.l.b16 %v1805
        %v1957 = vunpack.c.l.b16 %v1806
        %v1958 = vunpack.c.l.b16 %v1807
        %v1959 = vunpack.c.l.b16 %v1808
        %v1960 = vunpack.c.l.b16 %v1809
        %v1961 = vunpack.c.l.b16 %v1810
        %v1962 = vunpack.c.l.b16 %v1811
        %v1963 = vunpack.c.l.b16 %v1812
        %v1964 = vunpack.c.l.b16 %v1813
        %v1965 = vunpack.c.l.b16 %v1814
        %v1966 = vunpack.c.l.b16 %v1815
        %v1967 = vunpack.c.l.b16 %v1816
        %v1968 = vunpack.c.l.b16 %v1817
        %v1969 = vunpack.c.l.b16 %v1818
        %v1970 = vunpack.c.l.b16 %v1819
        %v1971 = vunpack.c.l.b16 %v1820
        %v1972 = vunpack.c.l.b16 %v1821
        %v1973 = vunpack.c.l.b16 %v1822
        %v1974 = vunpack.c.l.b16 %v1823
        %v1975 = vunpack.c.l.b16 %v1824
        %v1976 = vunpack.c.l.b16 %v1825
        %v1977 = vunpack.c.l.b16 %v1826
        %v1978 = vunpack.c.l.b16 %v1827
        %v1979 = vpack.c.b16 %v1908, %v1907
        %v1980 = vpack.c.b16 %v1910, %v1909
        %v1981 = vpack.c.b16 %v1912, %v1911
        %v1982 = vpack.c.b16 %v1914, %v1913
        %v1983 = vpack.c.b16 %v1916, %v1915
        %v1984 = vpack.c.b16 %v1918, %v1917
        %v1985 = vpack.c.b16 %v1920, %v1919
        %v1986 = vpack.c.b16 %v1922, %v1921
        %v1987 = vpack.c.b16 %v1924, %v1923
        %v1988 = vpack.c.b16 %v1926, %v1925
        %v1989 = vpack.c.b16 %v1928, %v1927
        %v1990 = vpack.c.b16 %v1930, %v1929
        %v1991 = vpack.c.b16 %v1932, %v1931
        %v1992 = vpack.c.b16 %v1934, %v1933
        %v1993 = vpack.c.b16 %v1936, %v1935
        %v1994 = vpack.c.b16 %v1938, %v1937
        %v1995 = vpack.c.b16 %v1940, %v1939
        %v1996 = vpack.c.b16 %v1942, %v1941
        %v1997 = vpack.c.b16 %v1944, %v1943
        %v1998 = vpack.c.b16 %v1946, %v1945
        %v1999 = vpack.c.b16 %v1948, %v1947
        %v2000 = vpack.c.b16 %v1950, %v1949
        %v2001 = vpack.c.b16 %v1952, %v1951
        %v2002 = vpack.c.b16 %v1954, %v1953
        %v2003 = vpack.c.b16 %v1956, %v1955
        %v2004 = vpack.c.b16 %v1958, %v1957
        %v2005 = vpack.c.b16 %v1960, %v1959
        %v2006 = vpack.c.b16 %v1962, %v1961
        %v2007 = vpack.c.b16 %v1964, %v1963
        %v2008 = vpack.c.b16 %v1966, %v1965
        %v2009 = vpack.c.b16 %v1968, %v1967
        %v2010 = vpack.c.b16 %v1970, %v1969
        %v2011 = vpack.c.b16 %v1972, %v1971
        %v2012 = vpack.c.b16 %v1974, %v1973
        %v2013 = vpack.c.b16 %v1976, %v1975
        %v2014 = vpack.c.b16 %v1978, %v1977
        %v2052 = vsel %vm305, %v1680, 0
        %v2055 = vsel %vm305, %v1685, 0
        %v2058 = vsel %vm305, %v1690, 0
        %v2061 = vsel %vm305, %v1695, 0
        %v2064 = vsel %vm305, %v1700, 0
        %v2067 = vsel %vm305, %v1705, 0
        %v2070 = vsel %vm305, %v1710, 0
        %v2073 = vsel %vm305, %v1715, 0
        %v2076 = vsel %vm305, %v1720, 0
        %v2079 = vsel %vm305, %v1725, 0
        %v2082 = vsel %vm305, %v1730, 0
        %v2085 = vsel %vm305, %v1735, 0
        %v2088 = vsel %vm305, %v1740, 0
        %v2091 = vsel %vm305, %v1745, 0
        %v2094 = vsel %vm305, %v1750, 0
        %v2097 = vsel %vm305, %v1755, 0
        %2099 = vmatprep.subr.bf16.mxu0 0
        %2100 = vmatpush1.bf16.msra.mxu0 %v1979
        %2101 = vmatprep.subr.bf16.mxu0 0
        %2102 = vmatpush1.bf16.msra.mxu0 %v1980
        %2103 = vmatprep.subr.bf16.mxu0 0
        %2104 = vmatpush1.bf16.msra.mxu0 %v1981
        %2105 = vmatprep.subr.bf16.mxu0 0
        %2106 = vmatpush1.bf16.msra.mxu0 %v1982
        %2107 = vmatprep.subr.bf16.mxu0 0
        %2108 = vmatpush1.bf16.msra.mxu0 %v1983
        %2109 = vmatprep.subr.bf16.mxu0 0
        %2110 = vmatpush1.bf16.msra.mxu0 %v1984
        %2111 = vmatprep.subr.bf16.mxu0 0
        %2112 = vmatpush1.bf16.msra.mxu0 %v1985
        %2113 = vmatprep.subr.bf16.mxu0 0
        %2114 = vmatpush1.bf16.msra.mxu0 %v1986
        %2115 = vmatprep.subr.bf16.mxu0 0
        %2116 = vmatpush1.bf16.msra.mxu0 %v1987
        %2117 = vmatprep.subr.bf16.mxu0 0
        %2118 = vmatpush1.bf16.msra.mxu0 %v1988
        %2119 = vmatprep.subr.bf16.mxu0 0
        %2120 = vmatpush1.bf16.msra.mxu0 %v1989
        %2121 = vmatprep.subr.bf16.mxu0 0
        %2122 = vmatpush1.bf16.msra.mxu0 %v1990
        %2123 = vmatprep.subr.bf16.mxu0 0
        %2124 = vmatpush1.bf16.msra.mxu0 %v1991
        %2125 = vmatprep.subr.bf16.mxu0 0
        %2126 = vmatpush1.bf16.msra.mxu0 %v1992
        %2127 = vmatprep.subr.bf16.mxu0 0
        %2128 = vmatpush1.bf16.msra.mxu0 %v1993
        %2129 = vmatprep.subr.bf16.mxu0 0
        %2130 = vmatpush1.bf16.msra.mxu0 %v1994
        %2131 = vmatprep.mubr.bf16.mxu0 %v1677
        %2132 = vmatmul.mubr.bf16.gmra.mrb[0].mxu0 %v1676
        %v2133 = vpop.f32.mrb[0].mxu0
        %v2134 = vadd.f32 %v1833, %v2133
        %v2135 = vpop.f32.mrb[0].mxu0
        %v2136 = vpop.f32.mrb[0].mxu0
        %v2137 = vadd.f32 %v1833, %v2136
        %v2138 = vpop.f32.mrb[0].mxu0
        %2139 = vmatprep.mubr.bf16.mxu0 %v1682
        %2140 = vmatmul.mubr.bf16.gmra.mrb[0].mxu0 %v1681
        %v2141 = vpop.f32.mrb[0].mxu0
        %v2142 = vadd.f32 %v1833, %v2141
        %v2143 = vpop.f32.mrb[0].mxu0
        %v2144 = vpop.f32.mrb[0].mxu0
        %v2145 = vadd.f32 %v1833, %v2144
        %v2146 = vpop.f32.mrb[0].mxu0
        %2147 = vmatprep.mubr.bf16.mxu0 %v1687
        %2148 = vmatmul.mubr.bf16.gmra.mrb[0].mxu0 %v1686
        %v2149 = vpop.f32.mrb[0].mxu0
        %v2150 = vadd.f32 %v1833, %v2149
        %v2151 = vpop.f32.mrb[0].mxu0
        %v2152 = vpop.f32.mrb[0].mxu0
        %v2153 = vadd.f32 %v1833, %v2152
        %v2154 = vpop.f32.mrb[0].mxu0
        %2155 = vmatprep.mubr.bf16.mxu0 %v1692
        %2156 = vmatmul.mubr.bf16.gmra.mrb[0].mxu0 %v1691
        %v2157 = vpop.f32.mrb[0].mxu0
        %v2158 = vadd.f32 %v1833, %v2157
        %v2159 = vpop.f32.mrb[0].mxu0
        %v2160 = vpop.f32.mrb[0].mxu0
        %v2161 = vadd.f32 %v1833, %v2160
        %v2162 = vpop.f32.mrb[0].mxu0
        %2163 = vmatprep.mubr.bf16.mxu0 %v1697
        %2164 = vmatmul.mubr.bf16.gmra.mrb[0].mxu0 %v1696
        %v2165 = vpop.f32.mrb[0].mxu0
        %v2166 = vadd.f32 %v1833, %v2165
        %v2167 = vpop.f32.mrb[0].mxu0
        %v2168 = vpop.f32.mrb[0].mxu0
        %v2169 = vadd.f32 %v1833, %v2168
        %v2170 = vpop.f32.mrb[0].mxu0
        %2171 = vmatprep.mubr.bf16.mxu0 %v1702
        %2172 = vmatmul.mubr.bf16.gmra.mrb[0].mxu0 %v1701
        %v2173 = vpop.f32.mrb[0].mxu0
        %v2174 = vadd.f32 %v1833, %v2173
        %v2175 = vpop.f32.mrb[0].mxu0
        %v2176 = vpop.f32.mrb[0].mxu0
        %v2177 = vadd.f32 %v1833, %v2176
        %v2178 = vpop.f32.mrb[0].mxu0
        %2179 = vmatprep.mubr.bf16.mxu0 %v1707
        %2180 = vmatmul.mubr.bf16.gmra.mrb[0].mxu0 %v1706
        %v2181 = vpop.f32.mrb[0].mxu0
        %v2182 = vadd.f32 %v1833, %v2181
        %v2183 = vpop.f32.mrb[0].mxu0
        %v2184 = vpop.f32.mrb[0].mxu0
        %v2185 = vadd.f32 %v1833, %v2184
        %v2186 = vpop.f32.mrb[0].mxu0
        %2187 = vmatprep.mubr.bf16.mxu0 %v1712
        %2188 = vmatmul.mubr.bf16.gmra.mrb[0].mxu0 %v1711
        %v2189 = vpop.f32.mrb[0].mxu0
        %v2190 = vadd.f32 %v1833, %v2189
        %v2191 = vpop.f32.mrb[0].mxu0
        %v2192 = vpop.f32.mrb[0].mxu0
        %v2193 = vadd.f32 %v1833, %v2192
        %v2194 = vpop.f32.mrb[0].mxu0
        %2195 = vmatprep.mubr.bf16.mxu0 %v1717
        %2196 = vmatmul.mubr.bf16.gmra.mrb[0].mxu0 %v1716
        %v2197 = vpop.f32.mrb[0].mxu0
        %v2198 = vadd.f32 %v1833, %v2197
        %v2199 = vpop.f32.mrb[0].mxu0
        %v2200 = vpop.f32.mrb[0].mxu0
        %v2201 = vadd.f32 %v1833, %v2200
        %v2202 = vpop.f32.mrb[0].mxu0
        %2203 = vmatprep.mubr.bf16.mxu0 %v1722
        %2204 = vmatmul.mubr.bf16.gmra.mrb[0].mxu0 %v1721
        %v2205 = vpop.f32.mrb[0].mxu0
        %v2206 = vadd.f32 %v1833, %v2205
        %v2207 = vpop.f32.mrb[0].mxu0
        %v2208 = vpop.f32.mrb[0].mxu0
        %v2209 = vadd.f32 %v1833, %v2208
        %v2210 = vpop.f32.mrb[0].mxu0
        %2211 = vmatprep.mubr.bf16.mxu0 %v1727
        %2212 = vmatmul.mubr.bf16.gmra.mrb[0].mxu0 %v1726
        %v2213 = vpop.f32.mrb[0].mxu0
        %v2214 = vadd.f32 %v1833, %v2213
        %v2215 = vpop.f32.mrb[0].mxu0
        %v2216 = vpop.f32.mrb[0].mxu0
        %v2217 = vadd.f32 %v1833, %v2216
        %v2218 = vpop.f32.mrb[0].mxu0
        %2219 = vmatprep.mubr.bf16.mxu0 %v1732
        %2220 = vmatmul.mubr.bf16.gmra.mrb[0].mxu0 %v1731
        %v2221 = vpop.f32.mrb[0].mxu0
        %v2222 = vadd.f32 %v1833, %v2221
        %v2223 = vpop.f32.mrb[0].mxu0
        %v2224 = vpop.f32.mrb[0].mxu0
        %v2225 = vadd.f32 %v1833, %v2224
        %v2226 = vpop.f32.mrb[0].mxu0
        %2227 = vmatprep.mubr.bf16.mxu0 %v1737
        %2228 = vmatmul.mubr.bf16.gmra.mrb[0].mxu0 %v1736
        %v2229 = vpop.f32.mrb[0].mxu0
        %v2230 = vadd.f32 %v1833, %v2229
        %v2231 = vpop.f32.mrb[0].mxu0
        %v2232 = vpop.f32.mrb[0].mxu0
        %v2233 = vadd.f32 %v1833, %v2232
        %v2234 = vpop.f32.mrb[0].mxu0
        %2235 = vmatprep.mubr.bf16.mxu0 %v1742
        %2236 = vmatmul.mubr.bf16.gmra.mrb[0].mxu0 %v1741
        %v2237 = vpop.f32.mrb[0].mxu0
        %v2238 = vadd.f32 %v1833, %v2237
        %v2239 = vpop.f32.mrb[0].mxu0
        %v2240 = vpop.f32.mrb[0].mxu0
        %v2241 = vadd.f32 %v1833, %v2240
        %v2242 = vpop.f32.mrb[0].mxu0
        %2243 = vmatprep.mubr.bf16.mxu0 %v1747
        %2244 = vmatmul.mubr.bf16.gmra.mrb[0].mxu0 %v1746
        %v2245 = vpop.f32.mrb[0].mxu0
        %v2246 = vadd.f32 %v1833, %v2245
        %v2247 = vpop.f32.mrb[0].mxu0
        %v2248 = vpop.f32.mrb[0].mxu0
        %v2249 = vadd.f32 %v1833, %v2248
        %v2250 = vpop.f32.mrb[0].mxu0
        %2251 = vmatprep.mubr.bf16.mxu0 %v1752
        %2252 = vmatmul.mubr.bf16.gmra.mrb[0].mxu0 %v1751
        %v2253 = vpop.f32.mrb[0].mxu0
        %v2254 = vadd.f32 %v1833, %v2253
        %v2255 = vpop.f32.mrb[0].mxu0
        %v2256 = vpop.f32.mrb[0].mxu0
        %v2257 = vadd.f32 %v1833, %v2256
        %v2258 = vpop.f32.mrb[0].mxu0
        %2259 = vdwg.mxu0
        %2260 = vmatprep.subr.bf16.mxu0 0
        %2261 = vmatpush1.bf16.msra.mxu0 %v1995
        %2262 = vmatprep.subr.bf16.mxu0 0
        %2263 = vmatpush1.bf16.msra.mxu0 %v1996
        %2264 = vmatprep.subr.bf16.mxu0 0
        %2265 = vmatpush1.bf16.msra.mxu0 %v1997
        %2266 = vmatprep.subr.bf16.mxu0 0
        %2267 = vmatpush1.bf16.msra.mxu0 %v1998
        %2268 = vmatprep.subr.bf16.mxu0 0
        %2269 = vmatpush1.bf16.msra.mxu0 %v1999
        %2270 = vmatprep.subr.bf16.mxu0 0
        %2271 = vmatpush1.bf16.msra.mxu0 %v2000
        %2272 = vmatprep.subr.bf16.mxu0 0
        %2273 = vmatpush1.bf16.msra.mxu0 %v2001
        %2274 = vmatprep.subr.bf16.mxu0 0
        %2275 = vmatpush1.bf16.msra.mxu0 %v2002
        %2276 = vmatprep.subr.bf16.mxu0 0
        %2277 = vmatpush1.bf16.msra.mxu0 %v2003
        %2278 = vmatprep.subr.bf16.mxu0 0
        %2279 = vmatpush1.bf16.msra.mxu0 %v2004
        %2280 = vmatprep.subr.bf16.mxu0 0
        %2281 = vmatpush1.bf16.msra.mxu0 %v2005
        %2282 = vmatprep.subr.bf16.mxu0 0
        %2283 = vmatpush1.bf16.msra.mxu0 %v2006
        %2284 = vmatprep.subr.bf16.mxu0 0
        %2285 = vmatpush1.bf16.msra.mxu0 %v2007
        %2286 = vmatprep.subr.bf16.mxu0 0
        %2287 = vmatpush1.bf16.msra.mxu0 %v2008
        %2288 = vmatprep.subr.bf16.mxu0 0
        %2289 = vmatpush1.bf16.msra.mxu0 %v2009
        %2290 = vmatprep.subr.bf16.mxu0 0
        %2291 = vmatpush1.bf16.msra.mxu0 %v2010
        %2292 = vmatprep.mubr.bf16.mxu0 %v1679
        %2293 = vmatmul.mubr.bf16.gmra.mrb[0].mxu0 %v1678
        %v2294 = vpop.f32.mrb[0].mxu0
        %v2295 = vadd.f32 %v2134, %v2294
        %v2296 = vpop.f32.mrb[0].mxu0
        %v2297 = vpop.f32.mrb[0].mxu0
        %v2298 = vadd.f32 %v2137, %v2297
        %v2299 = vpop.f32.mrb[0].mxu0
        %2300 = vmatprep.mubr.bf16.mxu0 %v1684
        %2301 = vmatmul.mubr.bf16.gmra.mrb[0].mxu0 %v1683
        %v2302 = vpop.f32.mrb[0].mxu0
        %v2303 = vadd.f32 %v2142, %v2302
        %v2304 = vpop.f32.mrb[0].mxu0
        %v2305 = vpop.f32.mrb[0].mxu0
        %v2306 = vadd.f32 %v2145, %v2305
        %v2307 = vpop.f32.mrb[0].mxu0
        %2308 = vmatprep.mubr.bf16.mxu0 %v1689
        %2309 = vmatmul.mubr.bf16.gmra.mrb[0].mxu0 %v1688
        %v2310 = vpop.f32.mrb[0].mxu0
        %v2311 = vadd.f32 %v2150, %v2310
        %v2312 = vpop.f32.mrb[0].mxu0
        %v2313 = vpop.f32.mrb[0].mxu0
        %v2314 = vadd.f32 %v2153, %v2313
        %v2315 = vpop.f32.mrb[0].mxu0
        %2316 = vmatprep.mubr.bf16.mxu0 %v1694
        %2317 = vmatmul.mubr.bf16.gmra.mrb[0].mxu0 %v1693
        %v2318 = vpop.f32.mrb[0].mxu0
        %v2319 = vadd.f32 %v2158, %v2318
        %v2320 = vpop.f32.mrb[0].mxu0
        %v2321 = vpop.f32.mrb[0].mxu0
        %v2322 = vadd.f32 %v2161, %v2321
        %v2323 = vpop.f32.mrb[0].mxu0
        %2324 = vmatprep.mubr.bf16.mxu0 %v1699
        %2325 = vmatmul.mubr.bf16.gmra.mrb[0].mxu0 %v1698
        %v2326 = vpop.f32.mrb[0].mxu0
        %v2327 = vadd.f32 %v2166, %v2326
        %v2328 = vpop.f32.mrb[0].mxu0
        %v2329 = vpop.f32.mrb[0].mxu0
        %v2330 = vadd.f32 %v2169, %v2329
        %v2331 = vpop.f32.mrb[0].mxu0
        %2332 = vmatprep.mubr.bf16.mxu0 %v1704
        %2333 = vmatmul.mubr.bf16.gmra.mrb[0].mxu0 %v1703
        %v2334 = vpop.f32.mrb[0].mxu0
        %v2335 = vadd.f32 %v2174, %v2334
        %v2336 = vpop.f32.mrb[0].mxu0
        %v2337 = vpop.f32.mrb[0].mxu0
        %v2338 = vadd.f32 %v2177, %v2337
        %v2339 = vpop.f32.mrb[0].mxu0
        %2340 = vmatprep.mubr.bf16.mxu0 %v1709
        %2341 = vmatmul.mubr.bf16.gmra.mrb[0].mxu0 %v1708
        %v2342 = vpop.f32.mrb[0].mxu0
        %v2343 = vadd.f32 %v2182, %v2342
        %v2344 = vpop.f32.mrb[0].mxu0
        %v2345 = vpop.f32.mrb[0].mxu0
        %v2346 = vadd.f32 %v2185, %v2345
        %v2347 = vpop.f32.mrb[0].mxu0
        %2348 = vmatprep.mubr.bf16.mxu0 %v1714
        %2349 = vmatmul.mubr.bf16.gmra.mrb[0].mxu0 %v1713
        %v2350 = vpop.f32.mrb[0].mxu0
        %v2351 = vadd.f32 %v2190, %v2350
        %v2352 = vpop.f32.mrb[0].mxu0
        %v2353 = vpop.f32.mrb[0].mxu0
        %v2354 = vadd.f32 %v2193, %v2353
        %v2355 = vpop.f32.mrb[0].mxu0
        %2356 = vmatprep.mubr.bf16.mxu0 %v1719
        %2357 = vmatmul.mubr.bf16.gmra.mrb[0].mxu0 %v1718
        %v2358 = vpop.f32.mrb[0].mxu0
        %v2359 = vadd.f32 %v2198, %v2358
        %v2360 = vpop.f32.mrb[0].mxu0
        %v2361 = vpop.f32.mrb[0].mxu0
        %v2362 = vadd.f32 %v2201, %v2361
        %v2363 = vpop.f32.mrb[0].mxu0
        %2364 = vmatprep.mubr.bf16.mxu0 %v1724
        %2365 = vmatmul.mubr.bf16.gmra.mrb[0].mxu0 %v1723
        %v2366 = vpop.f32.mrb[0].mxu0
        %v2367 = vadd.f32 %v2206, %v2366
        %v2368 = vpop.f32.mrb[0].mxu0
        %v2369 = vpop.f32.mrb[0].mxu0
        %v2370 = vadd.f32 %v2209, %v2369
        %v2371 = vpop.f32.mrb[0].mxu0
        %2372 = vmatprep.mubr.bf16.mxu0 %v1729
        %2373 = vmatmul.mubr.bf16.gmra.mrb[0].mxu0 %v1728
        %v2374 = vpop.f32.mrb[0].mxu0
        %v2375 = vadd.f32 %v2214, %v2374
        %v2376 = vpop.f32.mrb[0].mxu0
        %v2377 = vpop.f32.mrb[0].mxu0
        %v2378 = vadd.f32 %v2217, %v2377
        %v2379 = vpop.f32.mrb[0].mxu0
        %2380 = vmatprep.mubr.bf16.mxu0 %v1734
        %2381 = vmatmul.mubr.bf16.gmra.mrb[0].mxu0 %v1733
        %v2382 = vpop.f32.mrb[0].mxu0
        %v2383 = vadd.f32 %v2222, %v2382
        %v2384 = vpop.f32.mrb[0].mxu0
        %v2385 = vpop.f32.mrb[0].mxu0
        %v2386 = vadd.f32 %v2225, %v2385
        %v2387 = vpop.f32.mrb[0].mxu0
        %2388 = vmatprep.mubr.bf16.mxu0 %v1739
        %2389 = vmatmul.mubr.bf16.gmra.mrb[0].mxu0 %v1738
        %v2390 = vpop.f32.mrb[0].mxu0
        %v2391 = vadd.f32 %v2230, %v2390
        %v2392 = vpop.f32.mrb[0].mxu0
        %v2393 = vpop.f32.mrb[0].mxu0
        %v2394 = vadd.f32 %v2233, %v2393
        %v2395 = vpop.f32.mrb[0].mxu0
        %2396 = vmatprep.mubr.bf16.mxu0 %v1744
        %2397 = vmatmul.mubr.bf16.gmra.mrb[0].mxu0 %v1743
        %v2398 = vpop.f32.mrb[0].mxu0
        %v2399 = vadd.f32 %v2238, %v2398
        %v2400 = vpop.f32.mrb[0].mxu0
        %v2401 = vpop.f32.mrb[0].mxu0
        %v2402 = vadd.f32 %v2241, %v2401
        %v2403 = vpop.f32.mrb[0].mxu0
        %2404 = vmatprep.mubr.bf16.mxu0 %v1749
        %2405 = vmatmul.mubr.bf16.gmra.mrb[0].mxu0 %v1748
        %v2406 = vpop.f32.mrb[0].mxu0
        %v2407 = vadd.f32 %v2246, %v2406
        %v2408 = vpop.f32.mrb[0].mxu0
        %v2409 = vpop.f32.mrb[0].mxu0
        %v2410 = vadd.f32 %v2249, %v2409
        %v2411 = vpop.f32.mrb[0].mxu0
        %2412 = vmatprep.mubr.bf16.mxu0 %v1754
        %2413 = vmatmul.mubr.bf16.gmra.mrb[0].mxu0 %v1753
        %v2414 = vpop.f32.mrb[0].mxu0
        %v2415 = vadd.f32 %v2254, %v2414
        %v2416 = vpop.f32.mrb[0].mxu0
        %v2417 = vpop.f32.mrb[0].mxu0
        %v2418 = vadd.f32 %v2257, %v2417
        %v2419 = vpop.f32.mrb[0].mxu0
        %2420 = vdwg.mxu0
        %2421 = vmatprep.subr.bf16.mxu0 0
        %2422 = vmatpush1.bf16.msra.mxu0 %v2011
        %2423 = vmatprep.subr.bf16.mxu0 0
        %2424 = vmatpush1.bf16.msra.mxu0 %v2012
        %2425 = vmatprep.subr.bf16.mxu0 0
        %2426 = vmatpush1.bf16.msra.mxu0 %v2013
        %2427 = vmatprep.subr.bf16.mxu0 0
        %2428 = vmatpush1.bf16.msra.mxu0 %v2014
        %2429 = vmatprep.subr.bf16.mxu0 0
        %2430 = vmatpush1.bf16.msra.mxu0 0
        %2431 = vmatprep.subr.bf16.mxu0 0
        %2432 = vmatpush1.bf16.msra.mxu0 0
        %2433 = vmatprep.subr.bf16.mxu0 0
        %2434 = vmatpush1.bf16.msra.mxu0 0
        %2435 = vmatprep.subr.bf16.mxu0 0
        %2436 = vmatpush1.bf16.msra.mxu0 0
        %2437 = vmatprep.subr.bf16.mxu0 0
        %2438 = vmatpush1.bf16.msra.mxu0 0
        %2439 = vmatprep.subr.bf16.mxu0 0
        %2440 = vmatpush1.bf16.msra.mxu0 0
        %2441 = vmatprep.subr.bf16.mxu0 0
        %2442 = vmatpush1.bf16.msra.mxu0 0
        %2443 = vmatprep.subr.bf16.mxu0 0
        %2444 = vmatpush1.bf16.msra.mxu0 0
        %2445 = vmatprep.subr.bf16.mxu0 0
        %2446 = vmatpush1.bf16.msra.mxu0 0
        %2447 = vmatprep.subr.bf16.mxu0 0
        %2448 = vmatpush1.bf16.msra.mxu0 0
        %2449 = vmatprep.subr.bf16.mxu0 0
        %2450 = vmatpush1.bf16.msra.mxu0 0
        %2451 = vmatprep.subr.bf16.mxu0 0
        %2452 = vmatpush1.bf16.msra.mxu0 0
        %2453 = vmatprep.mubr.bf16.mxu0 0
        %2454 = vmatmul.mubr.bf16.gmra.mrb[0].mxu0 %v2052
        %v2455 = vpop.f32.mrb[0].mxu0
        %v2456 = vadd.f32 %v2295, %v2455
        %v2457 = vpop.f32.mrb[0].mxu0
        %v2458 = vpop.f32.mrb[0].mxu0
        %v2459 = vadd.f32 %v2298, %v2458
        %v2460 = vpop.f32.mrb[0].mxu0
        %2461 = vmatprep.mubr.bf16.mxu0 0
        %2462 = vmatmul.mubr.bf16.gmra.mrb[0].mxu0 %v2055
        %v2463 = vpop.f32.mrb[0].mxu0
        %v2464 = vadd.f32 %v2303, %v2463
        %v2465 = vpop.f32.mrb[0].mxu0
        %v2466 = vpop.f32.mrb[0].mxu0
        %v2467 = vadd.f32 %v2306, %v2466
        %v2468 = vpop.f32.mrb[0].mxu0
        %2469 = vmatprep.mubr.bf16.mxu0 0
        %2470 = vmatmul.mubr.bf16.gmra.mrb[0].mxu0 %v2058
        %v2471 = vpop.f32.mrb[0].mxu0
        %v2472 = vadd.f32 %v2311, %v2471
        %v2473 = vpop.f32.mrb[0].mxu0
        %v2474 = vpop.f32.mrb[0].mxu0
        %v2475 = vadd.f32 %v2314, %v2474
        %v2476 = vpop.f32.mrb[0].mxu0
        %2477 = vmatprep.mubr.bf16.mxu0 0
        %2478 = vmatmul.mubr.bf16.gmra.mrb[0].mxu0 %v2061
        %v2479 = vpop.f32.mrb[0].mxu0
        %v2480 = vadd.f32 %v2319, %v2479
        %v2481 = vpop.f32.mrb[0].mxu0
        %v2482 = vpop.f32.mrb[0].mxu0
        %v2483 = vadd.f32 %v2322, %v2482
        %v2484 = vpop.f32.mrb[0].mxu0
        %2485 = vmatprep.mubr.bf16.mxu0 0
        %2486 = vmatmul.mubr.bf16.gmra.mrb[0].mxu0 %v2064
        %v2487 = vpop.f32.mrb[0].mxu0
        %v2488 = vadd.f32 %v2327, %v2487
        %v2489 = vpop.f32.mrb[0].mxu0
        %v2490 = vpop.f32.mrb[0].mxu0
        %v2491 = vadd.f32 %v2330, %v2490
        %v2492 = vpop.f32.mrb[0].mxu0
        %2493 = vmatprep.mubr.bf16.mxu0 0
        %2494 = vmatmul.mubr.bf16.gmra.mrb[0].mxu0 %v2067
        %v2495 = vpop.f32.mrb[0].mxu0
        %v2496 = vadd.f32 %v2335, %v2495
        %v2497 = vpop.f32.mrb[0].mxu0
        %v2498 = vpop.f32.mrb[0].mxu0
        %v2499 = vadd.f32 %v2338, %v2498
        %v2500 = vpop.f32.mrb[0].mxu0
        %2501 = vmatprep.mubr.bf16.mxu0 0
        %2502 = vmatmul.mubr.bf16.gmra.mrb[0].mxu0 %v2070
        %v2503 = vpop.f32.mrb[0].mxu0
        %v2504 = vadd.f32 %v2343, %v2503
        %v2505 = vpop.f32.mrb[0].mxu0
        %v2506 = vpop.f32.mrb[0].mxu0
        %v2507 = vadd.f32 %v2346, %v2506
        %v2508 = vpop.f32.mrb[0].mxu0
        %2509 = vmatprep.mubr.bf16.mxu0 0
        %2510 = vmatmul.mubr.bf16.gmra.mrb[0].mxu0 %v2073
        %v2511 = vpop.f32.mrb[0].mxu0
        %v2512 = vadd.f32 %v2351, %v2511
        %v2513 = vpop.f32.mrb[0].mxu0
        %v2514 = vpop.f32.mrb[0].mxu0
        %v2515 = vadd.f32 %v2354, %v2514
        %v2516 = vpop.f32.mrb[0].mxu0
        %2517 = vmatprep.mubr.bf16.mxu0 0
        %2518 = vmatmul.mubr.bf16.gmra.mrb[0].mxu0 %v2076
        %v2519 = vpop.f32.mrb[0].mxu0
        %v2520 = vadd.f32 %v2359, %v2519
        %v2521 = vpop.f32.mrb[0].mxu0
        %v2522 = vpop.f32.mrb[0].mxu0
        %v2523 = vadd.f32 %v2362, %v2522
        %v2524 = vpop.f32.mrb[0].mxu0
        %2525 = vmatprep.mubr.bf16.mxu0 0
        %2526 = vmatmul.mubr.bf16.gmra.mrb[0].mxu0 %v2079
        %v2527 = vpop.f32.mrb[0].mxu0
        %v2528 = vadd.f32 %v2367, %v2527
        %v2529 = vpop.f32.mrb[0].mxu0
        %v2530 = vpop.f32.mrb[0].mxu0
        %v2531 = vadd.f32 %v2370, %v2530
        %v2532 = vpop.f32.mrb[0].mxu0
        %2533 = vmatprep.mubr.bf16.mxu0 0
        %2534 = vmatmul.mubr.bf16.gmra.mrb[0].mxu0 %v2082
        %v2535 = vpop.f32.mrb[0].mxu0
        %v2536 = vadd.f32 %v2375, %v2535
        %v2537 = vpop.f32.mrb[0].mxu0
        %v2538 = vpop.f32.mrb[0].mxu0
        %v2539 = vadd.f32 %v2378, %v2538
        %v2540 = vpop.f32.mrb[0].mxu0
        %2541 = vmatprep.mubr.bf16.mxu0 0
        %2542 = vmatmul.mubr.bf16.gmra.mrb[0].mxu0 %v2085
        %v2543 = vpop.f32.mrb[0].mxu0
        %v2544 = vadd.f32 %v2383, %v2543
        %v2545 = vpop.f32.mrb[0].mxu0
        %v2546 = vpop.f32.mrb[0].mxu0
        %v2547 = vadd.f32 %v2386, %v2546
        %v2548 = vpop.f32.mrb[0].mxu0
        %2549 = vmatprep.mubr.bf16.mxu0 0
        %2550 = vmatmul.mubr.bf16.gmra.mrb[0].mxu0 %v2088
        %v2551 = vpop.f32.mrb[0].mxu0
        %v2552 = vadd.f32 %v2391, %v2551
        %v2553 = vpop.f32.mrb[0].mxu0
        %v2554 = vpop.f32.mrb[0].mxu0
        %v2555 = vadd.f32 %v2394, %v2554
        %v2556 = vpop.f32.mrb[0].mxu0
        %2557 = vmatprep.mubr.bf16.mxu0 0
        %2558 = vmatmul.mubr.bf16.gmra.mrb[0].mxu0 %v2091
        %v2559 = vpop.f32.mrb[0].mxu0
        %v2560 = vadd.f32 %v2399, %v2559
        %v2561 = vpop.f32.mrb[0].mxu0
        %v2562 = vpop.f32.mrb[0].mxu0
        %v2563 = vadd.f32 %v2402, %v2562
        %v2564 = vpop.f32.mrb[0].mxu0
        %2565 = vmatprep.mubr.bf16.mxu0 0
        %2566 = vmatmul.mubr.bf16.gmra.mrb[0].mxu0 %v2094
        %v2567 = vpop.f32.mrb[0].mxu0
        %v2568 = vadd.f32 %v2407, %v2567
        %v2569 = vpop.f32.mrb[0].mxu0
        %v2570 = vpop.f32.mrb[0].mxu0
        %v2571 = vadd.f32 %v2410, %v2570
        %v2572 = vpop.f32.mrb[0].mxu0
        %2573 = vmatprep.mubr.bf16.mxu0 0
        %2574 = vmatmul.mubr.bf16.gmra.mrb[0].mxu0 %v2097
        %v2575 = vpop.f32.mrb[0].mxu0
        %v2576 = vadd.f32 %v2415, %v2575
        %v2577 = vpop.f32.mrb[0].mxu0
        %v2578 = vpop.f32.mrb[0].mxu0
        %v2579 = vadd.f32 %v2418, %v2578
        %v2580 = vpop.f32.mrb[0].mxu0
        %2581 = vdwg.mxu0
        %v2582 = vmax.f32 %v2456, 0.0
        %v2583 = vmax.f32 %v2459, 0.0
        %v2584 = vmax.f32 %v2464, 0.0
        %v2585 = vmax.f32 %v2467, 0.0
        %v2586 = vmax.f32 %v2472, 0.0
        %v2587 = vmax.f32 %v2475, 0.0
        %v2588 = vmax.f32 %v2480, 0.0
        %v2589 = vmax.f32 %v2483, 0.0
        %v2590 = vmax.f32 %v2488, 0.0
        %v2591 = vmax.f32 %v2491, 0.0
        %v2592 = vmax.f32 %v2496, 0.0
        %v2593 = vmax.f32 %v2499, 0.0
        %v2594 = vmax.f32 %v2504, 0.0
        %v2595 = vmax.f32 %v2507, 0.0
        %v2596 = vmax.f32 %v2512, 0.0
        %v2597 = vmax.f32 %v2515, 0.0
        %v2598 = vmax.f32 %v2520, 0.0
        %v2599 = vmax.f32 %v2523, 0.0
        %v2600 = vmax.f32 %v2528, 0.0
        %v2601 = vmax.f32 %v2531, 0.0
        %v2602 = vmax.f32 %v2536, 0.0
        %v2603 = vmax.f32 %v2539, 0.0
        %v2604 = vmax.f32 %v2544, 0.0
        %v2605 = vmax.f32 %v2547, 0.0
        %v2606 = vmax.f32 %v2552, 0.0
        %v2607 = vmax.f32 %v2555, 0.0
        %v2608 = vmax.f32 %v2560, 0.0
        %v2609 = vmax.f32 %v2563, 0.0
        %v2610 = vmax.f32 %v2568, 0.0
        %v2611 = vmax.f32 %v2571, 0.0
        %v2612 = vmax.f32 %v2576, 0.0
        %v2613 = vmax.f32 %v2579, 0.0
        %2614 = vst.msk [vmem:[%s393 + $0x1] sm:$0xff] %vm305, %v2582
        %2615 = vst.msk [vmem:[%s393 + $0x9] sm:$0xff] %vm305, %v2583
        %2616 = vst.msk [vmem:[%s393 + $0x19] sm:$0xff] %vm305, %v2584
        %2617 = vst.msk [vmem:[%s393 + $0x21] sm:$0xff] %vm305, %v2585
        %2618 = vst.msk [vmem:[%s393 + $0x31] sm:$0xff] %vm305, %v2586
        %2619 = vst.msk [vmem:[%s393 + $0x39] sm:$0xff] %vm305, %v2587
        %2620 = vst.msk [vmem:[%s393 + $0x49] sm:$0xff] %vm305, %v2588
        %2621 = vst.msk [vmem:[%s393 + $0x51] sm:$0xff] %vm305, %v2589
        %2622 = vst.msk [vmem:[%s393 + $0x61] sm:$0xff] %vm305, %v2590
        %2623 = vst.msk [vmem:[%s393 + $0x69] sm:$0xff] %vm305, %v2591
        %2624 = vst.msk [vmem:[%s393 + $0x79] sm:$0xff] %vm305, %v2592
        %2625 = vst.msk [vmem:[%s393 + $0x81] sm:$0xff] %vm305, %v2593
        %2626 = vst.msk [vmem:[%s393 + $0x91] sm:$0xff] %vm305, %v2594
        %2627 = vst.msk [vmem:[%s393 + $0x99] sm:$0xff] %vm305, %v2595
        %2628 = vst.msk [vmem:[%s393 + $0xa9] sm:$0xff] %vm305, %v2596
        %2629 = vst.msk [vmem:[%s393 + $0xb1] sm:$0xff] %vm305, %v2597
        %2630 = vst.msk [vmem:[%s393 + $0xc1] sm:$0xff] %vm305, %v2598
        %2631 = vst.msk [vmem:[%s393 + $0xc9] sm:$0xff] %vm305, %v2599
        %2632 = vst.msk [vmem:[%s393 + $0xd9] sm:$0xff] %vm305, %v2600
        %2633 = vst.msk [vmem:[%s393 + $0xe1] sm:$0xff] %vm305, %v2601
        %2634 = vst.msk [vmem:[%s393 + $0xf1] sm:$0xff] %vm305, %v2602
        %2635 = vst.msk [vmem:[%s393 + $0xf9] sm:$0xff] %vm305, %v2603
        %2636 = vst.msk [vmem:[%s393 + $0x109] sm:$0xff] %vm305, %v2604
        %2637 = vst.msk [vmem:[%s393 + $0x111] sm:$0xff] %vm305, %v2605
        %2638 = vst.msk [vmem:[%s393 + $0x121] sm:$0xff] %vm305, %v2606
        %2639 = vst.msk [vmem:[%s393 + $0x129] sm:$0xff] %vm305, %v2607
        %2640 = vst.msk [vmem:[%s393 + $0x139] sm:$0xff] %vm305, %v2608
        %2641 = vst.msk [vmem:[%s393 + $0x141] sm:$0xff] %vm305, %v2609
        %2642 = vst.msk [vmem:[%s393 + $0x151] sm:$0xff] %vm305, %v2610
        %2643 = vst.msk [vmem:[%s393 + $0x159] sm:$0xff] %vm305, %v2611
        %2644 = vst.msk [vmem:[%s393 + $0x169] sm:$0xff] %vm305, %v2612
        %2645 = vst.msk [vmem:[%s393 + $0x171] sm:$0xff] %vm305, %v2613
        %v2646 = vld [vmem:[#allocation2] sm:$0xff]
        %v2647 = vld [vmem:[#allocation2 + $0x8] sm:$0xff]
        %v2648 = vld [vmem:[#allocation2 + $0x18] sm:$0xff]
        %v2649 = vld [vmem:[#allocation2 + $0x20] sm:$0xff]
        %v2650 = vld [vmem:[#allocation2 + $0x30] sm:$0xff]
        %v2651 = vld [vmem:[#allocation2 + $0x38] sm:$0xff]
        %v2652 = vld [vmem:[#allocation2 + $0x48] sm:$0xff]
        %v2653 = vld [vmem:[#allocation2 + $0x50] sm:$0xff]
        %v2654 = vld [vmem:[#allocation2 + $0x60] sm:$0xff]
        %v2655 = vld [vmem:[#allocation2 + $0x68] sm:$0xff]
        %v2656 = vld [vmem:[#allocation2 + $0x78] sm:$0xff]
        %v2657 = vld [vmem:[#allocation2 + $0x80] sm:$0xff]
        %v2658 = vld [vmem:[#allocation2 + $0x90] sm:$0xff]
        %v2659 = vld [vmem:[#allocation2 + $0x98] sm:$0xff]
        %v2660 = vld [vmem:[#allocation2 + $0xa8] sm:$0xff]
        %v2661 = vld [vmem:[#allocation2 + $0xb0] sm:$0xff]
        %v2662 = vld [vmem:[#allocation2 + $0xc0] sm:$0xff]
        %v2663 = vld [vmem:[#allocation2 + $0xc8] sm:$0xff]
        %v2664 = vld [vmem:[#allocation2 + $0xd8] sm:$0xff]
        %v2665 = vld [vmem:[#allocation2 + $0xe0] sm:$0xff]
        %v2666 = vld [vmem:[#allocation2 + $0xf0] sm:$0xff]
        %v2667 = vld [vmem:[#allocation2 + $0xf8] sm:$0xff]
        %v2668 = vld [vmem:[#allocation2 + $0x108] sm:$0xff]
        %v2669 = vld [vmem:[#allocation2 + $0x110] sm:$0xff]
        %v2670 = vld [vmem:[#allocation2 + $0x120] sm:$0xff]
        %v2671 = vld [vmem:[#allocation2 + $0x128] sm:$0xff]
        %v2672 = vld [vmem:[#allocation2 + $0x138] sm:$0xff]
        %v2673 = vld [vmem:[#allocation2 + $0x140] sm:$0xff]
        %v2674 = vld [vmem:[#allocation2 + $0x150] sm:$0xff]
        %v2675 = vld [vmem:[#allocation2 + $0x158] sm:$0xff]
        %v2676 = vld [vmem:[#allocation2 + $0x168] sm:$0xff]
        %v2677 = vld [vmem:[#allocation2 + $0x170] sm:$0xff]
        %2678 = vst.msk [vmem:[#allocation3] sm:$0xff] %vm305, %v2646
        %2679 = vst.msk [vmem:[#allocation3 + $0x28] sm:$0xff] %vm305, %v2647
        %2680 = vst.msk [vmem:[#allocation3 + $0x50] sm:$0xff] %vm305, %v2648
        %2681 = vst.msk [vmem:[#allocation3 + $0x78] sm:$0xff] %vm305, %v2649
        %2682 = vst.msk [vmem:[#allocation3 + $0xa0] sm:$0xff] %vm305, %v2650
        %2683 = vst.msk [vmem:[#allocation3 + $0xc8] sm:$0xff] %vm305, %v2651
        %2684 = vst.msk [vmem:[#allocation3 + $0xf0] sm:$0xff] %vm305, %v2652
        %2685 = vst.msk [vmem:[#allocation3 + $0x118] sm:$0xff] %vm305, %v2653
        %2686 = vst.msk [vmem:[#allocation3 + $0x140] sm:$0xff] %vm305, %v2654
        %2687 = vst.msk [vmem:[#allocation3 + $0x168] sm:$0xff] %vm305, %v2655
        %2688 = vst.msk [vmem:[#allocation3 + $0x190] sm:$0xff] %vm305, %v2656
        %2689 = vst.msk [vmem:[#allocation3 + $0x1b8] sm:$0xff] %vm305, %v2657
        %2690 = vst.msk [vmem:[#allocation3 + $0x1e0] sm:$0xff] %vm305, %v2658
        %2691 = vst.msk [vmem:[#allocation3 + $0x208] sm:$0xff] %vm305, %v2659
        %2692 = vst.msk [vmem:[#allocation3 + $0x230] sm:$0xff] %vm305, %v2660
        %2693 = vst.msk [vmem:[#allocation3 + $0x258] sm:$0xff] %vm305, %v2661
        %2694 = vst.msk [vmem:[#allocation3 + $0x280] sm:$0xff] %vm305, %v2662
        %2695 = vst.msk [vmem:[#allocation3 + $0x2a8] sm:$0xff] %vm305, %v2663
        %2696 = vst.msk [vmem:[#allocation3 + $0x2d0] sm:$0xff] %vm305, %v2664
        %2697 = vst.msk [vmem:[#allocation3 + $0x2f8] sm:$0xff] %vm305, %v2665
        %2698 = vst.msk [vmem:[#allocation3 + $0x320] sm:$0xff] %vm305, %v2666
        %2699 = vst.msk [vmem:[#allocation3 + $0x348] sm:$0xff] %vm305, %v2667
        %2700 = vst.msk [vmem:[#allocation3 + $0x370] sm:$0xff] %vm305, %v2668
        %2701 = vst.msk [vmem:[#allocation3 + $0x398] sm:$0xff] %vm305, %v2669
        %2702 = vst.msk [vmem:[#allocation3 + $0x3c0] sm:$0xff] %vm305, %v2670
        %2703 = vst.msk [vmem:[#allocation3 + $0x3e8] sm:$0xff] %vm305, %v2671
        %2704 = vst.msk [vmem:[#allocation3 + $0x410] sm:$0xff] %vm305, %v2672
        %2705 = vst.msk [vmem:[#allocation3 + $0x438] sm:$0xff] %vm305, %v2673
        %2706 = vst.msk [vmem:[#allocation3 + $0x460] sm:$0xff] %vm305, %v2674
        %2707 = vst.msk [vmem:[#allocation3 + $0x488] sm:$0xff] %vm305, %v2675
        %2708 = vst.msk [vmem:[#allocation3 + $0x4b0] sm:$0xff] %vm305, %v2676
        %2709 = vst.msk [vmem:[#allocation3 + $0x4d8] sm:$0xff] %vm305, %v2677
        %v2710 = vld [vmem:[#allocation2 + $0x1] sm:$0xff]
        %v2711 = vld [vmem:[#allocation2 + $0x9] sm:$0xff]
        %v2712 = vld [vmem:[#allocation2 + $0x19] sm:$0xff]
        %v2713 = vld [vmem:[#allocation2 + $0x21] sm:$0xff]
        %v2714 = vld [vmem:[#allocation2 + $0x31] sm:$0xff]
        %v2715 = vld [vmem:[#allocation2 + $0x39] sm:$0xff]
        %v2716 = vld [vmem:[#allocation2 + $0x49] sm:$0xff]
        %v2717 = vld [vmem:[#allocation2 + $0x51] sm:$0xff]
        %v2718 = vld [vmem:[#allocation2 + $0x61] sm:$0xff]
        %v2719 = vld [vmem:[#allocation2 + $0x69] sm:$0xff]
        %v2720 = vld [vmem:[#allocation2 + $0x79] sm:$0xff]
        %v2721 = vld [vmem:[#allocation2 + $0x81] sm:$0xff]
        %v2722 = vld [vmem:[#allocation2 + $0x91] sm:$0xff]
        %v2723 = vld [vmem:[#allocation2 + $0x99] sm:$0xff]
        %v2724 = vld [vmem:[#allocation2 + $0xa9] sm:$0xff]
        %v2725 = vld [vmem:[#allocation2 + $0xb1] sm:$0xff]
        %v2726 = vld [vmem:[#allocation2 + $0xc1] sm:$0xff]
        %v2727 = vld [vmem:[#allocation2 + $0xc9] sm:$0xff]
        %v2728 = vld [vmem:[#allocation2 + $0xd9] sm:$0xff]
        %v2729 = vld [vmem:[#allocation2 + $0xe1] sm:$0xff]
        %v2730 = vld [vmem:[#allocation2 + $0xf1] sm:$0xff]
        %v2731 = vld [vmem:[#allocation2 + $0xf9] sm:$0xff]
        %v2732 = vld [vmem:[#allocation2 + $0x109] sm:$0xff]
        %v2733 = vld [vmem:[#allocation2 + $0x111] sm:$0xff]
        %v2734 = vld [vmem:[#allocation2 + $0x121] sm:$0xff]
        %v2735 = vld [vmem:[#allocation2 + $0x129] sm:$0xff]
        %v2736 = vld [vmem:[#allocation2 + $0x139] sm:$0xff]
        %v2737 = vld [vmem:[#allocation2 + $0x141] sm:$0xff]
        %v2738 = vld [vmem:[#allocation2 + $0x151] sm:$0xff]
        %v2739 = vld [vmem:[#allocation2 + $0x159] sm:$0xff]
        %v2740 = vld [vmem:[#allocation2 + $0x169] sm:$0xff]
        %v2741 = vld [vmem:[#allocation2 + $0x171] sm:$0xff]
        %2774 = vrot.lane.b32.xlu0 %v2710, 64
        %v2775 = vpop.permute.xlu0 %2774
        %2776 = vrot.lane.b32.xlu0 %v2711, 64
        %v2777 = vpop.permute.xlu0 %2776
        %2778 = vrot.lane.b32.xlu0 %v2712, 64
        %v2779 = vpop.permute.xlu0 %2778
        %2780 = vrot.lane.b32.xlu0 %v2713, 64
        %v2781 = vpop.permute.xlu0 %2780
        %2782 = vrot.lane.b32.xlu0 %v2714, 64
        %v2783 = vpop.permute.xlu0 %2782
        %2784 = vrot.lane.b32.xlu0 %v2715, 64
        %v2785 = vpop.permute.xlu0 %2784
        %2786 = vrot.lane.b32.xlu0 %v2716, 64
        %v2787 = vpop.permute.xlu0 %2786
        %2788 = vrot.lane.b32.xlu0 %v2717, 64
        %v2789 = vpop.permute.xlu0 %2788
        %2790 = vrot.lane.b32.xlu0 %v2718, 64
        %v2791 = vpop.permute.xlu0 %2790
        %2792 = vrot.lane.b32.xlu0 %v2719, 64
        %v2793 = vpop.permute.xlu0 %2792
        %2794 = vrot.lane.b32.xlu0 %v2720, 64
        %v2795 = vpop.permute.xlu0 %2794
        %2796 = vrot.lane.b32.xlu0 %v2721, 64
        %v2797 = vpop.permute.xlu0 %2796
        %2798 = vrot.lane.b32.xlu0 %v2722, 64
        %v2799 = vpop.permute.xlu0 %2798
        %2800 = vrot.lane.b32.xlu0 %v2723, 64
        %v2801 = vpop.permute.xlu0 %2800
        %2802 = vrot.lane.b32.xlu0 %v2724, 64
        %v2803 = vpop.permute.xlu0 %2802
        %2804 = vrot.lane.b32.xlu0 %v2725, 64
        %v2805 = vpop.permute.xlu0 %2804
        %2806 = vrot.lane.b32.xlu0 %v2726, 64
        %v2807 = vpop.permute.xlu0 %2806
        %2808 = vrot.lane.b32.xlu0 %v2727, 64
        %v2809 = vpop.permute.xlu0 %2808
        %2810 = vrot.lane.b32.xlu0 %v2728, 64
        %v2811 = vpop.permute.xlu0 %2810
        %2812 = vrot.lane.b32.xlu0 %v2729, 64
        %v2813 = vpop.permute.xlu0 %2812
        %2814 = vrot.lane.b32.xlu0 %v2730, 64
        %v2815 = vpop.permute.xlu0 %2814
        %2816 = vrot.lane.b32.xlu0 %v2731, 64
        %v2817 = vpop.permute.xlu0 %2816
        %2818 = vrot.lane.b32.xlu0 %v2732, 64
        %v2819 = vpop.permute.xlu0 %2818
        %2820 = vrot.lane.b32.xlu0 %v2733, 64
        %v2821 = vpop.permute.xlu0 %2820
        %2822 = vrot.lane.b32.xlu0 %v2734, 64
        %v2823 = vpop.permute.xlu0 %2822
        %2824 = vrot.lane.b32.xlu0 %v2735, 64
        %v2825 = vpop.permute.xlu0 %2824
        %2826 = vrot.lane.b32.xlu0 %v2736, 64
        %v2827 = vpop.permute.xlu0 %2826
        %2828 = vrot.lane.b32.xlu0 %v2737, 64
        %v2829 = vpop.permute.xlu0 %2828
        %2830 = vrot.lane.b32.xlu0 %v2738, 64
        %v2831 = vpop.permute.xlu0 %2830
        %2832 = vrot.lane.b32.xlu0 %v2739, 64
        %v2833 = vpop.permute.xlu0 %2832
        %2834 = vrot.lane.b32.xlu0 %v2740, 64
        %v2835 = vpop.permute.xlu0 %2834
        %2836 = vrot.lane.b32.xlu0 %v2741, 64
        %v2837 = vpop.permute.xlu0 %2836
        %2870 = vst.msk [vmem:[#allocation3] sm:$0xff] %vm650, %v2775
        %2871 = vst.msk [vmem:[#allocation3 + $0x28] sm:$0xff] %vm650, %v2777
        %2872 = vst.msk [vmem:[#allocation3 + $0x50] sm:$0xff] %vm650, %v2779
        %2873 = vst.msk [vmem:[#allocation3 + $0x78] sm:$0xff] %vm650, %v2781
        %2874 = vst.msk [vmem:[#allocation3 + $0xa0] sm:$0xff] %vm650, %v2783
        %2875 = vst.msk [vmem:[#allocation3 + $0xc8] sm:$0xff] %vm650, %v2785
        %2876 = vst.msk [vmem:[#allocation3 + $0xf0] sm:$0xff] %vm650, %v2787
        %2877 = vst.msk [vmem:[#allocation3 + $0x118] sm:$0xff] %vm650, %v2789
        %2878 = vst.msk [vmem:[#allocation3 + $0x140] sm:$0xff] %vm650, %v2791
        %2879 = vst.msk [vmem:[#allocation3 + $0x168] sm:$0xff] %vm650, %v2793
        %2880 = vst.msk [vmem:[#allocation3 + $0x190] sm:$0xff] %vm650, %v2795
        %2881 = vst.msk [vmem:[#allocation3 + $0x1b8] sm:$0xff] %vm650, %v2797
        %2882 = vst.msk [vmem:[#allocation3 + $0x1e0] sm:$0xff] %vm650, %v2799
        %2883 = vst.msk [vmem:[#allocation3 + $0x208] sm:$0xff] %vm650, %v2801
        %2884 = vst.msk [vmem:[#allocation3 + $0x230] sm:$0xff] %vm650, %v2803
        %2885 = vst.msk [vmem:[#allocation3 + $0x258] sm:$0xff] %vm650, %v2805
        %2886 = vst.msk [vmem:[#allocation3 + $0x280] sm:$0xff] %vm650, %v2807
        %2887 = vst.msk [vmem:[#allocation3 + $0x2a8] sm:$0xff] %vm650, %v2809
        %2888 = vst.msk [vmem:[#allocation3 + $0x2d0] sm:$0xff] %vm650, %v2811
        %2889 = vst.msk [vmem:[#allocation3 + $0x2f8] sm:$0xff] %vm650, %v2813
        %2890 = vst.msk [vmem:[#allocation3 + $0x320] sm:$0xff] %vm650, %v2815
        %2891 = vst.msk [vmem:[#allocation3 + $0x348] sm:$0xff] %vm650, %v2817
        %2892 = vst.msk [vmem:[#allocation3 + $0x370] sm:$0xff] %vm650, %v2819
        %2893 = vst.msk [vmem:[#allocation3 + $0x398] sm:$0xff] %vm650, %v2821
        %2894 = vst.msk [vmem:[#allocation3 + $0x3c0] sm:$0xff] %vm650, %v2823
        %2895 = vst.msk [vmem:[#allocation3 + $0x3e8] sm:$0xff] %vm650, %v2825
        %2896 = vst.msk [vmem:[#allocation3 + $0x410] sm:$0xff] %vm650, %v2827
        %2897 = vst.msk [vmem:[#allocation3 + $0x438] sm:$0xff] %vm650, %v2829
        %2898 = vst.msk [vmem:[#allocation3 + $0x460] sm:$0xff] %vm650, %v2831
        %2899 = vst.msk [vmem:[#allocation3 + $0x488] sm:$0xff] %vm650, %v2833
        %2900 = vst.msk [vmem:[#allocation3 + $0x4b0] sm:$0xff] %vm650, %v2835
        %2901 = vst.msk [vmem:[#allocation3 + $0x4d8] sm:$0xff] %vm650, %v2837
        %v2902 = vld [vmem:[#allocation2 + $0x2] sm:$0xff]
        %v2903 = vld [vmem:[#allocation2 + $0xa] sm:$0xff]
        %v2904 = vld [vmem:[#allocation2 + $0x1a] sm:$0xff]
        %v2905 = vld [vmem:[#allocation2 + $0x22] sm:$0xff]
        %v2906 = vld [vmem:[#allocation2 + $0x32] sm:$0xff]
        %v2907 = vld [vmem:[#allocation2 + $0x3a] sm:$0xff]
        %v2908 = vld [vmem:[#allocation2 + $0x4a] sm:$0xff]
        %v2909 = vld [vmem:[#allocation2 + $0x52] sm:$0xff]
        %v2910 = vld [vmem:[#allocation2 + $0x62] sm:$0xff]
        %v2911 = vld [vmem:[#allocation2 + $0x6a] sm:$0xff]
        %v2912 = vld [vmem:[#allocation2 + $0x7a] sm:$0xff]
        %v2913 = vld [vmem:[#allocation2 + $0x82] sm:$0xff]
        %v2914 = vld [vmem:[#allocation2 + $0x92] sm:$0xff]
        %v2915 = vld [vmem:[#allocation2 + $0x9a] sm:$0xff]
        %v2916 = vld [vmem:[#allocation2 + $0xaa] sm:$0xff]
        %v2917 = vld [vmem:[#allocation2 + $0xb2] sm:$0xff]
        %v2918 = vld [vmem:[#allocation2 + $0xc2] sm:$0xff]
        %v2919 = vld [vmem:[#allocation2 + $0xca] sm:$0xff]
        %v2920 = vld [vmem:[#allocation2 + $0xda] sm:$0xff]
        %v2921 = vld [vmem:[#allocation2 + $0xe2] sm:$0xff]
        %v2922 = vld [vmem:[#allocation2 + $0xf2] sm:$0xff]
        %v2923 = vld [vmem:[#allocation2 + $0xfa] sm:$0xff]
        %v2924 = vld [vmem:[#allocation2 + $0x10a] sm:$0xff]
        %v2925 = vld [vmem:[#allocation2 + $0x112] sm:$0xff]
        %v2926 = vld [vmem:[#allocation2 + $0x122] sm:$0xff]
        %v2927 = vld [vmem:[#allocation2 + $0x12a] sm:$0xff]
        %v2928 = vld [vmem:[#allocation2 + $0x13a] sm:$0xff]
        %v2929 = vld [vmem:[#allocation2 + $0x142] sm:$0xff]
        %v2930 = vld [vmem:[#allocation2 + $0x152] sm:$0xff]
        %v2931 = vld [vmem:[#allocation2 + $0x15a] sm:$0xff]
        %v2932 = vld [vmem:[#allocation2 + $0x16a] sm:$0xff]
        %v2933 = vld [vmem:[#allocation2 + $0x172] sm:$0xff]
        %2934 = vst.msk [vmem:[#allocation3 + $0x8] sm:$0xff] %vm305, %v2902
        %2935 = vst.msk [vmem:[#allocation3 + $0x30] sm:$0xff] %vm305, %v2903
        %2936 = vst.msk [vmem:[#allocation3 + $0x58] sm:$0xff] %vm305, %v2904
        %2937 = vst.msk [vmem:[#allocation3 + $0x80] sm:$0xff] %vm305, %v2905
        %2938 = vst.msk [vmem:[#allocation3 + $0xa8] sm:$0xff] %vm305, %v2906
        %2939 = vst.msk [vmem:[#allocation3 + $0xd0] sm:$0xff] %vm305, %v2907
        %2940 = vst.msk [vmem:[#allocation3 + $0xf8] sm:$0xff] %vm305, %v2908
        %2941 = vst.msk [vmem:[#allocation3 + $0x120] sm:$0xff] %vm305, %v2909
        %2942 = vst.msk [vmem:[#allocation3 + $0x148] sm:$0xff] %vm305, %v2910
        %2943 = vst.msk [vmem:[#allocation3 + $0x170] sm:$0xff] %vm305, %v2911
        %2944 = vst.msk [vmem:[#allocation3 + $0x198] sm:$0xff] %vm305, %v2912
        %2945 = vst.msk [vmem:[#allocation3 + $0x1c0] sm:$0xff] %vm305, %v2913
        %2946 = vst.msk [vmem:[#allocation3 + $0x1e8] sm:$0xff] %vm305, %v2914
        %2947 = vst.msk [vmem:[#allocation3 + $0x210] sm:$0xff] %vm305, %v2915
        %2948 = vst.msk [vmem:[#allocation3 + $0x238] sm:$0xff] %vm305, %v2916
        %2949 = vst.msk [vmem:[#allocation3 + $0x260] sm:$0xff] %vm305, %v2917
        %2950 = vst.msk [vmem:[#allocation3 + $0x288] sm:$0xff] %vm305, %v2918
        %2951 = vst.msk [vmem:[#allocation3 + $0x2b0] sm:$0xff] %vm305, %v2919
        %2952 = vst.msk [vmem:[#allocation3 + $0x2d8] sm:$0xff] %vm305, %v2920
        %2953 = vst.msk [vmem:[#allocation3 + $0x300] sm:$0xff] %vm305, %v2921
        %2954 = vst.msk [vmem:[#allocation3 + $0x328] sm:$0xff] %vm305, %v2922
        %2955 = vst.msk [vmem:[#allocation3 + $0x350] sm:$0xff] %vm305, %v2923
        %2956 = vst.msk [vmem:[#allocation3 + $0x378] sm:$0xff] %vm305, %v2924
        %2957 = vst.msk [vmem:[#allocation3 + $0x3a0] sm:$0xff] %vm305, %v2925
        %2958 = vst.msk [vmem:[#allocation3 + $0x3c8] sm:$0xff] %vm305, %v2926
        %2959 = vst.msk [vmem:[#allocation3 + $0x3f0] sm:$0xff] %vm305, %v2927
        %2960 = vst.msk [vmem:[#allocation3 + $0x418] sm:$0xff] %vm305, %v2928
        %2961 = vst.msk [vmem:[#allocation3 + $0x440] sm:$0xff] %vm305, %v2929
        %2962 = vst.msk [vmem:[#allocation3 + $0x468] sm:$0xff] %vm305, %v2930
        %2963 = vst.msk [vmem:[#allocation3 + $0x490] sm:$0xff] %vm305, %v2931
        %2964 = vst.msk [vmem:[#allocation3 + $0x4b8] sm:$0xff] %vm305, %v2932
        %2965 = vst.msk [vmem:[#allocation3 + $0x4e0] sm:$0xff] %vm305, %v2933
        %v2966 = vld [vmem:[%s393] sm:$0xff]
        %v2967 = vld [vmem:[%s393 + $0x8] sm:$0xff]
        %v2968 = vld [vmem:[%s393 + $0x18] sm:$0xff]
        %v2969 = vld [vmem:[%s393 + $0x20] sm:$0xff]
        %v2970 = vld [vmem:[%s393 + $0x30] sm:$0xff]
        %v2971 = vld [vmem:[%s393 + $0x38] sm:$0xff]
        %v2972 = vld [vmem:[%s393 + $0x48] sm:$0xff]
        %v2973 = vld [vmem:[%s393 + $0x50] sm:$0xff]
        %v2974 = vld [vmem:[%s393 + $0x60] sm:$0xff]
        %v2975 = vld [vmem:[%s393 + $0x68] sm:$0xff]
        %v2976 = vld [vmem:[%s393 + $0x78] sm:$0xff]
        %v2977 = vld [vmem:[%s393 + $0x80] sm:$0xff]
        %v2978 = vld [vmem:[%s393 + $0x90] sm:$0xff]
        %v2979 = vld [vmem:[%s393 + $0x98] sm:$0xff]
        %v2980 = vld [vmem:[%s393 + $0xa8] sm:$0xff]
        %v2981 = vld [vmem:[%s393 + $0xb0] sm:$0xff]
        %v2982 = vld [vmem:[%s393 + $0xc0] sm:$0xff]
        %v2983 = vld [vmem:[%s393 + $0xc8] sm:$0xff]
        %v2984 = vld [vmem:[%s393 + $0xd8] sm:$0xff]
        %v2985 = vld [vmem:[%s393 + $0xe0] sm:$0xff]
        %v2986 = vld [vmem:[%s393 + $0xf0] sm:$0xff]
        %v2987 = vld [vmem:[%s393 + $0xf8] sm:$0xff]
        %v2988 = vld [vmem:[%s393 + $0x108] sm:$0xff]
        %v2989 = vld [vmem:[%s393 + $0x110] sm:$0xff]
        %v2990 = vld [vmem:[%s393 + $0x120] sm:$0xff]
        %v2991 = vld [vmem:[%s393 + $0x128] sm:$0xff]
        %v2992 = vld [vmem:[%s393 + $0x138] sm:$0xff]
        %v2993 = vld [vmem:[%s393 + $0x140] sm:$0xff]
        %v2994 = vld [vmem:[%s393 + $0x150] sm:$0xff]
        %v2995 = vld [vmem:[%s393 + $0x158] sm:$0xff]
        %v2996 = vld [vmem:[%s393 + $0x168] sm:$0xff]
        %v2997 = vld [vmem:[%s393 + $0x170] sm:$0xff]
        %3030 = vrot.lane.b32.xlu0 %v2966, 64
        %v3031 = vpop.permute.xlu0 %3030
        %3032 = vrot.lane.b32.xlu0 %v2967, 64
        %v3033 = vpop.permute.xlu0 %3032
        %3034 = vrot.lane.b32.xlu0 %v2968, 64
        %v3035 = vpop.permute.xlu0 %3034
        %3036 = vrot.lane.b32.xlu0 %v2969, 64
        %v3037 = vpop.permute.xlu0 %3036
        %3038 = vrot.lane.b32.xlu0 %v2970, 64
        %v3039 = vpop.permute.xlu0 %3038
        %3040 = vrot.lane.b32.xlu0 %v2971, 64
        %v3041 = vpop.permute.xlu0 %3040
        %3042 = vrot.lane.b32.xlu0 %v2972, 64
        %v3043 = vpop.permute.xlu0 %3042
        %3044 = vrot.lane.b32.xlu0 %v2973, 64
        %v3045 = vpop.permute.xlu0 %3044
        %3046 = vrot.lane.b32.xlu0 %v2974, 64
        %v3047 = vpop.permute.xlu0 %3046
        %3048 = vrot.lane.b32.xlu0 %v2975, 64
        %v3049 = vpop.permute.xlu0 %3048
        %3050 = vrot.lane.b32.xlu0 %v2976, 64
        %v3051 = vpop.permute.xlu0 %3050
        %3052 = vrot.lane.b32.xlu0 %v2977, 64
        %v3053 = vpop.permute.xlu0 %3052
        %3054 = vrot.lane.b32.xlu0 %v2978, 64
        %v3055 = vpop.permute.xlu0 %3054
        %3056 = vrot.lane.b32.xlu0 %v2979, 64
        %v3057 = vpop.permute.xlu0 %3056
        %3058 = vrot.lane.b32.xlu0 %v2980, 64
        %v3059 = vpop.permute.xlu0 %3058
        %3060 = vrot.lane.b32.xlu0 %v2981, 64
        %v3061 = vpop.permute.xlu0 %3060
        %3062 = vrot.lane.b32.xlu0 %v2982, 64
        %v3063 = vpop.permute.xlu0 %3062
        %3064 = vrot.lane.b32.xlu0 %v2983, 64
        %v3065 = vpop.permute.xlu0 %3064
        %3066 = vrot.lane.b32.xlu0 %v2984, 64
        %v3067 = vpop.permute.xlu0 %3066
        %3068 = vrot.lane.b32.xlu0 %v2985, 64
        %v3069 = vpop.permute.xlu0 %3068
        %3070 = vrot.lane.b32.xlu0 %v2986, 64
        %v3071 = vpop.permute.xlu0 %3070
        %3072 = vrot.lane.b32.xlu0 %v2987, 64
        %v3073 = vpop.permute.xlu0 %3072
        %3074 = vrot.lane.b32.xlu0 %v2988, 64
        %v3075 = vpop.permute.xlu0 %3074
        %3076 = vrot.lane.b32.xlu0 %v2989, 64
        %v3077 = vpop.permute.xlu0 %3076
        %3078 = vrot.lane.b32.xlu0 %v2990, 64
        %v3079 = vpop.permute.xlu0 %3078
        %3080 = vrot.lane.b32.xlu0 %v2991, 64
        %v3081 = vpop.permute.xlu0 %3080
        %3082 = vrot.lane.b32.xlu0 %v2992, 64
        %v3083 = vpop.permute.xlu0 %3082
        %3084 = vrot.lane.b32.xlu0 %v2993, 64
        %v3085 = vpop.permute.xlu0 %3084
        %3086 = vrot.lane.b32.xlu0 %v2994, 64
        %v3087 = vpop.permute.xlu0 %3086
        %3088 = vrot.lane.b32.xlu0 %v2995, 64
        %v3089 = vpop.permute.xlu0 %3088
        %3090 = vrot.lane.b32.xlu0 %v2996, 64
        %v3091 = vpop.permute.xlu0 %3090
        %3092 = vrot.lane.b32.xlu0 %v2997, 64
        %v3093 = vpop.permute.xlu0 %3092
        %3126 = vst.msk [vmem:[#allocation3 + $0x8] sm:$0xff] %vm650, %v3031
        %3127 = vst.msk [vmem:[#allocation3 + $0x30] sm:$0xff] %vm650, %v3033
        %3128 = vst.msk [vmem:[#allocation3 + $0x58] sm:$0xff] %vm650, %v3035
        %3129 = vst.msk [vmem:[#allocation3 + $0x80] sm:$0xff] %vm650, %v3037
        %3130 = vst.msk [vmem:[#allocation3 + $0xa8] sm:$0xff] %vm650, %v3039
        %3131 = vst.msk [vmem:[#allocation3 + $0xd0] sm:$0xff] %vm650, %v3041
        %3132 = vst.msk [vmem:[#allocation3 + $0xf8] sm:$0xff] %vm650, %v3043
        %3133 = vst.msk [vmem:[#allocation3 + $0x120] sm:$0xff] %vm650, %v3045
        %3134 = vst.msk [vmem:[#allocation3 + $0x148] sm:$0xff] %vm650, %v3047
        %3135 = vst.msk [vmem:[#allocation3 + $0x170] sm:$0xff] %vm650, %v3049
        %3136 = vst.msk [vmem:[#allocation3 + $0x198] sm:$0xff] %vm650, %v3051
        %3137 = vst.msk [vmem:[#allocation3 + $0x1c0] sm:$0xff] %vm650, %v3053
        %3138 = vst.msk [vmem:[#allocation3 + $0x1e8] sm:$0xff] %vm650, %v3055
        %3139 = vst.msk [vmem:[#allocation3 + $0x210] sm:$0xff] %vm650, %v3057
        %3140 = vst.msk [vmem:[#allocation3 + $0x238] sm:$0xff] %vm650, %v3059
        %3141 = vst.msk [vmem:[#allocation3 + $0x260] sm:$0xff] %vm650, %v3061
        %3142 = vst.msk [vmem:[#allocation3 + $0x288] sm:$0xff] %vm650, %v3063
        %3143 = vst.msk [vmem:[#allocation3 + $0x2b0] sm:$0xff] %vm650, %v3065
        %3144 = vst.msk [vmem:[#allocation3 + $0x2d8] sm:$0xff] %vm650, %v3067
        %3145 = vst.msk [vmem:[#allocation3 + $0x300] sm:$0xff] %vm650, %v3069
        %3146 = vst.msk [vmem:[#allocation3 + $0x328] sm:$0xff] %vm650, %v3071
        %3147 = vst.msk [vmem:[#allocation3 + $0x350] sm:$0xff] %vm650, %v3073
        %3148 = vst.msk [vmem:[#allocation3 + $0x378] sm:$0xff] %vm650, %v3075
        %3149 = vst.msk [vmem:[#allocation3 + $0x3a0] sm:$0xff] %vm650, %v3077
        %3150 = vst.msk [vmem:[#allocation3 + $0x3c8] sm:$0xff] %vm650, %v3079
        %3151 = vst.msk [vmem:[#allocation3 + $0x3f0] sm:$0xff] %vm650, %v3081
        %3152 = vst.msk [vmem:[#allocation3 + $0x418] sm:$0xff] %vm650, %v3083
        %3153 = vst.msk [vmem:[#allocation3 + $0x440] sm:$0xff] %vm650, %v3085
        %3154 = vst.msk [vmem:[#allocation3 + $0x468] sm:$0xff] %vm650, %v3087
        %3155 = vst.msk [vmem:[#allocation3 + $0x490] sm:$0xff] %vm650, %v3089
        %3156 = vst.msk [vmem:[#allocation3 + $0x4b8] sm:$0xff] %vm650, %v3091
        %3157 = vst.msk [vmem:[#allocation3 + $0x4e0] sm:$0xff] %vm650, %v3093
        %v3158 = vld [vmem:[%s393 + $0x1] sm:$0xff]
        %v3159 = vld [vmem:[%s393 + $0x9] sm:$0xff]
        %v3160 = vld [vmem:[%s393 + $0x19] sm:$0xff]
        %v3161 = vld [vmem:[%s393 + $0x21] sm:$0xff]
        %v3162 = vld [vmem:[%s393 + $0x31] sm:$0xff]
        %v3163 = vld [vmem:[%s393 + $0x39] sm:$0xff]
        %v3164 = vld [vmem:[%s393 + $0x49] sm:$0xff]
        %v3165 = vld [vmem:[%s393 + $0x51] sm:$0xff]
        %v3166 = vld [vmem:[%s393 + $0x61] sm:$0xff]
        %v3167 = vld [vmem:[%s393 + $0x69] sm:$0xff]
        %v3168 = vld [vmem:[%s393 + $0x79] sm:$0xff]
        %v3169 = vld [vmem:[%s393 + $0x81] sm:$0xff]
        %v3170 = vld [vmem:[%s393 + $0x91] sm:$0xff]
        %v3171 = vld [vmem:[%s393 + $0x99] sm:$0xff]
        %v3172 = vld [vmem:[%s393 + $0xa9] sm:$0xff]
        %v3173 = vld [vmem:[%s393 + $0xb1] sm:$0xff]
        %v3174 = vld [vmem:[%s393 + $0xc1] sm:$0xff]
        %v3175 = vld [vmem:[%s393 + $0xc9] sm:$0xff]
        %v3176 = vld [vmem:[%s393 + $0xd9] sm:$0xff]
        %v3177 = vld [vmem:[%s393 + $0xe1] sm:$0xff]
        %v3178 = vld [vmem:[%s393 + $0xf1] sm:$0xff]
        %v3179 = vld [vmem:[%s393 + $0xf9] sm:$0xff]
        %v3180 = vld [vmem:[%s393 + $0x109] sm:$0xff]
        %v3181 = vld [vmem:[%s393 + $0x111] sm:$0xff]
        %v3182 = vld [vmem:[%s393 + $0x121] sm:$0xff]
        %v3183 = vld [vmem:[%s393 + $0x129] sm:$0xff]
        %v3184 = vld [vmem:[%s393 + $0x139] sm:$0xff]
        %v3185 = vld [vmem:[%s393 + $0x141] sm:$0xff]
        %v3186 = vld [vmem:[%s393 + $0x151] sm:$0xff]
        %v3187 = vld [vmem:[%s393 + $0x159] sm:$0xff]
        %v3188 = vld [vmem:[%s393 + $0x169] sm:$0xff]
        %v3189 = vld [vmem:[%s393 + $0x171] sm:$0xff]
        %3190 = vst.msk [vmem:[#allocation3 + $0x10] sm:$0xff] %vm305, %v3158
        %3191 = vst.msk [vmem:[#allocation3 + $0x38] sm:$0xff] %vm305, %v3159
        %3192 = vst.msk [vmem:[#allocation3 + $0x60] sm:$0xff] %vm305, %v3160
        %3193 = vst.msk [vmem:[#allocation3 + $0x88] sm:$0xff] %vm305, %v3161
        %3194 = vst.msk [vmem:[#allocation3 + $0xb0] sm:$0xff] %vm305, %v3162
        %3195 = vst.msk [vmem:[#allocation3 + $0xd8] sm:$0xff] %vm305, %v3163
        %3196 = vst.msk [vmem:[#allocation3 + $0x100] sm:$0xff] %vm305, %v3164
        %3197 = vst.msk [vmem:[#allocation3 + $0x128] sm:$0xff] %vm305, %v3165
        %3198 = vst.msk [vmem:[#allocation3 + $0x150] sm:$0xff] %vm305, %v3166
        %3199 = vst.msk [vmem:[#allocation3 + $0x178] sm:$0xff] %vm305, %v3167
        %3200 = vst.msk [vmem:[#allocation3 + $0x1a0] sm:$0xff] %vm305, %v3168
        %3201 = vst.msk [vmem:[#allocation3 + $0x1c8] sm:$0xff] %vm305, %v3169
        %3202 = vst.msk [vmem:[#allocation3 + $0x1f0] sm:$0xff] %vm305, %v3170
        %3203 = vst.msk [vmem:[#allocation3 + $0x218] sm:$0xff] %vm305, %v3171
        %3204 = vst.msk [vmem:[#allocation3 + $0x240] sm:$0xff] %vm305, %v3172
        %3205 = vst.msk [vmem:[#allocation3 + $0x268] sm:$0xff] %vm305, %v3173
        %3206 = vst.msk [vmem:[#allocation3 + $0x290] sm:$0xff] %vm305, %v3174
        %3207 = vst.msk [vmem:[#allocation3 + $0x2b8] sm:$0xff] %vm305, %v3175
        %3208 = vst.msk [vmem:[#allocation3 + $0x2e0] sm:$0xff] %vm305, %v3176
        %3209 = vst.msk [vmem:[#allocation3 + $0x308] sm:$0xff] %vm305, %v3177
        %3210 = vst.msk [vmem:[#allocation3 + $0x330] sm:$0xff] %vm305, %v3178
        %3211 = vst.msk [vmem:[#allocation3 + $0x358] sm:$0xff] %vm305, %v3179
        %3212 = vst.msk [vmem:[#allocation3 + $0x380] sm:$0xff] %vm305, %v3180
        %3213 = vst.msk [vmem:[#allocation3 + $0x3a8] sm:$0xff] %vm305, %v3181
        %3214 = vst.msk [vmem:[#allocation3 + $0x3d0] sm:$0xff] %vm305, %v3182
        %3215 = vst.msk [vmem:[#allocation3 + $0x3f8] sm:$0xff] %vm305, %v3183
        %3216 = vst.msk [vmem:[#allocation3 + $0x420] sm:$0xff] %vm305, %v3184
        %3217 = vst.msk [vmem:[#allocation3 + $0x448] sm:$0xff] %vm305, %v3185
        %3218 = vst.msk [vmem:[#allocation3 + $0x470] sm:$0xff] %vm305, %v3186
        %3219 = vst.msk [vmem:[#allocation3 + $0x498] sm:$0xff] %vm305, %v3187
        %3220 = vst.msk [vmem:[#allocation3 + $0x4c0] sm:$0xff] %vm305, %v3188
        %3221 = vst.msk [vmem:[#allocation3 + $0x4e8] sm:$0xff] %vm305, %v3189
        %v3222 = vld [vmem:[%s393 + $0x2] sm:$0xff]
        %v3223 = vld [vmem:[%s393 + $0xa] sm:$0xff]
        %v3224 = vld [vmem:[%s393 + $0x1a] sm:$0xff]
        %v3225 = vld [vmem:[%s393 + $0x22] sm:$0xff]
        %v3226 = vld [vmem:[%s393 + $0x32] sm:$0xff]
        %v3227 = vld [vmem:[%s393 + $0x3a] sm:$0xff]
        %v3228 = vld [vmem:[%s393 + $0x4a] sm:$0xff]
        %v3229 = vld [vmem:[%s393 + $0x52] sm:$0xff]
        %v3230 = vld [vmem:[%s393 + $0x62] sm:$0xff]
        %v3231 = vld [vmem:[%s393 + $0x6a] sm:$0xff]
        %v3232 = vld [vmem:[%s393 + $0x7a] sm:$0xff]
        %v3233 = vld [vmem:[%s393 + $0x82] sm:$0xff]
        %v3234 = vld [vmem:[%s393 + $0x92] sm:$0xff]
        %v3235 = vld [vmem:[%s393 + $0x9a] sm:$0xff]
        %v3236 = vld [vmem:[%s393 + $0xaa] sm:$0xff]
        %v3237 = vld [vmem:[%s393 + $0xb2] sm:$0xff]
        %v3238 = vld [vmem:[%s393 + $0xc2] sm:$0xff]
        %v3239 = vld [vmem:[%s393 + $0xca] sm:$0xff]
        %v3240 = vld [vmem:[%s393 + $0xda] sm:$0xff]
        %v3241 = vld [vmem:[%s393 + $0xe2] sm:$0xff]
        %v3242 = vld [vmem:[%s393 + $0xf2] sm:$0xff]
        %v3243 = vld [vmem:[%s393 + $0xfa] sm:$0xff]
        %v3244 = vld [vmem:[%s393 + $0x10a] sm:$0xff]
        %v3245 = vld [vmem:[%s393 + $0x112] sm:$0xff]
        %v3246 = vld [vmem:[%s393 + $0x122] sm:$0xff]
        %v3247 = vld [vmem:[%s393 + $0x12a] sm:$0xff]
        %v3248 = vld [vmem:[%s393 + $0x13a] sm:$0xff]
        %v3249 = vld [vmem:[%s393 + $0x142] sm:$0xff]
        %v3250 = vld [vmem:[%s393 + $0x152] sm:$0xff]
        %v3251 = vld [vmem:[%s393 + $0x15a] sm:$0xff]
        %v3252 = vld [vmem:[%s393 + $0x16a] sm:$0xff]
        %v3253 = vld [vmem:[%s393 + $0x172] sm:$0xff]
        %3286 = vrot.lane.b32.xlu0 %v3222, 64
        %v3287 = vpop.permute.xlu0 %3286
        %3288 = vrot.lane.b32.xlu0 %v3223, 64
        %v3289 = vpop.permute.xlu0 %3288
        %3290 = vrot.lane.b32.xlu0 %v3224, 64
        %v3291 = vpop.permute.xlu0 %3290
        %3292 = vrot.lane.b32.xlu0 %v3225, 64
        %v3293 = vpop.permute.xlu0 %3292
        %3294 = vrot.lane.b32.xlu0 %v3226, 64
        %v3295 = vpop.permute.xlu0 %3294
        %3296 = vrot.lane.b32.xlu0 %v3227, 64
        %v3297 = vpop.permute.xlu0 %3296
        %3298 = vrot.lane.b32.xlu0 %v3228, 64
        %v3299 = vpop.permute.xlu0 %3298
        %3300 = vrot.lane.b32.xlu0 %v3229, 64
        %v3301 = vpop.permute.xlu0 %3300
        %3302 = vrot.lane.b32.xlu0 %v3230, 64
        %v3303 = vpop.permute.xlu0 %3302
        %3304 = vrot.lane.b32.xlu0 %v3231, 64
        %v3305 = vpop.permute.xlu0 %3304
        %3306 = vrot.lane.b32.xlu0 %v3232, 64
        %v3307 = vpop.permute.xlu0 %3306
        %3308 = vrot.lane.b32.xlu0 %v3233, 64
        %v3309 = vpop.permute.xlu0 %3308
        %3310 = vrot.lane.b32.xlu0 %v3234, 64
        %v3311 = vpop.permute.xlu0 %3310
        %3312 = vrot.lane.b32.xlu0 %v3235, 64
        %v3313 = vpop.permute.xlu0 %3312
        %3314 = vrot.lane.b32.xlu0 %v3236, 64
        %v3315 = vpop.permute.xlu0 %3314
        %3316 = vrot.lane.b32.xlu0 %v3237, 64
        %v3317 = vpop.permute.xlu0 %3316
        %3318 = vrot.lane.b32.xlu0 %v3238, 64
        %v3319 = vpop.permute.xlu0 %3318
        %3320 = vrot.lane.b32.xlu0 %v3239, 64
        %v3321 = vpop.permute.xlu0 %3320
        %3322 = vrot.lane.b32.xlu0 %v3240, 64
        %v3323 = vpop.permute.xlu0 %3322
        %3324 = vrot.lane.b32.xlu0 %v3241, 64
        %v3325 = vpop.permute.xlu0 %3324
        %3326 = vrot.lane.b32.xlu0 %v3242, 64
        %v3327 = vpop.permute.xlu0 %3326
        %3328 = vrot.lane.b32.xlu0 %v3243, 64
        %v3329 = vpop.permute.xlu0 %3328
        %3330 = vrot.lane.b32.xlu0 %v3244, 64
        %v3331 = vpop.permute.xlu0 %3330
        %3332 = vrot.lane.b32.xlu0 %v3245, 64
        %v3333 = vpop.permute.xlu0 %3332
        %3334 = vrot.lane.b32.xlu0 %v3246, 64
        %v3335 = vpop.permute.xlu0 %3334
        %3336 = vrot.lane.b32.xlu0 %v3247, 64
        %v3337 = vpop.permute.xlu0 %3336
        %3338 = vrot.lane.b32.xlu0 %v3248, 64
        %v3339 = vpop.permute.xlu0 %3338
        %3340 = vrot.lane.b32.xlu0 %v3249, 64
        %v3341 = vpop.permute.xlu0 %3340
        %3342 = vrot.lane.b32.xlu0 %v3250, 64
        %v3343 = vpop.permute.xlu0 %3342
        %3344 = vrot.lane.b32.xlu0 %v3251, 64
        %v3345 = vpop.permute.xlu0 %3344
        %3346 = vrot.lane.b32.xlu0 %v3252, 64
        %v3347 = vpop.permute.xlu0 %3346
        %3348 = vrot.lane.b32.xlu0 %v3253, 64
        %v3349 = vpop.permute.xlu0 %3348
        %3382 = vst.msk [vmem:[#allocation3 + $0x10] sm:$0xff] %vm650, %v3287
        %3383 = vst.msk [vmem:[#allocation3 + $0x38] sm:$0xff] %vm650, %v3289
        %3384 = vst.msk [vmem:[#allocation3 + $0x60] sm:$0xff] %vm650, %v3291
        %3385 = vst.msk [vmem:[#allocation3 + $0x88] sm:$0xff] %vm650, %v3293
        %3386 = vst.msk [vmem:[#allocation3 + $0xb0] sm:$0xff] %vm650, %v3295
        %3387 = vst.msk [vmem:[#allocation3 + $0xd8] sm:$0xff] %vm650, %v3297
        %3388 = vst.msk [vmem:[#allocation3 + $0x100] sm:$0xff] %vm650, %v3299
        %3389 = vst.msk [vmem:[#allocation3 + $0x128] sm:$0xff] %vm650, %v3301
        %3390 = vst.msk [vmem:[#allocation3 + $0x150] sm:$0xff] %vm650, %v3303
        %3391 = vst.msk [vmem:[#allocation3 + $0x178] sm:$0xff] %vm650, %v3305
        %3392 = vst.msk [vmem:[#allocation3 + $0x1a0] sm:$0xff] %vm650, %v3307
        %3393 = vst.msk [vmem:[#allocation3 + $0x1c8] sm:$0xff] %vm650, %v3309
        %3394 = vst.msk [vmem:[#allocation3 + $0x1f0] sm:$0xff] %vm650, %v3311
        %3395 = vst.msk [vmem:[#allocation3 + $0x218] sm:$0xff] %vm650, %v3313
        %3396 = vst.msk [vmem:[#allocation3 + $0x240] sm:$0xff] %vm650, %v3315
        %3397 = vst.msk [vmem:[#allocation3 + $0x268] sm:$0xff] %vm650, %v3317
        %3398 = vst.msk [vmem:[#allocation3 + $0x290] sm:$0xff] %vm650, %v3319
        %3399 = vst.msk [vmem:[#allocation3 + $0x2b8] sm:$0xff] %vm650, %v3321
        %3400 = vst.msk [vmem:[#allocation3 + $0x2e0] sm:$0xff] %vm650, %v3323
        %3401 = vst.msk [vmem:[#allocation3 + $0x308] sm:$0xff] %vm650, %v3325
        %3402 = vst.msk [vmem:[#allocation3 + $0x330] sm:$0xff] %vm650, %v3327
        %3403 = vst.msk [vmem:[#allocation3 + $0x358] sm:$0xff] %vm650, %v3329
        %3404 = vst.msk [vmem:[#allocation3 + $0x380] sm:$0xff] %vm650, %v3331
        %3405 = vst.msk [vmem:[#allocation3 + $0x3a8] sm:$0xff] %vm650, %v3333
        %3406 = vst.msk [vmem:[#allocation3 + $0x3d0] sm:$0xff] %vm650, %v3335
        %3407 = vst.msk [vmem:[#allocation3 + $0x3f8] sm:$0xff] %vm650, %v3337
        %3408 = vst.msk [vmem:[#allocation3 + $0x420] sm:$0xff] %vm650, %v3339
        %3409 = vst.msk [vmem:[#allocation3 + $0x448] sm:$0xff] %vm650, %v3341
        %3410 = vst.msk [vmem:[#allocation3 + $0x470] sm:$0xff] %vm650, %v3343
        %3411 = vst.msk [vmem:[#allocation3 + $0x498] sm:$0xff] %vm650, %v3345
        %3412 = vst.msk [vmem:[#allocation3 + $0x4c0] sm:$0xff] %vm650, %v3347
        %3413 = vst.msk [vmem:[#allocation3 + $0x4e8] sm:$0xff] %vm650, %v3349
        %v3414 = vld [vmem:[%s1195] sm:$0xff]
        %v3415 = vld [vmem:[%s1195 + $0x8] sm:$0xff]
        %v3416 = vld [vmem:[%s1195 + $0x18] sm:$0xff]
        %v3417 = vld [vmem:[%s1195 + $0x20] sm:$0xff]
        %v3418 = vld [vmem:[%s1195 + $0x30] sm:$0xff]
        %v3419 = vld [vmem:[%s1195 + $0x38] sm:$0xff]
        %v3420 = vld [vmem:[%s1195 + $0x48] sm:$0xff]
        %v3421 = vld [vmem:[%s1195 + $0x50] sm:$0xff]
        %v3422 = vld [vmem:[%s1195 + $0x60] sm:$0xff]
        %v3423 = vld [vmem:[%s1195 + $0x68] sm:$0xff]
        %v3424 = vld [vmem:[%s1195 + $0x78] sm:$0xff]
        %v3425 = vld [vmem:[%s1195 + $0x80] sm:$0xff]
        %v3426 = vld [vmem:[%s1195 + $0x90] sm:$0xff]
        %v3427 = vld [vmem:[%s1195 + $0x98] sm:$0xff]
        %v3428 = vld [vmem:[%s1195 + $0xa8] sm:$0xff]
        %v3429 = vld [vmem:[%s1195 + $0xb0] sm:$0xff]
        %v3430 = vld [vmem:[%s1195 + $0xc0] sm:$0xff]
        %v3431 = vld [vmem:[%s1195 + $0xc8] sm:$0xff]
        %v3432 = vld [vmem:[%s1195 + $0xd8] sm:$0xff]
        %v3433 = vld [vmem:[%s1195 + $0xe0] sm:$0xff]
        %v3434 = vld [vmem:[%s1195 + $0xf0] sm:$0xff]
        %v3435 = vld [vmem:[%s1195 + $0xf8] sm:$0xff]
        %v3436 = vld [vmem:[%s1195 + $0x108] sm:$0xff]
        %v3437 = vld [vmem:[%s1195 + $0x110] sm:$0xff]
        %v3438 = vld [vmem:[%s1195 + $0x120] sm:$0xff]
        %v3439 = vld [vmem:[%s1195 + $0x128] sm:$0xff]
        %v3440 = vld [vmem:[%s1195 + $0x138] sm:$0xff]
        %v3441 = vld [vmem:[%s1195 + $0x140] sm:$0xff]
        %v3442 = vld [vmem:[%s1195 + $0x150] sm:$0xff]
        %v3443 = vld [vmem:[%s1195 + $0x158] sm:$0xff]
        %v3444 = vld [vmem:[%s1195 + $0x168] sm:$0xff]
        %v3445 = vld [vmem:[%s1195 + $0x170] sm:$0xff]
        %3446 = vst.msk [vmem:[#allocation3 + $0x18] sm:$0xff] %vm305, %v3414
        %3447 = vst.msk [vmem:[#allocation3 + $0x40] sm:$0xff] %vm305, %v3415
        %3448 = vst.msk [vmem:[#allocation3 + $0x68] sm:$0xff] %vm305, %v3416
        %3449 = vst.msk [vmem:[#allocation3 + $0x90] sm:$0xff] %vm305, %v3417
        %3450 = vst.msk [vmem:[#allocation3 + $0xb8] sm:$0xff] %vm305, %v3418
        %3451 = vst.msk [vmem:[#allocation3 + $0xe0] sm:$0xff] %vm305, %v3419
        %3452 = vst.msk [vmem:[#allocation3 + $0x108] sm:$0xff] %vm305, %v3420
        %3453 = vst.msk [vmem:[#allocation3 + $0x130] sm:$0xff] %vm305, %v3421
        %3454 = vst.msk [vmem:[#allocation3 + $0x158] sm:$0xff] %vm305, %v3422
        %3455 = vst.msk [vmem:[#allocation3 + $0x180] sm:$0xff] %vm305, %v3423
        %3456 = vst.msk [vmem:[#allocation3 + $0x1a8] sm:$0xff] %vm305, %v3424
        %3457 = vst.msk [vmem:[#allocation3 + $0x1d0] sm:$0xff] %vm305, %v3425
        %3458 = vst.msk [vmem:[#allocation3 + $0x1f8] sm:$0xff] %vm305, %v3426
        %3459 = vst.msk [vmem:[#allocation3 + $0x220] sm:$0xff] %vm305, %v3427
        %3460 = vst.msk [vmem:[#allocation3 + $0x248] sm:$0xff] %vm305, %v3428
        %3461 = vst.msk [vmem:[#allocation3 + $0x270] sm:$0xff] %vm305, %v3429
        %3462 = vst.msk [vmem:[#allocation3 + $0x298] sm:$0xff] %vm305, %v3430
        %3463 = vst.msk [vmem:[#allocation3 + $0x2c0] sm:$0xff] %vm305, %v3431
        %3464 = vst.msk [vmem:[#allocation3 + $0x2e8] sm:$0xff] %vm305, %v3432
        %3465 = vst.msk [vmem:[#allocation3 + $0x310] sm:$0xff] %vm305, %v3433
        %3466 = vst.msk [vmem:[#allocation3 + $0x338] sm:$0xff] %vm305, %v3434
        %3467 = vst.msk [vmem:[#allocation3 + $0x360] sm:$0xff] %vm305, %v3435
        %3468 = vst.msk [vmem:[#allocation3 + $0x388] sm:$0xff] %vm305, %v3436
        %3469 = vst.msk [vmem:[#allocation3 + $0x3b0] sm:$0xff] %vm305, %v3437
        %3470 = vst.msk [vmem:[#allocation3 + $0x3d8] sm:$0xff] %vm305, %v3438
        %3471 = vst.msk [vmem:[#allocation3 + $0x400] sm:$0xff] %vm305, %v3439
        %3472 = vst.msk [vmem:[#allocation3 + $0x428] sm:$0xff] %vm305, %v3440
        %3473 = vst.msk [vmem:[#allocation3 + $0x450] sm:$0xff] %vm305, %v3441
        %3474 = vst.msk [vmem:[#allocation3 + $0x478] sm:$0xff] %vm305, %v3442
        %3475 = vst.msk [vmem:[#allocation3 + $0x4a0] sm:$0xff] %vm305, %v3443
        %3476 = vst.msk [vmem:[#allocation3 + $0x4c8] sm:$0xff] %vm305, %v3444
        %3477 = vst.msk [vmem:[#allocation3 + $0x4f0] sm:$0xff] %vm305, %v3445
        %v3478 = vld [vmem:[%s1195 + $0x1] sm:$0xff]
        %v3479 = vld [vmem:[%s1195 + $0x9] sm:$0xff]
        %v3480 = vld [vmem:[%s1195 + $0x19] sm:$0xff]
        %v3481 = vld [vmem:[%s1195 + $0x21] sm:$0xff]
        %v3482 = vld [vmem:[%s1195 + $0x31] sm:$0xff]
        %v3483 = vld [vmem:[%s1195 + $0x39] sm:$0xff]
        %v3484 = vld [vmem:[%s1195 + $0x49] sm:$0xff]
        %v3485 = vld [vmem:[%s1195 + $0x51] sm:$0xff]
        %v3486 = vld [vmem:[%s1195 + $0x61] sm:$0xff]
        %v3487 = vld [vmem:[%s1195 + $0x69] sm:$0xff]
        %v3488 = vld [vmem:[%s1195 + $0x79] sm:$0xff]
        %v3489 = vld [vmem:[%s1195 + $0x81] sm:$0xff]
        %v3490 = vld [vmem:[%s1195 + $0x91] sm:$0xff]
        %v3491 = vld [vmem:[%s1195 + $0x99] sm:$0xff]
        %v3492 = vld [vmem:[%s1195 + $0xa9] sm:$0xff]
        %v3493 = vld [vmem:[%s1195 + $0xb1] sm:$0xff]
        %v3494 = vld [vmem:[%s1195 + $0xc1] sm:$0xff]
        %v3495 = vld [vmem:[%s1195 + $0xc9] sm:$0xff]
        %v3496 = vld [vmem:[%s1195 + $0xd9] sm:$0xff]
        %v3497 = vld [vmem:[%s1195 + $0xe1] sm:$0xff]
        %v3498 = vld [vmem:[%s1195 + $0xf1] sm:$0xff]
        %v3499 = vld [vmem:[%s1195 + $0xf9] sm:$0xff]
        %v3500 = vld [vmem:[%s1195 + $0x109] sm:$0xff]
        %v3501 = vld [vmem:[%s1195 + $0x111] sm:$0xff]
        %v3502 = vld [vmem:[%s1195 + $0x121] sm:$0xff]
        %v3503 = vld [vmem:[%s1195 + $0x129] sm:$0xff]
        %v3504 = vld [vmem:[%s1195 + $0x139] sm:$0xff]
        %v3505 = vld [vmem:[%s1195 + $0x141] sm:$0xff]
        %v3506 = vld [vmem:[%s1195 + $0x151] sm:$0xff]
        %v3507 = vld [vmem:[%s1195 + $0x159] sm:$0xff]
        %v3508 = vld [vmem:[%s1195 + $0x169] sm:$0xff]
        %v3509 = vld [vmem:[%s1195 + $0x171] sm:$0xff]
        %3542 = vrot.lane.b32.xlu0 %v3478, 64
        %v3543 = vpop.permute.xlu0 %3542
        %3544 = vrot.lane.b32.xlu0 %v3479, 64
        %v3545 = vpop.permute.xlu0 %3544
        %3546 = vrot.lane.b32.xlu0 %v3480, 64
        %v3547 = vpop.permute.xlu0 %3546
        %3548 = vrot.lane.b32.xlu0 %v3481, 64
        %v3549 = vpop.permute.xlu0 %3548
        %3550 = vrot.lane.b32.xlu0 %v3482, 64
        %v3551 = vpop.permute.xlu0 %3550
        %3552 = vrot.lane.b32.xlu0 %v3483, 64
        %v3553 = vpop.permute.xlu0 %3552
        %3554 = vrot.lane.b32.xlu0 %v3484, 64
        %v3555 = vpop.permute.xlu0 %3554
        %3556 = vrot.lane.b32.xlu0 %v3485, 64
        %v3557 = vpop.permute.xlu0 %3556
        %3558 = vrot.lane.b32.xlu0 %v3486, 64
        %v3559 = vpop.permute.xlu0 %3558
        %3560 = vrot.lane.b32.xlu0 %v3487, 64
        %v3561 = vpop.permute.xlu0 %3560
        %3562 = vrot.lane.b32.xlu0 %v3488, 64
        %v3563 = vpop.permute.xlu0 %3562
        %3564 = vrot.lane.b32.xlu0 %v3489, 64
        %v3565 = vpop.permute.xlu0 %3564
        %3566 = vrot.lane.b32.xlu0 %v3490, 64
        %v3567 = vpop.permute.xlu0 %3566
        %3568 = vrot.lane.b32.xlu0 %v3491, 64
        %v3569 = vpop.permute.xlu0 %3568
        %3570 = vrot.lane.b32.xlu0 %v3492, 64
        %v3571 = vpop.permute.xlu0 %3570
        %3572 = vrot.lane.b32.xlu0 %v3493, 64
        %v3573 = vpop.permute.xlu0 %3572
        %3574 = vrot.lane.b32.xlu0 %v3494, 64
        %v3575 = vpop.permute.xlu0 %3574
        %3576 = vrot.lane.b32.xlu0 %v3495, 64
        %v3577 = vpop.permute.xlu0 %3576
        %3578 = vrot.lane.b32.xlu0 %v3496, 64
        %v3579 = vpop.permute.xlu0 %3578
        %3580 = vrot.lane.b32.xlu0 %v3497, 64
        %v3581 = vpop.permute.xlu0 %3580
        %3582 = vrot.lane.b32.xlu0 %v3498, 64
        %v3583 = vpop.permute.xlu0 %3582
        %3584 = vrot.lane.b32.xlu0 %v3499, 64
        %v3585 = vpop.permute.xlu0 %3584
        %3586 = vrot.lane.b32.xlu0 %v3500, 64
        %v3587 = vpop.permute.xlu0 %3586
        %3588 = vrot.lane.b32.xlu0 %v3501, 64
        %v3589 = vpop.permute.xlu0 %3588
        %3590 = vrot.lane.b32.xlu0 %v3502, 64
        %v3591 = vpop.permute.xlu0 %3590
        %3592 = vrot.lane.b32.xlu0 %v3503, 64
        %v3593 = vpop.permute.xlu0 %3592
        %3594 = vrot.lane.b32.xlu0 %v3504, 64
        %v3595 = vpop.permute.xlu0 %3594
        %3596 = vrot.lane.b32.xlu0 %v3505, 64
        %v3597 = vpop.permute.xlu0 %3596
        %3598 = vrot.lane.b32.xlu0 %v3506, 64
        %v3599 = vpop.permute.xlu0 %3598
        %3600 = vrot.lane.b32.xlu0 %v3507, 64
        %v3601 = vpop.permute.xlu0 %3600
        %3602 = vrot.lane.b32.xlu0 %v3508, 64
        %v3603 = vpop.permute.xlu0 %3602
        %3604 = vrot.lane.b32.xlu0 %v3509, 64
        %v3605 = vpop.permute.xlu0 %3604
        %3638 = vst.msk [vmem:[#allocation3 + $0x18] sm:$0xff] %vm650, %v3543
        %3639 = vst.msk [vmem:[#allocation3 + $0x40] sm:$0xff] %vm650, %v3545
        %3640 = vst.msk [vmem:[#allocation3 + $0x68] sm:$0xff] %vm650, %v3547
        %3641 = vst.msk [vmem:[#allocation3 + $0x90] sm:$0xff] %vm650, %v3549
        %3642 = vst.msk [vmem:[#allocation3 + $0xb8] sm:$0xff] %vm650, %v3551
        %3643 = vst.msk [vmem:[#allocation3 + $0xe0] sm:$0xff] %vm650, %v3553
        %3644 = vst.msk [vmem:[#allocation3 + $0x108] sm:$0xff] %vm650, %v3555
        %3645 = vst.msk [vmem:[#allocation3 + $0x130] sm:$0xff] %vm650, %v3557
        %3646 = vst.msk [vmem:[#allocation3 + $0x158] sm:$0xff] %vm650, %v3559
        %3647 = vst.msk [vmem:[#allocation3 + $0x180] sm:$0xff] %vm650, %v3561
        %3648 = vst.msk [vmem:[#allocation3 + $0x1a8] sm:$0xff] %vm650, %v3563
        %3649 = vst.msk [vmem:[#allocation3 + $0x1d0] sm:$0xff] %vm650, %v3565
        %3650 = vst.msk [vmem:[#allocation3 + $0x1f8] sm:$0xff] %vm650, %v3567
        %3651 = vst.msk [vmem:[#allocation3 + $0x220] sm:$0xff] %vm650, %v3569
        %3652 = vst.msk [vmem:[#allocation3 + $0x248] sm:$0xff] %vm650, %v3571
        %3653 = vst.msk [vmem:[#allocation3 + $0x270] sm:$0xff] %vm650, %v3573
        %3654 = vst.msk [vmem:[#allocation3 + $0x298] sm:$0xff] %vm650, %v3575
        %3655 = vst.msk [vmem:[#allocation3 + $0x2c0] sm:$0xff] %vm650, %v3577
        %3656 = vst.msk [vmem:[#allocation3 + $0x2e8] sm:$0xff] %vm650, %v3579
        %3657 = vst.msk [vmem:[#allocation3 + $0x310] sm:$0xff] %vm650, %v3581
        %3658 = vst.msk [vmem:[#allocation3 + $0x338] sm:$0xff] %vm650, %v3583
        %3659 = vst.msk [vmem:[#allocation3 + $0x360] sm:$0xff] %vm650, %v3585
        %3660 = vst.msk [vmem:[#allocation3 + $0x388] sm:$0xff] %vm650, %v3587
        %3661 = vst.msk [vmem:[#allocation3 + $0x3b0] sm:$0xff] %vm650, %v3589
        %3662 = vst.msk [vmem:[#allocation3 + $0x3d8] sm:$0xff] %vm650, %v3591
        %3663 = vst.msk [vmem:[#allocation3 + $0x400] sm:$0xff] %vm650, %v3593
        %3664 = vst.msk [vmem:[#allocation3 + $0x428] sm:$0xff] %vm650, %v3595
        %3665 = vst.msk [vmem:[#allocation3 + $0x450] sm:$0xff] %vm650, %v3597
        %3666 = vst.msk [vmem:[#allocation3 + $0x478] sm:$0xff] %vm650, %v3599
        %3667 = vst.msk [vmem:[#allocation3 + $0x4a0] sm:$0xff] %vm650, %v3601
        %3668 = vst.msk [vmem:[#allocation3 + $0x4c8] sm:$0xff] %vm650, %v3603
        %3669 = vst.msk [vmem:[#allocation3 + $0x4f0] sm:$0xff] %vm650, %v3605
        %v3670 = vld [vmem:[%s1195 + $0x2] sm:$0xff]
        %v3671 = vld [vmem:[%s1195 + $0xa] sm:$0xff]
        %v3672 = vld [vmem:[%s1195 + $0x1a] sm:$0xff]
        %v3673 = vld [vmem:[%s1195 + $0x22] sm:$0xff]
        %v3674 = vld [vmem:[%s1195 + $0x32] sm:$0xff]
        %v3675 = vld [vmem:[%s1195 + $0x3a] sm:$0xff]
        %v3676 = vld [vmem:[%s1195 + $0x4a] sm:$0xff]
        %v3677 = vld [vmem:[%s1195 + $0x52] sm:$0xff]
        %v3678 = vld [vmem:[%s1195 + $0x62] sm:$0xff]
        %v3679 = vld [vmem:[%s1195 + $0x6a] sm:$0xff]
        %v3680 = vld [vmem:[%s1195 + $0x7a] sm:$0xff]
        %v3681 = vld [vmem:[%s1195 + $0x82] sm:$0xff]
        %v3682 = vld [vmem:[%s1195 + $0x92] sm:$0xff]
        %v3683 = vld [vmem:[%s1195 + $0x9a] sm:$0xff]
        %v3684 = vld [vmem:[%s1195 + $0xaa] sm:$0xff]
        %v3685 = vld [vmem:[%s1195 + $0xb2] sm:$0xff]
        %v3686 = vld [vmem:[%s1195 + $0xc2] sm:$0xff]
        %v3687 = vld [vmem:[%s1195 + $0xca] sm:$0xff]
        %v3688 = vld [vmem:[%s1195 + $0xda] sm:$0xff]
        %v3689 = vld [vmem:[%s1195 + $0xe2] sm:$0xff]
        %v3690 = vld [vmem:[%s1195 + $0xf2] sm:$0xff]
        %v3691 = vld [vmem:[%s1195 + $0xfa] sm:$0xff]
        %v3692 = vld [vmem:[%s1195 + $0x10a] sm:$0xff]
        %v3693 = vld [vmem:[%s1195 + $0x112] sm:$0xff]
        %v3694 = vld [vmem:[%s1195 + $0x122] sm:$0xff]
        %v3695 = vld [vmem:[%s1195 + $0x12a] sm:$0xff]
        %v3696 = vld [vmem:[%s1195 + $0x13a] sm:$0xff]
        %v3697 = vld [vmem:[%s1195 + $0x142] sm:$0xff]
        %v3698 = vld [vmem:[%s1195 + $0x152] sm:$0xff]
        %v3699 = vld [vmem:[%s1195 + $0x15a] sm:$0xff]
        %v3700 = vld [vmem:[%s1195 + $0x16a] sm:$0xff]
        %v3701 = vld [vmem:[%s1195 + $0x172] sm:$0xff]
        %3702 = vst.msk [vmem:[#allocation3 + $0x20] sm:$0xff] %vm305, %v3670
        %3703 = vst.msk [vmem:[#allocation3 + $0x48] sm:$0xff] %vm305, %v3671
        %3704 = vst.msk [vmem:[#allocation3 + $0x70] sm:$0xff] %vm305, %v3672
        %3705 = vst.msk [vmem:[#allocation3 + $0x98] sm:$0xff] %vm305, %v3673
        %3706 = vst.msk [vmem:[#allocation3 + $0xc0] sm:$0xff] %vm305, %v3674
        %3707 = vst.msk [vmem:[#allocation3 + $0xe8] sm:$0xff] %vm305, %v3675
        %3708 = vst.msk [vmem:[#allocation3 + $0x110] sm:$0xff] %vm305, %v3676
        %3709 = vst.msk [vmem:[#allocation3 + $0x138] sm:$0xff] %vm305, %v3677
        %3710 = vst.msk [vmem:[#allocation3 + $0x160] sm:$0xff] %vm305, %v3678
        %3711 = vst.msk [vmem:[#allocation3 + $0x188] sm:$0xff] %vm305, %v3679
        %3712 = vst.msk [vmem:[#allocation3 + $0x1b0] sm:$0xff] %vm305, %v3680
        %3713 = vst.msk [vmem:[#allocation3 + $0x1d8] sm:$0xff] %vm305, %v3681
        %3714 = vst.msk [vmem:[#allocation3 + $0x200] sm:$0xff] %vm305, %v3682
        %3715 = vst.msk [vmem:[#allocation3 + $0x228] sm:$0xff] %vm305, %v3683
        %3716 = vst.msk [vmem:[#allocation3 + $0x250] sm:$0xff] %vm305, %v3684
        %3717 = vst.msk [vmem:[#allocation3 + $0x278] sm:$0xff] %vm305, %v3685
        %3718 = vst.msk [vmem:[#allocation3 + $0x2a0] sm:$0xff] %vm305, %v3686
        %3719 = vst.msk [vmem:[#allocation3 + $0x2c8] sm:$0xff] %vm305, %v3687
        %3720 = vst.msk [vmem:[#allocation3 + $0x2f0] sm:$0xff] %vm305, %v3688
        %3721 = vst.msk [vmem:[#allocation3 + $0x318] sm:$0xff] %vm305, %v3689
        %3722 = vst.msk [vmem:[#allocation3 + $0x340] sm:$0xff] %vm305, %v3690
        %3723 = vst.msk [vmem:[#allocation3 + $0x368] sm:$0xff] %vm305, %v3691
        %3724 = vst.msk [vmem:[#allocation3 + $0x390] sm:$0xff] %vm305, %v3692
        %3725 = vst.msk [vmem:[#allocation3 + $0x3b8] sm:$0xff] %vm305, %v3693
        %3726 = vst.msk [vmem:[#allocation3 + $0x3e0] sm:$0xff] %vm305, %v3694
        %3727 = vst.msk [vmem:[#allocation3 + $0x408] sm:$0xff] %vm305, %v3695
        %3728 = vst.msk [vmem:[#allocation3 + $0x430] sm:$0xff] %vm305, %v3696
        %3729 = vst.msk [vmem:[#allocation3 + $0x458] sm:$0xff] %vm305, %v3697
        %3730 = vst.msk [vmem:[#allocation3 + $0x480] sm:$0xff] %vm305, %v3698
        %3731 = vst.msk [vmem:[#allocation3 + $0x4a8] sm:$0xff] %vm305, %v3699
        %3732 = vst.msk [vmem:[#allocation3 + $0x4d0] sm:$0xff] %vm305, %v3700
        %3733 = vst.msk [vmem:[#allocation3 + $0x4f8] sm:$0xff] %vm305, %v3701
        %v3734 = vld [vmem:[#allocation3] sm:$0xff]
        %v3735 = vld [vmem:[#allocation3 + $0x8] sm:$0xff]
        %v3736 = vld [vmem:[#allocation3 + $0x10] sm:$0xff]
        %v3737 = vld [vmem:[#allocation3 + $0x18] sm:$0xff]
        %v3738 = vld [vmem:[#allocation3 + $0x20] sm:$0xff]
        %v3739 = vld [vmem:[#allocation3 + $0x28] sm:$0xff]
        %v3740 = vld [vmem:[#allocation3 + $0x30] sm:$0xff]
        %v3741 = vld [vmem:[#allocation3 + $0x38] sm:$0xff]
        %v3742 = vld [vmem:[#allocation3 + $0x40] sm:$0xff]
        %v3743 = vld [vmem:[#allocation3 + $0x48] sm:$0xff]
        %v3744 = vld [vmem:[#allocation3 + $0x50] sm:$0xff]
        %v3745 = vld [vmem:[#allocation3 + $0x58] sm:$0xff]
        %v3746 = vld [vmem:[#allocation3 + $0x60] sm:$0xff]
        %v3747 = vld [vmem:[#allocation3 + $0x68] sm:$0xff]
        %v3748 = vld [vmem:[#allocation3 + $0x70] sm:$0xff]
        %v3749 = vld [vmem:[#allocation3 + $0x78] sm:$0xff]
        %v3750 = vld [vmem:[#allocation3 + $0x80] sm:$0xff]
        %v3751 = vld [vmem:[#allocation3 + $0x88] sm:$0xff]
        %v3752 = vld [vmem:[#allocation3 + $0x90] sm:$0xff]
        %v3753 = vld [vmem:[#allocation3 + $0x98] sm:$0xff]
        %v3754 = vld [vmem:[#allocation3 + $0xa0] sm:$0xff]
        %v3755 = vld [vmem:[#allocation3 + $0xa8] sm:$0xff]
        %v3756 = vld [vmem:[#allocation3 + $0xb0] sm:$0xff]
        %v3757 = vld [vmem:[#allocation3 + $0xb8] sm:$0xff]
        %v3758 = vld [vmem:[#allocation3 + $0xc0] sm:$0xff]
        %v3759 = vld [vmem:[#allocation3 + $0xc8] sm:$0xff]
        %v3760 = vld [vmem:[#allocation3 + $0xd0] sm:$0xff]
        %v3761 = vld [vmem:[#allocation3 + $0xd8] sm:$0xff]
        %v3762 = vld [vmem:[#allocation3 + $0xe0] sm:$0xff]
        %v3763 = vld [vmem:[#allocation3 + $0xe8] sm:$0xff]
        %v3764 = vld [vmem:[#allocation3 + $0xf0] sm:$0xff]
        %v3765 = vld [vmem:[#allocation3 + $0xf8] sm:$0xff]
        %v3766 = vld [vmem:[#allocation3 + $0x100] sm:$0xff]
        %v3767 = vld [vmem:[#allocation3 + $0x108] sm:$0xff]
        %v3768 = vld [vmem:[#allocation3 + $0x110] sm:$0xff]
        %v3769 = vld [vmem:[#allocation3 + $0x118] sm:$0xff]
        %v3770 = vld [vmem:[#allocation3 + $0x120] sm:$0xff]
        %v3771 = vld [vmem:[#allocation3 + $0x128] sm:$0xff]
        %v3772 = vld [vmem:[#allocation3 + $0x130] sm:$0xff]
        %v3773 = vld [vmem:[#allocation3 + $0x138] sm:$0xff]
        %v3774 = vld [vmem:[#allocation3 + $0x140] sm:$0xff]
        %v3775 = vld [vmem:[#allocation3 + $0x148] sm:$0xff]
        %v3776 = vld [vmem:[#allocation3 + $0x150] sm:$0xff]
        %v3777 = vld [vmem:[#allocation3 + $0x158] sm:$0xff]
        %v3778 = vld [vmem:[#allocation3 + $0x160] sm:$0xff]
        %v3779 = vld [vmem:[#allocation3 + $0x168] sm:$0xff]
        %v3780 = vld [vmem:[#allocation3 + $0x170] sm:$0xff]
        %v3781 = vld [vmem:[#allocation3 + $0x178] sm:$0xff]
        %v3782 = vld [vmem:[#allocation3 + $0x180] sm:$0xff]
        %v3783 = vld [vmem:[#allocation3 + $0x188] sm:$0xff]
        %v3784 = vld [vmem:[#allocation3 + $0x190] sm:$0xff]
        %v3785 = vld [vmem:[#allocation3 + $0x198] sm:$0xff]
        %v3786 = vld [vmem:[#allocation3 + $0x1a0] sm:$0xff]
        %v3787 = vld [vmem:[#allocation3 + $0x1a8] sm:$0xff]
        %v3788 = vld [vmem:[#allocation3 + $0x1b0] sm:$0xff]
        %v3789 = vld [vmem:[#allocation3 + $0x1b8] sm:$0xff]
        %v3790 = vld [vmem:[#allocation3 + $0x1c0] sm:$0xff]
        %v3791 = vld [vmem:[#allocation3 + $0x1c8] sm:$0xff]
        %v3792 = vld [vmem:[#allocation3 + $0x1d0] sm:$0xff]
        %v3793 = vld [vmem:[#allocation3 + $0x1d8] sm:$0xff]
        %v3794 = vld [vmem:[#allocation3 + $0x1e0] sm:$0xff]
        %v3795 = vld [vmem:[#allocation3 + $0x1e8] sm:$0xff]
        %v3796 = vld [vmem:[#allocation3 + $0x1f0] sm:$0xff]
        %v3797 = vld [vmem:[#allocation3 + $0x1f8] sm:$0xff]
        %v3798 = vld [vmem:[#allocation3 + $0x200] sm:$0xff]
        %v3799 = vld [vmem:[#allocation3 + $0x208] sm:$0xff]
        %v3800 = vld [vmem:[#allocation3 + $0x210] sm:$0xff]
        %v3801 = vld [vmem:[#allocation3 + $0x218] sm:$0xff]
        %v3802 = vld [vmem:[#allocation3 + $0x220] sm:$0xff]
        %v3803 = vld [vmem:[#allocation3 + $0x228] sm:$0xff]
        %v3804 = vld [vmem:[#allocation3 + $0x230] sm:$0xff]
        %v3805 = vld [vmem:[#allocation3 + $0x238] sm:$0xff]
        %v3806 = vld [vmem:[#allocation3 + $0x240] sm:$0xff]
        %v3807 = vld [vmem:[#allocation3 + $0x248] sm:$0xff]
        %v3808 = vld [vmem:[#allocation3 + $0x250] sm:$0xff]
        %v3809 = vld [vmem:[#allocation3 + $0x258] sm:$0xff]
        %v3810 = vld [vmem:[#allocation3 + $0x260] sm:$0xff]
        %v3811 = vld [vmem:[#allocation3 + $0x268] sm:$0xff]
        %v3812 = vld [vmem:[#allocation3 + $0x270] sm:$0xff]
        %v3813 = vld [vmem:[#allocation3 + $0x278] sm:$0xff]
        %v3814 = vld [vmem:[#allocation3 + $0x280] sm:$0xff]
        %v3815 = vld [vmem:[#allocation3 + $0x288] sm:$0xff]
        %v3816 = vld [vmem:[#allocation3 + $0x290] sm:$0xff]
        %v3817 = vld [vmem:[#allocation3 + $0x298] sm:$0xff]
        %v3818 = vld [vmem:[#allocation3 + $0x2a0] sm:$0xff]
        %v3819 = vld [vmem:[#allocation3 + $0x2a8] sm:$0xff]
        %v3820 = vld [vmem:[#allocation3 + $0x2b0] sm:$0xff]
        %v3821 = vld [vmem:[#allocation3 + $0x2b8] sm:$0xff]
        %v3822 = vld [vmem:[#allocation3 + $0x2c0] sm:$0xff]
        %v3823 = vld [vmem:[#allocation3 + $0x2c8] sm:$0xff]
        %v3824 = vld [vmem:[#allocation3 + $0x2d0] sm:$0xff]
        %v3825 = vld [vmem:[#allocation3 + $0x2d8] sm:$0xff]
        %v3826 = vld [vmem:[#allocation3 + $0x2e0] sm:$0xff]
        %v3827 = vld [vmem:[#allocation3 + $0x2e8] sm:$0xff]
        %v3828 = vld [vmem:[#allocation3 + $0x2f0] sm:$0xff]
        %v3829 = vld [vmem:[#allocation3 + $0x2f8] sm:$0xff]
        %v3830 = vld [vmem:[#allocation3 + $0x300] sm:$0xff]
        %v3831 = vld [vmem:[#allocation3 + $0x308] sm:$0xff]
        %v3832 = vld [vmem:[#allocation3 + $0x310] sm:$0xff]
        %v3833 = vld [vmem:[#allocation3 + $0x318] sm:$0xff]
        %v3834 = vld [vmem:[#allocation3 + $0x320] sm:$0xff]
        %v3835 = vld [vmem:[#allocation3 + $0x328] sm:$0xff]
        %v3836 = vld [vmem:[#allocation3 + $0x330] sm:$0xff]
        %v3837 = vld [vmem:[#allocation3 + $0x338] sm:$0xff]
        %v3838 = vld [vmem:[#allocation3 + $0x340] sm:$0xff]
        %v3839 = vld [vmem:[#allocation3 + $0x348] sm:$0xff]
        %v3840 = vld [vmem:[#allocation3 + $0x350] sm:$0xff]
        %v3841 = vld [vmem:[#allocation3 + $0x358] sm:$0xff]
        %v3842 = vld [vmem:[#allocation3 + $0x360] sm:$0xff]
        %v3843 = vld [vmem:[#allocation3 + $0x368] sm:$0xff]
        %v3844 = vld [vmem:[#allocation3 + $0x370] sm:$0xff]
        %v3845 = vld [vmem:[#allocation3 + $0x378] sm:$0xff]
        %v3846 = vld [vmem:[#allocation3 + $0x380] sm:$0xff]
        %v3847 = vld [vmem:[#allocation3 + $0x388] sm:$0xff]
        %v3848 = vld [vmem:[#allocation3 + $0x390] sm:$0xff]
        %v3849 = vld [vmem:[#allocation3 + $0x398] sm:$0xff]
        %v3850 = vld [vmem:[#allocation3 + $0x3a0] sm:$0xff]
        %v3851 = vld [vmem:[#allocation3 + $0x3a8] sm:$0xff]
        %v3852 = vld [vmem:[#allocation3 + $0x3b0] sm:$0xff]
        %v3853 = vld [vmem:[#allocation3 + $0x3b8] sm:$0xff]
        %v3854 = vld [vmem:[#allocation3 + $0x3c0] sm:$0xff]
        %v3855 = vld [vmem:[#allocation3 + $0x3c8] sm:$0xff]
        %v3856 = vld [vmem:[#allocation3 + $0x3d0] sm:$0xff]
        %v3857 = vld [vmem:[#allocation3 + $0x3d8] sm:$0xff]
        %v3858 = vld [vmem:[#allocation3 + $0x3e0] sm:$0xff]
        %v3859 = vld [vmem:[#allocation3 + $0x3e8] sm:$0xff]
        %v3860 = vld [vmem:[#allocation3 + $0x3f0] sm:$0xff]
        %v3861 = vld [vmem:[#allocation3 + $0x3f8] sm:$0xff]
        %v3862 = vld [vmem:[#allocation3 + $0x400] sm:$0xff]
        %v3863 = vld [vmem:[#allocation3 + $0x408] sm:$0xff]
        %v3864 = vld [vmem:[#allocation3 + $0x410] sm:$0xff]
        %v3865 = vld [vmem:[#allocation3 + $0x418] sm:$0xff]
        %v3866 = vld [vmem:[#allocation3 + $0x420] sm:$0xff]
        %v3867 = vld [vmem:[#allocation3 + $0x428] sm:$0xff]
        %v3868 = vld [vmem:[#allocation3 + $0x430] sm:$0xff]
        %v3869 = vld [vmem:[#allocation3 + $0x438] sm:$0xff]
        %v3870 = vld [vmem:[#allocation3 + $0x440] sm:$0xff]
        %v3871 = vld [vmem:[#allocation3 + $0x448] sm:$0xff]
        %v3872 = vld [vmem:[#allocation3 + $0x450] sm:$0xff]
        %v3873 = vld [vmem:[#allocation3 + $0x458] sm:$0xff]
        %v3874 = vld [vmem:[#allocation3 + $0x460] sm:$0xff]
        %v3875 = vld [vmem:[#allocation3 + $0x468] sm:$0xff]
        %v3876 = vld [vmem:[#allocation3 + $0x470] sm:$0xff]
        %v3877 = vld [vmem:[#allocation3 + $0x478] sm:$0xff]
        %v3878 = vld [vmem:[#allocation3 + $0x480] sm:$0xff]
        %v3879 = vld [vmem:[#allocation3 + $0x488] sm:$0xff]
        %v3880 = vld [vmem:[#allocation3 + $0x490] sm:$0xff]
        %v3881 = vld [vmem:[#allocation3 + $0x498] sm:$0xff]
        %v3882 = vld [vmem:[#allocation3 + $0x4a0] sm:$0xff]
        %v3883 = vld [vmem:[#allocation3 + $0x4a8] sm:$0xff]
        %v3884 = vld [vmem:[#allocation3 + $0x4b0] sm:$0xff]
        %v3885 = vld [vmem:[#allocation3 + $0x4b8] sm:$0xff]
        %v3886 = vld [vmem:[#allocation3 + $0x4c0] sm:$0xff]
        %v3887 = vld [vmem:[#allocation3 + $0x4c8] sm:$0xff]
        %v3888 = vld [vmem:[#allocation3 + $0x4d0] sm:$0xff]
        %v3889 = vld [vmem:[#allocation3 + $0x4d8] sm:$0xff]
        %v3890 = vld [vmem:[#allocation3 + $0x4e0] sm:$0xff]
        %v3891 = vld [vmem:[#allocation3 + $0x4e8] sm:$0xff]
        %v3892 = vld [vmem:[#allocation3 + $0x4f0] sm:$0xff]
        %v3893 = vld [vmem:[#allocation3 + $0x4f8] sm:$0xff]
        %v3894 = vpack.c.bf16 %v3739, %v3734
        %v3895 = vpack.c.bf16 %v3740, %v3735
        %v3896 = vpack.c.bf16 %v3741, %v3736
        %v3897 = vpack.c.bf16 %v3742, %v3737
        %v3898 = vpack.c.bf16 %v3743, %v3738
        %v3899 = vpack.c.bf16 %v3749, %v3744
        %v3900 = vpack.c.bf16 %v3750, %v3745
        %v3901 = vpack.c.bf16 %v3751, %v3746
        %v3902 = vpack.c.bf16 %v3752, %v3747
        %v3903 = vpack.c.bf16 %v3753, %v3748
        %v3904 = vpack.c.bf16 %v3759, %v3754
        %v3905 = vpack.c.bf16 %v3760, %v3755
        %v3906 = vpack.c.bf16 %v3761, %v3756
        %v3907 = vpack.c.bf16 %v3762, %v3757
        %v3908 = vpack.c.bf16 %v3763, %v3758
        %v3909 = vpack.c.bf16 %v3769, %v3764
        %v3910 = vpack.c.bf16 %v3770, %v3765
        %v3911 = vpack.c.bf16 %v3771, %v3766
        %v3912 = vpack.c.bf16 %v3772, %v3767
        %v3913 = vpack.c.bf16 %v3773, %v3768
        %v3914 = vpack.c.bf16 %v3779, %v3774
        %v3915 = vpack.c.bf16 %v3780, %v3775
        %v3916 = vpack.c.bf16 %v3781, %v3776
        %v3917 = vpack.c.bf16 %v3782, %v3777
        %v3918 = vpack.c.bf16 %v3783, %v3778
        %v3919 = vpack.c.bf16 %v3789, %v3784
        %v3920 = vpack.c.bf16 %v3790, %v3785
        %v3921 = vpack.c.bf16 %v3791, %v3786
        %v3922 = vpack.c.bf16 %v3792, %v3787
        %v3923 = vpack.c.bf16 %v3793, %v3788
        %v3924 = vpack.c.bf16 %v3799, %v3794
        %v3925 = vpack.c.bf16 %v3800, %v3795
        %v3926 = vpack.c.bf16 %v3801, %v3796
        %v3927 = vpack.c.bf16 %v3802, %v3797
        %v3928 = vpack.c.bf16 %v3803, %v3798
        %v3929 = vpack.c.bf16 %v3809, %v3804
        %v3930 = vpack.c.bf16 %v3810, %v3805
        %v3931 = vpack.c.bf16 %v3811, %v3806
        %v3932 = vpack.c.bf16 %v3812, %v3807
        %v3933 = vpack.c.bf16 %v3813, %v3808
        %v3934 = vpack.c.bf16 %v3819, %v3814
        %v3935 = vpack.c.bf16 %v3820, %v3815
        %v3936 = vpack.c.bf16 %v3821, %v3816
        %v3937 = vpack.c.bf16 %v3822, %v3817
        %v3938 = vpack.c.bf16 %v3823, %v3818
        %v3939 = vpack.c.bf16 %v3829, %v3824
        %v3940 = vpack.c.bf16 %v3830, %v3825
        %v3941 = vpack.c.bf16 %v3831, %v3826
        %v3942 = vpack.c.bf16 %v3832, %v3827
        %v3943 = vpack.c.bf16 %v3833, %v3828
        %v3944 = vpack.c.bf16 %v3839, %v3834
        %v3945 = vpack.c.bf16 %v3840, %v3835
        %v3946 = vpack.c.bf16 %v3841, %v3836
        %v3947 = vpack.c.bf16 %v3842, %v3837
        %v3948 = vpack.c.bf16 %v3843, %v3838
        %v3949 = vpack.c.bf16 %v3849, %v3844
        %v3950 = vpack.c.bf16 %v3850, %v3845
        %v3951 = vpack.c.bf16 %v3851, %v3846
        %v3952 = vpack.c.bf16 %v3852, %v3847
        %v3953 = vpack.c.bf16 %v3853, %v3848
        %v3954 = vpack.c.bf16 %v3859, %v3854
        %v3955 = vpack.c.bf16 %v3860, %v3855
        %v3956 = vpack.c.bf16 %v3861, %v3856
        %v3957 = vpack.c.bf16 %v3862, %v3857
        %v3958 = vpack.c.bf16 %v3863, %v3858
        %v3959 = vpack.c.bf16 %v3869, %v3864
        %v3960 = vpack.c.bf16 %v3870, %v3865
        %v3961 = vpack.c.bf16 %v3871, %v3866
        %v3962 = vpack.c.bf16 %v3872, %v3867
        %v3963 = vpack.c.bf16 %v3873, %v3868
        %v3964 = vpack.c.bf16 %v3879, %v3874
        %v3965 = vpack.c.bf16 %v3880, %v3875
        %v3966 = vpack.c.bf16 %v3881, %v3876
        %v3967 = vpack.c.bf16 %v3882, %v3877
        %v3968 = vpack.c.bf16 %v3883, %v3878
        %v3969 = vpack.c.bf16 %v3889, %v3884
        %v3970 = vpack.c.bf16 %v3890, %v3885
        %v3971 = vpack.c.bf16 %v3891, %v3886
        %v3972 = vpack.c.bf16 %v3892, %v3887
        %v3973 = vpack.c.bf16 %v3893, %v3888
        %v3974 = vld [vmem:[%s3] sm:$0xf]
        %v3975 = vld [vmem:[%s3 + $0x4] sm:$0xf]
        %v3976 = vld [vmem:[%s3 + $0x8] sm:$0xf]
        %v3977 = vld [vmem:[%s3 + $0xc] sm:$0xf]
        %v3978 = vld [vmem:[%s3 + $0x10] sm:$0xf]
        %v3979 = vld [vmem:[%s3 + $0x14] sm:$0xf]
        %v3980 = vld [vmem:[%s3 + $0x18] sm:$0xf]
        %v3981 = vld [vmem:[%s3 + $0x1c] sm:$0xf]
        %v3982 = vld [vmem:[%s3 + $0x20] sm:$0xf]
        %v3983 = vld [vmem:[%s3 + $0x24] sm:$0xf]
        %v3984 = vld [vmem:[%s3 + $0x28] sm:$0xf]
        %v3985 = vld [vmem:[%s3 + $0x2c] sm:$0xf]
        %v3986 = vld [vmem:[%s3 + $0x30] sm:$0xf]
        %v3987 = vld [vmem:[%s3 + $0x34] sm:$0xf]
        %v3988 = vld [vmem:[%s3 + $0x38] sm:$0xf]
        %v3989 = vld [vmem:[%s3 + $0x3c] sm:$0xf]
        %v3990 = vld [vmem:[%s3 + $0x40] sm:$0xf]
        %v3991 = vld [vmem:[%s3 + $0x44] sm:$0xf]
        %v3992 = vld [vmem:[%s3 + $0x48] sm:$0xf]
        %v3993 = vld [vmem:[%s3 + $0x4c] sm:$0xf]
        %v3994 = vld [vmem:[%s3 + $0x50] sm:$0xf]
        %v3995 = vld [vmem:[%s3 + $0x54] sm:$0xf]
        %v3996 = vld [vmem:[%s3 + $0x58] sm:$0xf]
        %v3997 = vld [vmem:[%s3 + $0x5c] sm:$0xf]
        %v3998 = vld [vmem:[%s3 + $0x60] sm:$0xf]
        %v3999 = vld [vmem:[%s3 + $0x64] sm:$0xf]
        %v4000 = vld [vmem:[%s3 + $0x68] sm:$0xf]
        %v4001 = vld [vmem:[%s3 + $0x6c] sm:$0xf]
        %v4002 = vld [vmem:[%s3 + $0x70] sm:$0xf]
        %v4003 = vld [vmem:[%s3 + $0x74] sm:$0xf]
        %v4004 = vld [vmem:[%s3 + $0x78] sm:$0xf]
        %v4005 = vld [vmem:[%s3 + $0x7c] sm:$0xf]
        %v4006 = vld [vmem:[%s3 + $0x80] sm:$0xf]
        %v4007 = vld [vmem:[%s3 + $0x84] sm:$0xf]
        %v4008 = vld [vmem:[%s3 + $0x88] sm:$0xf]
        %v4009 = vld [vmem:[%s3 + $0x8c] sm:$0xf]
        %v4010 = vld [vmem:[%s3 + $0x90] sm:$0xf]
        %v4011 = vld [vmem:[%s3 + $0x94] sm:$0xf]
        %v4012 = vld [vmem:[%s3 + $0x98] sm:$0xf]
        %v4013 = vld [vmem:[%s3 + $0x9c] sm:$0xf]
        %v4014 = vld [vmem:[%s3 + $0xa0] sm:$0xf]
        %v4015 = vld [vmem:[%s3 + $0xa4] sm:$0xf]
        %v4016 = vld [vmem:[%s3 + $0xa8] sm:$0xf]
        %v4017 = vld [vmem:[%s3 + $0xac] sm:$0xf]
        %v4018 = vld [vmem:[%s3 + $0xb0] sm:$0xf]
        %v4019 = vld [vmem:[%s3 + $0xb4] sm:$0xf]
        %v4020 = vld [vmem:[%s3 + $0xb8] sm:$0xf]
        %v4021 = vld [vmem:[%s3 + $0xbc] sm:$0xf]
        %v4022 = vld [vmem:[%s3 + $0xc0] sm:$0xf]
        %v4023 = vld [vmem:[%s3 + $0xc4] sm:$0xf]
        %v4024 = vld [vmem:[%s3 + $0xc8] sm:$0xf]
        %v4025 = vld [vmem:[%s3 + $0xcc] sm:$0xf]
        %v4026 = vld [vmem:[%s3 + $0xd0] sm:$0xf]
        %v4027 = vld [vmem:[%s3 + $0xd4] sm:$0xf]
        %v4028 = vld [vmem:[%s3 + $0xd8] sm:$0xf]
        %v4029 = vld [vmem:[%s3 + $0xdc] sm:$0xf]
        %v4030 = vld [vmem:[%s3 + $0xe0] sm:$0xf]
        %v4031 = vld [vmem:[%s3 + $0xe4] sm:$0xf]
        %v4032 = vld [vmem:[%s3 + $0xe8] sm:$0xf]
        %v4033 = vld [vmem:[%s3 + $0xec] sm:$0xf]
        %v4034 = vld [vmem:[%s3 + $0xf0] sm:$0xf]
        %v4035 = vld [vmem:[%s3 + $0xf4] sm:$0xf]
        %v4036 = vld [vmem:[%s3 + $0xf8] sm:$0xf]
        %v4037 = vld [vmem:[%s3 + $0xfc] sm:$0xf]
        %v4038 = vld [vmem:[%s3 + $0x100] sm:$0xf]
        %v4039 = vld [vmem:[%s3 + $0x104] sm:$0xf]
        %v4040 = vld [vmem:[%s3 + $0x108] sm:$0xf]
        %v4041 = vld [vmem:[%s3 + $0x10c] sm:$0xf]
        %v4042 = vld [vmem:[%s3 + $0x110] sm:$0xf]
        %v4043 = vld [vmem:[%s3 + $0x114] sm:$0xf]
        %v4044 = vld [vmem:[%s3 + $0x118] sm:$0xf]
        %v4045 = vld [vmem:[%s3 + $0x11c] sm:$0xf]
        %v4046 = vld [vmem:[%s4] sm:$0x1]
        %v4048 = vlaneseq
        %v4049 = vshrl.u32 %v4048, 7
        %v4050 = vsub.s32 0, %v4049
        %v4051 = vrot.slane %v4046, %v4050
        %v4125 = vunpack.c.l.b16 %v3974
        %v4126 = vunpack.c.l.b16 %v3975
        %v4127 = vunpack.c.l.b16 %v3976
        %v4128 = vunpack.c.l.b16 %v3977
        %v4129 = vunpack.c.l.b16 %v3978
        %v4130 = vunpack.c.l.b16 %v3979
        %v4131 = vunpack.c.l.b16 %v3980
        %v4132 = vunpack.c.l.b16 %v3981
        %v4133 = vunpack.c.l.b16 %v3982
        %v4134 = vunpack.c.l.b16 %v3983
        %v4135 = vunpack.c.l.b16 %v3984
        %v4136 = vunpack.c.l.b16 %v3985
        %v4137 = vunpack.c.l.b16 %v3986
        %v4138 = vunpack.c.l.b16 %v3987
        %v4139 = vunpack.c.l.b16 %v3988
        %v4140 = vunpack.c.l.b16 %v3989
        %v4141 = vunpack.c.l.b16 %v3990
        %v4142 = vunpack.c.l.b16 %v3991
        %v4143 = vunpack.c.l.b16 %v3992
        %v4144 = vunpack.c.l.b16 %v3993
        %v4145 = vunpack.c.l.b16 %v3994
        %v4146 = vunpack.c.l.b16 %v3995
        %v4147 = vunpack.c.l.b16 %v3996
        %v4148 = vunpack.c.l.b16 %v3997
        %v4149 = vunpack.c.l.b16 %v3998
        %v4150 = vunpack.c.l.b16 %v3999
        %v4151 = vunpack.c.l.b16 %v4000
        %v4152 = vunpack.c.l.b16 %v4001
        %v4153 = vunpack.c.l.b16 %v4002
        %v4154 = vunpack.c.l.b16 %v4003
        %v4155 = vunpack.c.l.b16 %v4004
        %v4156 = vunpack.c.l.b16 %v4005
        %v4157 = vunpack.c.l.b16 %v4006
        %v4158 = vunpack.c.l.b16 %v4007
        %v4159 = vunpack.c.l.b16 %v4008
        %v4160 = vunpack.c.l.b16 %v4009
        %v4161 = vunpack.c.l.b16 %v4010
        %v4162 = vunpack.c.l.b16 %v4011
        %v4163 = vunpack.c.l.b16 %v4012
        %v4164 = vunpack.c.l.b16 %v4013
        %v4165 = vunpack.c.l.b16 %v4014
        %v4166 = vunpack.c.l.b16 %v4015
        %v4167 = vunpack.c.l.b16 %v4016
        %v4168 = vunpack.c.l.b16 %v4017
        %v4169 = vunpack.c.l.b16 %v4018
        %v4170 = vunpack.c.l.b16 %v4019
        %v4171 = vunpack.c.l.b16 %v4020
        %v4172 = vunpack.c.l.b16 %v4021
        %v4173 = vunpack.c.l.b16 %v4022
        %v4174 = vunpack.c.l.b16 %v4023
        %v4175 = vunpack.c.l.b16 %v4024
        %v4176 = vunpack.c.l.b16 %v4025
        %v4177 = vunpack.c.l.b16 %v4026
        %v4178 = vunpack.c.l.b16 %v4027
        %v4179 = vunpack.c.l.b16 %v4028
        %v4180 = vunpack.c.l.b16 %v4029
        %v4181 = vunpack.c.l.b16 %v4030
        %v4182 = vunpack.c.l.b16 %v4031
        %v4183 = vunpack.c.l.b16 %v4032
        %v4184 = vunpack.c.l.b16 %v4033
        %v4185 = vunpack.c.l.b16 %v4034
        %v4186 = vunpack.c.l.b16 %v4035
        %v4187 = vunpack.c.l.b16 %v4036
        %v4188 = vunpack.c.l.b16 %v4037
        %v4189 = vunpack.c.l.b16 %v4038
        %v4190 = vunpack.c.l.b16 %v4039
        %v4191 = vunpack.c.l.b16 %v4040
        %v4192 = vunpack.c.l.b16 %v4041
        %v4193 = vunpack.c.l.b16 %v4042
        %v4194 = vunpack.c.l.b16 %v4043
        %v4195 = vunpack.c.l.b16 %v4044
        %v4196 = vunpack.c.l.b16 %v4045
        %v4197 = vpack.c.b16 %v4126, %v4125
        %v4198 = vpack.c.b16 %v4128, %v4127
        %v4199 = vpack.c.b16 %v4130, %v4129
        %v4200 = vpack.c.b16 %v4132, %v4131
        %v4201 = vpack.c.b16 %v4134, %v4133
        %v4202 = vpack.c.b16 %v4136, %v4135
        %v4203 = vpack.c.b16 %v4138, %v4137
        %v4204 = vpack.c.b16 %v4140, %v4139
        %v4205 = vpack.c.b16 %v4142, %v4141
        %v4206 = vpack.c.b16 %v4144, %v4143
        %v4207 = vpack.c.b16 %v4146, %v4145
        %v4208 = vpack.c.b16 %v4148, %v4147
        %v4209 = vpack.c.b16 %v4150, %v4149
        %v4210 = vpack.c.b16 %v4152, %v4151
        %v4211 = vpack.c.b16 %v4154, %v4153
        %v4212 = vpack.c.b16 %v4156, %v4155
        %v4213 = vpack.c.b16 %v4158, %v4157
        %v4214 = vpack.c.b16 %v4160, %v4159
        %v4215 = vpack.c.b16 %v4162, %v4161
        %v4216 = vpack.c.b16 %v4164, %v4163
        %v4217 = vpack.c.b16 %v4166, %v4165
        %v4218 = vpack.c.b16 %v4168, %v4167
        %v4219 = vpack.c.b16 %v4170, %v4169
        %v4220 = vpack.c.b16 %v4172, %v4171
        %v4221 = vpack.c.b16 %v4174, %v4173
        %v4222 = vpack.c.b16 %v4176, %v4175
        %v4223 = vpack.c.b16 %v4178, %v4177
        %v4224 = vpack.c.b16 %v4180, %v4179
        %v4225 = vpack.c.b16 %v4182, %v4181
        %v4226 = vpack.c.b16 %v4184, %v4183
        %v4227 = vpack.c.b16 %v4186, %v4185
        %v4228 = vpack.c.b16 %v4188, %v4187
        %v4229 = vpack.c.b16 %v4190, %v4189
        %v4230 = vpack.c.b16 %v4192, %v4191
        %v4231 = vpack.c.b16 %v4194, %v4193
        %v4232 = vpack.c.b16 %v4196, %v4195
        %v4270 = vsel %vm305, %v3898, 0
        %v4273 = vsel %vm305, %v3903, 0
        %v4276 = vsel %vm305, %v3908, 0
        %v4279 = vsel %vm305, %v3913, 0
        %v4282 = vsel %vm305, %v3918, 0
        %v4285 = vsel %vm305, %v3923, 0
        %v4288 = vsel %vm305, %v3928, 0
        %v4291 = vsel %vm305, %v3933, 0
        %v4294 = vsel %vm305, %v3938, 0
        %v4297 = vsel %vm305, %v3943, 0
        %v4300 = vsel %vm305, %v3948, 0
        %v4303 = vsel %vm305, %v3953, 0
        %v4306 = vsel %vm305, %v3958, 0
        %v4309 = vsel %vm305, %v3963, 0
        %v4312 = vsel %vm305, %v3968, 0
        %v4315 = vsel %vm305, %v3973, 0
        %4317 = vmatprep.subr.bf16.mxu0 0
        %4318 = vmatpush1.bf16.msra.mxu0 %v4197
        %4319 = vmatprep.subr.bf16.mxu0 0
        %4320 = vmatpush1.bf16.msra.mxu0 %v4198
        %4321 = vmatprep.subr.bf16.mxu0 0
        %4322 = vmatpush1.bf16.msra.mxu0 %v4199
        %4323 = vmatprep.subr.bf16.mxu0 0
        %4324 = vmatpush1.bf16.msra.mxu0 %v4200
        %4325 = vmatprep.subr.bf16.mxu0 0
        %4326 = vmatpush1.bf16.msra.mxu0 %v4201
        %4327 = vmatprep.subr.bf16.mxu0 0
        %4328 = vmatpush1.bf16.msra.mxu0 %v4202
        %4329 = vmatprep.subr.bf16.mxu0 0
        %4330 = vmatpush1.bf16.msra.mxu0 %v4203
        %4331 = vmatprep.subr.bf16.mxu0 0
        %4332 = vmatpush1.bf16.msra.mxu0 %v4204
        %4333 = vmatprep.subr.bf16.mxu0 0
        %4334 = vmatpush1.bf16.msra.mxu0 %v4205
        %4335 = vmatprep.subr.bf16.mxu0 0
        %4336 = vmatpush1.bf16.msra.mxu0 %v4206
        %4337 = vmatprep.subr.bf16.mxu0 0
        %4338 = vmatpush1.bf16.msra.mxu0 %v4207
        %4339 = vmatprep.subr.bf16.mxu0 0
        %4340 = vmatpush1.bf16.msra.mxu0 %v4208
        %4341 = vmatprep.subr.bf16.mxu0 0
        %4342 = vmatpush1.bf16.msra.mxu0 %v4209
        %4343 = vmatprep.subr.bf16.mxu0 0
        %4344 = vmatpush1.bf16.msra.mxu0 %v4210
        %4345 = vmatprep.subr.bf16.mxu0 0
        %4346 = vmatpush1.bf16.msra.mxu0 %v4211
        %4347 = vmatprep.subr.bf16.mxu0 0
        %4348 = vmatpush1.bf16.msra.mxu0 %v4212
        %4349 = vmatprep.mubr.bf16.mxu0 %v3895
        %4350 = vmatmul.mubr.bf16.gmra.mrb[0].mxu0 %v3894
        %v4351 = vpop.f32.mrb[0].mxu0
        %v4352 = vadd.f32 %v4051, %v4351
        %v4353 = vpop.f32.mrb[0].mxu0
        %v4354 = vpop.f32.mrb[0].mxu0
        %v4355 = vadd.f32 %v4051, %v4354
        %v4356 = vpop.f32.mrb[0].mxu0
        %4357 = vmatprep.mubr.bf16.mxu0 %v3900
        %4358 = vmatmul.mubr.bf16.gmra.mrb[0].mxu0 %v3899
        %v4359 = vpop.f32.mrb[0].mxu0
        %v4360 = vadd.f32 %v4051, %v4359
        %v4361 = vpop.f32.mrb[0].mxu0
        %v4362 = vpop.f32.mrb[0].mxu0
        %v4363 = vadd.f32 %v4051, %v4362
        %v4364 = vpop.f32.mrb[0].mxu0
        %4365 = vmatprep.mubr.bf16.mxu0 %v3905
        %4366 = vmatmul.mubr.bf16.gmra.mrb[0].mxu0 %v3904
        %v4367 = vpop.f32.mrb[0].mxu0
        %v4368 = vadd.f32 %v4051, %v4367
        %v4369 = vpop.f32.mrb[0].mxu0
        %v4370 = vpop.f32.mrb[0].mxu0
        %v4371 = vadd.f32 %v4051, %v4370
        %v4372 = vpop.f32.mrb[0].mxu0
        %4373 = vmatprep.mubr.bf16.mxu0 %v3910
        %4374 = vmatmul.mubr.bf16.gmra.mrb[0].mxu0 %v3909
        %v4375 = vpop.f32.mrb[0].mxu0
        %v4376 = vadd.f32 %v4051, %v4375
        %v4377 = vpop.f32.mrb[0].mxu0
        %v4378 = vpop.f32.mrb[0].mxu0
        %v4379 = vadd.f32 %v4051, %v4378
        %v4380 = vpop.f32.mrb[0].mxu0
        %4381 = vmatprep.mubr.bf16.mxu0 %v3915
        %4382 = vmatmul.mubr.bf16.gmra.mrb[0].mxu0 %v3914
        %v4383 = vpop.f32.mrb[0].mxu0
        %v4384 = vadd.f32 %v4051, %v4383
        %v4385 = vpop.f32.mrb[0].mxu0
        %v4386 = vpop.f32.mrb[0].mxu0
        %v4387 = vadd.f32 %v4051, %v4386
        %v4388 = vpop.f32.mrb[0].mxu0
        %4389 = vmatprep.mubr.bf16.mxu0 %v3920
        %4390 = vmatmul.mubr.bf16.gmra.mrb[0].mxu0 %v3919
        %v4391 = vpop.f32.mrb[0].mxu0
        %v4392 = vadd.f32 %v4051, %v4391
        %v4393 = vpop.f32.mrb[0].mxu0
        %v4394 = vpop.f32.mrb[0].mxu0
        %v4395 = vadd.f32 %v4051, %v4394
        %v4396 = vpop.f32.mrb[0].mxu0
        %4397 = vmatprep.mubr.bf16.mxu0 %v3925
        %4398 = vmatmul.mubr.bf16.gmra.mrb[0].mxu0 %v3924
        %v4399 = vpop.f32.mrb[0].mxu0
        %v4400 = vadd.f32 %v4051, %v4399
        %v4401 = vpop.f32.mrb[0].mxu0
        %v4402 = vpop.f32.mrb[0].mxu0
        %v4403 = vadd.f32 %v4051, %v4402
        %v4404 = vpop.f32.mrb[0].mxu0
        %4405 = vmatprep.mubr.bf16.mxu0 %v3930
        %4406 = vmatmul.mubr.bf16.gmra.mrb[0].mxu0 %v3929
        %v4407 = vpop.f32.mrb[0].mxu0
        %v4408 = vadd.f32 %v4051, %v4407
        %v4409 = vpop.f32.mrb[0].mxu0
        %v4410 = vpop.f32.mrb[0].mxu0
        %v4411 = vadd.f32 %v4051, %v4410
        %v4412 = vpop.f32.mrb[0].mxu0
        %4413 = vmatprep.mubr.bf16.mxu0 %v3935
        %4414 = vmatmul.mubr.bf16.gmra.mrb[0].mxu0 %v3934
        %v4415 = vpop.f32.mrb[0].mxu0
        %v4416 = vadd.f32 %v4051, %v4415
        %v4417 = vpop.f32.mrb[0].mxu0
        %v4418 = vpop.f32.mrb[0].mxu0
        %v4419 = vadd.f32 %v4051, %v4418
        %v4420 = vpop.f32.mrb[0].mxu0
        %4421 = vmatprep.mubr.bf16.mxu0 %v3940
        %4422 = vmatmul.mubr.bf16.gmra.mrb[0].mxu0 %v3939
        %v4423 = vpop.f32.mrb[0].mxu0
        %v4424 = vadd.f32 %v4051, %v4423
        %v4425 = vpop.f32.mrb[0].mxu0
        %v4426 = vpop.f32.mrb[0].mxu0
        %v4427 = vadd.f32 %v4051, %v4426
        %v4428 = vpop.f32.mrb[0].mxu0
        %4429 = vmatprep.mubr.bf16.mxu0 %v3945
        %4430 = vmatmul.mubr.bf16.gmra.mrb[0].mxu0 %v3944
        %v4431 = vpop.f32.mrb[0].mxu0
        %v4432 = vadd.f32 %v4051, %v4431
        %v4433 = vpop.f32.mrb[0].mxu0
        %v4434 = vpop.f32.mrb[0].mxu0
        %v4435 = vadd.f32 %v4051, %v4434
        %v4436 = vpop.f32.mrb[0].mxu0
        %4437 = vmatprep.mubr.bf16.mxu0 %v3950
        %4438 = vmatmul.mubr.bf16.gmra.mrb[0].mxu0 %v3949
        %v4439 = vpop.f32.mrb[0].mxu0
        %v4440 = vadd.f32 %v4051, %v4439
        %v4441 = vpop.f32.mrb[0].mxu0
        %v4442 = vpop.f32.mrb[0].mxu0
        %v4443 = vadd.f32 %v4051, %v4442
        %v4444 = vpop.f32.mrb[0].mxu0
        %4445 = vmatprep.mubr.bf16.mxu0 %v3955
        %4446 = vmatmul.mubr.bf16.gmra.mrb[0].mxu0 %v3954
        %v4447 = vpop.f32.mrb[0].mxu0
        %v4448 = vadd.f32 %v4051, %v4447
        %v4449 = vpop.f32.mrb[0].mxu0
        %v4450 = vpop.f32.mrb[0].mxu0
        %v4451 = vadd.f32 %v4051, %v4450
        %v4452 = vpop.f32.mrb[0].mxu0
        %4453 = vmatprep.mubr.bf16.mxu0 %v3960
        %4454 = vmatmul.mubr.bf16.gmra.mrb[0].mxu0 %v3959
        %v4455 = vpop.f32.mrb[0].mxu0
        %v4456 = vadd.f32 %v4051, %v4455
        %v4457 = vpop.f32.mrb[0].mxu0
        %v4458 = vpop.f32.mrb[0].mxu0
        %v4459 = vadd.f32 %v4051, %v4458
        %v4460 = vpop.f32.mrb[0].mxu0
        %4461 = vmatprep.mubr.bf16.mxu0 %v3965
        %4462 = vmatmul.mubr.bf16.gmra.mrb[0].mxu0 %v3964
        %v4463 = vpop.f32.mrb[0].mxu0
        %v4464 = vadd.f32 %v4051, %v4463
        %v4465 = vpop.f32.mrb[0].mxu0
        %v4466 = vpop.f32.mrb[0].mxu0
        %v4467 = vadd.f32 %v4051, %v4466
        %v4468 = vpop.f32.mrb[0].mxu0
        %4469 = vmatprep.mubr.bf16.mxu0 %v3970
        %4470 = vmatmul.mubr.bf16.gmra.mrb[0].mxu0 %v3969
        %v4471 = vpop.f32.mrb[0].mxu0
        %v4472 = vadd.f32 %v4051, %v4471
        %v4473 = vpop.f32.mrb[0].mxu0
        %v4474 = vpop.f32.mrb[0].mxu0
        %v4475 = vadd.f32 %v4051, %v4474
        %v4476 = vpop.f32.mrb[0].mxu0
        %4477 = vdwg.mxu0
        %4478 = vmatprep.subr.bf16.mxu0 0
        %4479 = vmatpush1.bf16.msra.mxu0 %v4213
        %4480 = vmatprep.subr.bf16.mxu0 0
        %4481 = vmatpush1.bf16.msra.mxu0 %v4214
        %4482 = vmatprep.subr.bf16.mxu0 0
        %4483 = vmatpush1.bf16.msra.mxu0 %v4215
        %4484 = vmatprep.subr.bf16.mxu0 0
        %4485 = vmatpush1.bf16.msra.mxu0 %v4216
        %4486 = vmatprep.subr.bf16.mxu0 0
        %4487 = vmatpush1.bf16.msra.mxu0 %v4217
        %4488 = vmatprep.subr.bf16.mxu0 0
        %4489 = vmatpush1.bf16.msra.mxu0 %v4218
        %4490 = vmatprep.subr.bf16.mxu0 0
        %4491 = vmatpush1.bf16.msra.mxu0 %v4219
        %4492 = vmatprep.subr.bf16.mxu0 0
        %4493 = vmatpush1.bf16.msra.mxu0 %v4220
        %4494 = vmatprep.subr.bf16.mxu0 0
        %4495 = vmatpush1.bf16.msra.mxu0 %v4221
        %4496 = vmatprep.subr.bf16.mxu0 0
        %4497 = vmatpush1.bf16.msra.mxu0 %v4222
        %4498 = vmatprep.subr.bf16.mxu0 0
        %4499 = vmatpush1.bf16.msra.mxu0 %v4223
        %4500 = vmatprep.subr.bf16.mxu0 0
        %4501 = vmatpush1.bf16.msra.mxu0 %v4224
        %4502 = vmatprep.subr.bf16.mxu0 0
        %4503 = vmatpush1.bf16.msra.mxu0 %v4225
        %4504 = vmatprep.subr.bf16.mxu0 0
        %4505 = vmatpush1.bf16.msra.mxu0 %v4226
        %4506 = vmatprep.subr.bf16.mxu0 0
        %4507 = vmatpush1.bf16.msra.mxu0 %v4227
        %4508 = vmatprep.subr.bf16.mxu0 0
        %4509 = vmatpush1.bf16.msra.mxu0 %v4228
        %4510 = vmatprep.mubr.bf16.mxu0 %v3897
        %4511 = vmatmul.mubr.bf16.gmra.mrb[0].mxu0 %v3896
        %v4512 = vpop.f32.mrb[0].mxu0
        %v4513 = vadd.f32 %v4352, %v4512
        %v4514 = vpop.f32.mrb[0].mxu0
        %v4515 = vpop.f32.mrb[0].mxu0
        %v4516 = vadd.f32 %v4355, %v4515
        %v4517 = vpop.f32.mrb[0].mxu0
        %4518 = vmatprep.mubr.bf16.mxu0 %v3902
        %4519 = vmatmul.mubr.bf16.gmra.mrb[0].mxu0 %v3901
        %v4520 = vpop.f32.mrb[0].mxu0
        %v4521 = vadd.f32 %v4360, %v4520
        %v4522 = vpop.f32.mrb[0].mxu0
        %v4523 = vpop.f32.mrb[0].mxu0
        %v4524 = vadd.f32 %v4363, %v4523
        %v4525 = vpop.f32.mrb[0].mxu0
        %4526 = vmatprep.mubr.bf16.mxu0 %v3907
        %4527 = vmatmul.mubr.bf16.gmra.mrb[0].mxu0 %v3906
        %v4528 = vpop.f32.mrb[0].mxu0
        %v4529 = vadd.f32 %v4368, %v4528
        %v4530 = vpop.f32.mrb[0].mxu0
        %v4531 = vpop.f32.mrb[0].mxu0
        %v4532 = vadd.f32 %v4371, %v4531
        %v4533 = vpop.f32.mrb[0].mxu0
        %4534 = vmatprep.mubr.bf16.mxu0 %v3912
        %4535 = vmatmul.mubr.bf16.gmra.mrb[0].mxu0 %v3911
        %v4536 = vpop.f32.mrb[0].mxu0
        %v4537 = vadd.f32 %v4376, %v4536
        %v4538 = vpop.f32.mrb[0].mxu0
        %v4539 = vpop.f32.mrb[0].mxu0
        %v4540 = vadd.f32 %v4379, %v4539
        %v4541 = vpop.f32.mrb[0].mxu0
        %4542 = vmatprep.mubr.bf16.mxu0 %v3917
        %4543 = vmatmul.mubr.bf16.gmra.mrb[0].mxu0 %v3916
        %v4544 = vpop.f32.mrb[0].mxu0
        %v4545 = vadd.f32 %v4384, %v4544
        %v4546 = vpop.f32.mrb[0].mxu0
        %v4547 = vpop.f32.mrb[0].mxu0
        %v4548 = vadd.f32 %v4387, %v4547
        %v4549 = vpop.f32.mrb[0].mxu0
        %4550 = vmatprep.mubr.bf16.mxu0 %v3922
        %4551 = vmatmul.mubr.bf16.gmra.mrb[0].mxu0 %v3921
        %v4552 = vpop.f32.mrb[0].mxu0
        %v4553 = vadd.f32 %v4392, %v4552
        %v4554 = vpop.f32.mrb[0].mxu0
        %v4555 = vpop.f32.mrb[0].mxu0
        %v4556 = vadd.f32 %v4395, %v4555
        %v4557 = vpop.f32.mrb[0].mxu0
        %4558 = vmatprep.mubr.bf16.mxu0 %v3927
        %4559 = vmatmul.mubr.bf16.gmra.mrb[0].mxu0 %v3926
        %v4560 = vpop.f32.mrb[0].mxu0
        %v4561 = vadd.f32 %v4400, %v4560
        %v4562 = vpop.f32.mrb[0].mxu0
        %v4563 = vpop.f32.mrb[0].mxu0
        %v4564 = vadd.f32 %v4403, %v4563
        %v4565 = vpop.f32.mrb[0].mxu0
        %4566 = vmatprep.mubr.bf16.mxu0 %v3932
        %4567 = vmatmul.mubr.bf16.gmra.mrb[0].mxu0 %v3931
        %v4568 = vpop.f32.mrb[0].mxu0
        %v4569 = vadd.f32 %v4408, %v4568
        %v4570 = vpop.f32.mrb[0].mxu0
        %v4571 = vpop.f32.mrb[0].mxu0
        %v4572 = vadd.f32 %v4411, %v4571
        %v4573 = vpop.f32.mrb[0].mxu0
        %4574 = vmatprep.mubr.bf16.mxu0 %v3937
        %4575 = vmatmul.mubr.bf16.gmra.mrb[0].mxu0 %v3936
        %v4576 = vpop.f32.mrb[0].mxu0
        %v4577 = vadd.f32 %v4416, %v4576
        %v4578 = vpop.f32.mrb[0].mxu0
        %v4579 = vpop.f32.mrb[0].mxu0
        %v4580 = vadd.f32 %v4419, %v4579
        %v4581 = vpop.f32.mrb[0].mxu0
        %4582 = vmatprep.mubr.bf16.mxu0 %v3942
        %4583 = vmatmul.mubr.bf16.gmra.mrb[0].mxu0 %v3941
        %v4584 = vpop.f32.mrb[0].mxu0
        %v4585 = vadd.f32 %v4424, %v4584
        %v4586 = vpop.f32.mrb[0].mxu0
        %v4587 = vpop.f32.mrb[0].mxu0
        %v4588 = vadd.f32 %v4427, %v4587
        %v4589 = vpop.f32.mrb[0].mxu0
        %4590 = vmatprep.mubr.bf16.mxu0 %v3947
        %4591 = vmatmul.mubr.bf16.gmra.mrb[0].mxu0 %v3946
        %v4592 = vpop.f32.mrb[0].mxu0
        %v4593 = vadd.f32 %v4432, %v4592
        %v4594 = vpop.f32.mrb[0].mxu0
        %v4595 = vpop.f32.mrb[0].mxu0
        %v4596 = vadd.f32 %v4435, %v4595
        %v4597 = vpop.f32.mrb[0].mxu0
        %4598 = vmatprep.mubr.bf16.mxu0 %v3952
        %4599 = vmatmul.mubr.bf16.gmra.mrb[0].mxu0 %v3951
        %v4600 = vpop.f32.mrb[0].mxu0
        %v4601 = vadd.f32 %v4440, %v4600
        %v4602 = vpop.f32.mrb[0].mxu0
        %v4603 = vpop.f32.mrb[0].mxu0
        %v4604 = vadd.f32 %v4443, %v4603
        %v4605 = vpop.f32.mrb[0].mxu0
        %4606 = vmatprep.mubr.bf16.mxu0 %v3957
        %4607 = vmatmul.mubr.bf16.gmra.mrb[0].mxu0 %v3956
        %v4608 = vpop.f32.mrb[0].mxu0
        %v4609 = vadd.f32 %v4448, %v4608
        %v4610 = vpop.f32.mrb[0].mxu0
        %v4611 = vpop.f32.mrb[0].mxu0
        %v4612 = vadd.f32 %v4451, %v4611
        %v4613 = vpop.f32.mrb[0].mxu0
        %4614 = vmatprep.mubr.bf16.mxu0 %v3962
        %4615 = vmatmul.mubr.bf16.gmra.mrb[0].mxu0 %v3961
        %v4616 = vpop.f32.mrb[0].mxu0
        %v4617 = vadd.f32 %v4456, %v4616
        %v4618 = vpop.f32.mrb[0].mxu0
        %v4619 = vpop.f32.mrb[0].mxu0
        %v4620 = vadd.f32 %v4459, %v4619
        %v4621 = vpop.f32.mrb[0].mxu0
        %4622 = vmatprep.mubr.bf16.mxu0 %v3967
        %4623 = vmatmul.mubr.bf16.gmra.mrb[0].mxu0 %v3966
        %v4624 = vpop.f32.mrb[0].mxu0
        %v4625 = vadd.f32 %v4464, %v4624
        %v4626 = vpop.f32.mrb[0].mxu0
        %v4627 = vpop.f32.mrb[0].mxu0
        %v4628 = vadd.f32 %v4467, %v4627
        %v4629 = vpop.f32.mrb[0].mxu0
        %4630 = vmatprep.mubr.bf16.mxu0 %v3972
        %4631 = vmatmul.mubr.bf16.gmra.mrb[0].mxu0 %v3971
        %v4632 = vpop.f32.mrb[0].mxu0
        %v4633 = vadd.f32 %v4472, %v4632
        %v4634 = vpop.f32.mrb[0].mxu0
        %v4635 = vpop.f32.mrb[0].mxu0
        %v4636 = vadd.f32 %v4475, %v4635
        %v4637 = vpop.f32.mrb[0].mxu0
        %4638 = vdwg.mxu0
        %4639 = vmatprep.subr.bf16.mxu0 0
        %4640 = vmatpush1.bf16.msra.mxu0 %v4229
        %4641 = vmatprep.subr.bf16.mxu0 0
        %4642 = vmatpush1.bf16.msra.mxu0 %v4230
        %4643 = vmatprep.subr.bf16.mxu0 0
        %4644 = vmatpush1.bf16.msra.mxu0 %v4231
        %4645 = vmatprep.subr.bf16.mxu0 0
        %4646 = vmatpush1.bf16.msra.mxu0 %v4232
        %4647 = vmatprep.subr.bf16.mxu0 0
        %4648 = vmatpush1.bf16.msra.mxu0 0
        %4649 = vmatprep.subr.bf16.mxu0 0
        %4650 = vmatpush1.bf16.msra.mxu0 0
        %4651 = vmatprep.subr.bf16.mxu0 0
        %4652 = vmatpush1.bf16.msra.mxu0 0
        %4653 = vmatprep.subr.bf16.mxu0 0
        %4654 = vmatpush1.bf16.msra.mxu0 0
        %4655 = vmatprep.subr.bf16.mxu0 0
        %4656 = vmatpush1.bf16.msra.mxu0 0
        %4657 = vmatprep.subr.bf16.mxu0 0
        %4658 = vmatpush1.bf16.msra.mxu0 0
        %4659 = vmatprep.subr.bf16.mxu0 0
        %4660 = vmatpush1.bf16.msra.mxu0 0
        %4661 = vmatprep.subr.bf16.mxu0 0
        %4662 = vmatpush1.bf16.msra.mxu0 0
        %4663 = vmatprep.subr.bf16.mxu0 0
        %4664 = vmatpush1.bf16.msra.mxu0 0
        %4665 = vmatprep.subr.bf16.mxu0 0
        %4666 = vmatpush1.bf16.msra.mxu0 0
        %4667 = vmatprep.subr.bf16.mxu0 0
        %4668 = vmatpush1.bf16.msra.mxu0 0
        %4669 = vmatprep.subr.bf16.mxu0 0
        %4670 = vmatpush1.bf16.msra.mxu0 0
        %4671 = vmatprep.mubr.bf16.mxu0 0
        %4672 = vmatmul.mubr.bf16.gmra.mrb[0].mxu0 %v4270
        %v4673 = vpop.f32.mrb[0].mxu0
        %v4674 = vadd.f32 %v4513, %v4673
        %v4675 = vpop.f32.mrb[0].mxu0
        %v4676 = vpop.f32.mrb[0].mxu0
        %v4677 = vadd.f32 %v4516, %v4676
        %v4678 = vpop.f32.mrb[0].mxu0
        %4679 = vmatprep.mubr.bf16.mxu0 0
        %4680 = vmatmul.mubr.bf16.gmra.mrb[0].mxu0 %v4273
        %v4681 = vpop.f32.mrb[0].mxu0
        %v4682 = vadd.f32 %v4521, %v4681
        %v4683 = vpop.f32.mrb[0].mxu0
        %v4684 = vpop.f32.mrb[0].mxu0
        %v4685 = vadd.f32 %v4524, %v4684
        %v4686 = vpop.f32.mrb[0].mxu0
        %4687 = vmatprep.mubr.bf16.mxu0 0
        %4688 = vmatmul.mubr.bf16.gmra.mrb[0].mxu0 %v4276
        %v4689 = vpop.f32.mrb[0].mxu0
        %v4690 = vadd.f32 %v4529, %v4689
        %v4691 = vpop.f32.mrb[0].mxu0
        %v4692 = vpop.f32.mrb[0].mxu0
        %v4693 = vadd.f32 %v4532, %v4692
        %v4694 = vpop.f32.mrb[0].mxu0
        %4695 = vmatprep.mubr.bf16.mxu0 0
        %4696 = vmatmul.mubr.bf16.gmra.mrb[0].mxu0 %v4279
        %v4697 = vpop.f32.mrb[0].mxu0
        %v4698 = vadd.f32 %v4537, %v4697
        %v4699 = vpop.f32.mrb[0].mxu0
        %v4700 = vpop.f32.mrb[0].mxu0
        %v4701 = vadd.f32 %v4540, %v4700
        %v4702 = vpop.f32.mrb[0].mxu0
        %4703 = vmatprep.mubr.bf16.mxu0 0
        %4704 = vmatmul.mubr.bf16.gmra.mrb[0].mxu0 %v4282
        %v4705 = vpop.f32.mrb[0].mxu0
        %v4706 = vadd.f32 %v4545, %v4705
        %v4707 = vpop.f32.mrb[0].mxu0
        %v4708 = vpop.f32.mrb[0].mxu0
        %v4709 = vadd.f32 %v4548, %v4708
        %v4710 = vpop.f32.mrb[0].mxu0
        %4711 = vmatprep.mubr.bf16.mxu0 0
        %4712 = vmatmul.mubr.bf16.gmra.mrb[0].mxu0 %v4285
        %v4713 = vpop.f32.mrb[0].mxu0
        %v4714 = vadd.f32 %v4553, %v4713
        %v4715 = vpop.f32.mrb[0].mxu0
        %v4716 = vpop.f32.mrb[0].mxu0
        %v4717 = vadd.f32 %v4556, %v4716
        %v4718 = vpop.f32.mrb[0].mxu0
        %4719 = vmatprep.mubr.bf16.mxu0 0
        %4720 = vmatmul.mubr.bf16.gmra.mrb[0].mxu0 %v4288
        %v4721 = vpop.f32.mrb[0].mxu0
        %v4722 = vadd.f32 %v4561, %v4721
        %v4723 = vpop.f32.mrb[0].mxu0
        %v4724 = vpop.f32.mrb[0].mxu0
        %v4725 = vadd.f32 %v4564, %v4724
        %v4726 = vpop.f32.mrb[0].mxu0
        %4727 = vmatprep.mubr.bf16.mxu0 0
        %4728 = vmatmul.mubr.bf16.gmra.mrb[0].mxu0 %v4291
        %v4729 = vpop.f32.mrb[0].mxu0
        %v4730 = vadd.f32 %v4569, %v4729
        %v4731 = vpop.f32.mrb[0].mxu0
        %v4732 = vpop.f32.mrb[0].mxu0
        %v4733 = vadd.f32 %v4572, %v4732
        %v4734 = vpop.f32.mrb[0].mxu0
        %4735 = vmatprep.mubr.bf16.mxu0 0
        %4736 = vmatmul.mubr.bf16.gmra.mrb[0].mxu0 %v4294
        %v4737 = vpop.f32.mrb[0].mxu0
        %v4738 = vadd.f32 %v4577, %v4737
        %v4739 = vpop.f32.mrb[0].mxu0
        %v4740 = vpop.f32.mrb[0].mxu0
        %v4741 = vadd.f32 %v4580, %v4740
        %v4742 = vpop.f32.mrb[0].mxu0
        %4743 = vmatprep.mubr.bf16.mxu0 0
        %4744 = vmatmul.mubr.bf16.gmra.mrb[0].mxu0 %v4297
        %v4745 = vpop.f32.mrb[0].mxu0
        %v4746 = vadd.f32 %v4585, %v4745
        %v4747 = vpop.f32.mrb[0].mxu0
        %v4748 = vpop.f32.mrb[0].mxu0
        %v4749 = vadd.f32 %v4588, %v4748
        %v4750 = vpop.f32.mrb[0].mxu0
        %4751 = vmatprep.mubr.bf16.mxu0 0
        %4752 = vmatmul.mubr.bf16.gmra.mrb[0].mxu0 %v4300
        %v4753 = vpop.f32.mrb[0].mxu0
        %v4754 = vadd.f32 %v4593, %v4753
        %v4755 = vpop.f32.mrb[0].mxu0
        %v4756 = vpop.f32.mrb[0].mxu0
        %v4757 = vadd.f32 %v4596, %v4756
        %v4758 = vpop.f32.mrb[0].mxu0
        %4759 = vmatprep.mubr.bf16.mxu0 0
        %4760 = vmatmul.mubr.bf16.gmra.mrb[0].mxu0 %v4303
        %v4761 = vpop.f32.mrb[0].mxu0
        %v4762 = vadd.f32 %v4601, %v4761
        %v4763 = vpop.f32.mrb[0].mxu0
        %v4764 = vpop.f32.mrb[0].mxu0
        %v4765 = vadd.f32 %v4604, %v4764
        %v4766 = vpop.f32.mrb[0].mxu0
        %4767 = vmatprep.mubr.bf16.mxu0 0
        %4768 = vmatmul.mubr.bf16.gmra.mrb[0].mxu0 %v4306
        %v4769 = vpop.f32.mrb[0].mxu0
        %v4770 = vadd.f32 %v4609, %v4769
        %v4771 = vpop.f32.mrb[0].mxu0
        %v4772 = vpop.f32.mrb[0].mxu0
        %v4773 = vadd.f32 %v4612, %v4772
        %v4774 = vpop.f32.mrb[0].mxu0
        %4775 = vmatprep.mubr.bf16.mxu0 0
        %4776 = vmatmul.mubr.bf16.gmra.mrb[0].mxu0 %v4309
        %v4777 = vpop.f32.mrb[0].mxu0
        %v4778 = vadd.f32 %v4617, %v4777
        %v4779 = vpop.f32.mrb[0].mxu0
        %v4780 = vpop.f32.mrb[0].mxu0
        %v4781 = vadd.f32 %v4620, %v4780
        %v4782 = vpop.f32.mrb[0].mxu0
        %4783 = vmatprep.mubr.bf16.mxu0 0
        %4784 = vmatmul.mubr.bf16.gmra.mrb[0].mxu0 %v4312
        %v4785 = vpop.f32.mrb[0].mxu0
        %v4786 = vadd.f32 %v4625, %v4785
        %v4787 = vpop.f32.mrb[0].mxu0
        %v4788 = vpop.f32.mrb[0].mxu0
        %v4789 = vadd.f32 %v4628, %v4788
        %v4790 = vpop.f32.mrb[0].mxu0
        %4791 = vmatprep.mubr.bf16.mxu0 0
        %4792 = vmatmul.mubr.bf16.gmra.mrb[0].mxu0 %v4315
        %v4793 = vpop.f32.mrb[0].mxu0
        %v4794 = vadd.f32 %v4633, %v4793
        %v4795 = vpop.f32.mrb[0].mxu0
        %v4796 = vpop.f32.mrb[0].mxu0
        %v4797 = vadd.f32 %v4636, %v4796
        %v4798 = vpop.f32.mrb[0].mxu0
        %4799 = vdwg.mxu0
        %v4800 = vsel %vm305, %v4674, 0.0
        %v4801 = vsel %vm305, %v4677, 0.0
        %v4802 = vadd.f32 %v4800, %v4801
        %v4803 = vsel %vm305, %v4682, 0.0
        %v4804 = vadd.f32 %v4802, %v4803
        %v4805 = vsel %vm305, %v4685, 0.0
        %v4806 = vadd.f32 %v4804, %v4805
        %v4807 = vsel %vm305, %v4690, 0.0
        %v4808 = vadd.f32 %v4806, %v4807
        %v4809 = vsel %vm305, %v4693, 0.0
        %v4810 = vadd.f32 %v4808, %v4809
        %v4811 = vsel %vm305, %v4698, 0.0
        %v4812 = vadd.f32 %v4810, %v4811
        %v4813 = vsel %vm305, %v4701, 0.0
        %v4814 = vadd.f32 %v4812, %v4813
        %v4815 = vsel %vm305, %v4706, 0.0
        %v4816 = vadd.f32 %v4814, %v4815
        %v4817 = vsel %vm305, %v4709, 0.0
        %v4818 = vadd.f32 %v4816, %v4817
        %v4819 = vsel %vm305, %v4714, 0.0
        %v4820 = vadd.f32 %v4818, %v4819
        %v4821 = vsel %vm305, %v4717, 0.0
        %v4822 = vadd.f32 %v4820, %v4821
        %v4823 = vsel %vm305, %v4722, 0.0
        %v4824 = vadd.f32 %v4822, %v4823
        %v4825 = vsel %vm305, %v4725, 0.0
        %v4826 = vadd.f32 %v4824, %v4825
        %v4827 = vsel %vm305, %v4730, 0.0
        %v4828 = vadd.f32 %v4826, %v4827
        %v4829 = vsel %vm305, %v4733, 0.0
        %v4830 = vadd.f32 %v4828, %v4829
        %v4831 = vsel %vm305, %v4738, 0.0
        %v4832 = vadd.f32 %v4830, %v4831
        %v4833 = vsel %vm305, %v4741, 0.0
        %v4834 = vadd.f32 %v4832, %v4833
        %v4835 = vsel %vm305, %v4746, 0.0
        %v4836 = vadd.f32 %v4834, %v4835
        %v4837 = vsel %vm305, %v4749, 0.0
        %v4838 = vadd.f32 %v4836, %v4837
        %v4839 = vsel %vm305, %v4754, 0.0
        %v4840 = vadd.f32 %v4838, %v4839
        %v4841 = vsel %vm305, %v4757, 0.0
        %v4842 = vadd.f32 %v4840, %v4841
        %v4843 = vsel %vm305, %v4762, 0.0
        %v4844 = vadd.f32 %v4842, %v4843
        %v4845 = vsel %vm305, %v4765, 0.0
        %v4846 = vadd.f32 %v4844, %v4845
        %v4847 = vsel %vm305, %v4770, 0.0
        %v4848 = vadd.f32 %v4846, %v4847
        %v4849 = vsel %vm305, %v4773, 0.0
        %v4850 = vadd.f32 %v4848, %v4849
        %v4851 = vsel %vm305, %v4778, 0.0
        %v4852 = vadd.f32 %v4850, %v4851
        %v4853 = vsel %vm305, %v4781, 0.0
        %v4854 = vadd.f32 %v4852, %v4853
        %v4855 = vsel %vm305, %v4786, 0.0
        %v4856 = vadd.f32 %v4854, %v4855
        %v4857 = vsel %vm305, %v4789, 0.0
        %v4858 = vadd.f32 %v4856, %v4857
        %v4859 = vsel %vm305, %v4794, 0.0
        %v4860 = vadd.f32 %v4858, %v4859
        %v4861 = vsel %vm305, %v4797, 0.0
        %v4862 = vadd.f32 %v4860, %v4861
        %v4863 = vrot.slane %v4862, 4
        %v4864 = vadd.f32 %v4862, %v4863
        %v4865 = vrot.slane %v4864, 2
        %v4866 = vadd.f32 %v4864, %v4865
        %v4867 = vrot.slane %v4866, 1
        %v4868 = vadd.f32 %v4866, %v4867
        %v4869 = vrcp.pop 256.0
        %v4870 = vmul.f32 %v4868, %v4869
        %v4871 = vsel %vm305, %v4674, -inf
        %v4872 = vsel %vm305, %v4677, -inf
        %v4873 = vsel %vm305, %v4682, -inf
        %v4874 = vsel %vm305, %v4685, -inf
        %v4875 = vsel %vm305, %v4690, -inf
        %v4876 = vmax.f32 %v4871, %v4875
        %v4877 = vsel %vm305, %v4693, -inf
        %v4878 = vmax.f32 %v4872, %v4877
        %v4879 = vsel %vm305, %v4698, -inf
        %v4880 = vmax.f32 %v4873, %v4879
        %v4881 = vsel %vm305, %v4701, -inf
        %v4882 = vmax.f32 %v4874, %v4881
        %v4883 = vsel %vm305, %v4706, -inf
        %v4884 = vmax.f32 %v4876, %v4883
        %v4885 = vsel %vm305, %v4709, -inf
        %v4886 = vmax.f32 %v4878, %v4885
        %v4887 = vsel %vm305, %v4714, -inf
        %v4888 = vmax.f32 %v4880, %v4887
        %v4889 = vsel %vm305, %v4717, -inf
        %v4890 = vmax.f32 %v4882, %v4889
        %v4891 = vsel %vm305, %v4722, -inf
        %v4892 = vmax.f32 %v4884, %v4891
        %v4893 = vsel %vm305, %v4725, -inf
        %v4894 = vmax.f32 %v4886, %v4893
        %v4895 = vsel %vm305, %v4730, -inf
        %v4896 = vmax.f32 %v4888, %v4895
        %v4897 = vsel %vm305, %v4733, -inf
        %v4898 = vmax.f32 %v4890, %v4897
        %v4899 = vsel %vm305, %v4738, -inf
        %v4900 = vmax.f32 %v4892, %v4899
        %v4901 = vsel %vm305, %v4741, -inf
        %v4902 = vmax.f32 %v4894, %v4901
        %v4903 = vsel %vm305, %v4746, -inf
        %v4904 = vmax.f32 %v4896, %v4903
        %v4905 = vsel %vm305, %v4749, -inf
        %v4906 = vmax.f32 %v4898, %v4905
        %v4907 = vsel %vm305, %v4754, -inf
        %v4908 = vmax.f32 %v4900, %v4907
        %v4909 = vsel %vm305, %v4757, -inf
        %v4910 = vmax.f32 %v4902, %v4909
        %v4911 = vsel %vm305, %v4762, -inf
        %v4912 = vmax.f32 %v4904, %v4911
        %v4913 = vsel %vm305, %v4765, -inf
        %v4914 = vmax.f32 %v4906, %v4913
        %v4915 = vsel %vm305, %v4770, -inf
        %v4916 = vmax.f32 %v4908, %v4915
        %v4917 = vsel %vm305, %v4773, -inf
        %v4918 = vmax.f32 %v4910, %v4917
        %v4919 = vsel %vm305, %v4778, -inf
        %v4920 = vmax.f32 %v4912, %v4919
        %v4921 = vsel %vm305, %v4781, -inf
        %v4922 = vmax.f32 %v4914, %v4921
        %v4923 = vsel %vm305, %v4786, -inf
        %v4924 = vmax.f32 %v4916, %v4923
        %v4925 = vsel %vm305, %v4789, -inf
        %v4926 = vmax.f32 %v4918, %v4925
        %v4927 = vsel %vm305, %v4794, -inf
        %v4928 = vmax.f32 %v4920, %v4927
        %v4929 = vsel %vm305, %v4797, -inf
        %v4930 = vmax.f32 %v4922, %v4929
        %v4931 = vmax.f32 %v4924, %v4926
        %v4932 = vmax.f32 %v4928, %v4930
        %v4933 = vmax.f32 %v4931, %v4932
        %v4934 = vrot.slane %v4933, 4
        %v4935 = vmax.f32 %v4933, %v4934
        %v4936 = vrot.slane %v4935, 2
        %v4937 = vmax.f32 %v4935, %v4936
        %v4938 = vrot.slane %v4937, 1
        %v4939 = vmax.f32 %v4937, %v4938
        %vm4940 = vcmask 1040384
        %v4941 = vsel %vm4940, %v4870, %v4939
        %v4942 = vld [vmem:[%s5] sm:$0xff]
        %v4943 = vld [vmem:[%s5 + $0x8] sm:$0xff]
        %v4944 = vld [vmem:[%s5 + $0x10] sm:$0xff]
        %v4945 = vld [vmem:[%s5 + $0x18] sm:$0xff]
        %v4946 = vld [vmem:[%s5 + $0x20] sm:$0xff]
        %v4947 = vld [vmem:[%s5 + $0x28] sm:$0xff]
        %v4948 = vld [vmem:[%s5 + $0x30] sm:$0xff]
        %v4949 = vld [vmem:[%s5 + $0x38] sm:$0xff]
        %v4951 = vsel %vm305, %v4941, 0
        %4953 = vmatprep.subr.mxu0 0.0
        %4954 = vmatpush1.msra.mxu0 %v4942
        %4955 = vmatprep.subr.mxu0 0.0
        %4956 = vmatpush1.msra.mxu0 %v4943
        %4957 = vmatprep.subr.mxu0 0.0
        %4958 = vmatpush1.msra.mxu0 %v4944
        %4959 = vmatprep.subr.mxu0 0.0
        %4960 = vmatpush1.msra.mxu0 %v4945
        %4961 = vmatprep.subr.mxu0 0.0
        %4962 = vmatpush1.msra.mxu0 %v4946
        %4963 = vmatprep.subr.mxu0 0.0
        %4964 = vmatpush1.msra.mxu0 %v4947
        %4965 = vmatprep.subr.mxu0 0.0
        %4966 = vmatpush1.msra.mxu0 %v4948
        %4967 = vmatprep.subr.mxu0 0.0
        %4968 = vmatpush1.msra.mxu0 %v4949
        %4969 = vmatprep.subr.mxu0 0.0
        %4970 = vmatpush1.msra.mxu0 0.0
        %4971 = vmatprep.subr.mxu0 0.0
        %4972 = vmatpush1.msra.mxu0 0.0
        %4973 = vmatprep.subr.mxu0 0.0
        %4974 = vmatpush1.msra.mxu0 0.0
        %4975 = vmatprep.subr.mxu0 0.0
        %4976 = vmatpush1.msra.mxu0 0.0
        %4977 = vmatprep.subr.mxu0 0.0
        %4978 = vmatpush1.msra.mxu0 0.0
        %4979 = vmatprep.subr.mxu0 0.0
        %4980 = vmatpush1.msra.mxu0 0.0
        %4981 = vmatprep.subr.mxu0 0.0
        %4982 = vmatpush1.msra.mxu0 0.0
        %4983 = vmatprep.subr.mxu0 0.0
        %4984 = vmatpush1.msra.mxu0 0.0
        %4985 = vmatprep.subr.mxu0 0.0
        %4986 = vmatpush1.msra.mxu0 0.0
        %4987 = vmatprep.subr.mxu0 0.0
        %4988 = vmatpush1.msra.mxu0 0.0
        %4989 = vmatprep.subr.mxu0 0.0
        %4990 = vmatpush1.msra.mxu0 0.0
        %4991 = vmatprep.subr.mxu0 0.0
        %4992 = vmatpush1.msra.mxu0 0.0
        %4993 = vmatprep.subr.mxu0 0.0
        %4994 = vmatpush1.msra.mxu0 0.0
        %4995 = vmatprep.subr.mxu0 0.0
        %4996 = vmatpush1.msra.mxu0 0.0
        %4997 = vmatprep.subr.mxu0 0.0
        %4998 = vmatpush1.msra.mxu0 0.0
        %4999 = vmatprep.subr.mxu0 0.0
        %5000 = vmatpush1.msra.mxu0 0.0
        %5001 = vmatprep.subr.mxu0 0.0
        %5002 = vmatpush1.msra.mxu0 0.0
        %5003 = vmatprep.subr.mxu0 0.0
        %5004 = vmatpush1.msra.mxu0 0.0
        %5005 = vmatprep.subr.mxu0 0.0
        %5006 = vmatpush1.msra.mxu0 0.0
        %5007 = vmatprep.subr.mxu0 0.0
        %5008 = vmatpush1.msra.mxu0 0.0
        %5009 = vmatprep.subr.mxu0 0.0
        %5010 = vmatpush1.msra.mxu0 0.0
        %5011 = vmatprep.subr.mxu0 0.0
        %5012 = vmatpush1.msra.mxu0 0.0
        %5013 = vmatprep.subr.mxu0 0.0
        %5014 = vmatpush1.msra.mxu0 0.0
        %5015 = vmatprep.subr.mxu0 0.0
        %5016 = vmatpush1.msra.mxu0 0.0
        %5017 = vmatprep.mubr.f32.mxu0 0.0
        %5018 = vmatmul.mubr.f32.gmra.mrb[0].mxu0 %v4951
        %v5019 = vpop.f32.mrb[0].mxu0
        %v5020 = vadd.f32 0.0, %v5019
        %v5021 = vpop.f32.mrb[0].mxu0
        %5022 = vdwg.mxu0
        %v5023 = vmax.f32 %v5020, 0.0
        %v5024 = vld [vmem:[%s6] sm:$0xf]
        %vm5025 = vcmask 31744
        %v5027 = vsel %vm5025, %v5023, 0
        %vm5029 = vcmask 1043456
        %v5031 = vsel %vm5029, %v5024, 0
        %5033 = vmatprep.subr.mxu0 0.0
        %5034 = vmatpush1.msra.mxu0 %v5031
        %5035 = vmatprep.subr.mxu0 0.0
        %5036 = vmatpush1.msra.mxu0 0.0
        %5037 = vmatprep.subr.mxu0 0.0
        %5038 = vmatpush1.msra.mxu0 0.0
        %5039 = vmatprep.subr.mxu0 0.0
        %5040 = vmatpush1.msra.mxu0 0.0
        %5041 = vmatprep.subr.mxu0 0.0
        %5042 = vmatpush1.msra.mxu0 0.0
        %5043 = vmatprep.subr.mxu0 0.0
        %5044 = vmatpush1.msra.mxu0 0.0
        %5045 = vmatprep.subr.mxu0 0.0
        %5046 = vmatpush1.msra.mxu0 0.0
        %5047 = vmatprep.subr.mxu0 0.0
        %5048 = vmatpush1.msra.mxu0 0.0
        %5049 = vmatprep.subr.mxu0 0.0
        %5050 = vmatpush1.msra.mxu0 0.0
        %5051 = vmatprep.subr.mxu0 0.0
        %5052 = vmatpush1.msra.mxu0 0.0
        %5053 = vmatprep.subr.mxu0 0.0
        %5054 = vmatpush1.msra.mxu0 0.0
        %5055 = vmatprep.subr.mxu0 0.0
        %5056 = vmatpush1.msra.mxu0 0.0
        %5057 = vmatprep.subr.mxu0 0.0
        %5058 = vmatpush1.msra.mxu0 0.0
        %5059 = vmatprep.subr.mxu0 0.0
        %5060 = vmatpush1.msra.mxu0 0.0
        %5061 = vmatprep.subr.mxu0 0.0
        %5062 = vmatpush1.msra.mxu0 0.0
        %5063 = vmatprep.subr.mxu0 0.0
        %5064 = vmatpush1.msra.mxu0 0.0
        %5065 = vmatprep.subr.mxu0 0.0
        %5066 = vmatpush1.msra.mxu0 0.0
        %5067 = vmatprep.subr.mxu0 0.0
        %5068 = vmatpush1.msra.mxu0 0.0
        %5069 = vmatprep.subr.mxu0 0.0
        %5070 = vmatpush1.msra.mxu0 0.0
        %5071 = vmatprep.subr.mxu0 0.0
        %5072 = vmatpush1.msra.mxu0 0.0
        %5073 = vmatprep.subr.mxu0 0.0
        %5074 = vmatpush1.msra.mxu0 0.0
        %5075 = vmatprep.subr.mxu0 0.0
        %5076 = vmatpush1.msra.mxu0 0.0
        %5077 = vmatprep.subr.mxu0 0.0
        %5078 = vmatpush1.msra.mxu0 0.0
        %5079 = vmatprep.subr.mxu0 0.0
        %5080 = vmatpush1.msra.mxu0 0.0
        %5081 = vmatprep.subr.mxu0 0.0
        %5082 = vmatpush1.msra.mxu0 0.0
        %5083 = vmatprep.subr.mxu0 0.0
        %5084 = vmatpush1.msra.mxu0 0.0
        %5085 = vmatprep.subr.mxu0 0.0
        %5086 = vmatpush1.msra.mxu0 0.0
        %5087 = vmatprep.subr.mxu0 0.0
        %5088 = vmatpush1.msra.mxu0 0.0
        %5089 = vmatprep.subr.mxu0 0.0
        %5090 = vmatpush1.msra.mxu0 0.0
        %5091 = vmatprep.subr.mxu0 0.0
        %5092 = vmatpush1.msra.mxu0 0.0
        %5093 = vmatprep.subr.mxu0 0.0
        %5094 = vmatpush1.msra.mxu0 0.0
        %5095 = vmatprep.subr.mxu0 0.0
        %5096 = vmatpush1.msra.mxu0 0.0
        %5097 = vmatprep.mubr.f32.mxu0 0.0
        %5098 = vmatmul.mubr.f32.gmra.mrb[0].mxu0 %v5027
        %v5099 = vpop.f32.mrb[0].mxu0
        %v5100 = vadd.f32 0.0, %v5099
        %v5101 = vpop.f32.mrb[0].mxu0
        %5102 = vdwg.mxu0
        %v5104 = vrot.slane %v5100, 1
        %v5106 = vadd.f32 %v5100, %v5104
        %v5107 = vsub.f32 0.0, %v5106
        %v5108 = vmul.f32 %v5107, 1.442695
        %v5109 = vpow.pop %v5108
        %v5110 = vadd.f32 %v5109, 1.0
        %v5111 = vrcp.pop %v5110
        %v5112 = vlaneseq
        %v5113 = vshrl.u32 %v5112, 7
        %v5114 = vsub.s32 0, %v5113
        %v5115 = vrot.slane %v5111, %v5114
        %v5116 = vmul.f32 %v4674, %v5115
        %v5117 = vmul.f32 %v4677, %v5115
        %v5118 = vmul.f32 %v4682, %v5115
        %v5119 = vmul.f32 %v4685, %v5115
        %v5120 = vmul.f32 %v4690, %v5115
        %v5121 = vmul.f32 %v4693, %v5115
        %v5122 = vmul.f32 %v4698, %v5115
        %v5123 = vmul.f32 %v4701, %v5115
        %v5124 = vmul.f32 %v4706, %v5115
        %v5125 = vmul.f32 %v4709, %v5115
        %v5126 = vmul.f32 %v4714, %v5115
        %v5127 = vmul.f32 %v4717, %v5115
        %v5128 = vmul.f32 %v4722, %v5115
        %v5129 = vmul.f32 %v4725, %v5115
        %v5130 = vmul.f32 %v4730, %v5115
        %v5131 = vmul.f32 %v4733, %v5115
        %v5132 = vmul.f32 %v4738, %v5115
        %v5133 = vmul.f32 %v4741, %v5115
        %v5134 = vmul.f32 %v4746, %v5115
        %v5135 = vmul.f32 %v4749, %v5115
        %v5136 = vmul.f32 %v4754, %v5115
        %v5137 = vmul.f32 %v4757, %v5115
        %v5138 = vmul.f32 %v4762, %v5115
        %v5139 = vmul.f32 %v4765, %v5115
        %v5140 = vmul.f32 %v4770, %v5115
        %v5141 = vmul.f32 %v4773, %v5115
        %v5142 = vmul.f32 %v4778, %v5115
        %v5143 = vmul.f32 %v4781, %v5115
        %v5144 = vmul.f32 %v4786, %v5115
        %v5145 = vmul.f32 %v4789, %v5115
        %v5146 = vmul.f32 %v4794, %v5115
        %v5147 = vmul.f32 %v4797, %v5115
        %v5148 = vsel %vm305, %v5116, 0.0
        %5149 = vadd.xlane.f32.xlu0 %v5148
        %v5150 = vpop.xlane.xlu0 %5149
        %v5151 = vsel %vm305, %v5117, 0.0
        %5152 = vadd.xlane.f32.xlu0 %v5151
        %v5153 = vpop.xlane.xlu0 %5152
        %v5154 = vsel %vm305, %v5118, 0.0
        %5155 = vadd.xlane.f32.xlu0 %v5154
        %v5156 = vpop.xlane.xlu0 %5155
        %v5157 = vsel %vm305, %v5119, 0.0
        %5158 = vadd.xlane.f32.xlu0 %v5157
        %v5159 = vpop.xlane.xlu0 %5158
        %v5160 = vsel %vm305, %v5120, 0.0
        %5161 = vadd.xlane.f32.xlu0 %v5160
        %v5162 = vpop.xlane.xlu0 %5161
        %v5163 = vsel %vm305, %v5121, 0.0
        %5164 = vadd.xlane.f32.xlu0 %v5163
        %v5165 = vpop.xlane.xlu0 %5164
        %v5166 = vsel %vm305, %v5122, 0.0
        %5167 = vadd.xlane.f32.xlu0 %v5166
        %v5168 = vpop.xlane.xlu0 %5167
        %v5169 = vsel %vm305, %v5123, 0.0
        %5170 = vadd.xlane.f32.xlu0 %v5169
        %v5171 = vpop.xlane.xlu0 %5170
        %v5172 = vsel %vm305, %v5124, 0.0
        %5173 = vadd.xlane.f32.xlu0 %v5172
        %v5174 = vpop.xlane.xlu0 %5173
        %v5175 = vsel %vm305, %v5125, 0.0
        %5176 = vadd.xlane.f32.xlu0 %v5175
        %v5177 = vpop.xlane.xlu0 %5176
        %v5178 = vsel %vm305, %v5126, 0.0
        %5179 = vadd.xlane.f32.xlu0 %v5178
        %v5180 = vpop.xlane.xlu0 %5179
        %v5181 = vsel %vm305, %v5127, 0.0
        %5182 = vadd.xlane.f32.xlu0 %v5181
        %v5183 = vpop.xlane.xlu0 %5182
        %v5184 = vsel %vm305, %v5128, 0.0
        %5185 = vadd.xlane.f32.xlu0 %v5184
        %v5186 = vpop.xlane.xlu0 %5185
        %v5187 = vsel %vm305, %v5129, 0.0
        %5188 = vadd.xlane.f32.xlu0 %v5187
        %v5189 = vpop.xlane.xlu0 %5188
        %v5190 = vsel %vm305, %v5130, 0.0
        %5191 = vadd.xlane.f32.xlu0 %v5190
        %v5192 = vpop.xlane.xlu0 %5191
        %v5193 = vsel %vm305, %v5131, 0.0
        %5194 = vadd.xlane.f32.xlu0 %v5193
        %v5195 = vpop.xlane.xlu0 %5194
        %v5196 = vsel %vm305, %v5132, 0.0
        %5197 = vadd.xlane.f32.xlu0 %v5196
        %v5198 = vpop.xlane.xlu0 %5197
        %v5199 = vsel %vm305, %v5133, 0.0
        %5200 = vadd.xlane.f32.xlu0 %v5199
        %v5201 = vpop.xlane.xlu0 %5200
        %v5202 = vsel %vm305, %v5134, 0.0
        %5203 = vadd.xlane.f32.xlu0 %v5202
        %v5204 = vpop.xlane.xlu0 %5203
        %v5205 = vsel %vm305, %v5135, 0.0
        %5206 = vadd.xlane.f32.xlu0 %v5205
        %v5207 = vpop.xlane.xlu0 %5206
        %v5208 = vsel %vm305, %v5136, 0.0
        %5209 = vadd.xlane.f32.xlu0 %v5208
        %v5210 = vpop.xlane.xlu0 %5209
        %v5211 = vsel %vm305, %v5137, 0.0
        %5212 = vadd.xlane.f32.xlu0 %v5211
        %v5213 = vpop.xlane.xlu0 %5212
        %v5214 = vsel %vm305, %v5138, 0.0
        %5215 = vadd.xlane.f32.xlu0 %v5214
        %v5216 = vpop.xlane.xlu0 %5215
        %v5217 = vsel %vm305, %v5139, 0.0
        %5218 = vadd.xlane.f32.xlu0 %v5217
        %v5219 = vpop.xlane.xlu0 %5218
        %v5220 = vsel %vm305, %v5140, 0.0
        %5221 = vadd.xlane.f32.xlu0 %v5220
        %v5222 = vpop.xlane.xlu0 %5221
        %v5223 = vsel %vm305, %v5141, 0.0
        %5224 = vadd.xlane.f32.xlu0 %v5223
        %v5225 = vpop.xlane.xlu0 %5224
        %v5226 = vsel %vm305, %v5142, 0.0
        %5227 = vadd.xlane.f32.xlu0 %v5226
        %v5228 = vpop.xlane.xlu0 %5227
        %v5229 = vsel %vm305, %v5143, 0.0
        %5230 = vadd.xlane.f32.xlu0 %v5229
        %v5231 = vpop.xlane.xlu0 %5230
        %v5232 = vsel %vm305, %v5144, 0.0
        %5233 = vadd.xlane.f32.xlu0 %v5232
        %v5234 = vpop.xlane.xlu0 %5233
        %v5235 = vsel %vm305, %v5145, 0.0
        %5236 = vadd.xlane.f32.xlu0 %v5235
        %v5237 = vpop.xlane.xlu0 %5236
        %v5238 = vsel %vm305, %v5146, 0.0
        %5239 = vadd.xlane.f32.xlu0 %v5238
        %v5240 = vpop.xlane.xlu0 %5239
        %v5241 = vsel %vm305, %v5147, 0.0
        %5242 = vadd.xlane.f32.xlu0 %v5241
        %v5243 = vpop.xlane.xlu0 %5242
        %v5244 = vrcp.pop 64.0
        %v5245 = vmul.f32 %v5150, %v5244
        %v5246 = vmul.f32 %v5153, %v5244
        %v5247 = vmul.f32 %v5156, %v5244
        %v5248 = vmul.f32 %v5159, %v5244
        %v5249 = vmul.f32 %v5162, %v5244
        %v5250 = vmul.f32 %v5165, %v5244
        %v5251 = vmul.f32 %v5168, %v5244
        %v5252 = vmul.f32 %v5171, %v5244
        %v5253 = vmul.f32 %v5174, %v5244
        %v5254 = vmul.f32 %v5177, %v5244
        %v5255 = vmul.f32 %v5180, %v5244
        %v5256 = vmul.f32 %v5183, %v5244
        %v5257 = vmul.f32 %v5186, %v5244
        %v5258 = vmul.f32 %v5189, %v5244
        %v5259 = vmul.f32 %v5192, %v5244
        %v5260 = vmul.f32 %v5195, %v5244
        %v5261 = vmul.f32 %v5198, %v5244
        %v5262 = vmul.f32 %v5201, %v5244
        %v5263 = vmul.f32 %v5204, %v5244
        %v5264 = vmul.f32 %v5207, %v5244
        %v5265 = vmul.f32 %v5210, %v5244
        %v5266 = vmul.f32 %v5213, %v5244
        %v5267 = vmul.f32 %v5216, %v5244
        %v5268 = vmul.f32 %v5219, %v5244
        %v5269 = vmul.f32 %v5222, %v5244
        %v5270 = vmul.f32 %v5225, %v5244
        %v5271 = vmul.f32 %v5228, %v5244
        %v5272 = vmul.f32 %v5231, %v5244
        %v5273 = vmul.f32 %v5234, %v5244
        %v5274 = vmul.f32 %v5237, %v5244
        %v5275 = vmul.f32 %v5240, %v5244
        %v5276 = vmul.f32 %v5243, %v5244
        %v5277 = vsel %vm305, %v5116, -inf
        %5278 = vmax.xlane.f32.xlu0 %v5277
        %v5279 = vpop.xlane.xlu0 %5278
        %v5280 = vsel %vm305, %v5117, -inf
        %5281 = vmax.xlane.f32.xlu0 %v5280
        %v5282 = vpop.xlane.xlu0 %5281
        %v5283 = vsel %vm305, %v5118, -inf
        %5284 = vmax.xlane.f32.xlu0 %v5283
        %v5285 = vpop.xlane.xlu0 %5284
        %v5286 = vsel %vm305, %v5119, -inf
        %5287 = vmax.xlane.f32.xlu0 %v5286
        %v5288 = vpop.xlane.xlu0 %5287
        %v5289 = vsel %vm305, %v5120, -inf
        %5290 = vmax.xlane.f32.xlu0 %v5289
        %v5291 = vpop.xlane.xlu0 %5290
        %v5292 = vsel %vm305, %v5121, -inf
        %5293 = vmax.xlane.f32.xlu0 %v5292
        %v5294 = vpop.xlane.xlu0 %5293
        %v5295 = vsel %vm305, %v5122, -inf
        %5296 = vmax.xlane.f32.xlu0 %v5295
        %v5297 = vpop.xlane.xlu0 %5296
        %v5298 = vsel %vm305, %v5123, -inf
        %5299 = vmax.xlane.f32.xlu0 %v5298
        %v5300 = vpop.xlane.xlu0 %5299
        %v5301 = vsel %vm305, %v5124, -inf
        %5302 = vmax.xlane.f32.xlu0 %v5301
        %v5303 = vpop.xlane.xlu0 %5302
        %v5304 = vsel %vm305, %v5125, -inf
        %5305 = vmax.xlane.f32.xlu0 %v5304
        %v5306 = vpop.xlane.xlu0 %5305
        %v5307 = vsel %vm305, %v5126, -inf
        %5308 = vmax.xlane.f32.xlu0 %v5307
        %v5309 = vpop.xlane.xlu0 %5308
        %v5310 = vsel %vm305, %v5127, -inf
        %5311 = vmax.xlane.f32.xlu0 %v5310
        %v5312 = vpop.xlane.xlu0 %5311
        %v5313 = vsel %vm305, %v5128, -inf
        %5314 = vmax.xlane.f32.xlu0 %v5313
        %v5315 = vpop.xlane.xlu0 %5314
        %v5316 = vsel %vm305, %v5129, -inf
        %5317 = vmax.xlane.f32.xlu0 %v5316
        %v5318 = vpop.xlane.xlu0 %5317
        %v5319 = vsel %vm305, %v5130, -inf
        %5320 = vmax.xlane.f32.xlu0 %v5319
        %v5321 = vpop.xlane.xlu0 %5320
        %v5322 = vsel %vm305, %v5131, -inf
        %5323 = vmax.xlane.f32.xlu0 %v5322
        %v5324 = vpop.xlane.xlu0 %5323
        %v5325 = vsel %vm305, %v5132, -inf
        %5326 = vmax.xlane.f32.xlu0 %v5325
        %v5327 = vpop.xlane.xlu0 %5326
        %v5328 = vsel %vm305, %v5133, -inf
        %5329 = vmax.xlane.f32.xlu0 %v5328
        %v5330 = vpop.xlane.xlu0 %5329
        %v5331 = vsel %vm305, %v5134, -inf
        %5332 = vmax.xlane.f32.xlu0 %v5331
        %v5333 = vpop.xlane.xlu0 %5332
        %v5334 = vsel %vm305, %v5135, -inf
        %5335 = vmax.xlane.f32.xlu0 %v5334
        %v5336 = vpop.xlane.xlu0 %5335
        %v5337 = vsel %vm305, %v5136, -inf
        %5338 = vmax.xlane.f32.xlu0 %v5337
        %v5339 = vpop.xlane.xlu0 %5338
        %v5340 = vsel %vm305, %v5137, -inf
        %5341 = vmax.xlane.f32.xlu0 %v5340
        %v5342 = vpop.xlane.xlu0 %5341
        %v5343 = vsel %vm305, %v5138, -inf
        %5344 = vmax.xlane.f32.xlu0 %v5343
        %v5345 = vpop.xlane.xlu0 %5344
        %v5346 = vsel %vm305, %v5139, -inf
        %5347 = vmax.xlane.f32.xlu0 %v5346
        %v5348 = vpop.xlane.xlu0 %5347
        %v5349 = vsel %vm305, %v5140, -inf
        %5350 = vmax.xlane.f32.xlu0 %v5349
        %v5351 = vpop.xlane.xlu0 %5350
        %v5352 = vsel %vm305, %v5141, -inf
        %5353 = vmax.xlane.f32.xlu0 %v5352
        %v5354 = vpop.xlane.xlu0 %5353
        %v5355 = vsel %vm305, %v5142, -inf
        %5356 = vmax.xlane.f32.xlu0 %v5355
        %v5357 = vpop.xlane.xlu0 %5356
        %v5358 = vsel %vm305, %v5143, -inf
        %5359 = vmax.xlane.f32.xlu0 %v5358
        %v5360 = vpop.xlane.xlu0 %5359
        %v5361 = vsel %vm305, %v5144, -inf
        %5362 = vmax.xlane.f32.xlu0 %v5361
        %v5363 = vpop.xlane.xlu0 %5362
        %v5364 = vsel %vm305, %v5145, -inf
        %5365 = vmax.xlane.f32.xlu0 %v5364
        %v5366 = vpop.xlane.xlu0 %5365
        %v5367 = vsel %vm305, %v5146, -inf
        %5368 = vmax.xlane.f32.xlu0 %v5367
        %v5369 = vpop.xlane.xlu0 %5368
        %v5370 = vsel %vm305, %v5147, -inf
        %5371 = vmax.xlane.f32.xlu0 %v5370
        %v5372 = vpop.xlane.xlu0 %5371
        %v5373 = vld [vmem:[%s7] sm:$0xff]
        %v5374 = vld [vmem:[%s7 + $0x10] sm:$0xff]
        %v5375 = vld [vmem:[%s7 + $0x20] sm:$0xff]
        %v5376 = vld [vmem:[%s7 + $0x30] sm:$0xff]
        %v5377 = vld [vmem:[%s7 + $0x40] sm:$0xff]
        %v5378 = vld [vmem:[%s7 + $0x50] sm:$0xff]
        %v5379 = vld [vmem:[%s7 + $0x60] sm:$0xff]
        %v5380 = vld [vmem:[%s7 + $0x70] sm:$0xff]
        %v5381 = vld [vmem:[%s7 + $0x80] sm:$0xff]
        %v5382 = vld [vmem:[%s7 + $0x90] sm:$0xff]
        %v5383 = vld [vmem:[%s7 + $0xa0] sm:$0xff]
        %v5384 = vld [vmem:[%s7 + $0xb0] sm:$0xff]
        %v5385 = vld [vmem:[%s7 + $0xc0] sm:$0xff]
        %v5386 = vld [vmem:[%s7 + $0xd0] sm:$0xff]
        %v5387 = vld [vmem:[%s7 + $0xe0] sm:$0xff]
        %v5388 = vld [vmem:[%s7 + $0xf0] sm:$0xff]
        %v5389 = vld [vmem:[%s7 + $0x100] sm:$0xff]
        %v5390 = vld [vmem:[%s7 + $0x110] sm:$0xff]
        %v5391 = vld [vmem:[%s7 + $0x120] sm:$0xff]
        %v5392 = vld [vmem:[%s7 + $0x130] sm:$0xff]
        %v5393 = vld [vmem:[%s7 + $0x140] sm:$0xff]
        %v5394 = vld [vmem:[%s7 + $0x150] sm:$0xff]
        %v5395 = vld [vmem:[%s7 + $0x160] sm:$0xff]
        %v5396 = vld [vmem:[%s7 + $0x170] sm:$0xff]
        %v5397 = vld [vmem:[%s7 + $0x180] sm:$0xff]
        %v5398 = vld [vmem:[%s7 + $0x190] sm:$0xff]
        %v5399 = vld [vmem:[%s7 + $0x1a0] sm:$0xff]
        %v5400 = vld [vmem:[%s7 + $0x1b0] sm:$0xff]
        %v5401 = vld [vmem:[%s7 + $0x1c0] sm:$0xff]
        %v5402 = vld [vmem:[%s7 + $0x1d0] sm:$0xff]
        %v5403 = vld [vmem:[%s7 + $0x1e0] sm:$0xff]
        %v5404 = vld [vmem:[%s7 + $0x1f0] sm:$0xff]
        %v5405 = vpack.c.bf16 %v5246, %v5245
        %v5406 = vpack.c.bf16 %v5248, %v5247
        %v5407 = vpack.c.bf16 %v5250, %v5249
        %v5408 = vpack.c.bf16 %v5252, %v5251
        %v5409 = vpack.c.bf16 %v5254, %v5253
        %v5410 = vpack.c.bf16 %v5256, %v5255
        %v5411 = vpack.c.bf16 %v5258, %v5257
        %v5412 = vpack.c.bf16 %v5260, %v5259
        %v5413 = vpack.c.bf16 %v5262, %v5261
        %v5414 = vpack.c.bf16 %v5264, %v5263
        %v5415 = vpack.c.bf16 %v5266, %v5265
        %v5416 = vpack.c.bf16 %v5268, %v5267
        %v5417 = vpack.c.bf16 %v5270, %v5269
        %v5418 = vpack.c.bf16 %v5272, %v5271
        %v5419 = vpack.c.bf16 %v5274, %v5273
        %v5420 = vpack.c.bf16 %v5276, %v5275
        %v5421 = vld [vmem:[%s7 + $0x8] sm:$0xff]
        %v5422 = vld [vmem:[%s7 + $0x18] sm:$0xff]
        %v5423 = vld [vmem:[%s7 + $0x28] sm:$0xff]
        %v5424 = vld [vmem:[%s7 + $0x38] sm:$0xff]
        %v5425 = vld [vmem:[%s7 + $0x48] sm:$0xff]
        %v5426 = vld [vmem:[%s7 + $0x58] sm:$0xff]
        %v5427 = vld [vmem:[%s7 + $0x68] sm:$0xff]
        %v5428 = vld [vmem:[%s7 + $0x78] sm:$0xff]
        %v5429 = vld [vmem:[%s7 + $0x88] sm:$0xff]
        %v5430 = vld [vmem:[%s7 + $0x98] sm:$0xff]
        %v5431 = vld [vmem:[%s7 + $0xa8] sm:$0xff]
        %v5432 = vld [vmem:[%s7 + $0xb8] sm:$0xff]
        %v5433 = vld [vmem:[%s7 + $0xc8] sm:$0xff]
        %v5434 = vld [vmem:[%s7 + $0xd8] sm:$0xff]
        %v5435 = vld [vmem:[%s7 + $0xe8] sm:$0xff]
        %v5436 = vld [vmem:[%s7 + $0xf8] sm:$0xff]
        %v5437 = vld [vmem:[%s7 + $0x108] sm:$0xff]
        %v5438 = vld [vmem:[%s7 + $0x118] sm:$0xff]
        %v5439 = vld [vmem:[%s7 + $0x128] sm:$0xff]
        %v5440 = vld [vmem:[%s7 + $0x138] sm:$0xff]
        %v5441 = vld [vmem:[%s7 + $0x148] sm:$0xff]
        %v5442 = vld [vmem:[%s7 + $0x158] sm:$0xff]
        %v5443 = vld [vmem:[%s7 + $0x168] sm:$0xff]
        %v5444 = vld [vmem:[%s7 + $0x178] sm:$0xff]
        %v5445 = vld [vmem:[%s7 + $0x188] sm:$0xff]
        %v5446 = vld [vmem:[%s7 + $0x198] sm:$0xff]
        %v5447 = vld [vmem:[%s7 + $0x1a8] sm:$0xff]
        %v5448 = vld [vmem:[%s7 + $0x1b8] sm:$0xff]
        %v5449 = vld [vmem:[%s7 + $0x1c8] sm:$0xff]
        %v5450 = vld [vmem:[%s7 + $0x1d8] sm:$0xff]
        %v5451 = vld [vmem:[%s7 + $0x1e8] sm:$0xff]
        %v5452 = vld [vmem:[%s7 + $0x1f8] sm:$0xff]
        %v5453 = vpack.c.bf16 %v5282, %v5279
        %v5454 = vpack.c.bf16 %v5288, %v5285
        %v5455 = vpack.c.bf16 %v5294, %v5291
        %v5456 = vpack.c.bf16 %v5300, %v5297
        %v5457 = vpack.c.bf16 %v5306, %v5303
        %v5458 = vpack.c.bf16 %v5312, %v5309
        %v5459 = vpack.c.bf16 %v5318, %v5315
        %v5460 = vpack.c.bf16 %v5324, %v5321
        %v5461 = vpack.c.bf16 %v5330, %v5327
        %v5462 = vpack.c.bf16 %v5336, %v5333
        %v5463 = vpack.c.bf16 %v5342, %v5339
        %v5464 = vpack.c.bf16 %v5348, %v5345
        %v5465 = vpack.c.bf16 %v5354, %v5351
        %v5466 = vpack.c.bf16 %v5360, %v5357
        %v5467 = vpack.c.bf16 %v5366, %v5363
        %v5468 = vpack.c.bf16 %v5372, %v5369
        %v5501 = vunpack.c.l.b16 %v5421
        %v5502 = vunpack.c.h.b16 %v5421
        %v5503 = vunpack.c.l.b16 %v5422
        %v5504 = vunpack.c.h.b16 %v5422
        %v5505 = vunpack.c.l.b16 %v5423
        %v5506 = vunpack.c.h.b16 %v5423
        %v5507 = vunpack.c.l.b16 %v5424
        %v5508 = vunpack.c.h.b16 %v5424
        %v5509 = vunpack.c.l.b16 %v5425
        %v5510 = vunpack.c.h.b16 %v5425
        %v5511 = vunpack.c.l.b16 %v5426
        %v5512 = vunpack.c.h.b16 %v5426
        %v5513 = vunpack.c.l.b16 %v5427
        %v5514 = vunpack.c.h.b16 %v5427
        %v5515 = vunpack.c.l.b16 %v5428
        %v5516 = vunpack.c.h.b16 %v5428
        %v5517 = vunpack.c.l.b16 %v5429
        %v5518 = vunpack.c.h.b16 %v5429
        %v5519 = vunpack.c.l.b16 %v5430
        %v5520 = vunpack.c.h.b16 %v5430
        %v5521 = vunpack.c.l.b16 %v5431
        %v5522 = vunpack.c.h.b16 %v5431
        %v5523 = vunpack.c.l.b16 %v5432
        %v5524 = vunpack.c.h.b16 %v5432
        %v5525 = vunpack.c.l.b16 %v5433
        %v5526 = vunpack.c.h.b16 %v5433
        %v5527 = vunpack.c.l.b16 %v5434
        %v5528 = vunpack.c.h.b16 %v5434
        %v5529 = vunpack.c.l.b16 %v5435
        %v5530 = vunpack.c.h.b16 %v5435
        %v5531 = vunpack.c.l.b16 %v5436
        %v5532 = vunpack.c.h.b16 %v5436
        %v5533 = vunpack.c.l.b16 %v5437
        %v5534 = vunpack.c.h.b16 %v5437
        %v5535 = vunpack.c.l.b16 %v5438
        %v5536 = vunpack.c.h.b16 %v5438
        %v5537 = vunpack.c.l.b16 %v5439
        %v5538 = vunpack.c.h.b16 %v5439
        %v5539 = vunpack.c.l.b16 %v5440
        %v5540 = vunpack.c.h.b16 %v5440
        %v5541 = vunpack.c.l.b16 %v5441
        %v5542 = vunpack.c.h.b16 %v5441
        %v5543 = vunpack.c.l.b16 %v5442
        %v5544 = vunpack.c.h.b16 %v5442
        %v5545 = vunpack.c.l.b16 %v5443
        %v5546 = vunpack.c.h.b16 %v5443
        %v5547 = vunpack.c.l.b16 %v5444
        %v5548 = vunpack.c.h.b16 %v5444
        %v5549 = vunpack.c.l.b16 %v5445
        %v5550 = vunpack.c.h.b16 %v5445
        %v5551 = vunpack.c.l.b16 %v5446
        %v5552 = vunpack.c.h.b16 %v5446
        %v5553 = vunpack.c.l.b16 %v5447
        %v5554 = vunpack.c.h.b16 %v5447
        %v5555 = vunpack.c.l.b16 %v5448
        %v5556 = vunpack.c.h.b16 %v5448
        %v5557 = vunpack.c.l.b16 %v5449
        %v5558 = vunpack.c.h.b16 %v5449
        %v5559 = vunpack.c.l.b16 %v5450
        %v5560 = vunpack.c.h.b16 %v5450
        %v5561 = vunpack.c.l.b16 %v5451
        %v5562 = vunpack.c.h.b16 %v5451
        %v5563 = vunpack.c.l.b16 %v5452
        %v5564 = vunpack.c.h.b16 %v5452
        %v5565 = vpack.c.b16 %v5503, %v5501
        %v5566 = vpack.c.b16 %v5504, %v5502
        %v5567 = vpack.c.b16 %v5507, %v5505
        %v5568 = vpack.c.b16 %v5508, %v5506
        %v5569 = vpack.c.b16 %v5511, %v5509
        %v5570 = vpack.c.b16 %v5512, %v5510
        %v5571 = vpack.c.b16 %v5515, %v5513
        %v5572 = vpack.c.b16 %v5516, %v5514
        %v5573 = vpack.c.b16 %v5519, %v5517
        %v5574 = vpack.c.b16 %v5520, %v5518
        %v5575 = vpack.c.b16 %v5523, %v5521
        %v5576 = vpack.c.b16 %v5524, %v5522
        %v5577 = vpack.c.b16 %v5527, %v5525
        %v5578 = vpack.c.b16 %v5528, %v5526
        %v5579 = vpack.c.b16 %v5531, %v5529
        %v5580 = vpack.c.b16 %v5532, %v5530
        %v5581 = vpack.c.b16 %v5535, %v5533
        %v5582 = vpack.c.b16 %v5536, %v5534
        %v5583 = vpack.c.b16 %v5539, %v5537
        %v5584 = vpack.c.b16 %v5540, %v5538
        %v5585 = vpack.c.b16 %v5543, %v5541
        %v5586 = vpack.c.b16 %v5544, %v5542
        %v5587 = vpack.c.b16 %v5547, %v5545
        %v5588 = vpack.c.b16 %v5548, %v5546
        %v5589 = vpack.c.b16 %v5551, %v5549
        %v5590 = vpack.c.b16 %v5552, %v5550
        %v5591 = vpack.c.b16 %v5555, %v5553
        %v5592 = vpack.c.b16 %v5556, %v5554
        %v5593 = vpack.c.b16 %v5559, %v5557
        %v5594 = vpack.c.b16 %v5560, %v5558
        %v5595 = vpack.c.b16 %v5563, %v5561
        %v5596 = vpack.c.b16 %v5564, %v5562
        %5629 = vmatprep.subr.bf16.mxu0 0
        %5630 = vmatpush1.bf16.msra.mxu0 %v5453
        %5631 = vmatprep.subr.bf16.mxu0 0
        %5632 = vmatpush1.bf16.msra.mxu0 %v5454
        %5633 = vmatprep.subr.bf16.mxu0 0
        %5634 = vmatpush1.bf16.msra.mxu0 %v5455
        %5635 = vmatprep.subr.bf16.mxu0 0
        %5636 = vmatpush1.bf16.msra.mxu0 %v5456
        %5637 = vmatprep.subr.bf16.mxu0 0
        %5638 = vmatpush1.bf16.msra.mxu0 %v5457
        %5639 = vmatprep.subr.bf16.mxu0 0
        %5640 = vmatpush1.bf16.msra.mxu0 %v5458
        %5641 = vmatprep.subr.bf16.mxu0 0
        %5642 = vmatpush1.bf16.msra.mxu0 %v5459
        %5643 = vmatprep.subr.bf16.mxu0 0
        %5644 = vmatpush1.bf16.msra.mxu0 %v5460
        %5645 = vmatprep.subr.bf16.mxu0 0
        %5646 = vmatpush1.bf16.msra.mxu0 %v5461
        %5647 = vmatprep.subr.bf16.mxu0 0
        %5648 = vmatpush1.bf16.msra.mxu0 %v5462
        %5649 = vmatprep.subr.bf16.mxu0 0
        %5650 = vmatpush1.bf16.msra.mxu0 %v5463
        %5651 = vmatprep.subr.bf16.mxu0 0
        %5652 = vmatpush1.bf16.msra.mxu0 %v5464
        %5653 = vmatprep.subr.bf16.mxu0 0
        %5654 = vmatpush1.bf16.msra.mxu0 %v5465
        %5655 = vmatprep.subr.bf16.mxu0 0
        %5656 = vmatpush1.bf16.msra.mxu0 %v5466
        %5657 = vmatprep.subr.bf16.mxu0 0
        %5658 = vmatpush1.bf16.msra.mxu0 %v5467
        %5659 = vmatprep.subr.bf16.mxu0 0
        %5660 = vmatpush1.bf16.msra.mxu0 %v5468
        %5661 = vmatprep.mubr.bf16.mxu0 %v5566
        %5662 = vmatmul.mubr.bf16.gmra.mrb[0].mxu0 %v5565
        %v5663 = vpop.f32.mrb[0].mxu0
        %v5664 = vadd.f32 0.0, %v5663
        %v5665 = vpop.f32.mrb[0].mxu0
        %v5666 = vpop.f32.mrb[0].mxu0
        %v5667 = vadd.f32 0.0, %v5666
        %v5668 = vpop.f32.mrb[0].mxu0
        %5669 = vmatprep.mubr.bf16.mxu0 %v5568
        %5670 = vmatmul.mubr.bf16.gmra.mrb[0].mxu0 %v5567
        %v5671 = vpop.f32.mrb[0].mxu0
        %v5672 = vadd.f32 0.0, %v5671
        %v5673 = vpop.f32.mrb[0].mxu0
        %v5674 = vpop.f32.mrb[0].mxu0
        %v5675 = vadd.f32 0.0, %v5674
        %v5676 = vpop.f32.mrb[0].mxu0
        %5677 = vmatprep.mubr.bf16.mxu0 %v5570
        %5678 = vmatmul.mubr.bf16.gmra.mrb[0].mxu0 %v5569
        %v5679 = vpop.f32.mrb[0].mxu0
        %v5680 = vadd.f32 0.0, %v5679
        %v5681 = vpop.f32.mrb[0].mxu0
        %v5682 = vpop.f32.mrb[0].mxu0
        %v5683 = vadd.f32 0.0, %v5682
        %v5684 = vpop.f32.mrb[0].mxu0
        %5685 = vmatprep.mubr.bf16.mxu0 %v5572
        %5686 = vmatmul.mubr.bf16.gmra.mrb[0].mxu0 %v5571
        %v5687 = vpop.f32.mrb[0].mxu0
        %v5688 = vadd.f32 0.0, %v5687
        %v5689 = vpop.f32.mrb[0].mxu0
        %v5690 = vpop.f32.mrb[0].mxu0
        %v5691 = vadd.f32 0.0, %v5690
        %v5692 = vpop.f32.mrb[0].mxu0
        %5693 = vmatprep.mubr.bf16.mxu0 %v5574
        %5694 = vmatmul.mubr.bf16.gmra.mrb[0].mxu0 %v5573
        %v5695 = vpop.f32.mrb[0].mxu0
        %v5696 = vadd.f32 0.0, %v5695
        %v5697 = vpop.f32.mrb[0].mxu0
        %v5698 = vpop.f32.mrb[0].mxu0
        %v5699 = vadd.f32 0.0, %v5698
        %v5700 = vpop.f32.mrb[0].mxu0
        %5701 = vmatprep.mubr.bf16.mxu0 %v5576
        %5702 = vmatmul.mubr.bf16.gmra.mrb[0].mxu0 %v5575
        %v5703 = vpop.f32.mrb[0].mxu0
        %v5704 = vadd.f32 0.0, %v5703
        %v5705 = vpop.f32.mrb[0].mxu0
        %v5706 = vpop.f32.mrb[0].mxu0
        %v5707 = vadd.f32 0.0, %v5706
        %v5708 = vpop.f32.mrb[0].mxu0
        %5709 = vmatprep.mubr.bf16.mxu0 %v5578
        %5710 = vmatmul.mubr.bf16.gmra.mrb[0].mxu0 %v5577
        %v5711 = vpop.f32.mrb[0].mxu0
        %v5712 = vadd.f32 0.0, %v5711
        %v5713 = vpop.f32.mrb[0].mxu0
        %v5714 = vpop.f32.mrb[0].mxu0
        %v5715 = vadd.f32 0.0, %v5714
        %v5716 = vpop.f32.mrb[0].mxu0
        %5717 = vmatprep.mubr.bf16.mxu0 %v5580
        %5718 = vmatmul.mubr.bf16.gmra.mrb[0].mxu0 %v5579
        %v5719 = vpop.f32.mrb[0].mxu0
        %v5720 = vadd.f32 0.0, %v5719
        %v5721 = vpop.f32.mrb[0].mxu0
        %v5722 = vpop.f32.mrb[0].mxu0
        %v5723 = vadd.f32 0.0, %v5722
        %v5724 = vpop.f32.mrb[0].mxu0
        %5725 = vmatprep.mubr.bf16.mxu0 %v5582
        %5726 = vmatmul.mubr.bf16.gmra.mrb[0].mxu0 %v5581
        %v5727 = vpop.f32.mrb[0].mxu0
        %v5728 = vadd.f32 0.0, %v5727
        %v5729 = vpop.f32.mrb[0].mxu0
        %v5730 = vpop.f32.mrb[0].mxu0
        %v5731 = vadd.f32 0.0, %v5730
        %v5732 = vpop.f32.mrb[0].mxu0
        %5733 = vmatprep.mubr.bf16.mxu0 %v5584
        %5734 = vmatmul.mubr.bf16.gmra.mrb[0].mxu0 %v5583
        %v5735 = vpop.f32.mrb[0].mxu0
        %v5736 = vadd.f32 0.0, %v5735
        %v5737 = vpop.f32.mrb[0].mxu0
        %v5738 = vpop.f32.mrb[0].mxu0
        %v5739 = vadd.f32 0.0, %v5738
        %v5740 = vpop.f32.mrb[0].mxu0
        %5741 = vmatprep.mubr.bf16.mxu0 %v5586
        %5742 = vmatmul.mubr.bf16.gmra.mrb[0].mxu0 %v5585
        %v5743 = vpop.f32.mrb[0].mxu0
        %v5744 = vadd.f32 0.0, %v5743
        %v5745 = vpop.f32.mrb[0].mxu0
        %v5746 = vpop.f32.mrb[0].mxu0
        %v5747 = vadd.f32 0.0, %v5746
        %v5748 = vpop.f32.mrb[0].mxu0
        %5749 = vmatprep.mubr.bf16.mxu0 %v5588
        %5750 = vmatmul.mubr.bf16.gmra.mrb[0].mxu0 %v5587
        %v5751 = vpop.f32.mrb[0].mxu0
        %v5752 = vadd.f32 0.0, %v5751
        %v5753 = vpop.f32.mrb[0].mxu0
        %v5754 = vpop.f32.mrb[0].mxu0
        %v5755 = vadd.f32 0.0, %v5754
        %v5756 = vpop.f32.mrb[0].mxu0
        %5757 = vmatprep.mubr.bf16.mxu0 %v5590
        %5758 = vmatmul.mubr.bf16.gmra.mrb[0].mxu0 %v5589
        %v5759 = vpop.f32.mrb[0].mxu0
        %v5760 = vadd.f32 0.0, %v5759
        %v5761 = vpop.f32.mrb[0].mxu0
        %v5762 = vpop.f32.mrb[0].mxu0
        %v5763 = vadd.f32 0.0, %v5762
        %v5764 = vpop.f32.mrb[0].mxu0
        %5765 = vmatprep.mubr.bf16.mxu0 %v5592
        %5766 = vmatmul.mubr.bf16.gmra.mrb[0].mxu0 %v5591
        %v5767 = vpop.f32.mrb[0].mxu0
        %v5768 = vadd.f32 0.0, %v5767
        %v5769 = vpop.f32.mrb[0].mxu0
        %v5770 = vpop.f32.mrb[0].mxu0
        %v5771 = vadd.f32 0.0, %v5770
        %v5772 = vpop.f32.mrb[0].mxu0
        %5773 = vmatprep.mubr.bf16.mxu0 %v5594
        %5774 = vmatmul.mubr.bf16.gmra.mrb[0].mxu0 %v5593
        %v5775 = vpop.f32.mrb[0].mxu0
        %v5776 = vadd.f32 0.0, %v5775
        %v5777 = vpop.f32.mrb[0].mxu0
        %v5778 = vpop.f32.mrb[0].mxu0
        %v5779 = vadd.f32 0.0, %v5778
        %v5780 = vpop.f32.mrb[0].mxu0
        %5781 = vmatprep.mubr.bf16.mxu0 %v5596
        %5782 = vmatmul.mubr.bf16.gmra.mrb[0].mxu0 %v5595
        %v5783 = vpop.f32.mrb[0].mxu0
        %v5784 = vadd.f32 0.0, %v5783
        %v5785 = vpop.f32.mrb[0].mxu0
        %v5786 = vpop.f32.mrb[0].mxu0
        %v5787 = vadd.f32 0.0, %v5786
        %v5788 = vpop.f32.mrb[0].mxu0
        %5789 = vdwg.mxu0
        %v5822 = vunpack.c.l.b16 %v5373
        %v5823 = vunpack.c.h.b16 %v5373
        %v5824 = vunpack.c.l.b16 %v5374
        %v5825 = vunpack.c.h.b16 %v5374
        %v5826 = vunpack.c.l.b16 %v5375
        %v5827 = vunpack.c.h.b16 %v5375
        %v5828 = vunpack.c.l.b16 %v5376
        %v5829 = vunpack.c.h.b16 %v5376
        %v5830 = vunpack.c.l.b16 %v5377
        %v5831 = vunpack.c.h.b16 %v5377
        %v5832 = vunpack.c.l.b16 %v5378
        %v5833 = vunpack.c.h.b16 %v5378
        %v5834 = vunpack.c.l.b16 %v5379
        %v5835 = vunpack.c.h.b16 %v5379
        %v5836 = vunpack.c.l.b16 %v5380
        %v5837 = vunpack.c.h.b16 %v5380
        %v5838 = vunpack.c.l.b16 %v5381
        %v5839 = vunpack.c.h.b16 %v5381
        %v5840 = vunpack.c.l.b16 %v5382
        %v5841 = vunpack.c.h.b16 %v5382
        %v5842 = vunpack.c.l.b16 %v5383
        %v5843 = vunpack.c.h.b16 %v5383
        %v5844 = vunpack.c.l.b16 %v5384
        %v5845 = vunpack.c.h.b16 %v5384
        %v5846 = vunpack.c.l.b16 %v5385
        %v5847 = vunpack.c.h.b16 %v5385
        %v5848 = vunpack.c.l.b16 %v5386
        %v5849 = vunpack.c.h.b16 %v5386
        %v5850 = vunpack.c.l.b16 %v5387
        %v5851 = vunpack.c.h.b16 %v5387
        %v5852 = vunpack.c.l.b16 %v5388
        %v5853 = vunpack.c.h.b16 %v5388
        %v5854 = vunpack.c.l.b16 %v5389
        %v5855 = vunpack.c.h.b16 %v5389
        %v5856 = vunpack.c.l.b16 %v5390
        %v5857 = vunpack.c.h.b16 %v5390
        %v5858 = vunpack.c.l.b16 %v5391
        %v5859 = vunpack.c.h.b16 %v5391
        %v5860 = vunpack.c.l.b16 %v5392
        %v5861 = vunpack.c.h.b16 %v5392
        %v5862 = vunpack.c.l.b16 %v5393
        %v5863 = vunpack.c.h.b16 %v5393
        %v5864 = vunpack.c.l.b16 %v5394
        %v5865 = vunpack.c.h.b16 %v5394
        %v5866 = vunpack.c.l.b16 %v5395
        %v5867 = vunpack.c.h.b16 %v5395
        %v5868 = vunpack.c.l.b16 %v5396
        %v5869 = vunpack.c.h.b16 %v5396
        %v5870 = vunpack.c.l.b16 %v5397
        %v5871 = vunpack.c.h.b16 %v5397
        %v5872 = vunpack.c.l.b16 %v5398
        %v5873 = vunpack.c.h.b16 %v5398
        %v5874 = vunpack.c.l.b16 %v5399
        %v5875 = vunpack.c.h.b16 %v5399
        %v5876 = vunpack.c.l.b16 %v5400
        %v5877 = vunpack.c.h.b16 %v5400
        %v5878 = vunpack.c.l.b16 %v5401
        %v5879 = vunpack.c.h.b16 %v5401
        %v5880 = vunpack.c.l.b16 %v5402
        %v5881 = vunpack.c.h.b16 %v5402
        %v5882 = vunpack.c.l.b16 %v5403
        %v5883 = vunpack.c.h.b16 %v5403
        %v5884 = vunpack.c.l.b16 %v5404
        %v5885 = vunpack.c.h.b16 %v5404
        %v5886 = vpack.c.b16 %v5824, %v5822
        %v5887 = vpack.c.b16 %v5825, %v5823
        %v5888 = vpack.c.b16 %v5828, %v5826
        %v5889 = vpack.c.b16 %v5829, %v5827
        %v5890 = vpack.c.b16 %v5832, %v5830
        %v5891 = vpack.c.b16 %v5833, %v5831
        %v5892 = vpack.c.b16 %v5836, %v5834
        %v5893 = vpack.c.b16 %v5837, %v5835
        %v5894 = vpack.c.b16 %v5840, %v5838
        %v5895 = vpack.c.b16 %v5841, %v5839
        %v5896 = vpack.c.b16 %v5844, %v5842
        %v5897 = vpack.c.b16 %v5845, %v5843
        %v5898 = vpack.c.b16 %v5848, %v5846
        %v5899 = vpack.c.b16 %v5849, %v5847
        %v5900 = vpack.c.b16 %v5852, %v5850
        %v5901 = vpack.c.b16 %v5853, %v5851
        %v5902 = vpack.c.b16 %v5856, %v5854
        %v5903 = vpack.c.b16 %v5857, %v5855
        %v5904 = vpack.c.b16 %v5860, %v5858
        %v5905 = vpack.c.b16 %v5861, %v5859
        %v5906 = vpack.c.b16 %v5864, %v5862
        %v5907 = vpack.c.b16 %v5865, %v5863
        %v5908 = vpack.c.b16 %v5868, %v5866
        %v5909 = vpack.c.b16 %v5869, %v5867
        %v5910 = vpack.c.b16 %v5872, %v5870
        %v5911 = vpack.c.b16 %v5873, %v5871
        %v5912 = vpack.c.b16 %v5876, %v5874
        %v5913 = vpack.c.b16 %v5877, %v5875
        %v5914 = vpack.c.b16 %v5880, %v5878
        %v5915 = vpack.c.b16 %v5881, %v5879
        %v5916 = vpack.c.b16 %v5884, %v5882
        %v5917 = vpack.c.b16 %v5885, %v5883
        %5950 = vmatprep.subr.bf16.mxu0 0
        %5951 = vmatpush1.bf16.msra.mxu0 %v5405
        %5952 = vmatprep.subr.bf16.mxu0 0
        %5953 = vmatpush1.bf16.msra.mxu0 %v5406
        %5954 = vmatprep.subr.bf16.mxu0 0
        %5955 = vmatpush1.bf16.msra.mxu0 %v5407
        %5956 = vmatprep.subr.bf16.mxu0 0
        %5957 = vmatpush1.bf16.msra.mxu0 %v5408
        %5958 = vmatprep.subr.bf16.mxu0 0
        %5959 = vmatpush1.bf16.msra.mxu0 %v5409
        %5960 = vmatprep.subr.bf16.mxu0 0
        %5961 = vmatpush1.bf16.msra.mxu0 %v5410
        %5962 = vmatprep.subr.bf16.mxu0 0
        %5963 = vmatpush1.bf16.msra.mxu0 %v5411
        %5964 = vmatprep.subr.bf16.mxu0 0
        %5965 = vmatpush1.bf16.msra.mxu0 %v5412
        %5966 = vmatprep.subr.bf16.mxu0 0
        %5967 = vmatpush1.bf16.msra.mxu0 %v5413
        %5968 = vmatprep.subr.bf16.mxu0 0
        %5969 = vmatpush1.bf16.msra.mxu0 %v5414
        %5970 = vmatprep.subr.bf16.mxu0 0
        %5971 = vmatpush1.bf16.msra.mxu0 %v5415
        %5972 = vmatprep.subr.bf16.mxu0 0
        %5973 = vmatpush1.bf16.msra.mxu0 %v5416
        %5974 = vmatprep.subr.bf16.mxu0 0
        %5975 = vmatpush1.bf16.msra.mxu0 %v5417
        %5976 = vmatprep.subr.bf16.mxu0 0
        %5977 = vmatpush1.bf16.msra.mxu0 %v5418
        %5978 = vmatprep.subr.bf16.mxu0 0
        %5979 = vmatpush1.bf16.msra.mxu0 %v5419
        %5980 = vmatprep.subr.bf16.mxu0 0
        %5981 = vmatpush1.bf16.msra.mxu0 %v5420
        %5982 = vmatprep.mubr.bf16.mxu0 %v5887
        %5983 = vmatmul.mubr.bf16.gmra.mrb[0].mxu0 %v5886
        %v5984 = vpop.f32.mrb[0].mxu0
        %v5985 = vadd.f32 %v5664, %v5984
        %v5986 = vpop.f32.mrb[0].mxu0
        %v5987 = vpop.f32.mrb[0].mxu0
        %v5988 = vadd.f32 %v5667, %v5987
        %v5989 = vpop.f32.mrb[0].mxu0
        %5990 = vmatprep.mubr.bf16.mxu0 %v5889
        %5991 = vmatmul.mubr.bf16.gmra.mrb[0].mxu0 %v5888
        %v5992 = vpop.f32.mrb[0].mxu0
        %v5993 = vadd.f32 %v5672, %v5992
        %v5994 = vpop.f32.mrb[0].mxu0
        %v5995 = vpop.f32.mrb[0].mxu0
        %v5996 = vadd.f32 %v5675, %v5995
        %v5997 = vpop.f32.mrb[0].mxu0
        %5998 = vmatprep.mubr.bf16.mxu0 %v5891
        %5999 = vmatmul.mubr.bf16.gmra.mrb[0].mxu0 %v5890
        %v6000 = vpop.f32.mrb[0].mxu0
        %v6001 = vadd.f32 %v5680, %v6000
        %v6002 = vpop.f32.mrb[0].mxu0
        %v6003 = vpop.f32.mrb[0].mxu0
        %v6004 = vadd.f32 %v5683, %v6003
        %v6005 = vpop.f32.mrb[0].mxu0
        %6006 = vmatprep.mubr.bf16.mxu0 %v5893
        %6007 = vmatmul.mubr.bf16.gmra.mrb[0].mxu0 %v5892
        %v6008 = vpop.f32.mrb[0].mxu0
        %v6009 = vadd.f32 %v5688, %v6008
        %v6010 = vpop.f32.mrb[0].mxu0
        %v6011 = vpop.f32.mrb[0].mxu0
        %v6012 = vadd.f32 %v5691, %v6011
        %v6013 = vpop.f32.mrb[0].mxu0
        %6014 = vmatprep.mubr.bf16.mxu0 %v5895
        %6015 = vmatmul.mubr.bf16.gmra.mrb[0].mxu0 %v5894
        %v6016 = vpop.f32.mrb[0].mxu0
        %v6017 = vadd.f32 %v5696, %v6016
        %v6018 = vpop.f32.mrb[0].mxu0
        %v6019 = vpop.f32.mrb[0].mxu0
        %v6020 = vadd.f32 %v5699, %v6019
        %v6021 = vpop.f32.mrb[0].mxu0
        %6022 = vmatprep.mubr.bf16.mxu0 %v5897
        %6023 = vmatmul.mubr.bf16.gmra.mrb[0].mxu0 %v5896
        %v6024 = vpop.f32.mrb[0].mxu0
        %v6025 = vadd.f32 %v5704, %v6024
        %v6026 = vpop.f32.mrb[0].mxu0
        %v6027 = vpop.f32.mrb[0].mxu0
        %v6028 = vadd.f32 %v5707, %v6027
        %v6029 = vpop.f32.mrb[0].mxu0
        %6030 = vmatprep.mubr.bf16.mxu0 %v5899
        %6031 = vmatmul.mubr.bf16.gmra.mrb[0].mxu0 %v5898
        %v6032 = vpop.f32.mrb[0].mxu0
        %v6033 = vadd.f32 %v5712, %v6032
        %v6034 = vpop.f32.mrb[0].mxu0
        %v6035 = vpop.f32.mrb[0].mxu0
        %v6036 = vadd.f32 %v5715, %v6035
        %v6037 = vpop.f32.mrb[0].mxu0
        %6038 = vmatprep.mubr.bf16.mxu0 %v5901
        %6039 = vmatmul.mubr.bf16.gmra.mrb[0].mxu0 %v5900
        %v6040 = vpop.f32.mrb[0].mxu0
        %v6041 = vadd.f32 %v5720, %v6040
        %v6042 = vpop.f32.mrb[0].mxu0
        %v6043 = vpop.f32.mrb[0].mxu0
        %v6044 = vadd.f32 %v5723, %v6043
        %v6045 = vpop.f32.mrb[0].mxu0
        %6046 = vmatprep.mubr.bf16.mxu0 %v5903
        %6047 = vmatmul.mubr.bf16.gmra.mrb[0].mxu0 %v5902
        %v6048 = vpop.f32.mrb[0].mxu0
        %v6049 = vadd.f32 %v5728, %v6048
        %v6050 = vpop.f32.mrb[0].mxu0
        %v6051 = vpop.f32.mrb[0].mxu0
        %v6052 = vadd.f32 %v5731, %v6051
        %v6053 = vpop.f32.mrb[0].mxu0
        %6054 = vmatprep.mubr.bf16.mxu0 %v5905
        %6055 = vmatmul.mubr.bf16.gmra.mrb[0].mxu0 %v5904
        %v6056 = vpop.f32.mrb[0].mxu0
        %v6057 = vadd.f32 %v5736, %v6056
        %v6058 = vpop.f32.mrb[0].mxu0
        %v6059 = vpop.f32.mrb[0].mxu0
        %v6060 = vadd.f32 %v5739, %v6059
        %v6061 = vpop.f32.mrb[0].mxu0
        %6062 = vmatprep.mubr.bf16.mxu0 %v5907
        %6063 = vmatmul.mubr.bf16.gmra.mrb[0].mxu0 %v5906
        %v6064 = vpop.f32.mrb[0].mxu0
        %v6065 = vadd.f32 %v5744, %v6064
        %v6066 = vpop.f32.mrb[0].mxu0
        %v6067 = vpop.f32.mrb[0].mxu0
        %v6068 = vadd.f32 %v5747, %v6067
        %v6069 = vpop.f32.mrb[0].mxu0
        %6070 = vmatprep.mubr.bf16.mxu0 %v5909
        %6071 = vmatmul.mubr.bf16.gmra.mrb[0].mxu0 %v5908
        %v6072 = vpop.f32.mrb[0].mxu0
        %v6073 = vadd.f32 %v5752, %v6072
        %v6074 = vpop.f32.mrb[0].mxu0
        %v6075 = vpop.f32.mrb[0].mxu0
        %v6076 = vadd.f32 %v5755, %v6075
        %v6077 = vpop.f32.mrb[0].mxu0
        %6078 = vmatprep.mubr.bf16.mxu0 %v5911
        %6079 = vmatmul.mubr.bf16.gmra.mrb[0].mxu0 %v5910
        %v6080 = vpop.f32.mrb[0].mxu0
        %v6081 = vadd.f32 %v5760, %v6080
        %v6082 = vpop.f32.mrb[0].mxu0
        %v6083 = vpop.f32.mrb[0].mxu0
        %v6084 = vadd.f32 %v5763, %v6083
        %v6085 = vpop.f32.mrb[0].mxu0
        %6086 = vmatprep.mubr.bf16.mxu0 %v5913
        %6087 = vmatmul.mubr.bf16.gmra.mrb[0].mxu0 %v5912
        %v6088 = vpop.f32.mrb[0].mxu0
        %v6089 = vadd.f32 %v5768, %v6088
        %v6090 = vpop.f32.mrb[0].mxu0
        %v6091 = vpop.f32.mrb[0].mxu0
        %v6092 = vadd.f32 %v5771, %v6091
        %v6093 = vpop.f32.mrb[0].mxu0
        %6094 = vmatprep.mubr.bf16.mxu0 %v5915
        %6095 = vmatmul.mubr.bf16.gmra.mrb[0].mxu0 %v5914
        %v6096 = vpop.f32.mrb[0].mxu0
        %v6097 = vadd.f32 %v5776, %v6096
        %v6098 = vpop.f32.mrb[0].mxu0
        %v6099 = vpop.f32.mrb[0].mxu0
        %v6100 = vadd.f32 %v5779, %v6099
        %v6101 = vpop.f32.mrb[0].mxu0
        %6102 = vmatprep.mubr.bf16.mxu0 %v5917
        %6103 = vmatmul.mubr.bf16.gmra.mrb[0].mxu0 %v5916
        %v6104 = vpop.f32.mrb[0].mxu0
        %v6105 = vadd.f32 %v5784, %v6104
        %v6106 = vpop.f32.mrb[0].mxu0
        %v6107 = vpop.f32.mrb[0].mxu0
        %v6108 = vadd.f32 %v5787, %v6107
        %v6109 = vpop.f32.mrb[0].mxu0
        %6110 = vdwg.mxu0
        %v6111 = vsub.f32 0.0, %v5985
        %v6112 = vsub.f32 0.0, %v5988
        %v6113 = vsub.f32 0.0, %v5993
        %v6114 = vsub.f32 0.0, %v5996
        %v6115 = vsub.f32 0.0, %v6001
        %v6116 = vsub.f32 0.0, %v6004
        %v6117 = vsub.f32 0.0, %v6009
        %v6118 = vsub.f32 0.0, %v6012
        %v6119 = vsub.f32 0.0, %v6017
        %v6120 = vsub.f32 0.0, %v6020
        %v6121 = vsub.f32 0.0, %v6025
        %v6122 = vsub.f32 0.0, %v6028
        %v6123 = vsub.f32 0.0, %v6033
        %v6124 = vsub.f32 0.0, %v6036
        %v6125 = vsub.f32 0.0, %v6041
        %v6126 = vsub.f32 0.0, %v6044
        %v6127 = vsub.f32 0.0, %v6049
        %v6128 = vsub.f32 0.0, %v6052
        %v6129 = vsub.f32 0.0, %v6057
        %v6130 = vsub.f32 0.0, %v6060
        %v6131 = vsub.f32 0.0, %v6065
        %v6132 = vsub.f32 0.0, %v6068
        %v6133 = vsub.f32 0.0, %v6073
        %v6134 = vsub.f32 0.0, %v6076
        %v6135 = vsub.f32 0.0, %v6081
        %v6136 = vsub.f32 0.0, %v6084
        %v6137 = vsub.f32 0.0, %v6089
        %v6138 = vsub.f32 0.0, %v6092
        %v6139 = vsub.f32 0.0, %v6097
        %v6140 = vsub.f32 0.0, %v6100
        %v6141 = vsub.f32 0.0, %v6105
        %v6142 = vsub.f32 0.0, %v6108
        %v6143 = vmul.f32 %v6111, 1.442695
        %v6144 = vpow.pop %v6143
        %v6145 = vmul.f32 %v6112, 1.442695
        %v6146 = vpow.pop %v6145
        %v6147 = vmul.f32 %v6113, 1.442695
        %v6148 = vpow.pop %v6147
        %v6149 = vmul.f32 %v6114, 1.442695
        %v6150 = vpow.pop %v6149
        %v6151 = vmul.f32 %v6115, 1.442695
        %v6152 = vpow.pop %v6151
        %v6153 = vmul.f32 %v6116, 1.442695
        %v6154 = vpow.pop %v6153
        %v6155 = vmul.f32 %v6117, 1.442695
        %v6156 = vpow.pop %v6155
        %v6157 = vmul.f32 %v6118, 1.442695
        %v6158 = vpow.pop %v6157
        %v6159 = vmul.f32 %v6119, 1.442695
        %v6160 = vpow.pop %v6159
        %v6161 = vmul.f32 %v6120, 1.442695
        %v6162 = vpow.pop %v6161
        %v6163 = vmul.f32 %v6121, 1.442695
        %v6164 = vpow.pop %v6163
        %v6165 = vmul.f32 %v6122, 1.442695
        %v6166 = vpow.pop %v6165
        %v6167 = vmul.f32 %v6123, 1.442695
        %v6168 = vpow.pop %v6167
        %v6169 = vmul.f32 %v6124, 1.442695
        %v6170 = vpow.pop %v6169
        %v6171 = vmul.f32 %v6125, 1.442695
        %v6172 = vpow.pop %v6171
        %v6173 = vmul.f32 %v6126, 1.442695
        %v6174 = vpow.pop %v6173
        %v6175 = vmul.f32 %v6127, 1.442695
        %v6176 = vpow.pop %v6175
        %v6177 = vmul.f32 %v6128, 1.442695
        %v6178 = vpow.pop %v6177
        %v6179 = vmul.f32 %v6129, 1.442695
        %v6180 = vpow.pop %v6179
        %v6181 = vmul.f32 %v6130, 1.442695
        %v6182 = vpow.pop %v6181
        %v6183 = vmul.f32 %v6131, 1.442695
        %v6184 = vpow.pop %v6183
        %v6185 = vmul.f32 %v6132, 1.442695
        %v6186 = vpow.pop %v6185
        %v6187 = vmul.f32 %v6133, 1.442695
        %v6188 = vpow.pop %v6187
        %v6189 = vmul.f32 %v6134, 1.442695
        %v6190 = vpow.pop %v6189
        %v6191 = vmul.f32 %v6135, 1.442695
        %v6192 = vpow.pop %v6191
        %v6193 = vmul.f32 %v6136, 1.442695
        %v6194 = vpow.pop %v6193
        %v6195 = vmul.f32 %v6137, 1.442695
        %v6196 = vpow.pop %v6195
        %v6197 = vmul.f32 %v6138, 1.442695
        %v6198 = vpow.pop %v6197
        %v6199 = vmul.f32 %v6139, 1.442695
        %v6200 = vpow.pop %v6199
        %v6201 = vmul.f32 %v6140, 1.442695
        %v6202 = vpow.pop %v6201
        %v6203 = vmul.f32 %v6141, 1.442695
        %v6204 = vpow.pop %v6203
        %v6205 = vmul.f32 %v6142, 1.442695
        %v6206 = vpow.pop %v6205
        %v6207 = vadd.f32 %v6144, 1.0
        %v6208 = vadd.f32 %v6146, 1.0
        %v6209 = vadd.f32 %v6148, 1.0
        %v6210 = vadd.f32 %v6150, 1.0
        %v6211 = vadd.f32 %v6152, 1.0
        %v6212 = vadd.f32 %v6154, 1.0
        %v6213 = vadd.f32 %v6156, 1.0
        %v6214 = vadd.f32 %v6158, 1.0
        %v6215 = vadd.f32 %v6160, 1.0
        %v6216 = vadd.f32 %v6162, 1.0
        %v6217 = vadd.f32 %v6164, 1.0
        %v6218 = vadd.f32 %v6166, 1.0
        %v6219 = vadd.f32 %v6168, 1.0
        %v6220 = vadd.f32 %v6170, 1.0
        %v6221 = vadd.f32 %v6172, 1.0
        %v6222 = vadd.f32 %v6174, 1.0
        %v6223 = vadd.f32 %v6176, 1.0
        %v6224 = vadd.f32 %v6178, 1.0
        %v6225 = vadd.f32 %v6180, 1.0
        %v6226 = vadd.f32 %v6182, 1.0
        %v6227 = vadd.f32 %v6184, 1.0
        %v6228 = vadd.f32 %v6186, 1.0
        %v6229 = vadd.f32 %v6188, 1.0
        %v6230 = vadd.f32 %v6190, 1.0
        %v6231 = vadd.f32 %v6192, 1.0
        %v6232 = vadd.f32 %v6194, 1.0
        %v6233 = vadd.f32 %v6196, 1.0
        %v6234 = vadd.f32 %v6198, 1.0
        %v6235 = vadd.f32 %v6200, 1.0
        %v6236 = vadd.f32 %v6202, 1.0
        %v6237 = vadd.f32 %v6204, 1.0
        %v6238 = vadd.f32 %v6206, 1.0
        %v6239 = vrcp.pop %v6207
        %v6240 = vrcp.pop %v6208
        %v6241 = vrcp.pop %v6209
        %v6242 = vrcp.pop %v6210
        %v6243 = vrcp.pop %v6211
        %v6244 = vrcp.pop %v6212
        %v6245 = vrcp.pop %v6213
        %v6246 = vrcp.pop %v6214
        %v6247 = vrcp.pop %v6215
        %v6248 = vrcp.pop %v6216
        %v6249 = vrcp.pop %v6217
        %v6250 = vrcp.pop %v6218
        %v6251 = vrcp.pop %v6219
        %v6252 = vrcp.pop %v6220
        %v6253 = vrcp.pop %v6221
        %v6254 = vrcp.pop %v6222
        %v6255 = vrcp.pop %v6223
        %v6256 = vrcp.pop %v6224
        %v6257 = vrcp.pop %v6225
        %v6258 = vrcp.pop %v6226
        %v6259 = vrcp.pop %v6227
        %v6260 = vrcp.pop %v6228
        %v6261 = vrcp.pop %v6229
        %v6262 = vrcp.pop %v6230
        %v6263 = vrcp.pop %v6231
        %v6264 = vrcp.pop %v6232
        %v6265 = vrcp.pop %v6233
        %v6266 = vrcp.pop %v6234
        %v6267 = vrcp.pop %v6235
        %v6268 = vrcp.pop %v6236
        %v6269 = vrcp.pop %v6237
        %v6270 = vrcp.pop %v6238
        %v6271 = vmul.f32 %v5116, %v6239
        %v6272 = vmul.f32 %v5117, %v6240
        %v6273 = vmul.f32 %v5118, %v6241
        %v6274 = vmul.f32 %v5119, %v6242
        %v6275 = vmul.f32 %v5120, %v6243
        %v6276 = vmul.f32 %v5121, %v6244
        %v6277 = vmul.f32 %v5122, %v6245
        %v6278 = vmul.f32 %v5123, %v6246
        %v6279 = vmul.f32 %v5124, %v6247
        %v6280 = vmul.f32 %v5125, %v6248
        %v6281 = vmul.f32 %v5126, %v6249
        %v6282 = vmul.f32 %v5127, %v6250
        %v6283 = vmul.f32 %v5128, %v6251
        %v6284 = vmul.f32 %v5129, %v6252
        %v6285 = vmul.f32 %v5130, %v6253
        %v6286 = vmul.f32 %v5131, %v6254
        %v6287 = vmul.f32 %v5132, %v6255
        %v6288 = vmul.f32 %v5133, %v6256
        %v6289 = vmul.f32 %v5134, %v6257
        %v6290 = vmul.f32 %v5135, %v6258
        %v6291 = vmul.f32 %v5136, %v6259
        %v6292 = vmul.f32 %v5137, %v6260
        %v6293 = vmul.f32 %v5138, %v6261
        %v6294 = vmul.f32 %v5139, %v6262
        %v6295 = vmul.f32 %v5140, %v6263
        %v6296 = vmul.f32 %v5141, %v6264
        %v6297 = vmul.f32 %v5142, %v6265
        %v6298 = vmul.f32 %v5143, %v6266
        %v6299 = vmul.f32 %v5144, %v6267
        %v6300 = vmul.f32 %v5145, %v6268
        %v6301 = vmul.f32 %v5146, %v6269
        %v6302 = vmul.f32 %v5147, %v6270
        %6303 = vst.msk [vmem:[%s298] sm:$0xff] %vm305, %v6271
        %6304 = vst.msk [vmem:[%s298 + $0x8] sm:$0xff] %vm305, %v6272
        %6305 = vst.msk [vmem:[%s298 + $0x10] sm:$0xff] %vm305, %v6273
        %6306 = vst.msk [vmem:[%s298 + $0x18] sm:$0xff] %vm305, %v6274
        %6307 = vst.msk [vmem:[%s298 + $0x20] sm:$0xff] %vm305, %v6275
        %6308 = vst.msk [vmem:[%s298 + $0x28] sm:$0xff] %vm305, %v6276
        %6309 = vst.msk [vmem:[%s298 + $0x30] sm:$0xff] %vm305, %v6277
        %6310 = vst.msk [vmem:[%s298 + $0x38] sm:$0xff] %vm305, %v6278
        %6311 = vst.msk [vmem:[%s298 + $0x40] sm:$0xff] %vm305, %v6279
        %6312 = vst.msk [vmem:[%s298 + $0x48] sm:$0xff] %vm305, %v6280
        %6313 = vst.msk [vmem:[%s298 + $0x50] sm:$0xff] %vm305, %v6281
        %6314 = vst.msk [vmem:[%s298 + $0x58] sm:$0xff] %vm305, %v6282
        %6315 = vst.msk [vmem:[%s298 + $0x60] sm:$0xff] %vm305, %v6283
        %6316 = vst.msk [vmem:[%s298 + $0x68] sm:$0xff] %vm305, %v6284
        %6317 = vst.msk [vmem:[%s298 + $0x70] sm:$0xff] %vm305, %v6285
        %6318 = vst.msk [vmem:[%s298 + $0x78] sm:$0xff] %vm305, %v6286
        %6319 = vst.msk [vmem:[%s298 + $0x80] sm:$0xff] %vm305, %v6287
        %6320 = vst.msk [vmem:[%s298 + $0x88] sm:$0xff] %vm305, %v6288
        %6321 = vst.msk [vmem:[%s298 + $0x90] sm:$0xff] %vm305, %v6289
        %6322 = vst.msk [vmem:[%s298 + $0x98] sm:$0xff] %vm305, %v6290
        %6323 = vst.msk [vmem:[%s298 + $0xa0] sm:$0xff] %vm305, %v6291
        %6324 = vst.msk [vmem:[%s298 + $0xa8] sm:$0xff] %vm305, %v6292
        %6325 = vst.msk [vmem:[%s298 + $0xb0] sm:$0xff] %vm305, %v6293
        %6326 = vst.msk [vmem:[%s298 + $0xb8] sm:$0xff] %vm305, %v6294
        %6327 = vst.msk [vmem:[%s298 + $0xc0] sm:$0xff] %vm305, %v6295
        %6328 = vst.msk [vmem:[%s298 + $0xc8] sm:$0xff] %vm305, %v6296
        %6329 = vst.msk [vmem:[%s298 + $0xd0] sm:$0xff] %vm305, %v6297
        %6330 = vst.msk [vmem:[%s298 + $0xd8] sm:$0xff] %vm305, %v6298
        %6331 = vst.msk [vmem:[%s298 + $0xe0] sm:$0xff] %vm305, %v6299
        %6332 = vst.msk [vmem:[%s298 + $0xe8] sm:$0xff] %vm305, %v6300
        %6333 = vst.msk [vmem:[%s298 + $0xf0] sm:$0xff] %vm305, %v6301
        %6334 = vst.msk [vmem:[%s298 + $0xf8] sm:$0xff] %vm305, %v6302
        %s6335 = sand.u32 %s203, 1
        %s6336 = scalar_lea.sflag [#allocation5], %s6335
        %s6337 = sand.u32 %s203, 1
        %s6338 = smul.addr %s6337, 256
        %s6339 = scalar_lea.vmem [#allocation4], %s6338
        // Predicated region
        $region53: #{cbam_forward.1} parent=51 // pred_check
          %p6340 = pneg %p213
        $region54: #{cbam_forward.1} parent=51 // pred_check_branch
          %6342 = sbr.rel (%p6340) target = $region56
        $region55: #{cbam_forward.1} parent=51 // pred_region
          %s6344 = ssub.s32 4096, 4096
          %6345 = vsyncadd %s6336, %s6344
          %s6346 = smul.addr %s22, 32
          %s6347 = smul.addr %s6346, 128
          %s6348 = scalar_lea.hbm %s8, %s6347
          %s6349 = sshll.u32 %s6339, 4
          %s6350 = int_to_ptr.vmem [resolvable:$true] %s6349
          %6355 = dma.vmem_to_hbm [thread:$0]  %s6350, 4096, %s6348, %s6336, 128, 128, 8
        $region56: #{cbam_forward.1} parent=51 // pred_fallthru
          _
      $region52: #{cbam_forward.1} parent=5 // pred_fallthru
        _
      %p6356 = scmp.le.s32.totalorder 2, %s17
      // Predicated region
      $region57: #{cbam_forward.1} parent=5 // pred_check
        %p6357 = pneg %p6356
      $region58: #{cbam_forward.1} parent=5 // pred_check_branch
        %6359 = sbr.rel (%p6357) target = $region60
      $region59: #{cbam_forward.1} parent=5 // pred_region
        %s6360 = ssub.s32 %s17, 2
        // Predicated region
        $region61: #{cbam_forward.1} parent=59 // pred_check
          %p6361 = pneg %p219
        $region62: #{cbam_forward.1} parent=59 // pred_check_branch
          %6363 = sbr.rel (%p6361) target = $region64
        $region63: #{cbam_forward.1} parent=59 // pred_region
          %s6364 = sand.u32 %s204, 1
          %s6365 = scalar_lea.sflag [#allocation5], %s6364
          %s6366 = sand.u32 %s204, 1
          %s6367 = smul.addr %s6366, 256
          %s6368 = scalar_lea.vmem [#allocation4], %s6367
          %6369 = dma.done %s6365, 4096
        $region64: #{cbam_forward.1} parent=59 // pred_fallthru
          _
      $region60: #{cbam_forward.1} parent=5 // pred_fallthru
        _
    $region6: #{cbam_forward.1} parent=1 // loop_footer
      %s21 = sadd.s32 1, %s17
    $region7: #{cbam_forward.1} parent=1 // loop_footer_branch
      %16 = sbr.rel target = $region3
    $region8: #{cbam_forward.1} parent=1 // loop_exit
      _
    %6370 = vsyncpa [#allocation5], 1
    %s6371 = scalar_lea.sflag [#allocation5], 1
    %6372 = vsyncpa %s6371, 1

</llo_original>
